<compile_context>
chip_gen: v5e
topology: v5e:2x2
jax: 0.10.0
libtpu: 0.0.40
codegen_flags: <defaults>
</compile_context>

<pallas_src>
import functools

import jax
import jax.numpy as jnp
from jax.experimental import pallas as pl
from jax.experimental.pallas import tpu as pltpu

# ----- model hyper-parameters (small synthetic sizes) -----
B = 2            # batch
NC = 4           # input channels (nc)
IMGH = IMGW = 16
MID_CH = 64
FEAT_CH = 512    # FeatureExtraction_output
NH = 32          # hidden_size (nh)
NCLASS = 16      # class_size (nclass)
NUM_STEPS = 8    # decoding steps (len of `text`)
LANE = 128       # TPU lane width (generator output padded to this for dense stores)
CONV2_TILE_N = 256   # Cout tile for the 512-channel conv (256 fills v6e/v7x MXU)


# ---------------------------------------------------------------------------
# Kernel 1: matmul + bias + ReLU (whole operands in VMEM).  Used for conv1
# after wrapper-side im2col (taps folded into K => a single MXU dot).
# ---------------------------------------------------------------------------
def _matmul_bias_relu_kernel(x_ref, w_ref, b_ref, o_ref):
    o_ref[...] = jnp.maximum(
        jnp.dot(x_ref[...], w_ref[...], preferred_element_type=jnp.float32)
        + b_ref[...], 0.0)


def conv3x3_relu_im2col(x, w, b):
    """3x3 stride-1 pad-1 conv + ReLU via wrapper im2col (small Cin)."""
    bsz, h, wd, cin = x.shape
    cout = w.shape[0]
    xp = jnp.pad(x, ((0, 0), (1, 1), (1, 1), (0, 0)))
    # im2col: tap-major, cin-minor columns (matches w_flat below). Tiny (512x36 f32).
    cols = jnp.stack([xp[:, di:di + h, dj:dj + wd, :]
                      for di in range(3) for dj in range(3)], axis=3)   # (B,H,W,9,Cin)
    cols = cols.reshape(bsz * h * wd, 9 * cin)
    w_flat = w.transpose(2, 3, 1, 0).reshape(9 * cin, cout)             # (9*Cin, Cout)
    y = pl.pallas_call(
        _matmul_bias_relu_kernel,
        out_shape=jax.ShapeDtypeStruct((bsz * h * wd, cout), jnp.float32),
    )(cols, w_flat, b.reshape(1, cout))
    return y.reshape(bsz, h, wd, cout)


# ---------------------------------------------------------------------------
# Kernel 2: conv2d 3x3 stride 1 pad 1 + ReLU, NHWC, Cout-tiled grid.
# im2col folded into the kernel as 9 shifted VMEM window reads + 9 MXU dots;
# the accumulator is only (B*H*W, TILE_N) so it never spills.
# ---------------------------------------------------------------------------
def _conv3x3_relu_kernel(x_ref, w_ref, b_ref, o_ref, *, bsz, hh, ww, cin):
    # x_ref: (B, H+2, W+2, Cin) padded NHWC (full input, same every grid step)
    # w_ref: (9, Cin, TILE_N)   taps ordered (di, dj)
    # b_ref: (1, TILE_N)
    # o_ref: (B*H*W, TILE_N)
    acc = None
    for di in range(3):
        for dj in range(3):
            patch = x_ref[:, di:di + hh, dj:dj + ww, :]          # (B, H, W, Cin)
            patch = patch.reshape(bsz * hh * ww, cin)            # collapse majors
            term = jnp.dot(patch, w_ref[di * 3 + dj],
                           preferred_element_type=jnp.float32)   # (B*H*W, TILE_N)
            acc = term if acc is None else acc + term
    o_ref[...] = jnp.maximum(acc + b_ref[...], 0.0)


def conv3x3_relu_tiled(x, w, b, *, tile_n=CONV2_TILE_N):
    """x: (B,H,W,Cin) NHWC;  w: (Cout,Cin,3,3) (PyTorch layout);  b: (Cout,)."""
    bsz, h, wd, cin = x.shape
    cout = w.shape[0]
    tile_n = min(tile_n, cout)
    assert cout % tile_n == 0
    xp = jnp.pad(x, ((0, 0), (1, 1), (1, 1), (0, 0)))            # spatial pad=1
    w9 = w.transpose(2, 3, 1, 0).reshape(9, cin, cout)           # (tap, Cin, Cout)
    y = pl.pallas_call(
        functools.partial(_conv3x3_relu_kernel, bsz=bsz, hh=h, ww=wd, cin=cin),
        grid=(cout // tile_n,),
        in_specs=[
            pl.BlockSpec((bsz, h + 2, wd + 2, cin), lambda j: (0, 0, 0, 0)),
            pl.BlockSpec((9, cin, tile_n), lambda j: (0, 0, j)),
            pl.BlockSpec((1, tile_n), lambda j: (0, j)),
        ],
        out_specs=pl.BlockSpec((bsz * h * wd, tile_n), lambda j: (0, j)),
        out_shape=jax.ShapeDtypeStruct((bsz * h * wd, cout), jnp.float32),
        compiler_params=pltpu.CompilerParams(
            dimension_semantics=("parallel",)),                  # v7x: use both TCs
    )(xp, w9, b.reshape(1, cout))
    return y.reshape(bsz, h, wd, cout)


def maxpool2x2_nhwc(x):  # glue: tiny reduction, fused by XLA under jit
    bsz, h, w, c = x.shape
    return x.reshape(bsz, h // 2, 2, w // 2, 2, c).max(axis=(2, 4))


# ---------------------------------------------------------------------------
# Kernel 3: LSTM-attention decoder.  Single invocation; all step-independent
# projections are in the prologue, the 8-step recurrence is unrolled, and the
# generator is one batched matmul + one dense store at the end.
# Teacher forcing (is_train=True path).
# ---------------------------------------------------------------------------
def _attn_decoder_kernel(bh_ref, onehots_ref, w_proj_ref, b_h2h_ref,
                         w_oh_ref, bsum_ref, w_h2h_ref, w_score_ref,
                         w_hh_ref, w_gen_ref, b_gen_ref, out_ref,
                         *, nh, num_steps, bsz, t_len, c_dim):
    # ---- prologue: everything independent of the recurrence (one MXU pass over C) ----
    bh2d = bh_ref[...].reshape(bsz * t_len, c_dim)                       # (B*T, C)
    proj = jnp.dot(bh2d, w_proj_ref[...],
                   preferred_element_type=jnp.float32)                   # (B*T, 5*NH)
    bhw = proj[:, :4 * nh].reshape(bsz, t_len, 4 * nh)                   # (B, T, 4NH)
    hproj = proj[:, 4 * nh:].reshape(bsz, t_len, nh) + b_h2h_ref[...]    # bias folded
    # teacher-forced one-hot gate contribution + (b_ih + b_hh), all steps at once
    pre_gates = (jnp.dot(onehots_ref[...], w_oh_ref[...],
                         preferred_element_type=jnp.float32)
                 + bsum_ref[...]).reshape(num_steps, bsz, 4 * nh)

    w_h2h = w_h2h_ref[...]                                               # (NH, NH)
    w_hh = w_hh_ref[...]                                                 # (NH, 4NH)
    w_score_b = jnp.broadcast_to(w_score_ref[...], (bsz, t_len, nh))

    h = jnp.zeros((bsz, nh), jnp.float32)
    c = jnp.zeros((bsz, nh), jnp.float32)
    h_steps = []

    # Full unroll of the recurrence (== lax.fori_loop(..., unroll=True)).
    for step in range(num_steps):
        # --- attention over visual features ---
        hp = jnp.dot(h, w_h2h, preferred_element_type=jnp.float32)       # (B, NH)
        t = jnp.tanh(hproj + hp[:, None, :])                             # (B, T, NH)
        e = jnp.sum(t * w_score_b, axis=-1)                              # (B, T)
        e = e - jnp.max(e, axis=-1, keepdims=True)                       # stable softmax
        p = jnp.exp(e)
        alpha = p * pl.reciprocal(jnp.sum(p, axis=-1, keepdims=True),
                                  approx=True)                           # (B, T)

        # --- LSTMCell gates: hoisted context projection (alpha @ bhW) + h @ W_hh ---
        ctx_g = jnp.einsum('bqt,btg->bqg', alpha[:, None, :], bhw,
                           preferred_element_type=jnp.float32)[:, 0, :]  # (B, 4NH)
        gates = (ctx_g
                 + jnp.dot(h, w_hh, preferred_element_type=jnp.float32)
                 + pre_gates[step])                                      # (B, 4NH)
        i_g = jax.nn.sigmoid(gates[:, 0 * nh:1 * nh])
        f_g = jax.nn.sigmoid(gates[:, 1 * nh:2 * nh])
        g_g = jnp.tanh(gates[:, 2 * nh:3 * nh])
        o_g = jax.nn.sigmoid(gates[:, 3 * nh:4 * nh])
        c = f_g * c + i_g * g_g
        h = o_g * jnp.tanh(c)
        h_steps.append(h)

    # ---- epilogue: one batched generator matmul + one dense (S*B, 128) store ----
    h_all = jnp.concatenate(h_steps, axis=0)                             # (S*B, NH)
    out_ref[...] = (jnp.dot(h_all, w_gen_ref[...],
                            preferred_element_type=jnp.float32)
                    + b_gen_ref[...])


def attention_decode(params, batch_h, text):
    """batch_h: (B, T, C) visual features; text: (B, num_steps) int tokens."""
    bsz, t_len, c = batch_h.shape
    num_steps = text.shape[1]
    nclass = params["gen_w"].shape[0]

    # Fused prologue weight: [context->gates (C,4NH) | i2h (C,NH)] along lanes,
    # so both slices inside the kernel are vreg-column aligned.
    w_proj = jnp.concatenate([params["lstm_w_ih"][:, :c].T,              # (C, 4NH)
                              params["i2h_w"].T], axis=1)                # (C, NH)

    # Teacher-forced one-hots for all steps, step-major.
    onehots = jax.nn.one_hot(text, nclass, dtype=jnp.float32)            # (B, S, NCLASS)
    onehots = onehots.transpose(1, 0, 2).reshape(num_steps * bsz, nclass)
    w_oh = params["lstm_w_ih"][:, c:].T                                  # (NCLASS, 4NH)
    bias_sum = (params["lstm_b_ih"] + params["lstm_b_hh"]).reshape(1, 4 * NH)

    # Generator weights zero-padded to 128 output lanes (NCLASS <= 128).
    gen_w_pad = jnp.zeros((NH, LANE), jnp.float32).at[:, :nclass].set(params["gen_w"].T)
    gen_b_pad = jnp.zeros((1, LANE), jnp.float32).at[:, :nclass].set(
        params["gen_b"][None, :])

    out_pad = pl.pallas_call(
        functools.partial(_attn_decoder_kernel, nh=NH, num_steps=num_steps,
                          bsz=bsz, t_len=t_len, c_dim=c),
        out_shape=jax.ShapeDtypeStruct((num_steps * bsz, LANE), jnp.float32),
    )(batch_h, onehots, w_proj, params["h2h_b"].reshape(1, NH),
      w_oh, bias_sum, params["h2h_w"].T, params["score_w"].reshape(1, 1, NH),
      params["lstm_w_hh"].T, gen_w_pad, gen_b_pad)

    out = out_pad.reshape(num_steps, bsz, LANE)[:, :, :nclass]
    return out.transpose(1, 0, 2)                                        # (B, S, NCLASS)


# ---------------------------------------------------------------------------
# Full Attn_model.forward
# ---------------------------------------------------------------------------
def attn_model_forward(params, x, text, is_train=True, finetune=False):
    # NCHW (PyTorch input convention) -> NHWC once; stay NHWC through the CNN.
    f = x.transpose(0, 2, 3, 1)
    # FeatureExtraction (simplified ResNet stand-in; see TODO at top)
    f = conv3x3_relu_im2col(f, params["conv1_w"], params["conv1_b"])     # Cin=4: taps->K
    f = maxpool2x2_nhwc(f)
    f = conv3x3_relu_tiled(f, params["conv2_w"], params["conv2_b"])      # Cout-tiled grid
    f = maxpool2x2_nhwc(f)                                               # (B, H/4, W/4, 512)
    b, h, w, c = f.shape
    # == permute(0, 2, 3, 1).view(b, h*w, c) of the NCHW feature map.
    visual_feature = f.reshape(b, h * w, c)
    return attention_decode(params, visual_feature, text)


def init_params(key):
    ks = jax.random.split(key, 14)
    def init(k, shape, scale=0.1):
        return jax.random.normal(k, shape, dtype=jnp.float32) * scale
    return dict(
        conv1_w=init(ks[0], (MID_CH, NC, 3, 3)),
        conv1_b=init(ks[1], (MID_CH,)),
        conv2_w=init(ks[2], (FEAT_CH, MID_CH, 3, 3), 0.05),
        conv2_b=init(ks[3], (FEAT_CH,)),
        i2h_w=init(ks[4], (NH, FEAT_CH)),                   # Linear(512, NH, bias=False)
        h2h_w=init(ks[5], (NH, NH)),                        # Linear(NH, NH)
        h2h_b=init(ks[6], (NH,)),
        score_w=init(ks[7], (1, NH)),                       # Linear(NH, 1, bias=False)
        lstm_w_ih=init(ks[8], (4 * NH, FEAT_CH + NCLASS)),  # LSTMCell weights (i,f,g,o)
        lstm_b_ih=init(ks[9], (4 * NH,)),
        lstm_w_hh=init(ks[10], (4 * NH, NH)),
        lstm_b_hh=init(ks[11], (4 * NH,)),
        gen_w=init(ks[12], (NCLASS, NH)),                   # generator Linear(NH, NCLASS)
        gen_b=init(ks[13], (NCLASS,)),
    )


if __name__ == "__main__":
    key = jax.random.PRNGKey(0)
    k_params, k_x, k_text = jax.random.split(key, 3)
    params = init_params(k_params)

    x = jax.random.normal(k_x, (B, NC, IMGH, IMGW), dtype=jnp.float32)   # NCHW input
    text = jax.random.randint(k_text, (B, NUM_STEPS), 0, NCLASS)         # token ids

    forward = jax.jit(attn_model_forward, static_argnames=("is_train", "finetune"))
    probs = forward(params, x, text)
    jax.block_until_ready(probs)
    assert probs.shape == (B, NUM_STEPS, NCLASS), probs.shape
    assert bool(jnp.all(jnp.isfinite(probs)))
    print("KERNEL_OK")
</pallas_src>

<mosaic_0001>
module attributes {stable_mosaic.version = 11 : i64} {
  func.func @_matmul_bias_relu_kernel(%arg0: memref<512x36xf32, #tpu.memory_space<vmem>>, %arg1: memref<36x64xf32, #tpu.memory_space<vmem>>, %arg2: memref<1x64xf32, #tpu.memory_space<vmem>>, %arg3: memref<512x64xf32, #tpu.memory_space<vmem>>) attributes {dimension_semantics = [], scalar_prefetch = 0 : i64, scratch_operands = 0 : i64, tpu.core_type = #tpu.core_type<tc>} {
    %c0 = arith.constant 0 : index
    %c0_0 = arith.constant 0 : index
    %0 = vector.load %arg0[%c0, %c0_0] : memref<512x36xf32, #tpu.memory_space<vmem>>, vector<512x36xf32>
    %c0_1 = arith.constant 0 : index
    %c0_2 = arith.constant 0 : index
    %1 = vector.load %arg1[%c0_1, %c0_2] : memref<36x64xf32, #tpu.memory_space<vmem>>, vector<36x64xf32>
    %cst = arith.constant dense<0.000000e+00> : vector<512x64xf32>
    %2 = tpu.matmul %0, %1, %cst {dimension_numbers = #tpu.dot_dimension_numbers<[1], [0], [0], [1], [0, 0, 1, 1], [], []>} : vector<512x36xf32>, vector<36x64xf32>, vector<512x64xf32> -> vector<512x64xf32>
    %c0_3 = arith.constant 0 : index
    %c0_4 = arith.constant 0 : index
    %3 = vector.load %arg2[%c0_3, %c0_4] : memref<1x64xf32, #tpu.memory_space<vmem>>, vector<1x64xf32>
    %4 = vector.broadcast %3 : vector<1x64xf32> to vector<512x64xf32>
    %5 = arith.addf %2, %4 : vector<512x64xf32>
    %cst_5 = arith.constant 0.000000e+00 : f32
    %6 = vector.broadcast %cst_5 : f32 to vector<512x64xf32>
    %7 = arith.maximumf %5, %6 : vector<512x64xf32>
    %c0_6 = arith.constant 0 : index
    %c0_7 = arith.constant 0 : index
    %8 = vector.load %arg3[%c0_6, %c0_7] : memref<512x64xf32, #tpu.memory_space<vmem>>, vector<512x64xf32>
    tpu.vector_store %arg3[%c0_6, %c0_7], %7 {strides = array<i32>} : memref<512x64xf32, #tpu.memory_space<vmem>>, vector<512x64xf32>,
    return
  }
}

module attributes {stable_mosaic.version = 11 : i64} {
  func.func @_conv3x3_relu_kernel(%arg0: i32, %arg1: memref<2x10x10x64xf32, #tpu.memory_space<vmem>>, %arg2: memref<9x64x256xf32, #tpu.memory_space<vmem>>, %arg3: memref<1x256xf32, #tpu.memory_space<vmem>>, %arg4: memref<128x256xf32, #tpu.memory_space<vmem>>) attributes {dimension_semantics = [#tpu.dimension_semantics<parallel>], iteration_bounds = array<i64: 2>, scalar_prefetch = 0 : i64, scratch_operands = 0 : i64, tpu.core_type = #tpu.core_type<tc>, window_params = [{pipeline_mode = #tpu.pipeline_mode<synchronous>, transform_indices = @transform_0, window_bounds = array<i64: 2, 10, 10, 64>}, {transform_indices = @transform_1, window_bounds = array<i64: 9, 64, 256>}, {transform_indices = @transform_2, window_bounds = array<i64: 1, 256>}, {transform_indices = @transform_3, window_bounds = array<i64: 128, 256>}]} {
    %c0 = arith.constant 0 : index
    %c0_0 = arith.constant 0 : index
    %c0_1 = arith.constant 0 : index
    %c0_2 = arith.constant 0 : index
    %0 = vector.load %arg1[%c0, %c0_0, %c0_1, %c0_2] : memref<2x10x10x64xf32, #tpu.memory_space<vmem>>, vector<2x8x8x64xf32>
    %1 = vector.shape_cast %0 : vector<2x8x8x64xf32> to vector<128x64xf32>
    %c0_3 = arith.constant 0 : index
    %c0_4 = arith.constant 0 : index
    %c0_5 = arith.constant 0 : index
    %2 = vector.load %arg2[%c0_3, %c0_4, %c0_5] : memref<9x64x256xf32, #tpu.memory_space<vmem>>, vector<1x64x256xf32>
    %3 = vector.shape_cast %2 : vector<1x64x256xf32> to vector<64x256xf32>
    %cst = arith.constant dense<0.000000e+00> : vector<128x256xf32>
    %4 = tpu.matmul %1, %3, %cst {dimension_numbers = #tpu.dot_dimension_numbers<[1], [0], [0], [1], [0, 0, 1, 1], [], []>} : vector<128x64xf32>, vector<64x256xf32>, vector<128x256xf32> -> vector<128x256xf32>
    %c0_6 = arith.constant 0 : index
    %c0_7 = arith.constant 0 : index
    %c1 = arith.constant 1 : index
    %c0_8 = arith.constant 0 : index
    %5 = vector.load %arg1[%c0_6, %c0_7, %c1, %c0_8] : memref<2x10x10x64xf32, #tpu.memory_space<vmem>>, vector<2x8x8x64xf32>
    %6 = vector.shape_cast %5 : vector<2x8x8x64xf32> to vector<128x64xf32>
    %c1_9 = arith.constant 1 : index
    %c0_10 = arith.constant 0 : index
    %c0_11 = arith.constant 0 : index
    %7 = vector.load %arg2[%c1_9, %c0_10, %c0_11] : memref<9x64x256xf32, #tpu.memory_space<vmem>>, vector<1x64x256xf32>
    %8 = vector.shape_cast %7 : vector<1x64x256xf32> to vector<64x256xf32>
    %cst_12 = arith.constant dense<0.000000e+00> : vector<128x256xf32>
    %9 = tpu.matmul %6, %8, %cst_12 {dimension_numbers = #tpu.dot_dimension_numbers<[1], [0], [0], [1], [0, 0, 1, 1], [], []>} : vector<128x64xf32>, vector<64x256xf32>, vector<128x256xf32> -> vector<128x256xf32>
    %10 = arith.addf %4, %9 : vector<128x256xf32>
    %c0_13 = arith.constant 0 : index
    %c0_14 = arith.constant 0 : index
    %c2 = arith.constant 2 : index
    %c0_15 = arith.constant 0 : index
    %11 = vector.load %arg1[%c0_13, %c0_14, %c2, %c0_15] : memref<2x10x10x64xf32, #tpu.memory_space<vmem>>, vector<2x8x8x64xf32>
    %12 = vector.shape_cast %11 : vector<2x8x8x64xf32> to vector<128x64xf32>
    %c2_16 = arith.constant 2 : index
    %c0_17 = arith.constant 0 : index
    %c0_18 = arith.constant 0 : index
    %13 = vector.load %arg2[%c2_16, %c0_17, %c0_18] : memref<9x64x256xf32, #tpu.memory_space<vmem>>, vector<1x64x256xf32>
    %14 = vector.shape_cast %13 : vector<1x64x256xf32> to vector<64x256xf32>
    %cst_19 = arith.constant dense<0.000000e+00> : vector<128x256xf32>
    %15 = tpu.matmul %12, %14, %cst_19 {dimension_numbers = #tpu.dot_dimension_numbers<[1], [0], [0], [1], [0, 0, 1, 1], [], []>} : vector<128x64xf32>, vector<64x256xf32>, vector<128x256xf32> -> vector<128x256xf32>
    %16 = arith.addf %10, %15 : vector<128x256xf32>
    %c0_20 = arith.constant 0 : index
    %c1_21 = arith.constant 1 : index
    %c0_22 = arith.constant 0 : index
    %c0_23 = arith.constant 0 : index
    %17 = vector.load %arg1[%c0_20, %c1_21, %c0_22, %c0_23] : memref<2x10x10x64xf32, #tpu.memory_space<vmem>>, vector<2x8x8x64xf32>
    %18 = vector.shape_cast %17 : vector<2x8x8x64xf32> to vector<128x64xf32>
    %c3 = arith.constant 3 : index
    %c0_24 = arith.constant 0 : index
    %c0_25 = arith.constant 0 : index
    %19 = vector.load %arg2[%c3, %c0_24, %c0_25] : memref<9x64x256xf32, #tpu.memory_space<vmem>>, vector<1x64x256xf32>
    %20 = vector.shape_cast %19 : vector<1x64x256xf32> to vector<64x256xf32>
    %cst_26 = arith.constant dense<0.000000e+00> : vector<128x256xf32>
    %21 = tpu.matmul %18, %20, %cst_26 {dimension_numbers = #tpu.dot_dimension_numbers<[1], [0], [0], [1], [0, 0, 1, 1], [], []>} : vector<128x64xf32>, vector<64x256xf32>, vector<128x256xf32> -> vector<128x256xf32>
    %22 = arith.addf %16, %21 : vector<128x256xf32>
    %c0_27 = arith.constant 0 : index
    %c1_28 = arith.constant 1 : index
    %c1_29 = arith.constant 1 : index
    %c0_30 = arith.constant 0 : index
    %23 = vector.load %arg1[%c0_27, %c1_28, %c1_29, %c0_30] : memref<2x10x10x64xf32, #tpu.memory_space<vmem>>, vector<2x8x8x64xf32>
    %24 = vector.shape_cast %23 : vector<2x8x8x64xf32> to vector<128x64xf32>
    %c4 = arith.constant 4 : index
    %c0_31 = arith.constant 0 : index
    %c0_32 = arith.constant 0 : index
    %25 = vector.load %arg2[%c4, %c0_31, %c0_32] : memref<9x64x256xf32, #tpu.memory_space<vmem>>, vector<1x64x256xf32>
    %26 = vector.shape_cast %25 : vector<1x64x256xf32> to vector<64x256xf32>
    %cst_33 = arith.constant dense<0.000000e+00> : vector<128x256xf32>
    %27 = tpu.matmul %24, %26, %cst_33 {dimension_numbers = #tpu.dot_dimension_numbers<[1], [0], [0], [1], [0, 0, 1, 1], [], []>} : vector<128x64xf32>, vector<64x256xf32>, vector<128x256xf32> -> vector<128x256xf32>
    %28 = arith.addf %22, %27 : vector<128x256xf32>
    %c0_34 = arith.constant 0 : index
    %c1_35 = arith.constant 1 : index
    %c2_36 = arith.constant 2 : index
    %c0_37 = arith.constant 0 : index
    %29 = vector.load %arg1[%c0_34, %c1_35, %c2_36, %c0_37] : memref<2x10x10x64xf32, #tpu.memory_space<vmem>>, vector<2x8x8x64xf32>
    %30 = vector.shape_cast %29 : vector<2x8x8x64xf32> to vector<128x64xf32>
    %c5 = arith.constant 5 : index
    %c0_38 = arith.constant 0 : index
    %c0_39 = arith.constant 0 : index
    %31 = vector.load %arg2[%c5, %c0_38, %c0_39] : memref<9x64x256xf32, #tpu.memory_space<vmem>>, vector<1x64x256xf32>
    %32 = vector.shape_cast %31 : vector<1x64x256xf32> to vector<64x256xf32>
    %cst_40 = arith.constant dense<0.000000e+00> : vector<128x256xf32>
    %33 = tpu.matmul %30, %32, %cst_40 {dimension_numbers = #tpu.dot_dimension_numbers<[1], [0], [0], [1], [0, 0, 1, 1], [], []>} : vector<128x64xf32>, vector<64x256xf32>, vector<128x256xf32> -> vector<128x256xf32>
    %34 = arith.addf %28, %33 : vector<128x256xf32>
    %c0_41 = arith.constant 0 : index
    %c2_42 = arith.constant 2 : index
    %c0_43 = arith.constant 0 : index
    %c0_44 = arith.constant 0 : index
    %35 = vector.load %arg1[%c0_41, %c2_42, %c0_43, %c0_44] : memref<2x10x10x64xf32, #tpu.memory_space<vmem>>, vector<2x8x8x64xf32>
    %36 = vector.shape_cast %35 : vector<2x8x8x64xf32> to vector<128x64xf32>
    %c6 = arith.constant 6 : index
    %c0_45 = arith.constant 0 : index
    %c0_46 = arith.constant 0 : index
    %37 = vector.load %arg2[%c6, %c0_45, %c0_46] : memref<9x64x256xf32, #tpu.memory_space<vmem>>, vector<1x64x256xf32>
    %38 = vector.shape_cast %37 : vector<1x64x256xf32> to vector<64x256xf32>
    %cst_47 = arith.constant dense<0.000000e+00> : vector<128x256xf32>
    %39 = tpu.matmul %36, %38, %cst_47 {dimension_numbers = #tpu.dot_dimension_numbers<[1], [0], [0], [1], [0, 0, 1, 1], [], []>} : vector<128x64xf32>, vector<64x256xf32>, vector<128x256xf32> -> vector<128x256xf32>
    %40 = arith.addf %34, %39 : vector<128x256xf32>
    %c0_48 = arith.constant 0 : index
    %c2_49 = arith.constant 2 : index
    %c1_50 = arith.constant 1 : index
    %c0_51 = arith.constant 0 : index
    %41 = vector.load %arg1[%c0_48, %c2_49, %c1_50, %c0_51] : memref<2x10x10x64xf32, #tpu.memory_space<vmem>>, vector<2x8x8x64xf32>
    %42 = vector.shape_cast %41 : vector<2x8x8x64xf32> to vector<128x64xf32>
    %c7 = arith.constant 7 : index
    %c0_52 = arith.constant 0 : index
    %c0_53 = arith.constant 0 : index
    %43 = vector.load %arg2[%c7, %c0_52, %c0_53] : memref<9x64x256xf32, #tpu.memory_space<vmem>>, vector<1x64x256xf32>
    %44 = vector.shape_cast %43 : vector<1x64x256xf32> to vector<64x256xf32>
    %cst_54 = arith.constant dense<0.000000e+00> : vector<128x256xf32>
    %45 = tpu.matmul %42, %44, %cst_54 {dimension_numbers = #tpu.dot_dimension_numbers<[1], [0], [0], [1], [0, 0, 1, 1], [], []>} : vector<128x64xf32>, vector<64x256xf32>, vector<128x256xf32> -> vector<128x256xf32>
    %46 = arith.addf %40, %45 : vector<128x256xf32>
    %c0_55 = arith.constant 0 : index
    %c2_56 = arith.constant 2 : index
    %c2_57 = arith.constant 2 : index
    %c0_58 = arith.constant 0 : index
    %47 = vector.load %arg1[%c0_55, %c2_56, %c2_57, %c0_58] : memref<2x10x10x64xf32, #tpu.memory_space<vmem>>, vector<2x8x8x64xf32>
    %48 = vector.shape_cast %47 : vector<2x8x8x64xf32> to vector<128x64xf32>
    %c8 = arith.constant 8 : index
    %c0_59 = arith.constant 0 : index
    %c0_60 = arith.constant 0 : index
    %49 = vector.load %arg2[%c8, %c0_59, %c0_60] : memref<9x64x256xf32, #tpu.memory_space<vmem>>, vector<1x64x256xf32>
    %50 = vector.shape_cast %49 : vector<1x64x256xf32> to vector<64x256xf32>
    %cst_61 = arith.constant dense<0.000000e+00> : vector<128x256xf32>
    %51 = tpu.matmul %48, %50, %cst_61 {dimension_numbers = #tpu.dot_dimension_numbers<[1], [0], [0], [1], [0, 0, 1, 1], [], []>} : vector<128x64xf32>, vector<64x256xf32>, vector<128x256xf32> -> vector<128x256xf32>
    %52 = arith.addf %46, %51 : vector<128x256xf32>
    %c0_62 = arith.constant 0 : index
    %c0_63 = arith.constant 0 : index
    %53 = vector.load %arg3[%c0_62, %c0_63] : memref<1x256xf32, #tpu.memory_space<vmem>>, vector<1x256xf32>
    %54 = vector.broadcast %53 : vector<1x256xf32> to vector<128x256xf32>
    %55 = arith.addf %52, %54 : vector<128x256xf32>
    %cst_64 = arith.constant 0.000000e+00 : f32
    %56 = vector.broadcast %cst_64 : f32 to vector<128x256xf32>
    %57 = arith.maximumf %55, %56 : vector<128x256xf32>
    %c0_65 = arith.constant 0 : index
    %c0_66 = arith.constant 0 : index
    %58 = vector.load %arg4[%c0_65, %c0_66] : memref<128x256xf32, #tpu.memory_space<vmem>>, vector<128x256xf32>
    tpu.vector_store %arg4[%c0_65, %c0_66], %57 {strides = array<i32>} : memref<128x256xf32, #tpu.memory_space<vmem>>, vector<128x256xf32>,
    return
  }
  func.func @transform_0(%arg0: i32) -> (i32, i32, i32, i32) {
    %c0_i32 = arith.constant 0 : i32
    %c0_i32_0 = arith.constant 0 : i32
    %c0_i32_1 = arith.constant 0 : i32
    %c0_i32_2 = arith.constant 0 : i32
    %c0_i32_3 = arith.constant 0 : i32
    return %c0_i32, %c0_i32_0, %c0_i32_1, %c0_i32_2 : i32, i32, i32, i32
  }
  func.func @transform_1(%arg0: i32) -> (i32, i32, i32) {
    %c0_i32 = arith.constant 0 : i32
    %c0_i32_0 = arith.constant 0 : i32
    %c0_i32_1 = arith.constant 0 : i32
    return %c0_i32, %c0_i32_0, %arg0 : i32, i32, i32
  }
  func.func @transform_2(%arg0: i32) -> (i32, i32) {
    %c0_i32 = arith.constant 0 : i32
    %c0_i32_0 = arith.constant 0 : i32
    return %c0_i32, %arg0 : i32, i32
  }
  func.func @transform_3(%arg0: i32) -> (i32, i32) {
    %c0_i32 = arith.constant 0 : i32
    %c0_i32_0 = arith.constant 0 : i32
    return %c0_i32, %arg0 : i32, i32
  }
}

module attributes {stable_mosaic.version = 11 : i64} {
  func.func @_attn_decoder_kernel(%arg0: memref<2x16x512xf32, #tpu.memory_space<vmem>>, %arg1: memref<16x16xf32, #tpu.memory_space<vmem>>, %arg2: memref<512x160xf32, #tpu.memory_space<vmem>>, %arg3: memref<1x32xf32, #tpu.memory_space<vmem>>, %arg4: memref<16x128xf32, #tpu.memory_space<vmem>>, %arg5: memref<1x128xf32, #tpu.memory_space<vmem>>, %arg6: memref<32x32xf32, #tpu.memory_space<vmem>>, %arg7: memref<1x1x32xf32, #tpu.memory_space<vmem>>, %arg8: memref<32x128xf32, #tpu.memory_space<vmem>>, %arg9: memref<32x128xf32, #tpu.memory_space<vmem>>, %arg10: memref<1x128xf32, #tpu.memory_space<vmem>>, %arg11: memref<16x128xf32, #tpu.memory_space<vmem>>) attributes {dimension_semantics = [], scalar_prefetch = 0 : i64, scratch_operands = 0 : i64, tpu.core_type = #tpu.core_type<tc>} {
    %c0 = arith.constant 0 : index
    %c0_0 = arith.constant 0 : index
    %c0_1 = arith.constant 0 : index
    %0 = vector.load %arg0[%c0, %c0_0, %c0_1] : memref<2x16x512xf32, #tpu.memory_space<vmem>>, vector<2x16x512xf32>
    %1 = vector.shape_cast %0 : vector<2x16x512xf32> to vector<32x512xf32>
    %c0_2 = arith.constant 0 : index
    %c0_3 = arith.constant 0 : index
    %2 = vector.load %arg2[%c0_2, %c0_3] : memref<512x160xf32, #tpu.memory_space<vmem>>, vector<512x160xf32>
    %cst = arith.constant dense<0.000000e+00> : vector<32x160xf32>
    %3 = tpu.matmul %1, %2, %cst {dimension_numbers = #tpu.dot_dimension_numbers<[1], [0], [0], [1], [0, 0, 1, 1], [], []>} : vector<32x512xf32>, vector<512x160xf32>, vector<32x160xf32> -> vector<32x160xf32>
    %4 = vector.extract_strided_slice %3 {offsets = [0, 0], sizes = [32, 128], strides = [1, 1]} : vector<32x160xf32> to vector<32x128xf32>
    %5 = vector.shape_cast %4 : vector<32x128xf32> to vector<2x16x128xf32>
    %6 = vector.extract_strided_slice %3 {offsets = [0, 128], sizes = [32, 32], strides = [1, 1]} : vector<32x160xf32> to vector<32x32xf32>
    %7 = vector.shape_cast %6 : vector<32x32xf32> to vector<2x16x32xf32>
    %c0_4 = arith.constant 0 : index
    %c0_5 = arith.constant 0 : index
    %8 = vector.load %arg3[%c0_4, %c0_5] : memref<1x32xf32, #tpu.memory_space<vmem>>, vector<1x32xf32>
    %9 = vector.shape_cast %8 : vector<1x32xf32> to vector<1x1x32xf32>
    %10 = vector.broadcast %9 : vector<1x1x32xf32> to vector<2x16x32xf32>
    %11 = arith.addf %7, %10 : vector<2x16x32xf32>
    %c0_6 = arith.constant 0 : index
    %c0_7 = arith.constant 0 : index
    %12 = vector.load %arg1[%c0_6, %c0_7] : memref<16x16xf32, #tpu.memory_space<vmem>>, vector<16x16xf32>
    %c0_8 = arith.constant 0 : index
    %c0_9 = arith.constant 0 : index
    %13 = vector.load %arg4[%c0_8, %c0_9] : memref<16x128xf32, #tpu.memory_space<vmem>>, vector<16x128xf32>
    %cst_10 = arith.constant dense<0.000000e+00> : vector<16x128xf32>
    %14 = tpu.matmul %12, %13, %cst_10 {dimension_numbers = #tpu.dot_dimension_numbers<[1], [0], [0], [1], [0, 0, 1, 1], [], []>} : vector<16x16xf32>, vector<16x128xf32>, vector<16x128xf32> -> vector<16x128xf32>
    %c0_11 = arith.constant 0 : index
    %c0_12 = arith.constant 0 : index
    %15 = vector.load %arg5[%c0_11, %c0_12] : memref<1x128xf32, #tpu.memory_space<vmem>>, vector<1x128xf32>
    %16 = vector.broadcast %15 : vector<1x128xf32> to vector<16x128xf32>
    %17 = arith.addf %14, %16 : vector<16x128xf32>
    %18 = vector.shape_cast %17 : vector<16x128xf32> to vector<8x2x128xf32>
    %c0_13 = arith.constant 0 : index
    %c0_14 = arith.constant 0 : index
    %19 = vector.load %arg6[%c0_13, %c0_14] : memref<32x32xf32, #tpu.memory_space<vmem>>, vector<32x32xf32>
    %c0_15 = arith.constant 0 : index
    %c0_16 = arith.constant 0 : index
    %20 = vector.load %arg8[%c0_15, %c0_16] : memref<32x128xf32, #tpu.memory_space<vmem>>, vector<32x128xf32>
    %c0_17 = arith.constant 0 : index
    %c0_18 = arith.constant 0 : index
    %c0_19 = arith.constant 0 : index
    %21 = vector.load %arg7[%c0_17, %c0_18, %c0_19] : memref<1x1x32xf32, #tpu.memory_space<vmem>>, vector<1x1x32xf32>
    %22 = vector.shape_cast %21 : vector<1x1x32xf32> to vector<1x1x32xf32>
    %23 = vector.broadcast %22 : vector<1x1x32xf32> to vector<2x16x32xf32>
    %cst_20 = arith.constant 0.000000e+00 : f32
    %24 = vector.broadcast %cst_20 : f32 to vector<2x32xf32>
    %cst_21 = arith.constant 0.000000e+00 : f32
    %25 = vector.broadcast %cst_21 : f32 to vector<2x32xf32>
    %cst_22 = arith.constant dense<0.000000e+00> : vector<2x32xf32>
    %26 = tpu.matmul %24, %19, %cst_22 {dimension_numbers = #tpu.dot_dimension_numbers<[1], [0], [0], [1], [0, 0, 1, 1], [], []>} : vector<2x32xf32>, vector<32x32xf32>, vector<2x32xf32> -> vector<2x32xf32>
    %27 = vector.shape_cast %26 : vector<2x32xf32> to vector<2x1x32xf32>
    %28 = vector.broadcast %27 : vector<2x1x32xf32> to vector<2x16x32xf32>
    %29 = arith.addf %11, %28 : vector<2x16x32xf32>
    %30 = math.tanh %29 : vector<2x16x32xf32>
    %31 = arith.mulf %30, %23 : vector<2x16x32xf32>
    %cst_23 = arith.constant dense<0.000000e+00> : vector<2x16xf32>
    %32 = vector.multi_reduction <add>, %31, %cst_23 [2] : vector<2x16x32xf32> to vector<2x16xf32>
    %cst_24 = arith.constant dense<0xFF800000> : vector<2xf32>
    %33 = vector.multi_reduction <maximumf>, %32, %cst_24 [1] : vector<2x16xf32> to vector<2xf32>
    %34 = vector.shape_cast %33 : vector<2xf32> to vector<2x1xf32>
    %35 = vector.broadcast %34 : vector<2x1xf32> to vector<2x16xf32>
    %36 = arith.subf %32, %35 : vector<2x16xf32>
    %37 = math.exp %36 : vector<2x16xf32>
    %cst_25 = arith.constant dense<0.000000e+00> : vector<2xf32>
    %38 = vector.multi_reduction <add>, %37, %cst_25 [1] : vector<2x16xf32> to vector<2xf32>
    %39 = vector.shape_cast %38 : vector<2xf32> to vector<2x1xf32>
    %40 = tpu.reciprocal %39 {approx = true} : vector<2x1xf32> -> vector<2x1xf32>
    %41 = vector.broadcast %40 : vector<2x1xf32> to vector<2x16xf32>
    %42 = arith.mulf %37, %41 : vector<2x16xf32>
    %43 = vector.shape_cast %42 : vector<2x16xf32> to vector<2x1x16xf32>
    "tpu.trace_start"() <{level = 10 : i32, message = "bqt,btg->bqg"}> : () -> ()
    %cst_26 = arith.constant dense<0.000000e+00> : vector<2x1x128xf32>
    %44 = tpu.matmul %43, %5, %cst_26 {dimension_numbers = #tpu.dot_dimension_numbers<[2], [1], [1], [2], [0, 0, 0, 1, 1, 2], [0], [0]>} : vector<2x1x16xf32>, vector<2x16x128xf32>, vector<2x1x128xf32> -> vector<2x1x128xf32>
    "tpu.trace_stop"() : () -> ()
    %45 = vector.shape_cast %44 : vector<2x1x128xf32> to vector<2x128xf32>
    %cst_27 = arith.constant dense<0.000000e+00> : vector<2x128xf32>
    %46 = tpu.matmul %24, %20, %cst_27 {dimension_numbers = #tpu.dot_dimension_numbers<[1], [0], [0], [1], [0, 0, 1, 1], [], []>} : vector<2x32xf32>, vector<32x128xf32>, vector<2x128xf32> -> vector<2x128xf32>
    %47 = arith.addf %45, %46 : vector<2x128xf32>
    %48 = vector.extract_strided_slice %18 {offsets = [0, 0, 0], sizes = [1, 2, 128], strides = [1, 1, 1]} : vector<8x2x128xf32> to vector<1x2x128xf32>
    %49 = vector.shape_cast %48 : vector<1x2x128xf32> to vector<2x128xf32>
    %50 = arith.addf %47, %49 : vector<2x128xf32>
    %51 = vector.extract_strided_slice %50 {offsets = [0, 0], sizes = [2, 32], strides = [1, 1]} : vector<2x128xf32> to vector<2x32xf32>
    %52 = arith.negf %51 : vector<2x32xf32>
    %53 = math.exp %52 : vector<2x32xf32>
    %cst_28 = arith.constant 1.000000e+00 : f32
    %54 = vector.broadcast %cst_28 : f32 to vector<2x32xf32>
    %55 = arith.addf %54, %53 : vector<2x32xf32>
    %56 = arith.divf %54, %55 : vector<2x32xf32>
    %57 = vector.extract_strided_slice %50 {offsets = [0, 32], sizes = [2, 32], strides = [1, 1]} : vector<2x128xf32> to vector<2x32xf32>
    %58 = arith.negf %57 : vector<2x32xf32>
    %59 = math.exp %58 : vector<2x32xf32>
    %cst_29 = arith.constant 1.000000e+00 : f32
    %60 = vector.broadcast %cst_29 : f32 to vector<2x32xf32>
    %61 = arith.addf %60, %59 : vector<2x32xf32>
    %62 = arith.divf %60, %61 : vector<2x32xf32>
    %63 = vector.extract_strided_slice %50 {offsets = [0, 64], sizes = [2, 32], strides = [1, 1]} : vector<2x128xf32> to vector<2x32xf32>
    %64 = math.tanh %63 : vector<2x32xf32>
    %65 = vector.extract_strided_slice %50 {offsets = [0, 96], sizes = [2, 32], strides = [1, 1]} : vector<2x128xf32> to vector<2x32xf32>
    %66 = arith.negf %65 : vector<2x32xf32>
    %67 = math.exp %66 : vector<2x32xf32>
    %cst_30 = arith.constant 1.000000e+00 : f32
    %68 = vector.broadcast %cst_30 : f32 to vector<2x32xf32>
    %69 = arith.addf %68, %67 : vector<2x32xf32>
    %70 = arith.divf %68, %69 : vector<2x32xf32>
    %71 = arith.mulf %62, %25 : vector<2x32xf32>
    %72 = arith.mulf %56, %64 : vector<2x32xf32>
    %73 = arith.addf %71, %72 : vector<2x32xf32>
    %74 = math.tanh %73 : vector<2x32xf32>
    %75 = arith.mulf %70, %74 : vector<2x32xf32>
    %cst_31 = arith.constant dense<0.000000e+00> : vector<2x32xf32>
    %76 = tpu.matmul %75, %19, %cst_31 {dimension_numbers = #tpu.dot_dimension_numbers<[1], [0], [0], [1], [0, 0, 1, 1], [], []>} : vector<2x32xf32>, vector<32x32xf32>, vector<2x32xf32> -> vector<2x32xf32>
    %77 = vector.shape_cast %76 : vector<2x32xf32> to vector<2x1x32xf32>
    %78 = vector.broadcast %77 : vector<2x1x32xf32> to vector<2x16x32xf32>
    %79 = arith.addf %11, %78 : vector<2x16x32xf32>
    %80 = math.tanh %79 : vector<2x16x32xf32>
    %81 = arith.mulf %80, %23 : vector<2x16x32xf32>
    %cst_32 = arith.constant dense<0.000000e+00> : vector<2x16xf32>
    %82 = vector.multi_reduction <add>, %81, %cst_32 [2] : vector<2x16x32xf32> to vector<2x16xf32>
    %cst_33 = arith.constant dense<0xFF800000> : vector<2xf32>
    %83 = vector.multi_reduction <maximumf>, %82, %cst_33 [1] : vector<2x16xf32> to vector<2xf32>
    %84 = vector.shape_cast %83 : vector<2xf32> to vector<2x1xf32>
    %85 = vector.broadcast %84 : vector<2x1xf32> to vector<2x16xf32>
    %86 = arith.subf %82, %85 : vector<2x16xf32>
    %87 = math.exp %86 : vector<2x16xf32>
    %cst_34 = arith.constant dense<0.000000e+00> : vector<2xf32>
    %88 = vector.multi_reduction <add>, %87, %cst_34 [1] : vector<2x16xf32> to vector<2xf32>
    %89 = vector.shape_cast %88 : vector<2xf32> to vector<2x1xf32>
    %90 = tpu.reciprocal %89 {approx = true} : vector<2x1xf32> -> vector<2x1xf32>
    %91 = vector.broadcast %90 : vector<2x1xf32> to vector<2x16xf32>
    %92 = arith.mulf %87, %91 : vector<2x16xf32>
    %93 = vector.shape_cast %92 : vector<2x16xf32> to vector<2x1x16xf32>
    "tpu.trace_start"() <{level = 10 : i32, message = "bqt,btg->bqg"}> : () -> ()
    %cst_35 = arith.constant dense<0.000000e+00> : vector<2x1x128xf32>
    %94 = tpu.matmul %93, %5, %cst_35 {dimension_numbers = #tpu.dot_dimension_numbers<[2], [1], [1], [2], [0, 0, 0, 1, 1, 2], [0], [0]>} : vector<2x1x16xf32>, vector<2x16x128xf32>, vector<2x1x128xf32> -> vector<2x1x128xf32>
    "tpu.trace_stop"() : () -> ()
    %95 = vector.shape_cast %94 : vector<2x1x128xf32> to vector<2x128xf32>
    %cst_36 = arith.constant dense<0.000000e+00> : vector<2x128xf32>
    %96 = tpu.matmul %75, %20, %cst_36 {dimension_numbers = #tpu.dot_dimension_numbers<[1], [0], [0], [1], [0, 0, 1, 1], [], []>} : vector<2x32xf32>, vector<32x128xf32>, vector<2x128xf32> -> vector<2x128xf32>
    %97 = arith.addf %95, %96 : vector<2x128xf32>
    %98 = vector.extract_strided_slice %18 {offsets = [1, 0, 0], sizes = [1, 2, 128], strides = [1, 1, 1]} : vector<8x2x128xf32> to vector<1x2x128xf32>
    %99 = vector.shape_cast %98 : vector<1x2x128xf32> to vector<2x128xf32>
    %100 = arith.addf %97, %99 : vector<2x128xf32>
    %101 = vector.extract_strided_slice %100 {offsets = [0, 0], sizes = [2, 32], strides = [1, 1]} : vector<2x128xf32> to vector<2x32xf32>
    %102 = arith.negf %101 : vector<2x32xf32>
    %103 = math.exp %102 : vector<2x32xf32>
    %cst_37 = arith.constant 1.000000e+00 : f32
    %104 = vector.broadcast %cst_37 : f32 to vector<2x32xf32>
    %105 = arith.addf %104, %103 : vector<2x32xf32>
    %106 = arith.divf %104, %105 : vector<2x32xf32>
    %107 = vector.extract_strided_slice %100 {offsets = [0, 32], sizes = [2, 32], strides = [1, 1]} : vector<2x128xf32> to vector<2x32xf32>
    %108 = arith.negf %107 : vector<2x32xf32>
    %109 = math.exp %108 : vector<2x32xf32>
    %cst_38 = arith.constant 1.000000e+00 : f32
    %110 = vector.broadcast %cst_38 : f32 to vector<2x32xf32>
    %111 = arith.addf %110, %109 : vector<2x32xf32>
    %112 = arith.divf %110, %111 : vector<2x32xf32>
    %113 = vector.extract_strided_slice %100 {offsets = [0, 64], sizes = [2, 32], strides = [1, 1]} : vector<2x128xf32> to vector<2x32xf32>
    %114 = math.tanh %113 : vector<2x32xf32>
    %115 = vector.extract_strided_slice %100 {offsets = [0, 96], sizes = [2, 32], strides = [1, 1]} : vector<2x128xf32> to vector<2x32xf32>
    %116 = arith.negf %115 : vector<2x32xf32>
    %117 = math.exp %116 : vector<2x32xf32>
    %cst_39 = arith.constant 1.000000e+00 : f32
    %118 = vector.broadcast %cst_39 : f32 to vector<2x32xf32>
    %119 = arith.addf %118, %117 : vector<2x32xf32>
    %120 = arith.divf %118, %119 : vector<2x32xf32>
    %121 = arith.mulf %112, %73 : vector<2x32xf32>
    %122 = arith.mulf %106, %114 : vector<2x32xf32>
    %123 = arith.addf %121, %122 : vector<2x32xf32>
    %124 = math.tanh %123 : vector<2x32xf32>
    %125 = arith.mulf %120, %124 : vector<2x32xf32>
    %cst_40 = arith.constant dense<0.000000e+00> : vector<2x32xf32>
    %126 = tpu.matmul %125, %19, %cst_40 {dimension_numbers = #tpu.dot_dimension_numbers<[1], [0], [0], [1], [0, 0, 1, 1], [], []>} : vector<2x32xf32>, vector<32x32xf32>, vector<2x32xf32> -> vector<2x32xf32>
    %127 = vector.shape_cast %126 : vector<2x32xf32> to vector<2x1x32xf32>
    %128 = vector.broadcast %127 : vector<2x1x32xf32> to vector<2x16x32xf32>
    %129 = arith.addf %11, %128 : vector<2x16x32xf32>
    %130 = math.tanh %129 : vector<2x16x32xf32>
    %131 = arith.mulf %130, %23 : vector<2x16x32xf32>
    %cst_41 = arith.constant dense<0.000000e+00> : vector<2x16xf32>
    %132 = vector.multi_reduction <add>, %131, %cst_41 [2] : vector<2x16x32xf32> to vector<2x16xf32>
    %cst_42 = arith.constant dense<0xFF800000> : vector<2xf32>
    %133 = vector.multi_reduction <maximumf>, %132, %cst_42 [1] : vector<2x16xf32> to vector<2xf32>
    %134 = vector.shape_cast %133 : vector<2xf32> to vector<2x1xf32>
    %135 = vector.broadcast %134 : vector<2x1xf32> to vector<2x16xf32>
    %136 = arith.subf %132, %135 : vector<2x16xf32>
    %137 = math.exp %136 : vector<2x16xf32>
    %cst_43 = arith.constant dense<0.000000e+00> : vector<2xf32>
    %138 = vector.multi_reduction <add>, %137, %cst_43 [1] : vector<2x16xf32> to vector<2xf32>
    %139 = vector.shape_cast %138 : vector<2xf32> to vector<2x1xf32>
    %140 = tpu.reciprocal %139 {approx = true} : vector<2x1xf32> -> vector<2x1xf32>
    %141 = vector.broadcast %140 : vector<2x1xf32> to vector<2x16xf32>
    %142 = arith.mulf %137, %141 : vector<2x16xf32>
    %143 = vector.shape_cast %142 : vector<2x16xf32> to vector<2x1x16xf32>
    "tpu.trace_start"() <{level = 10 : i32, message = "bqt,btg->bqg"}> : () -> ()
    %cst_44 = arith.constant dense<0.000000e+00> : vector<2x1x128xf32>
    %144 = tpu.matmul %143, %5, %cst_44 {dimension_numbers = #tpu.dot_dimension_numbers<[2], [1], [1], [2], [0, 0, 0, 1, 1, 2], [0], [0]>} : vector<2x1x16xf32>, vector<2x16x128xf32>, vector<2x1x128xf32> -> vector<2x1x128xf32>
    "tpu.trace_stop"() : () -> ()
    %145 = vector.shape_cast %144 : vector<2x1x128xf32> to vector<2x128xf32>
    %cst_45 = arith.constant dense<0.000000e+00> : vector<2x128xf32>
    %146 = tpu.matmul %125, %20, %cst_45 {dimension_numbers = #tpu.dot_dimension_numbers<[1], [0], [0], [1], [0, 0, 1, 1], [], []>} : vector<2x32xf32>, vector<32x128xf32>, vector<2x128xf32> -> vector<2x128xf32>
    %147 = arith.addf %145, %146 : vector<2x128xf32>
    %148 = vector.extract_strided_slice %18 {offsets = [2, 0, 0], sizes = [1, 2, 128], strides = [1, 1, 1]} : vector<8x2x128xf32> to vector<1x2x128xf32>
    %149 = vector.shape_cast %148 : vector<1x2x128xf32> to vector<2x128xf32>
    %150 = arith.addf %147, %149 : vector<2x128xf32>
    %151 = vector.extract_strided_slice %150 {offsets = [0, 0], sizes = [2, 32], strides = [1, 1]} : vector<2x128xf32> to vector<2x32xf32>
    %152 = arith.negf %151 : vector<2x32xf32>
    %153 = math.exp %152 : vector<2x32xf32>
    %cst_46 = arith.constant 1.000000e+00 : f32
    %154 = vector.broadcast %cst_46 : f32 to vector<2x32xf32>
    %155 = arith.addf %154, %153 : vector<2x32xf32>
    %156 = arith.divf %154, %155 : vector<2x32xf32>
    %157 = vector.extract_strided_slice %150 {offsets = [0, 32], sizes = [2, 32], strides = [1, 1]} : vector<2x128xf32> to vector<2x32xf32>
    %158 = arith.negf %157 : vector<2x32xf32>
    %159 = math.exp %158 : vector<2x32xf32>
    %cst_47 = arith.constant 1.000000e+00 : f32
    %160 = vector.broadcast %cst_47 : f32 to vector<2x32xf32>
    %161 = arith.addf %160, %159 : vector<2x32xf32>
    %162 = arith.divf %160, %161 : vector<2x32xf32>
    %163 = vector.extract_strided_slice %150 {offsets = [0, 64], sizes = [2, 32], strides = [1, 1]} : vector<2x128xf32> to vector<2x32xf32>
    %164 = math.tanh %163 : vector<2x32xf32>
    %165 = vector.extract_strided_slice %150 {offsets = [0, 96], sizes = [2, 32], strides = [1, 1]} : vector<2x128xf32> to vector<2x32xf32>
    %166 = arith.negf %165 : vector<2x32xf32>
    %167 = math.exp %166 : vector<2x32xf32>
    %cst_48 = arith.constant 1.000000e+00 : f32
    %168 = vector.broadcast %cst_48 : f32 to vector<2x32xf32>
    %169 = arith.addf %168, %167 : vector<2x32xf32>
    %170 = arith.divf %168, %169 : vector<2x32xf32>
    %171 = arith.mulf %162, %123 : vector<2x32xf32>
    %172 = arith.mulf %156, %164 : vector<2x32xf32>
    %173 = arith.addf %171, %172 : vector<2x32xf32>
    %174 = math.tanh %173 : vector<2x32xf32>
    %175 = arith.mulf %170, %174 : vector<2x32xf32>
    %cst_49 = arith.constant dense<0.000000e+00> : vector<2x32xf32>
    %176 = tpu.matmul %175, %19, %cst_49 {dimension_numbers = #tpu.dot_dimension_numbers<[1], [0], [0], [1], [0, 0, 1, 1], [], []>} : vector<2x32xf32>, vector<32x32xf32>, vector<2x32xf32> -> vector<2x32xf32>
    %177 = vector.shape_cast %176 : vector<2x32xf32> to vector<2x1x32xf32>
    %178 = vector.broadcast %177 : vector<2x1x32xf32> to vector<2x16x32xf32>
    %179 = arith.addf %11, %178 : vector<2x16x32xf32>
    %180 = math.tanh %179 : vector<2x16x32xf32>
    %181 = arith.mulf %180, %23 : vector<2x16x32xf32>
    %cst_50 = arith.constant dense<0.000000e+00> : vector<2x16xf32>
    %182 = vector.multi_reduction <add>, %181, %cst_50 [2] : vector<2x16x32xf32> to vector<2x16xf32>
    %cst_51 = arith.constant dense<0xFF800000> : vector<2xf32>
    %183 = vector.multi_reduction <maximumf>, %182, %cst_51 [1] : vector<2x16xf32> to vector<2xf32>
    %184 = vector.shape_cast %183 : vector<2xf32> to vector<2x1xf32>
    %185 = vector.broadcast %184 : vector<2x1xf32> to vector<2x16xf32>
    %186 = arith.subf %182, %185 : vector<2x16xf32>
    %187 = math.exp %186 : vector<2x16xf32>
    %cst_52 = arith.constant dense<0.000000e+00> : vector<2xf32>
    %188 = vector.multi_reduction <add>, %187, %cst_52 [1] : vector<2x16xf32> to vector<2xf32>
    %189 = vector.shape_cast %188 : vector<2xf32> to vector<2x1xf32>
    %190 = tpu.reciprocal %189 {approx = true} : vector<2x1xf32> -> vector<2x1xf32>
    %191 = vector.broadcast %190 : vector<2x1xf32> to vector<2x16xf32>
    %192 = arith.mulf %187, %191 : vector<2x16xf32>
    %193 = vector.shape_cast %192 : vector<2x16xf32> to vector<2x1x16xf32>
    "tpu.trace_start"() <{level = 10 : i32, message = "bqt,btg->bqg"}> : () -> ()
    %cst_53 = arith.constant dense<0.000000e+00> : vector<2x1x128xf32>
    %194 = tpu.matmul %193, %5, %cst_53 {dimension_numbers = #tpu.dot_dimension_numbers<[2], [1], [1], [2], [0, 0, 0, 1, 1, 2], [0], [0]>} : vector<2x1x16xf32>, vector<2x16x128xf32>, vector<2x1x128xf32> -> vector<2x1x128xf32>
    "tpu.trace_stop"() : () -> ()
    %195 = vector.shape_cast %194 : vector<2x1x128xf32> to vector<2x128xf32>
    %cst_54 = arith.constant dense<0.000000e+00> : vector<2x128xf32>
    %196 = tpu.matmul %175, %20, %cst_54 {dimension_numbers = #tpu.dot_dimension_numbers<[1], [0], [0], [1], [0, 0, 1, 1], [], []>} : vector<2x32xf32>, vector<32x128xf32>, vector<2x128xf32> -> vector<2x128xf32>
    %197 = arith.addf %195, %196 : vector<2x128xf32>
    %198 = vector.extract_strided_slice %18 {offsets = [3, 0, 0], sizes = [1, 2, 128], strides = [1, 1, 1]} : vector<8x2x128xf32> to vector<1x2x128xf32>
    %199 = vector.shape_cast %198 : vector<1x2x128xf32> to vector<2x128xf32>
    %200 = arith.addf %197, %199 : vector<2x128xf32>
    %201 = vector.extract_strided_slice %200 {offsets = [0, 0], sizes = [2, 32], strides = [1, 1]} : vector<2x128xf32> to vector<2x32xf32>
    %202 = arith.negf %201 : vector<2x32xf32>
    %203 = math.exp %202 : vector<2x32xf32>
    %cst_55 = arith.constant 1.000000e+00 : f32
    %204 = vector.broadcast %cst_55 : f32 to vector<2x32xf32>
    %205 = arith.addf %204, %203 : vector<2x32xf32>
    %206 = arith.divf %204, %205 : vector<2x32xf32>
    %207 = vector.extract_strided_slice %200 {offsets = [0, 32], sizes = [2, 32], strides = [1, 1]} : vector<2x128xf32> to vector<2x32xf32>
    %208 = arith.negf %207 : vector<2x32xf32>
    %209 = math.exp %208 : vector<2x32xf32>
    %cst_56 = arith.constant 1.000000e+00 : f32
    %210 = vector.broadcast %cst_56 : f32 to vector<2x32xf32>
    %211 = arith.addf %210, %209 : vector<2x32xf32>
    %212 = arith.divf %210, %211 : vector<2x32xf32>
    %213 = vector.extract_strided_slice %200 {offsets = [0, 64], sizes = [2, 32], strides = [1, 1]} : vector<2x128xf32> to vector<2x32xf32>
    %214 = math.tanh %213 : vector<2x32xf32>
    %215 = vector.extract_strided_slice %200 {offsets = [0, 96], sizes = [2, 32], strides = [1, 1]} : vector<2x128xf32> to vector<2x32xf32>
    %216 = arith.negf %215 : vector<2x32xf32>
    %217 = math.exp %216 : vector<2x32xf32>
    %cst_57 = arith.constant 1.000000e+00 : f32
    %218 = vector.broadcast %cst_57 : f32 to vector<2x32xf32>
    %219 = arith.addf %218, %217 : vector<2x32xf32>
    %220 = arith.divf %218, %219 : vector<2x32xf32>
    %221 = arith.mulf %212, %173 : vector<2x32xf32>
    %222 = arith.mulf %206, %214 : vector<2x32xf32>
    %223 = arith.addf %221, %222 : vector<2x32xf32>
    %224 = math.tanh %223 : vector<2x32xf32>
    %225 = arith.mulf %220, %224 : vector<2x32xf32>
    %cst_58 = arith.constant dense<0.000000e+00> : vector<2x32xf32>
    %226 = tpu.matmul %225, %19, %cst_58 {dimension_numbers = #tpu.dot_dimension_numbers<[1], [0], [0], [1], [0, 0, 1, 1], [], []>} : vector<2x32xf32>, vector<32x32xf32>, vector<2x32xf32> -> vector<2x32xf32>
    %227 = vector.shape_cast %226 : vector<2x32xf32> to vector<2x1x32xf32>
    %228 = vector.broadcast %227 : vector<2x1x32xf32> to vector<2x16x32xf32>
    %229 = arith.addf %11, %228 : vector<2x16x32xf32>
    %230 = math.tanh %229 : vector<2x16x32xf32>
    %231 = arith.mulf %230, %23 : vector<2x16x32xf32>
    %cst_59 = arith.constant dense<0.000000e+00> : vector<2x16xf32>
    %232 = vector.multi_reduction <add>, %231, %cst_59 [2] : vector<2x16x32xf32> to vector<2x16xf32>
    %cst_60 = arith.constant dense<0xFF800000> : vector<2xf32>
    %233 = vector.multi_reduction <maximumf>, %232, %cst_60 [1] : vector<2x16xf32> to vector<2xf32>
    %234 = vector.shape_cast %233 : vector<2xf32> to vector<2x1xf32>
    %235 = vector.broadcast %234 : vector<2x1xf32> to vector<2x16xf32>
    %236 = arith.subf %232, %235 : vector<2x16xf32>
    %237 = math.exp %236 : vector<2x16xf32>
    %cst_61 = arith.constant dense<0.000000e+00> : vector<2xf32>
    %238 = vector.multi_reduction <add>, %237, %cst_61 [1] : vector<2x16xf32> to vector<2xf32>
    %239 = vector.shape_cast %238 : vector<2xf32> to vector<2x1xf32>
    %240 = tpu.reciprocal %239 {approx = true} : vector<2x1xf32> -> vector<2x1xf32>
    %241 = vector.broadcast %240 : vector<2x1xf32> to vector<2x16xf32>
    %242 = arith.mulf %237, %241 : vector<2x16xf32>
    %243 = vector.shape_cast %242 : vector<2x16xf32> to vector<2x1x16xf32>
    "tpu.trace_start"() <{level = 10 : i32, message = "bqt,btg->bqg"}> : () -> ()
    %cst_62 = arith.constant dense<0.000000e+00> : vector<2x1x128xf32>
    %244 = tpu.matmul %243, %5, %cst_62 {dimension_numbers = #tpu.dot_dimension_numbers<[2], [1], [1], [2], [0, 0, 0, 1, 1, 2], [0], [0]>} : vector<2x1x16xf32>, vector<2x16x128xf32>, vector<2x1x128xf32> -> vector<2x1x128xf32>
    "tpu.trace_stop"() : () -> ()
    %245 = vector.shape_cast %244 : vector<2x1x128xf32> to vector<2x128xf32>
    %cst_63 = arith.constant dense<0.000000e+00> : vector<2x128xf32>
    %246 = tpu.matmul %225, %20, %cst_63 {dimension_numbers = #tpu.dot_dimension_numbers<[1], [0], [0], [1], [0, 0, 1, 1], [], []>} : vector<2x32xf32>, vector<32x128xf32>, vector<2x128xf32> -> vector<2x128xf32>
    %247 = arith.addf %245, %246 : vector<2x128xf32>
    %248 = vector.extract_strided_slice %18 {offsets = [4, 0, 0], sizes = [1, 2, 128], strides = [1, 1, 1]} : vector<8x2x128xf32> to vector<1x2x128xf32>
    %249 = vector.shape_cast %248 : vector<1x2x128xf32> to vector<2x128xf32>
    %250 = arith.addf %247, %249 : vector<2x128xf32>
    %251 = vector.extract_strided_slice %250 {offsets = [0, 0], sizes = [2, 32], strides = [1, 1]} : vector<2x128xf32> to vector<2x32xf32>
    %252 = arith.negf %251 : vector<2x32xf32>
    %253 = math.exp %252 : vector<2x32xf32>
    %cst_64 = arith.constant 1.000000e+00 : f32
    %254 = vector.broadcast %cst_64 : f32 to vector<2x32xf32>
    %255 = arith.addf %254, %253 : vector<2x32xf32>
    %256 = arith.divf %254, %255 : vector<2x32xf32>
    %257 = vector.extract_strided_slice %250 {offsets = [0, 32], sizes = [2, 32], strides = [1, 1]} : vector<2x128xf32> to vector<2x32xf32>
    %258 = arith.negf %257 : vector<2x32xf32>
    %259 = math.exp %258 : vector<2x32xf32>
    %cst_65 = arith.constant 1.000000e+00 : f32
    %260 = vector.broadcast %cst_65 : f32 to vector<2x32xf32>
    %261 = arith.addf %260, %259 : vector<2x32xf32>
    %262 = arith.divf %260, %261 : vector<2x32xf32>
    %263 = vector.extract_strided_slice %250 {offsets = [0, 64], sizes = [2, 32], strides = [1, 1]} : vector<2x128xf32> to vector<2x32xf32>
    %264 = math.tanh %263 : vector<2x32xf32>
    %265 = vector.extract_strided_slice %250 {offsets = [0, 96], sizes = [2, 32], strides = [1, 1]} : vector<2x128xf32> to vector<2x32xf32>
    %266 = arith.negf %265 : vector<2x32xf32>
    %267 = math.exp %266 : vector<2x32xf32>
    %cst_66 = arith.constant 1.000000e+00 : f32
    %268 = vector.broadcast %cst_66 : f32 to vector<2x32xf32>
    %269 = arith.addf %268, %267 : vector<2x32xf32>
    %270 = arith.divf %268, %269 : vector<2x32xf32>
    %271 = arith.mulf %262, %223 : vector<2x32xf32>
    %272 = arith.mulf %256, %264 : vector<2x32xf32>
    %273 = arith.addf %271, %272 : vector<2x32xf32>
    %274 = math.tanh %273 : vector<2x32xf32>
    %275 = arith.mulf %270, %274 : vector<2x32xf32>
    %cst_67 = arith.constant dense<0.000000e+00> : vector<2x32xf32>
    %276 = tpu.matmul %275, %19, %cst_67 {dimension_numbers = #tpu.dot_dimension_numbers<[1], [0], [0], [1], [0, 0, 1, 1], [], []>} : vector<2x32xf32>, vector<32x32xf32>, vector<2x32xf32> -> vector<2x32xf32>
    %277 = vector.shape_cast %276 : vector<2x32xf32> to vector<2x1x32xf32>
    %278 = vector.broadcast %277 : vector<2x1x32xf32> to vector<2x16x32xf32>
    %279 = arith.addf %11, %278 : vector<2x16x32xf32>
    %280 = math.tanh %279 : vector<2x16x32xf32>
    %281 = arith.mulf %280, %23 : vector<2x16x32xf32>
    %cst_68 = arith.constant dense<0.000000e+00> : vector<2x16xf32>
    %282 = vector.multi_reduction <add>, %281, %cst_68 [2] : vector<2x16x32xf32> to vector<2x16xf32>
    %cst_69 = arith.constant dense<0xFF800000> : vector<2xf32>
    %283 = vector.multi_reduction <maximumf>, %282, %cst_69 [1] : vector<2x16xf32> to vector<2xf32>
    %284 = vector.shape_cast %283 : vector<2xf32> to vector<2x1xf32>
    %285 = vector.broadcast %284 : vector<2x1xf32> to vector<2x16xf32>
    %286 = arith.subf %282, %285 : vector<2x16xf32>
    %287 = math.exp %286 : vector<2x16xf32>
    %cst_70 = arith.constant dense<0.000000e+00> : vector<2xf32>
    %288 = vector.multi_reduction <add>, %287, %cst_70 [1] : vector<2x16xf32> to vector<2xf32>
    %289 = vector.shape_cast %288 : vector<2xf32> to vector<2x1xf32>
    %290 = tpu.reciprocal %289 {approx = true} : vector<2x1xf32> -> vector<2x1xf32>
    %291 = vector.broadcast %290 : vector<2x1xf32> to vector<2x16xf32>
    %292 = arith.mulf %287, %291 : vector<2x16xf32>
    %293 = vector.shape_cast %292 : vector<2x16xf32> to vector<2x1x16xf32>
    "tpu.trace_start"() <{level = 10 : i32, message = "bqt,btg->bqg"}> : () -> ()
    %cst_71 = arith.constant dense<0.000000e+00> : vector<2x1x128xf32>
    %294 = tpu.matmul %293, %5, %cst_71 {dimension_numbers = #tpu.dot_dimension_numbers<[2], [1], [1], [2], [0, 0, 0, 1, 1, 2], [0], [0]>} : vector<2x1x16xf32>, vector<2x16x128xf32>, vector<2x1x128xf32> -> vector<2x1x128xf32>
    "tpu.trace_stop"() : () -> ()
    %295 = vector.shape_cast %294 : vector<2x1x128xf32> to vector<2x128xf32>
    %cst_72 = arith.constant dense<0.000000e+00> : vector<2x128xf32>
    %296 = tpu.matmul %275, %20, %cst_72 {dimension_numbers = #tpu.dot_dimension_numbers<[1], [0], [0], [1], [0, 0, 1, 1], [], []>} : vector<2x32xf32>, vector<32x128xf32>, vector<2x128xf32> -> vector<2x128xf32>
    %297 = arith.addf %295, %296 : vector<2x128xf32>
    %298 = vector.extract_strided_slice %18 {offsets = [5, 0, 0], sizes = [1, 2, 128], strides = [1, 1, 1]} : vector<8x2x128xf32> to vector<1x2x128xf32>
    %299 = vector.shape_cast %298 : vector<1x2x128xf32> to vector<2x128xf32>
    %300 = arith.addf %297, %299 : vector<2x128xf32>
    %301 = vector.extract_strided_slice %300 {offsets = [0, 0], sizes = [2, 32], strides = [1, 1]} : vector<2x128xf32> to vector<2x32xf32>
    %302 = arith.negf %301 : vector<2x32xf32>
    %303 = math.exp %302 : vector<2x32xf32>
    %cst_73 = arith.constant 1.000000e+00 : f32
    %304 = vector.broadcast %cst_73 : f32 to vector<2x32xf32>
    %305 = arith.addf %304, %303 : vector<2x32xf32>
    %306 = arith.divf %304, %305 : vector<2x32xf32>
    %307 = vector.extract_strided_slice %300 {offsets = [0, 32], sizes = [2, 32], strides = [1, 1]} : vector<2x128xf32> to vector<2x32xf32>
    %308 = arith.negf %307 : vector<2x32xf32>
    %309 = math.exp %308 : vector<2x32xf32>
    %cst_74 = arith.constant 1.000000e+00 : f32
    %310 = vector.broadcast %cst_74 : f32 to vector<2x32xf32>
    %311 = arith.addf %310, %309 : vector<2x32xf32>
    %312 = arith.divf %310, %311 : vector<2x32xf32>
    %313 = vector.extract_strided_slice %300 {offsets = [0, 64], sizes = [2, 32], strides = [1, 1]} : vector<2x128xf32> to vector<2x32xf32>
    %314 = math.tanh %313 : vector<2x32xf32>
    %315 = vector.extract_strided_slice %300 {offsets = [0, 96], sizes = [2, 32], strides = [1, 1]} : vector<2x128xf32> to vector<2x32xf32>
    %316 = arith.negf %315 : vector<2x32xf32>
    %317 = math.exp %316 : vector<2x32xf32>
    %cst_75 = arith.constant 1.000000e+00 : f32
    %318 = vector.broadcast %cst_75 : f32 to vector<2x32xf32>
    %319 = arith.addf %318, %317 : vector<2x32xf32>
    %320 = arith.divf %318, %319 : vector<2x32xf32>
    %321 = arith.mulf %312, %273 : vector<2x32xf32>
    %322 = arith.mulf %306, %314 : vector<2x32xf32>
    %323 = arith.addf %321, %322 : vector<2x32xf32>
    %324 = math.tanh %323 : vector<2x32xf32>
    %325 = arith.mulf %320, %324 : vector<2x32xf32>
    %cst_76 = arith.constant dense<0.000000e+00> : vector<2x32xf32>
    %326 = tpu.matmul %325, %19, %cst_76 {dimension_numbers = #tpu.dot_dimension_numbers<[1], [0], [0], [1], [0, 0, 1, 1], [], []>} : vector<2x32xf32>, vector<32x32xf32>, vector<2x32xf32> -> vector<2x32xf32>
    %327 = vector.shape_cast %326 : vector<2x32xf32> to vector<2x1x32xf32>
    %328 = vector.broadcast %327 : vector<2x1x32xf32> to vector<2x16x32xf32>
    %329 = arith.addf %11, %328 : vector<2x16x32xf32>
    %330 = math.tanh %329 : vector<2x16x32xf32>
    %331 = arith.mulf %330, %23 : vector<2x16x32xf32>
    %cst_77 = arith.constant dense<0.000000e+00> : vector<2x16xf32>
    %332 = vector.multi_reduction <add>, %331, %cst_77 [2] : vector<2x16x32xf32> to vector<2x16xf32>
    %cst_78 = arith.constant dense<0xFF800000> : vector<2xf32>
    %333 = vector.multi_reduction <maximumf>, %332, %cst_78 [1] : vector<2x16xf32> to vector<2xf32>
    %334 = vector.shape_cast %333 : vector<2xf32> to vector<2x1xf32>
    %335 = vector.broadcast %334 : vector<2x1xf32> to vector<2x16xf32>
    %336 = arith.subf %332, %335 : vector<2x16xf32>
    %337 = math.exp %336 : vector<2x16xf32>
    %cst_79 = arith.constant dense<0.000000e+00> : vector<2xf32>
    %338 = vector.multi_reduction <add>, %337, %cst_79 [1] : vector<2x16xf32> to vector<2xf32>
    %339 = vector.shape_cast %338 : vector<2xf32> to vector<2x1xf32>
    %340 = tpu.reciprocal %339 {approx = true} : vector<2x1xf32> -> vector<2x1xf32>
    %341 = vector.broadcast %340 : vector<2x1xf32> to vector<2x16xf32>
    %342 = arith.mulf %337, %341 : vector<2x16xf32>
    %343 = vector.shape_cast %342 : vector<2x16xf32> to vector<2x1x16xf32>
    "tpu.trace_start"() <{level = 10 : i32, message = "bqt,btg->bqg"}> : () -> ()
    %cst_80 = arith.constant dense<0.000000e+00> : vector<2x1x128xf32>
    %344 = tpu.matmul %343, %5, %cst_80 {dimension_numbers = #tpu.dot_dimension_numbers<[2], [1], [1], [2], [0, 0, 0, 1, 1, 2], [0], [0]>} : vector<2x1x16xf32>, vector<2x16x128xf32>, vector<2x1x128xf32> -> vector<2x1x128xf32>
    "tpu.trace_stop"() : () -> ()
    %345 = vector.shape_cast %344 : vector<2x1x128xf32> to vector<2x128xf32>
    %cst_81 = arith.constant dense<0.000000e+00> : vector<2x128xf32>
    %346 = tpu.matmul %325, %20, %cst_81 {dimension_numbers = #tpu.dot_dimension_numbers<[1], [0], [0], [1], [0, 0, 1, 1], [], []>} : vector<2x32xf32>, vector<32x128xf32>, vector<2x128xf32> -> vector<2x128xf32>
    %347 = arith.addf %345, %346 : vector<2x128xf32>
    %348 = vector.extract_strided_slice %18 {offsets = [6, 0, 0], sizes = [1, 2, 128], strides = [1, 1, 1]} : vector<8x2x128xf32> to vector<1x2x128xf32>
    %349 = vector.shape_cast %348 : vector<1x2x128xf32> to vector<2x128xf32>
    %350 = arith.addf %347, %349 : vector<2x128xf32>
    %351 = vector.extract_strided_slice %350 {offsets = [0, 0], sizes = [2, 32], strides = [1, 1]} : vector<2x128xf32> to vector<2x32xf32>
    %352 = arith.negf %351 : vector<2x32xf32>
    %353 = math.exp %352 : vector<2x32xf32>
    %cst_82 = arith.constant 1.000000e+00 : f32
    %354 = vector.broadcast %cst_82 : f32 to vector<2x32xf32>
    %355 = arith.addf %354, %353 : vector<2x32xf32>
    %356 = arith.divf %354, %355 : vector<2x32xf32>
    %357 = vector.extract_strided_slice %350 {offsets = [0, 32], sizes = [2, 32], strides = [1, 1]} : vector<2x128xf32> to vector<2x32xf32>
    %358 = arith.negf %357 : vector<2x32xf32>
    %359 = math.exp %358 : vector<2x32xf32>
    %cst_83 = arith.constant 1.000000e+00 : f32
    %360 = vector.broadcast %cst_83 : f32 to vector<2x32xf32>
    %361 = arith.addf %360, %359 : vector<2x32xf32>
    %362 = arith.divf %360, %361 : vector<2x32xf32>
    %363 = vector.extract_strided_slice %350 {offsets = [0, 64], sizes = [2, 32], strides = [1, 1]} : vector<2x128xf32> to vector<2x32xf32>
    %364 = math.tanh %363 : vector<2x32xf32>
    %365 = vector.extract_strided_slice %350 {offsets = [0, 96], sizes = [2, 32], strides = [1, 1]} : vector<2x128xf32> to vector<2x32xf32>
    %366 = arith.negf %365 : vector<2x32xf32>
    %367 = math.exp %366 : vector<2x32xf32>
    %cst_84 = arith.constant 1.000000e+00 : f32
    %368 = vector.broadcast %cst_84 : f32 to vector<2x32xf32>
    %369 = arith.addf %368, %367 : vector<2x32xf32>
    %370 = arith.divf %368, %369 : vector<2x32xf32>
    %371 = arith.mulf %362, %323 : vector<2x32xf32>
    %372 = arith.mulf %356, %364 : vector<2x32xf32>
    %373 = arith.addf %371, %372 : vector<2x32xf32>
    %374 = math.tanh %373 : vector<2x32xf32>
    %375 = arith.mulf %370, %374 : vector<2x32xf32>
    %cst_85 = arith.constant dense<0.000000e+00> : vector<2x32xf32>
    %376 = tpu.matmul %375, %19, %cst_85 {dimension_numbers = #tpu.dot_dimension_numbers<[1], [0], [0], [1], [0, 0, 1, 1], [], []>} : vector<2x32xf32>, vector<32x32xf32>, vector<2x32xf32> -> vector<2x32xf32>
    %377 = vector.shape_cast %376 : vector<2x32xf32> to vector<2x1x32xf32>
    %378 = vector.broadcast %377 : vector<2x1x32xf32> to vector<2x16x32xf32>
    %379 = arith.addf %11, %378 : vector<2x16x32xf32>
    %380 = math.tanh %379 : vector<2x16x32xf32>
    %381 = arith.mulf %380, %23 : vector<2x16x32xf32>
    %cst_86 = arith.constant dense<0.000000e+00> : vector<2x16xf32>
    %382 = vector.multi_reduction <add>, %381, %cst_86 [2] : vector<2x16x32xf32> to vector<2x16xf32>
    %cst_87 = arith.constant dense<0xFF800000> : vector<2xf32>
    %383 = vector.multi_reduction <maximumf>, %382, %cst_87 [1] : vector<2x16xf32> to vector<2xf32>
    %384 = vector.shape_cast %383 : vector<2xf32> to vector<2x1xf32>
    %385 = vector.broadcast %384 : vector<2x1xf32> to vector<2x16xf32>
    %386 = arith.subf %382, %385 : vector<2x16xf32>
    %387 = math.exp %386 : vector<2x16xf32>
    %cst_88 = arith.constant dense<0.000000e+00> : vector<2xf32>
    %388 = vector.multi_reduction <add>, %387, %cst_88 [1] : vector<2x16xf32> to vector<2xf32>
    %389 = vector.shape_cast %388 : vector<2xf32> to vector<2x1xf32>
    %390 = tpu.reciprocal %389 {approx = true} : vector<2x1xf32> -> vector<2x1xf32>
    %391 = vector.broadcast %390 : vector<2x1xf32> to vector<2x16xf32>
    %392 = arith.mulf %387, %391 : vector<2x16xf32>
    %393 = vector.shape_cast %392 : vector<2x16xf32> to vector<2x1x16xf32>
    "tpu.trace_start"() <{level = 10 : i32, message = "bqt,btg->bqg"}> : () -> ()
    %cst_89 = arith.constant dense<0.000000e+00> : vector<2x1x128xf32>
    %394 = tpu.matmul %393, %5, %cst_89 {dimension_numbers = #tpu.dot_dimension_numbers<[2], [1], [1], [2], [0, 0, 0, 1, 1, 2], [0], [0]>} : vector<2x1x16xf32>, vector<2x16x128xf32>, vector<2x1x128xf32> -> vector<2x1x128xf32>
    "tpu.trace_stop"() : () -> ()
    %395 = vector.shape_cast %394 : vector<2x1x128xf32> to vector<2x128xf32>
    %cst_90 = arith.constant dense<0.000000e+00> : vector<2x128xf32>
    %396 = tpu.matmul %375, %20, %cst_90 {dimension_numbers = #tpu.dot_dimension_numbers<[1], [0], [0], [1], [0, 0, 1, 1], [], []>} : vector<2x32xf32>, vector<32x128xf32>, vector<2x128xf32> -> vector<2x128xf32>
    %397 = arith.addf %395, %396 : vector<2x128xf32>
    %398 = vector.extract_strided_slice %18 {offsets = [7, 0, 0], sizes = [1, 2, 128], strides = [1, 1, 1]} : vector<8x2x128xf32> to vector<1x2x128xf32>
    %399 = vector.shape_cast %398 : vector<1x2x128xf32> to vector<2x128xf32>
    %400 = arith.addf %397, %399 : vector<2x128xf32>
    %401 = vector.extract_strided_slice %400 {offsets = [0, 0], sizes = [2, 32], strides = [1, 1]} : vector<2x128xf32> to vector<2x32xf32>
    %402 = arith.negf %401 : vector<2x32xf32>
    %403 = math.exp %402 : vector<2x32xf32>
    %cst_91 = arith.constant 1.000000e+00 : f32
    %404 = vector.broadcast %cst_91 : f32 to vector<2x32xf32>
    %405 = arith.addf %404, %403 : vector<2x32xf32>
    %406 = arith.divf %404, %405 : vector<2x32xf32>
    %407 = vector.extract_strided_slice %400 {offsets = [0, 32], sizes = [2, 32], strides = [1, 1]} : vector<2x128xf32> to vector<2x32xf32>
    %408 = arith.negf %407 : vector<2x32xf32>
    %409 = math.exp %408 : vector<2x32xf32>
    %cst_92 = arith.constant 1.000000e+00 : f32
    %410 = vector.broadcast %cst_92 : f32 to vector<2x32xf32>
    %411 = arith.addf %410, %409 : vector<2x32xf32>
    %412 = arith.divf %410, %411 : vector<2x32xf32>
    %413 = vector.extract_strided_slice %400 {offsets = [0, 64], sizes = [2, 32], strides = [1, 1]} : vector<2x128xf32> to vector<2x32xf32>
    %414 = math.tanh %413 : vector<2x32xf32>
    %415 = vector.extract_strided_slice %400 {offsets = [0, 96], sizes = [2, 32], strides = [1, 1]} : vector<2x128xf32> to vector<2x32xf32>
    %416 = arith.negf %415 : vector<2x32xf32>
    %417 = math.exp %416 : vector<2x32xf32>
    %cst_93 = arith.constant 1.000000e+00 : f32
    %418 = vector.broadcast %cst_93 : f32 to vector<2x32xf32>
    %419 = arith.addf %418, %417 : vector<2x32xf32>
    %420 = arith.divf %418, %419 : vector<2x32xf32>
    %421 = arith.mulf %412, %373 : vector<2x32xf32>
    %422 = arith.mulf %406, %414 : vector<2x32xf32>
    %423 = arith.addf %421, %422 : vector<2x32xf32>
    %424 = math.tanh %423 : vector<2x32xf32>
    %425 = arith.mulf %420, %424 : vector<2x32xf32>
    %426 = tpu.concatenate %75, %125, %175, %225, %275, %325, %375, %425 in 0 : vector<2x32xf32>, vector<2x32xf32>, vector<2x32xf32>, vector<2x32xf32>, vector<2x32xf32>, vector<2x32xf32>, vector<2x32xf32>, vector<2x32xf32> -> vector<16x32xf32>
    %c0_94 = arith.constant 0 : index
    %c0_95 = arith.constant 0 : index
    %427 = vector.load %arg9[%c0_94, %c0_95] : memref<32x128xf32, #tpu.memory_space<vmem>>, vector<32x128xf32>
    %cst_96 = arith.constant dense<0.000000e+00> : vector<16x128xf32>
    %428 = tpu.matmul %426, %427, %cst_96 {dimension_numbers = #tpu.dot_dimension_numbers<[1], [0], [0], [1], [0, 0, 1, 1], [], []>} : vector<16x32xf32>, vector<32x128xf32>, vector<16x128xf32> -> vector<16x128xf32>
    %c0_97 = arith.constant 0 : index
    %c0_98 = arith.constant 0 : index
    %429 = vector.load %arg10[%c0_97, %c0_98] : memref<1x128xf32, #tpu.memory_space<vmem>>, vector<1x128xf32>
    %430 = vector.broadcast %429 : vector<1x128xf32> to vector<16x128xf32>
    %431 = arith.addf %428, %430 : vector<16x128xf32>
    %c0_99 = arith.constant 0 : index
    %c0_100 = arith.constant 0 : index
    %432 = vector.load %arg11[%c0_99, %c0_100] : memref<16x128xf32, #tpu.memory_space<vmem>>, vector<16x128xf32>
    tpu.vector_store %arg11[%c0_99, %c0_100], %431 {strides = array<i32>} : memref<16x128xf32, #tpu.memory_space<vmem>>, vector<16x128xf32>,
    return
  }
}

</mosaic_0001>

<llo_original>
// kernel: attn_model_forward.3
$region0: #{attn_model_forward.3}
  #allocation0 [shape = 'u32[]', space=smem, size = 0x4, offset = 0x4, fixed_abs, tag = 'smem constant byte address 0x4 - core index']
  #allocation1 [shape = 'u32[72,128]{1,0:T(1,128)}', space=vmem, size = 0x9000, scoped, tag = 'internal scratch']
  %s0 = inlined_call_operand.vmem [shape: f32[512,36], index: 0, kind: input, shape index: {}]
  %s1 = inlined_call_operand.vmem [shape: f32[36,64], index: 1, kind: input, shape index: {}]
  %s2 = inlined_call_operand.vmem [shape: f32[1,64], index: 2, kind: input, shape index: {}]
  %s3 = inlined_call_operand.vmem [shape: f32[512,64], index: 3, kind: output, shape index: {}]
  %s4 = sld [smem:[#allocation0]]
  $region22: #{attn_model_forward.3} parent=0
    _
  %s6 = ssub.s32 1, %s4
  %s7 = scalar_select 0, %s6, %s4
  // Predicated region
  $region2: #{attn_model_forward.3} parent=0 // pred_check
    _
  $region3: #{attn_model_forward.3} parent=0 // pred_check_branch
    %9 = sbr.rel (0) target = $region5
  $region4: #{attn_model_forward.3} parent=0 // pred_region
    _
  $region5: #{attn_model_forward.3} parent=0 // pred_fallthru
    _
  // Predicated region
  $region6: #{attn_model_forward.3} parent=0 // pred_check
    _
  $region7: #{attn_model_forward.3} parent=0 // pred_check_branch
    %11 = sbr.rel (0) target = $region9
  $region8: #{attn_model_forward.3} parent=0 // pred_region
    _
  $region9: #{attn_model_forward.3} parent=0 // pred_fallthru
    _
  // Predicated region
  $region10: #{attn_model_forward.3} parent=0 // pred_check
    _
  $region11: #{attn_model_forward.3} parent=0 // pred_check_branch
    %13 = sbr.rel (0) target = $region13
  $region12: #{attn_model_forward.3} parent=0 // pred_region
    _
  $region13: #{attn_model_forward.3} parent=0 // pred_fallthru
    _
  %v14 = vld [vmem:[%s0] sm:$0xff]
  %v15 = vld [vmem:[%s0 + $0x8] sm:$0xff]
  %v16 = vld [vmem:[%s0 + $0x10] sm:$0xff]
  %v17 = vld [vmem:[%s0 + $0x18] sm:$0xff]
  %v18 = vld [vmem:[%s0 + $0x20] sm:$0xff]
  %v19 = vld [vmem:[%s0 + $0x28] sm:$0xff]
  %v20 = vld [vmem:[%s0 + $0x30] sm:$0xff]
  %v21 = vld [vmem:[%s0 + $0x38] sm:$0xff]
  %v22 = vld [vmem:[%s0 + $0x40] sm:$0xff]
  %v23 = vld [vmem:[%s0 + $0x48] sm:$0xff]
  %v24 = vld [vmem:[%s0 + $0x50] sm:$0xff]
  %v25 = vld [vmem:[%s0 + $0x58] sm:$0xff]
  %v26 = vld [vmem:[%s0 + $0x60] sm:$0xff]
  %v27 = vld [vmem:[%s0 + $0x68] sm:$0xff]
  %v28 = vld [vmem:[%s0 + $0x70] sm:$0xff]
  %v29 = vld [vmem:[%s0 + $0x78] sm:$0xff]
  %v30 = vld [vmem:[%s0 + $0x80] sm:$0xff]
  %v31 = vld [vmem:[%s0 + $0x88] sm:$0xff]
  %v32 = vld [vmem:[%s0 + $0x90] sm:$0xff]
  %v33 = vld [vmem:[%s0 + $0x98] sm:$0xff]
  %v34 = vld [vmem:[%s0 + $0xa0] sm:$0xff]
  %v35 = vld [vmem:[%s0 + $0xa8] sm:$0xff]
  %v36 = vld [vmem:[%s0 + $0xb0] sm:$0xff]
  %v37 = vld [vmem:[%s0 + $0xb8] sm:$0xff]
  %v38 = vld [vmem:[%s0 + $0xc0] sm:$0xff]
  %v39 = vld [vmem:[%s0 + $0xc8] sm:$0xff]
  %v40 = vld [vmem:[%s0 + $0xd0] sm:$0xff]
  %v41 = vld [vmem:[%s0 + $0xd8] sm:$0xff]
  %v42 = vld [vmem:[%s0 + $0xe0] sm:$0xff]
  %v43 = vld [vmem:[%s0 + $0xe8] sm:$0xff]
  %v44 = vld [vmem:[%s0 + $0xf0] sm:$0xff]
  %v45 = vld [vmem:[%s0 + $0xf8] sm:$0xff]
  %v46 = vld [vmem:[%s0 + $0x100] sm:$0xff]
  %v47 = vld [vmem:[%s0 + $0x108] sm:$0xff]
  %v48 = vld [vmem:[%s0 + $0x110] sm:$0xff]
  %v49 = vld [vmem:[%s0 + $0x118] sm:$0xff]
  %v50 = vld [vmem:[%s0 + $0x120] sm:$0xff]
  %v51 = vld [vmem:[%s0 + $0x128] sm:$0xff]
  %v52 = vld [vmem:[%s0 + $0x130] sm:$0xff]
  %v53 = vld [vmem:[%s0 + $0x138] sm:$0xff]
  %v54 = vld [vmem:[%s0 + $0x140] sm:$0xff]
  %v55 = vld [vmem:[%s0 + $0x148] sm:$0xff]
  %v56 = vld [vmem:[%s0 + $0x150] sm:$0xff]
  %v57 = vld [vmem:[%s0 + $0x158] sm:$0xff]
  %v58 = vld [vmem:[%s0 + $0x160] sm:$0xff]
  %v59 = vld [vmem:[%s0 + $0x168] sm:$0xff]
  %v60 = vld [vmem:[%s0 + $0x170] sm:$0xff]
  %v61 = vld [vmem:[%s0 + $0x178] sm:$0xff]
  %v62 = vld [vmem:[%s0 + $0x180] sm:$0xff]
  %v63 = vld [vmem:[%s0 + $0x188] sm:$0xff]
  %v64 = vld [vmem:[%s0 + $0x190] sm:$0xff]
  %v65 = vld [vmem:[%s0 + $0x198] sm:$0xff]
  %v66 = vld [vmem:[%s0 + $0x1a0] sm:$0xff]
  %v67 = vld [vmem:[%s0 + $0x1a8] sm:$0xff]
  %v68 = vld [vmem:[%s0 + $0x1b0] sm:$0xff]
  %v69 = vld [vmem:[%s0 + $0x1b8] sm:$0xff]
  %v70 = vld [vmem:[%s0 + $0x1c0] sm:$0xff]
  %v71 = vld [vmem:[%s0 + $0x1c8] sm:$0xff]
  %v72 = vld [vmem:[%s0 + $0x1d0] sm:$0xff]
  %v73 = vld [vmem:[%s0 + $0x1d8] sm:$0xff]
  %v74 = vld [vmem:[%s0 + $0x1e0] sm:$0xff]
  %v75 = vld [vmem:[%s0 + $0x1e8] sm:$0xff]
  %v76 = vld [vmem:[%s0 + $0x1f0] sm:$0xff]
  %v77 = vld [vmem:[%s0 + $0x1f8] sm:$0xff]
  %v78 = vld [vmem:[%s1] sm:$0xff]
  %v79 = vld [vmem:[%s1 + $0x8] sm:$0xff]
  %v80 = vld [vmem:[%s1 + $0x10] sm:$0xff]
  %v81 = vld [vmem:[%s1 + $0x18] sm:$0xff]
  %v82 = vld [vmem:[%s1 + $0x20] sm:$0xf]
  %v83 = vld [vmem:[%s2] sm:$0x1]
  %v85 = vperm.slane %v83, 0
  %vm87 = vcmask 293888
  %v89 = vsel %vm87, %v14, 0
  %v92 = vsel %vm87, %v15, 0
  %v95 = vsel %vm87, %v16, 0
  %v98 = vsel %vm87, %v17, 0
  %v101 = vsel %vm87, %v18, 0
  %v104 = vsel %vm87, %v19, 0
  %v107 = vsel %vm87, %v20, 0
  %v110 = vsel %vm87, %v21, 0
  %v113 = vsel %vm87, %v22, 0
  %v116 = vsel %vm87, %v23, 0
  %v119 = vsel %vm87, %v24, 0
  %v122 = vsel %vm87, %v25, 0
  %v125 = vsel %vm87, %v26, 0
  %v128 = vsel %vm87, %v27, 0
  %v131 = vsel %vm87, %v28, 0
  %v134 = vsel %vm87, %v29, 0
  %v137 = vsel %vm87, %v30, 0
  %v140 = vsel %vm87, %v31, 0
  %v143 = vsel %vm87, %v32, 0
  %v146 = vsel %vm87, %v33, 0
  %v149 = vsel %vm87, %v34, 0
  %v152 = vsel %vm87, %v35, 0
  %v155 = vsel %vm87, %v36, 0
  %v158 = vsel %vm87, %v37, 0
  %v161 = vsel %vm87, %v38, 0
  %v164 = vsel %vm87, %v39, 0
  %v167 = vsel %vm87, %v40, 0
  %v170 = vsel %vm87, %v41, 0
  %v173 = vsel %vm87, %v42, 0
  %v176 = vsel %vm87, %v43, 0
  %v179 = vsel %vm87, %v44, 0
  %v182 = vsel %vm87, %v45, 0
  %v185 = vsel %vm87, %v46, 0
  %v188 = vsel %vm87, %v47, 0
  %v191 = vsel %vm87, %v48, 0
  %v194 = vsel %vm87, %v49, 0
  %v197 = vsel %vm87, %v50, 0
  %v200 = vsel %vm87, %v51, 0
  %v203 = vsel %vm87, %v52, 0
  %v206 = vsel %vm87, %v53, 0
  %v209 = vsel %vm87, %v54, 0
  %v212 = vsel %vm87, %v55, 0
  %v215 = vsel %vm87, %v56, 0
  %v218 = vsel %vm87, %v57, 0
  %v221 = vsel %vm87, %v58, 0
  %v224 = vsel %vm87, %v59, 0
  %v227 = vsel %vm87, %v60, 0
  %v230 = vsel %vm87, %v61, 0
  %v233 = vsel %vm87, %v62, 0
  %v236 = vsel %vm87, %v63, 0
  %v239 = vsel %vm87, %v64, 0
  %v242 = vsel %vm87, %v65, 0
  %v245 = vsel %vm87, %v66, 0
  %v248 = vsel %vm87, %v67, 0
  %v251 = vsel %vm87, %v68, 0
  %v254 = vsel %vm87, %v69, 0
  %v257 = vsel %vm87, %v70, 0
  %v260 = vsel %vm87, %v71, 0
  %v263 = vsel %vm87, %v72, 0
  %v266 = vsel %vm87, %v73, 0
  %v269 = vsel %vm87, %v74, 0
  %v272 = vsel %vm87, %v75, 0
  %v275 = vsel %vm87, %v76, 0
  %v278 = vsel %vm87, %v77, 0
  %vm280 = vcmask 1043456
  %v282 = vsel %vm280, %v82, 0
  %284 = vmatpush.msra.mxu0 0.0
  %285 = vmatpush.msra.mxu0 0.0
  %286 = vmatpush.msra.mxu0 0.0
  %287 = vmatpush.msra.mxu0 0.0
  %288 = vmatpush.msra.mxu0 0.0
  %289 = vmatpush.msra.mxu0 0.0
  %290 = vmatpush.msra.mxu0 0.0
  %291 = vmatpush.msra.mxu0 0.0
  %292 = vmatpush.msra.mxu0 0.0
  %293 = vmatpush.msra.mxu0 0.0
  %294 = vmatpush.msra.mxu0 0.0
  %295 = vmatpush.msra.mxu0 %v282
  %296 = vmatpush.msra.mxu0 %v81
  %297 = vmatpush.msra.mxu0 %v80
  %298 = vmatpush.msra.mxu0 %v79
  %299 = vmatpush.msra.mxu0 %v78
  %300 = vmatmul.f32.gmra.mxu0 %v89
  %v301 = vpop.f32.mrf.mxu0
  %v302 = vadd.f32 %v85, %v301
  %303 = vmatmul.f32.gmra.mxu0 %v92
  %v304 = vpop.f32.mrf.mxu0
  %v305 = vadd.f32 %v85, %v304
  %306 = vmatmul.f32.gmra.mxu0 %v95
  %v307 = vpop.f32.mrf.mxu0
  %v308 = vadd.f32 %v85, %v307
  %309 = vmatmul.f32.gmra.mxu0 %v98
  %v310 = vpop.f32.mrf.mxu0
  %v311 = vadd.f32 %v85, %v310
  %312 = vmatmul.f32.gmra.mxu0 %v101
  %v313 = vpop.f32.mrf.mxu0
  %v314 = vadd.f32 %v85, %v313
  %315 = vmatmul.f32.gmra.mxu0 %v104
  %v316 = vpop.f32.mrf.mxu0
  %v317 = vadd.f32 %v85, %v316
  %318 = vmatmul.f32.gmra.mxu0 %v107
  %v319 = vpop.f32.mrf.mxu0
  %v320 = vadd.f32 %v85, %v319
  %321 = vmatmul.f32.gmra.mxu0 %v110
  %v322 = vpop.f32.mrf.mxu0
  %v323 = vadd.f32 %v85, %v322
  %324 = vmatmul.f32.gmra.mxu0 %v113
  %v325 = vpop.f32.mrf.mxu0
  %v326 = vadd.f32 %v85, %v325
  %327 = vmatmul.f32.gmra.mxu0 %v116
  %v328 = vpop.f32.mrf.mxu0
  %v329 = vadd.f32 %v85, %v328
  %330 = vmatmul.f32.gmra.mxu0 %v119
  %v331 = vpop.f32.mrf.mxu0
  %v332 = vadd.f32 %v85, %v331
  %333 = vmatmul.f32.gmra.mxu0 %v122
  %v334 = vpop.f32.mrf.mxu0
  %v335 = vadd.f32 %v85, %v334
  %336 = vmatmul.f32.gmra.mxu0 %v125
  %v337 = vpop.f32.mrf.mxu0
  %v338 = vadd.f32 %v85, %v337
  %339 = vmatmul.f32.gmra.mxu0 %v128
  %v340 = vpop.f32.mrf.mxu0
  %v341 = vadd.f32 %v85, %v340
  %342 = vmatmul.f32.gmra.mxu0 %v131
  %v343 = vpop.f32.mrf.mxu0
  %v344 = vadd.f32 %v85, %v343
  %345 = vmatmul.f32.gmra.mxu0 %v134
  %v346 = vpop.f32.mrf.mxu0
  %v347 = vadd.f32 %v85, %v346
  %348 = vmatmul.f32.gmra.mxu0 %v137
  %v349 = vpop.f32.mrf.mxu0
  %v350 = vadd.f32 %v85, %v349
  %351 = vmatmul.f32.gmra.mxu0 %v140
  %v352 = vpop.f32.mrf.mxu0
  %v353 = vadd.f32 %v85, %v352
  %354 = vmatmul.f32.gmra.mxu0 %v143
  %v355 = vpop.f32.mrf.mxu0
  %v356 = vadd.f32 %v85, %v355
  %357 = vmatmul.f32.gmra.mxu0 %v146
  %v358 = vpop.f32.mrf.mxu0
  %v359 = vadd.f32 %v85, %v358
  %360 = vmatmul.f32.gmra.mxu0 %v149
  %v361 = vpop.f32.mrf.mxu0
  %v362 = vadd.f32 %v85, %v361
  %363 = vmatmul.f32.gmra.mxu0 %v152
  %v364 = vpop.f32.mrf.mxu0
  %v365 = vadd.f32 %v85, %v364
  %366 = vmatmul.f32.gmra.mxu0 %v155
  %v367 = vpop.f32.mrf.mxu0
  %v368 = vadd.f32 %v85, %v367
  %369 = vmatmul.f32.gmra.mxu0 %v158
  %v370 = vpop.f32.mrf.mxu0
  %v371 = vadd.f32 %v85, %v370
  %372 = vmatmul.f32.gmra.mxu0 %v161
  %v373 = vpop.f32.mrf.mxu0
  %v374 = vadd.f32 %v85, %v373
  %375 = vmatmul.f32.gmra.mxu0 %v164
  %v376 = vpop.f32.mrf.mxu0
  %v377 = vadd.f32 %v85, %v376
  %378 = vmatmul.f32.gmra.mxu0 %v167
  %v379 = vpop.f32.mrf.mxu0
  %v380 = vadd.f32 %v85, %v379
  %381 = vmatmul.f32.gmra.mxu0 %v170
  %v382 = vpop.f32.mrf.mxu0
  %v383 = vadd.f32 %v85, %v382
  %384 = vmatmul.f32.gmra.mxu0 %v173
  %v385 = vpop.f32.mrf.mxu0
  %v386 = vadd.f32 %v85, %v385
  %387 = vmatmul.f32.gmra.mxu0 %v176
  %v388 = vpop.f32.mrf.mxu0
  %v389 = vadd.f32 %v85, %v388
  %390 = vmatmul.f32.gmra.mxu0 %v179
  %v391 = vpop.f32.mrf.mxu0
  %v392 = vadd.f32 %v85, %v391
  %393 = vmatmul.f32.gmra.mxu0 %v182
  %v394 = vpop.f32.mrf.mxu0
  %v395 = vadd.f32 %v85, %v394
  %396 = vmatmul.f32.gmra.mxu0 %v185
  %v397 = vpop.f32.mrf.mxu0
  %v398 = vadd.f32 %v85, %v397
  %399 = vmatmul.f32.gmra.mxu0 %v188
  %v400 = vpop.f32.mrf.mxu0
  %v401 = vadd.f32 %v85, %v400
  %402 = vmatmul.f32.gmra.mxu0 %v191
  %v403 = vpop.f32.mrf.mxu0
  %v404 = vadd.f32 %v85, %v403
  %405 = vmatmul.f32.gmra.mxu0 %v194
  %v406 = vpop.f32.mrf.mxu0
  %v407 = vadd.f32 %v85, %v406
  %408 = vmatmul.f32.gmra.mxu0 %v197
  %v409 = vpop.f32.mrf.mxu0
  %v410 = vadd.f32 %v85, %v409
  %411 = vmatmul.f32.gmra.mxu0 %v200
  %v412 = vpop.f32.mrf.mxu0
  %v413 = vadd.f32 %v85, %v412
  %414 = vmatmul.f32.gmra.mxu0 %v203
  %v415 = vpop.f32.mrf.mxu0
  %v416 = vadd.f32 %v85, %v415
  %417 = vmatmul.f32.gmra.mxu0 %v206
  %v418 = vpop.f32.mrf.mxu0
  %v419 = vadd.f32 %v85, %v418
  %420 = vmatmul.f32.gmra.mxu0 %v209
  %v421 = vpop.f32.mrf.mxu0
  %v422 = vadd.f32 %v85, %v421
  %423 = vmatmul.f32.gmra.mxu0 %v212
  %v424 = vpop.f32.mrf.mxu0
  %v425 = vadd.f32 %v85, %v424
  %426 = vmatmul.f32.gmra.mxu0 %v215
  %v427 = vpop.f32.mrf.mxu0
  %v428 = vadd.f32 %v85, %v427
  %429 = vmatmul.f32.gmra.mxu0 %v218
  %v430 = vpop.f32.mrf.mxu0
  %v431 = vadd.f32 %v85, %v430
  %432 = vmatmul.f32.gmra.mxu0 %v221
  %v433 = vpop.f32.mrf.mxu0
  %v434 = vadd.f32 %v85, %v433
  %435 = vmatmul.f32.gmra.mxu0 %v224
  %v436 = vpop.f32.mrf.mxu0
  %v437 = vadd.f32 %v85, %v436
  %438 = vmatmul.f32.gmra.mxu0 %v227
  %v439 = vpop.f32.mrf.mxu0
  %v440 = vadd.f32 %v85, %v439
  %441 = vmatmul.f32.gmra.mxu0 %v230
  %v442 = vpop.f32.mrf.mxu0
  %v443 = vadd.f32 %v85, %v442
  %444 = vmatmul.f32.gmra.mxu0 %v233
  %v445 = vpop.f32.mrf.mxu0
  %v446 = vadd.f32 %v85, %v445
  %447 = vmatmul.f32.gmra.mxu0 %v236
  %v448 = vpop.f32.mrf.mxu0
  %v449 = vadd.f32 %v85, %v448
  %450 = vmatmul.f32.gmra.mxu0 %v239
  %v451 = vpop.f32.mrf.mxu0
  %v452 = vadd.f32 %v85, %v451
  %453 = vmatmul.f32.gmra.mxu0 %v242
  %v454 = vpop.f32.mrf.mxu0
  %v455 = vadd.f32 %v85, %v454
  %456 = vmatmul.f32.gmra.mxu0 %v245
  %v457 = vpop.f32.mrf.mxu0
  %v458 = vadd.f32 %v85, %v457
  %459 = vmatmul.f32.gmra.mxu0 %v248
  %v460 = vpop.f32.mrf.mxu0
  %v461 = vadd.f32 %v85, %v460
  %462 = vmatmul.f32.gmra.mxu0 %v251
  %v463 = vpop.f32.mrf.mxu0
  %v464 = vadd.f32 %v85, %v463
  %465 = vmatmul.f32.gmra.mxu0 %v254
  %v466 = vpop.f32.mrf.mxu0
  %v467 = vadd.f32 %v85, %v466
  %468 = vmatmul.f32.gmra.mxu0 %v257
  %v469 = vpop.f32.mrf.mxu0
  %v470 = vadd.f32 %v85, %v469
  %471 = vmatmul.f32.gmra.mxu0 %v260
  %v472 = vpop.f32.mrf.mxu0
  %v473 = vadd.f32 %v85, %v472
  %474 = vmatmul.f32.gmra.mxu0 %v263
  %v475 = vpop.f32.mrf.mxu0
  %v476 = vadd.f32 %v85, %v475
  %477 = vmatmul.f32.gmra.mxu0 %v266
  %v478 = vpop.f32.mrf.mxu0
  %v479 = vadd.f32 %v85, %v478
  %480 = vmatmul.f32.gmra.mxu0 %v269
  %v481 = vpop.f32.mrf.mxu0
  %v482 = vadd.f32 %v85, %v481
  %483 = vmatmul.f32.gmra.mxu0 %v272
  %v484 = vpop.f32.mrf.mxu0
  %v485 = vadd.f32 %v85, %v484
  %486 = vmatmul.f32.gmra.mxu0 %v275
  %v487 = vpop.f32.mrf.mxu0
  %v488 = vadd.f32 %v85, %v487
  %489 = vmatmul.f32.gmra.mxu0 %v278
  %v490 = vpop.f32.mrf.mxu0
  %v491 = vadd.f32 %v85, %v490
  %492 = vdwg.mxu0
  %v493 = vmax.f32 %v302, 0.0
  %v494 = vmax.f32 %v305, 0.0
  %v495 = vmax.f32 %v308, 0.0
  %v496 = vmax.f32 %v311, 0.0
  %v497 = vmax.f32 %v314, 0.0
  %v498 = vmax.f32 %v317, 0.0
  %v499 = vmax.f32 %v320, 0.0
  %v500 = vmax.f32 %v323, 0.0
  %v501 = vmax.f32 %v326, 0.0
  %v502 = vmax.f32 %v329, 0.0
  %v503 = vmax.f32 %v332, 0.0
  %v504 = vmax.f32 %v335, 0.0
  %v505 = vmax.f32 %v338, 0.0
  %v506 = vmax.f32 %v341, 0.0
  %v507 = vmax.f32 %v344, 0.0
  %v508 = vmax.f32 %v347, 0.0
  %v509 = vmax.f32 %v350, 0.0
  %v510 = vmax.f32 %v353, 0.0
  %v511 = vmax.f32 %v356, 0.0
  %v512 = vmax.f32 %v359, 0.0
  %v513 = vmax.f32 %v362, 0.0
  %v514 = vmax.f32 %v365, 0.0
  %v515 = vmax.f32 %v368, 0.0
  %v516 = vmax.f32 %v371, 0.0
  %v517 = vmax.f32 %v374, 0.0
  %v518 = vmax.f32 %v377, 0.0
  %v519 = vmax.f32 %v380, 0.0
  %v520 = vmax.f32 %v383, 0.0
  %v521 = vmax.f32 %v386, 0.0
  %v522 = vmax.f32 %v389, 0.0
  %v523 = vmax.f32 %v392, 0.0
  %v524 = vmax.f32 %v395, 0.0
  %v525 = vmax.f32 %v398, 0.0
  %v526 = vmax.f32 %v401, 0.0
  %v527 = vmax.f32 %v404, 0.0
  %v528 = vmax.f32 %v407, 0.0
  %v529 = vmax.f32 %v410, 0.0
  %v530 = vmax.f32 %v413, 0.0
  %v531 = vmax.f32 %v416, 0.0
  %v532 = vmax.f32 %v419, 0.0
  %v533 = vmax.f32 %v422, 0.0
  %v534 = vmax.f32 %v425, 0.0
  %v535 = vmax.f32 %v428, 0.0
  %v536 = vmax.f32 %v431, 0.0
  %v537 = vmax.f32 %v434, 0.0
  %v538 = vmax.f32 %v437, 0.0
  %v539 = vmax.f32 %v440, 0.0
  %v540 = vmax.f32 %v443, 0.0
  %v541 = vmax.f32 %v446, 0.0
  %v542 = vmax.f32 %v449, 0.0
  %v543 = vmax.f32 %v452, 0.0
  %v544 = vmax.f32 %v455, 0.0
  %v545 = vmax.f32 %v458, 0.0
  %v546 = vmax.f32 %v461, 0.0
  %v547 = vmax.f32 %v464, 0.0
  %v548 = vmax.f32 %v467, 0.0
  %v549 = vmax.f32 %v470, 0.0
  %v550 = vmax.f32 %v473, 0.0
  %v551 = vmax.f32 %v476, 0.0
  %v552 = vmax.f32 %v479, 0.0
  %v553 = vmax.f32 %v482, 0.0
  %v554 = vmax.f32 %v485, 0.0
  %v555 = vmax.f32 %v488, 0.0
  %v556 = vmax.f32 %v491, 0.0
  %vm557 = vcmask 523264
  %558 = vst.msk [vmem:[%s3] sm:$0xff] %vm557, %v493
  %559 = vst.msk [vmem:[%s3 + $0x8] sm:$0xff] %vm557, %v494
  %560 = vst.msk [vmem:[%s3 + $0x10] sm:$0xff] %vm557, %v495
  %561 = vst.msk [vmem:[%s3 + $0x18] sm:$0xff] %vm557, %v496
  %562 = vst.msk [vmem:[%s3 + $0x20] sm:$0xff] %vm557, %v497
  %563 = vst.msk [vmem:[%s3 + $0x28] sm:$0xff] %vm557, %v498
  %564 = vst.msk [vmem:[%s3 + $0x30] sm:$0xff] %vm557, %v499
  %565 = vst.msk [vmem:[%s3 + $0x38] sm:$0xff] %vm557, %v500
  %566 = vst.msk [vmem:[%s3 + $0x40] sm:$0xff] %vm557, %v501
  %567 = vst.msk [vmem:[%s3 + $0x48] sm:$0xff] %vm557, %v502
  %568 = vst.msk [vmem:[%s3 + $0x50] sm:$0xff] %vm557, %v503
  %569 = vst.msk [vmem:[%s3 + $0x58] sm:$0xff] %vm557, %v504
  %570 = vst.msk [vmem:[%s3 + $0x60] sm:$0xff] %vm557, %v505
  %571 = vst.msk [vmem:[%s3 + $0x68] sm:$0xff] %vm557, %v506
  %572 = vst.msk [vmem:[%s3 + $0x70] sm:$0xff] %vm557, %v507
  %573 = vst.msk [vmem:[%s3 + $0x78] sm:$0xff] %vm557, %v508
  %574 = vst.msk [vmem:[%s3 + $0x80] sm:$0xff] %vm557, %v509
  %575 = vst.msk [vmem:[%s3 + $0x88] sm:$0xff] %vm557, %v510
  %576 = vst.msk [vmem:[%s3 + $0x90] sm:$0xff] %vm557, %v511
  %577 = vst.msk [vmem:[%s3 + $0x98] sm:$0xff] %vm557, %v512
  %578 = vst.msk [vmem:[%s3 + $0xa0] sm:$0xff] %vm557, %v513
  %579 = vst.msk [vmem:[%s3 + $0xa8] sm:$0xff] %vm557, %v514
  %580 = vst.msk [vmem:[%s3 + $0xb0] sm:$0xff] %vm557, %v515
  %581 = vst.msk [vmem:[%s3 + $0xb8] sm:$0xff] %vm557, %v516
  %582 = vst.msk [vmem:[%s3 + $0xc0] sm:$0xff] %vm557, %v517
  %583 = vst.msk [vmem:[%s3 + $0xc8] sm:$0xff] %vm557, %v518
  %584 = vst.msk [vmem:[%s3 + $0xd0] sm:$0xff] %vm557, %v519
  %585 = vst.msk [vmem:[%s3 + $0xd8] sm:$0xff] %vm557, %v520
  %586 = vst.msk [vmem:[%s3 + $0xe0] sm:$0xff] %vm557, %v521
  %587 = vst.msk [vmem:[%s3 + $0xe8] sm:$0xff] %vm557, %v522
  %588 = vst.msk [vmem:[%s3 + $0xf0] sm:$0xff] %vm557, %v523
  %589 = vst.msk [vmem:[%s3 + $0xf8] sm:$0xff] %vm557, %v524
  %590 = vst.msk [vmem:[%s3 + $0x100] sm:$0xff] %vm557, %v525
  %591 = vst.msk [vmem:[%s3 + $0x108] sm:$0xff] %vm557, %v526
  %592 = vst.msk [vmem:[%s3 + $0x110] sm:$0xff] %vm557, %v527
  %593 = vst.msk [vmem:[%s3 + $0x118] sm:$0xff] %vm557, %v528
  %594 = vst.msk [vmem:[%s3 + $0x120] sm:$0xff] %vm557, %v529
  %595 = vst.msk [vmem:[%s3 + $0x128] sm:$0xff] %vm557, %v530
  %596 = vst.msk [vmem:[%s3 + $0x130] sm:$0xff] %vm557, %v531
  %597 = vst.msk [vmem:[%s3 + $0x138] sm:$0xff] %vm557, %v532
  %598 = vst.msk [vmem:[%s3 + $0x140] sm:$0xff] %vm557, %v533
  %599 = vst.msk [vmem:[%s3 + $0x148] sm:$0xff] %vm557, %v534
  %600 = vst.msk [vmem:[%s3 + $0x150] sm:$0xff] %vm557, %v535
  %601 = vst.msk [vmem:[%s3 + $0x158] sm:$0xff] %vm557, %v536
  %602 = vst.msk [vmem:[%s3 + $0x160] sm:$0xff] %vm557, %v537
  %603 = vst.msk [vmem:[%s3 + $0x168] sm:$0xff] %vm557, %v538
  %604 = vst.msk [vmem:[%s3 + $0x170] sm:$0xff] %vm557, %v539
  %605 = vst.msk [vmem:[%s3 + $0x178] sm:$0xff] %vm557, %v540
  %606 = vst.msk [vmem:[%s3 + $0x180] sm:$0xff] %vm557, %v541
  %607 = vst.msk [vmem:[%s3 + $0x188] sm:$0xff] %vm557, %v542
  %608 = vst.msk [vmem:[%s3 + $0x190] sm:$0xff] %vm557, %v543
  %609 = vst.msk [vmem:[%s3 + $0x198] sm:$0xff] %vm557, %v544
  %610 = vst.msk [vmem:[%s3 + $0x1a0] sm:$0xff] %vm557, %v545
  %611 = vst.msk [vmem:[%s3 + $0x1a8] sm:$0xff] %vm557, %v546
  %612 = vst.msk [vmem:[%s3 + $0x1b0] sm:$0xff] %vm557, %v547
  %613 = vst.msk [vmem:[%s3 + $0x1b8] sm:$0xff] %vm557, %v548
  %614 = vst.msk [vmem:[%s3 + $0x1c0] sm:$0xff] %vm557, %v549
  %615 = vst.msk [vmem:[%s3 + $0x1c8] sm:$0xff] %vm557, %v550
  %616 = vst.msk [vmem:[%s3 + $0x1d0] sm:$0xff] %vm557, %v551
  %617 = vst.msk [vmem:[%s3 + $0x1d8] sm:$0xff] %vm557, %v552
  %618 = vst.msk [vmem:[%s3 + $0x1e0] sm:$0xff] %vm557, %v553
  %619 = vst.msk [vmem:[%s3 + $0x1e8] sm:$0xff] %vm557, %v554
  %620 = vst.msk [vmem:[%s3 + $0x1f0] sm:$0xff] %vm557, %v555
  %621 = vst.msk [vmem:[%s3 + $0x1f8] sm:$0xff] %vm557, %v556
  // Predicated region
  $region14: #{attn_model_forward.3} parent=0 // pred_check
    _
  $region15: #{attn_model_forward.3} parent=0 // pred_check_branch
    %623 = sbr.rel (0) target = $region17
  $region16: #{attn_model_forward.3} parent=0 // pred_region
    _
  $region17: #{attn_model_forward.3} parent=0 // pred_fallthru
    _
  // Predicated region
  $region18: #{attn_model_forward.3} parent=0 // pred_check
    _
  $region19: #{attn_model_forward.3} parent=0 // pred_check_branch
    %625 = sbr.rel (0) target = $region21
  $region20: #{attn_model_forward.3} parent=0 // pred_region
    _
  $region21: #{attn_model_forward.3} parent=0 // pred_fallthru
    _

// kernel: attn_model_forward.4
$region0: #{attn_model_forward.4}
  #allocation0 [shape = 'u32[]', space=smem, size = 0x4, offset = 0x4, fixed_abs, tag = 'smem constant byte address 0x4 - core index']
  #allocation1 [shape = 'u32[72,128]{1,0:T(1,128)}', space=vmem, size = 0x9000, scoped, tag = 'internal scratch']
  %s0 = inlined_call_operand.vmem [shape: f32[2,10,10,64], index: 0, kind: input, shape index: {}]
  %s1 = inlined_call_operand.vmem [shape: f32[9,64,512], index: 1, kind: input, shape index: {}]
  %s2 = inlined_call_operand.vmem [shape: f32[1,512], index: 2, kind: input, shape index: {}]
  %s3 = inlined_call_operand.vmem [shape: f32[128,512], index: 3, kind: output, shape index: {}]
  %s4 = sld [smem:[#allocation0]]
  $region87: #{attn_model_forward.4} parent=0
    _
  %s6 = ssub.s32 1, %s4
  %s7 = scalar_select 0, %s6, %s4
  $region1: #{attn_model_forward.4} parent=0
    #allocation2 [shape = 'u8[1179648]{0}', space=vmem, size = 0x120000, scoped, tag = 'input window, operand 1']
    #allocation3 [shape = 'u8[262144]{0}', space=vmem, size = 0x40000, scoped, tag = 'output window, operand 0']
    loop: start=0, step=1, limit=4
    $region2: #{attn_model_forward.4} parent=1 // loop_pre_header
      _
    $region3: #{attn_model_forward.4} parent=1 // loop_header
      %s9 = sphi 0, %s13
      %p10 = scmp.ge.s32.totalorder %s9, 4
      %s17 = sphi 0, %s17
      %s19 = sphi 0, %s17
      %s20 = sphi 0, %s19
      %s34 = sphi 0, %s20
      %s40 = sphi 0, %s42
      %s43 = sphi 0, %s40
      %s44 = sphi 0, %s43
      %s60 = sphi 0, %s44
      %s66 = sphi 0, %s68
      %s69 = sphi 0, %s66
      %s70 = sphi 0, %s69
      %s86 = sphi 0, %s70
      %s92 = sphi 0, %s94
      %s95 = sphi 0, %s92
      %s96 = sphi 0, %s95
      %s112 = sphi 0, %s96
    $region4: #{attn_model_forward.4} parent=1 // loop_header_branch
      %12 = sbr.rel (%p10) target = $region8
    $region5: #{attn_model_forward.4} parent=1 // loop_body
      %s14 = ssub.s32 %s9, 1
      %s15 = ssub.s32 %s9, 2
      %s16 = sadd.s32 %s9, 1
      %s18 = sadd.s32 %s17, 1
      %p21 = scmp.eq.s32.totalorder %s9, 1
      %p22 = scmp.ne.s32.totalorder %s17, %s19
      %p23 = scmp.eq.s32.totalorder %s9, 0
      %p24 = por %p22, %p23
      %p25 = scmp.ne.s32.totalorder %s17, %s19
      %p26 = scmp.eq.s32.totalorder %s14, 1
      %p27 = por %p25, %p26
      %p28 = scmp.ne.s32.totalorder %s19, %s20
      %p29 = scmp.eq.s32.totalorder %s14, 0
      %p30 = por %p28, %p29
      %p31 = scmp.ne.s32.totalorder %s19, %s20
      %p32 = scmp.eq.s32.totalorder %s15, 1
      %p33 = por %p31, %p32
      %p35 = scmp.ne.s32.totalorder %s20, %s34
      %p36 = scmp.eq.s32.totalorder %s15, 0
      %p37 = por %p35, %p36
      %s38 = ssub.s32 %s9, %s16
      %p39 = scmp.eq.s32.totalorder %s38, 0
      %s41 = sadd.s32 %s40, 1
      %s42 = scalar_select %p39, %s40, %s41
      %p45 = pneg %p39
      %p46 = scmp.eq.s32.totalorder %s9, 1
      %p47 = por %p45, %p46
      %p48 = scmp.ne.s32.totalorder %s40, %s43
      %p49 = scmp.eq.s32.totalorder %s9, 0
      %p50 = por %p48, %p49
      %p51 = scmp.ne.s32.totalorder %s40, %s43
      %p52 = scmp.eq.s32.totalorder %s14, 1
      %p53 = por %p51, %p52
      %p54 = scmp.ne.s32.totalorder %s43, %s44
      %p55 = scmp.eq.s32.totalorder %s14, 0
      %p56 = por %p54, %p55
      %p57 = scmp.ne.s32.totalorder %s43, %s44
      %p58 = scmp.eq.s32.totalorder %s15, 1
      %p59 = por %p57, %p58
      %p61 = scmp.ne.s32.totalorder %s44, %s60
      %p62 = scmp.eq.s32.totalorder %s15, 0
      %p63 = por %p61, %p62
      %s64 = ssub.s32 %s9, %s16
      %p65 = scmp.eq.s32.totalorder %s64, 0
      %s67 = sadd.s32 %s66, 1
      %s68 = scalar_select %p65, %s66, %s67
      %p71 = pneg %p65
      %p72 = scmp.eq.s32.totalorder %s9, 1
      %p73 = por %p71, %p72
      %p74 = scmp.ne.s32.totalorder %s66, %s69
      %p75 = scmp.eq.s32.totalorder %s9, 0
      %p76 = por %p74, %p75
      %p77 = scmp.ne.s32.totalorder %s66, %s69
      %p78 = scmp.eq.s32.totalorder %s14, 1
      %p79 = por %p77, %p78
      %p80 = scmp.ne.s32.totalorder %s69, %s70
      %p81 = scmp.eq.s32.totalorder %s14, 0
      %p82 = por %p80, %p81
      %p83 = scmp.ne.s32.totalorder %s69, %s70
      %p84 = scmp.eq.s32.totalorder %s15, 1
      %p85 = por %p83, %p84
      %p87 = scmp.ne.s32.totalorder %s70, %s86
      %p88 = scmp.eq.s32.totalorder %s15, 0
      %p89 = por %p87, %p88
      %s90 = ssub.s32 %s9, %s16
      %p91 = scmp.eq.s32.totalorder %s90, 0
      %s93 = sadd.s32 %s92, 1
      %s94 = scalar_select %p91, %s92, %s93
      %p97 = pneg %p91
      %p98 = scmp.eq.s32.totalorder %s9, 1
      %p99 = por %p97, %p98
      %p100 = scmp.ne.s32.totalorder %s92, %s95
      %p101 = scmp.eq.s32.totalorder %s9, 0
      %p102 = por %p100, %p101
      %p103 = scmp.ne.s32.totalorder %s92, %s95
      %p104 = scmp.eq.s32.totalorder %s14, 1
      %p105 = por %p103, %p104
      %p106 = scmp.ne.s32.totalorder %s95, %s96
      %p107 = scmp.eq.s32.totalorder %s14, 0
      %p108 = por %p106, %p107
      %p109 = scmp.ne.s32.totalorder %s95, %s96
      %p110 = scmp.eq.s32.totalorder %s15, 1
      %p111 = por %p109, %p110
      %p113 = scmp.ne.s32.totalorder %s96, %s112
      %p114 = scmp.eq.s32.totalorder %s15, 0
      %p115 = por %p113, %p114
      %p116 = scmp.le.s32.totalorder 1, %s9
      %p117 = scmp.lt.s32.totalorder %s9, 3
      %p118 = pnand %p116, %p117
      %p119 = pneg %p118
      // Predicated region
      $region9: #{attn_model_forward.4} parent=5 // pred_check
        _
      $region10: #{attn_model_forward.4} parent=5 // pred_check_branch
        %121 = sbr.rel (%p118) target = $region12
      $region11: #{attn_model_forward.4} parent=5 // pred_region
        %s122 = ssub.s32 %s9, 1
        // Predicated region
        $region13: #{attn_model_forward.4} parent=11 // pred_check
          %p123 = pneg %p30
        $region14: #{attn_model_forward.4} parent=11 // pred_check_branch
          %125 = sbr.rel (%p123) target = $region16
        $region15: #{attn_model_forward.4} parent=11 // pred_region
          _
        $region16: #{attn_model_forward.4} parent=11 // pred_fallthru
          _
      $region12: #{attn_model_forward.4} parent=5 // pred_fallthru
        _
      %p126 = scmp.lt.s32.totalorder %s9, 2
      // Predicated region
      $region17: #{attn_model_forward.4} parent=5 // pred_check
        %p127 = pneg %p126
      $region18: #{attn_model_forward.4} parent=5 // pred_check_branch
        %129 = sbr.rel (%p127) target = $region20
      $region19: #{attn_model_forward.4} parent=5 // pred_region
        // Predicated region
        $region21: #{attn_model_forward.4} parent=19 // pred_check
          %p130 = pneg %p50
        $region22: #{attn_model_forward.4} parent=19 // pred_check_branch
          %132 = sbr.rel (%p130) target = $region24
        $region23: #{attn_model_forward.4} parent=19 // pred_region
          %s133 = sand.u32 %s40, 1
          %s134 = sand.u32 %s40, 1
          %s135 = smul.addr %s134, 1152
          %s136 = scalar_lea.vmem [#allocation2], %s135
          %s137 = smul.u32 2, %s9
          %s138 = smul.addr %s137, 8
          %s139 = scalar_lea.vmem %s1, %s138
          // Predicated region
          $region25: #{attn_model_forward.4} parent=23 // pred_check
            _
          $region26: #{attn_model_forward.4} parent=23 // pred_check_branch
            %141 = sbr.rel (0) target = $region28
          $region27: #{attn_model_forward.4} parent=23 // pred_region
            // Predicated region
            $region29: #{attn_model_forward.4} parent=27 // pred_check
              _
            $region30: #{attn_model_forward.4} parent=27 // pred_check_branch
              %143 = sbr.rel (0) target = $region32
            $region31: #{attn_model_forward.4} parent=27 // pred_region
              loop: start=0, step=1, limit=1
              $region33: #{attn_model_forward.4} parent=31 // loop_pre_header
                _
              $region34: #{attn_model_forward.4} parent=31 // loop_header
                %s145 = sphi 0, %s149
                %p146 = scmp.ge.s32.totalorder %s145, 1
                %s150 = sphi %s139, %s139
                %s151 = sphi %s136, %s136
              $region35: #{attn_model_forward.4} parent=31 // loop_header_branch
                %148 = sbr.rel (%p146) target = $region39
              $region36: #{attn_model_forward.4} parent=31 // loop_body
                %v152 = vld [vmem:[%s150] sm:$0xff]
                %153 = vst [vmem:[%s151] sm:$0xff] %v152
                %v154 = vld [vmem:[%s150 + $0x8] sm:$0xff]
                %155 = vst [vmem:[%s151 + $0x8] sm:$0xff] %v154
                %v156 = vld [vmem:[%s150 + $0x20] sm:$0xff]
                %157 = vst [vmem:[%s151 + $0x10] sm:$0xff] %v156
                %v158 = vld [vmem:[%s150 + $0x28] sm:$0xff]
                %159 = vst [vmem:[%s151 + $0x18] sm:$0xff] %v158
                %v160 = vld [vmem:[%s150 + $0x40] sm:$0xff]
                %161 = vst [vmem:[%s151 + $0x20] sm:$0xff] %v160
                %v162 = vld [vmem:[%s150 + $0x48] sm:$0xff]
                %163 = vst [vmem:[%s151 + $0x28] sm:$0xff] %v162
                %v164 = vld [vmem:[%s150 + $0x60] sm:$0xff]
                %165 = vst [vmem:[%s151 + $0x30] sm:$0xff] %v164
                %v166 = vld [vmem:[%s150 + $0x68] sm:$0xff]
                %167 = vst [vmem:[%s151 + $0x38] sm:$0xff] %v166
                %v168 = vld [vmem:[%s150 + $0x80] sm:$0xff]
                %169 = vst [vmem:[%s151 + $0x40] sm:$0xff] %v168
                %v170 = vld [vmem:[%s150 + $0x88] sm:$0xff]
                %171 = vst [vmem:[%s151 + $0x48] sm:$0xff] %v170
                %v172 = vld [vmem:[%s150 + $0xa0] sm:$0xff]
                %173 = vst [vmem:[%s151 + $0x50] sm:$0xff] %v172
                %v174 = vld [vmem:[%s150 + $0xa8] sm:$0xff]
                %175 = vst [vmem:[%s151 + $0x58] sm:$0xff] %v174
                %v176 = vld [vmem:[%s150 + $0xc0] sm:$0xff]
                %177 = vst [vmem:[%s151 + $0x60] sm:$0xff] %v176
                %v178 = vld [vmem:[%s150 + $0xc8] sm:$0xff]
                %179 = vst [vmem:[%s151 + $0x68] sm:$0xff] %v178
                %v180 = vld [vmem:[%s150 + $0xe0] sm:$0xff]
                %181 = vst [vmem:[%s151 + $0x70] sm:$0xff] %v180
                %v182 = vld [vmem:[%s150 + $0xe8] sm:$0xff]
                %183 = vst [vmem:[%s151 + $0x78] sm:$0xff] %v182
                %v184 = vld [vmem:[%s150 + $0x100] sm:$0xff]
                %185 = vst [vmem:[%s151 + $0x80] sm:$0xff] %v184
                %v186 = vld [vmem:[%s150 + $0x108] sm:$0xff]
                %187 = vst [vmem:[%s151 + $0x88] sm:$0xff] %v186
                %v188 = vld [vmem:[%s150 + $0x120] sm:$0xff]
                %189 = vst [vmem:[%s151 + $0x90] sm:$0xff] %v188
                %v190 = vld [vmem:[%s150 + $0x128] sm:$0xff]
                %191 = vst [vmem:[%s151 + $0x98] sm:$0xff] %v190
                %v192 = vld [vmem:[%s150 + $0x140] sm:$0xff]
                %193 = vst [vmem:[%s151 + $0xa0] sm:$0xff] %v192
                %v194 = vld [vmem:[%s150 + $0x148] sm:$0xff]
                %195 = vst [vmem:[%s151 + $0xa8] sm:$0xff] %v194
                %v196 = vld [vmem:[%s150 + $0x160] sm:$0xff]
                %197 = vst [vmem:[%s151 + $0xb0] sm:$0xff] %v196
                %v198 = vld [vmem:[%s150 + $0x168] sm:$0xff]
                %199 = vst [vmem:[%s151 + $0xb8] sm:$0xff] %v198
                %v200 = vld [vmem:[%s150 + $0x180] sm:$0xff]
                %201 = vst [vmem:[%s151 + $0xc0] sm:$0xff] %v200
                %v202 = vld [vmem:[%s150 + $0x188] sm:$0xff]
                %203 = vst [vmem:[%s151 + $0xc8] sm:$0xff] %v202
                %v204 = vld [vmem:[%s150 + $0x1a0] sm:$0xff]
                %205 = vst [vmem:[%s151 + $0xd0] sm:$0xff] %v204
                %v206 = vld [vmem:[%s150 + $0x1a8] sm:$0xff]
                %207 = vst [vmem:[%s151 + $0xd8] sm:$0xff] %v206
                %v208 = vld [vmem:[%s150 + $0x1c0] sm:$0xff]
                %209 = vst [vmem:[%s151 + $0xe0] sm:$0xff] %v208
                %v210 = vld [vmem:[%s150 + $0x1c8] sm:$0xff]
                %211 = vst [vmem:[%s151 + $0xe8] sm:$0xff] %v210
                %v212 = vld [vmem:[%s150 + $0x1e0] sm:$0xff]
                %213 = vst [vmem:[%s151 + $0xf0] sm:$0xff] %v212
                %v214 = vld [vmem:[%s150 + $0x1e8] sm:$0xff]
                %215 = vst [vmem:[%s151 + $0xf8] sm:$0xff] %v214
                %v216 = vld [vmem:[%s150 + $0x200] sm:$0xff]
                %217 = vst [vmem:[%s151 + $0x100] sm:$0xff] %v216
                %v218 = vld [vmem:[%s150 + $0x208] sm:$0xff]
                %219 = vst [vmem:[%s151 + $0x108] sm:$0xff] %v218
                %v220 = vld [vmem:[%s150 + $0x220] sm:$0xff]
                %221 = vst [vmem:[%s151 + $0x110] sm:$0xff] %v220
                %v222 = vld [vmem:[%s150 + $0x228] sm:$0xff]
                %223 = vst [vmem:[%s151 + $0x118] sm:$0xff] %v222
                %v224 = vld [vmem:[%s150 + $0x240] sm:$0xff]
                %225 = vst [vmem:[%s151 + $0x120] sm:$0xff] %v224
                %v226 = vld [vmem:[%s150 + $0x248] sm:$0xff]
                %227 = vst [vmem:[%s151 + $0x128] sm:$0xff] %v226
                %v228 = vld [vmem:[%s150 + $0x260] sm:$0xff]
                %229 = vst [vmem:[%s151 + $0x130] sm:$0xff] %v228
                %v230 = vld [vmem:[%s150 + $0x268] sm:$0xff]
                %231 = vst [vmem:[%s151 + $0x138] sm:$0xff] %v230
                %v232 = vld [vmem:[%s150 + $0x280] sm:$0xff]
                %233 = vst [vmem:[%s151 + $0x140] sm:$0xff] %v232
                %v234 = vld [vmem:[%s150 + $0x288] sm:$0xff]
                %235 = vst [vmem:[%s151 + $0x148] sm:$0xff] %v234
                %v236 = vld [vmem:[%s150 + $0x2a0] sm:$0xff]
                %237 = vst [vmem:[%s151 + $0x150] sm:$0xff] %v236
                %v238 = vld [vmem:[%s150 + $0x2a8] sm:$0xff]
                %239 = vst [vmem:[%s151 + $0x158] sm:$0xff] %v238
                %v240 = vld [vmem:[%s150 + $0x2c0] sm:$0xff]
                %241 = vst [vmem:[%s151 + $0x160] sm:$0xff] %v240
                %v242 = vld [vmem:[%s150 + $0x2c8] sm:$0xff]
                %243 = vst [vmem:[%s151 + $0x168] sm:$0xff] %v242
                %v244 = vld [vmem:[%s150 + $0x2e0] sm:$0xff]
                %245 = vst [vmem:[%s151 + $0x170] sm:$0xff] %v244
                %v246 = vld [vmem:[%s150 + $0x2e8] sm:$0xff]
                %247 = vst [vmem:[%s151 + $0x178] sm:$0xff] %v246
                %v248 = vld [vmem:[%s150 + $0x300] sm:$0xff]
                %249 = vst [vmem:[%s151 + $0x180] sm:$0xff] %v248
                %v250 = vld [vmem:[%s150 + $0x308] sm:$0xff]
                %251 = vst [vmem:[%s151 + $0x188] sm:$0xff] %v250
                %v252 = vld [vmem:[%s150 + $0x320] sm:$0xff]
                %253 = vst [vmem:[%s151 + $0x190] sm:$0xff] %v252
                %v254 = vld [vmem:[%s150 + $0x328] sm:$0xff]
                %255 = vst [vmem:[%s151 + $0x198] sm:$0xff] %v254
                %v256 = vld [vmem:[%s150 + $0x340] sm:$0xff]
                %257 = vst [vmem:[%s151 + $0x1a0] sm:$0xff] %v256
                %v258 = vld [vmem:[%s150 + $0x348] sm:$0xff]
                %259 = vst [vmem:[%s151 + $0x1a8] sm:$0xff] %v258
                %v260 = vld [vmem:[%s150 + $0x360] sm:$0xff]
                %261 = vst [vmem:[%s151 + $0x1b0] sm:$0xff] %v260
                %v262 = vld [vmem:[%s150 + $0x368] sm:$0xff]
                %263 = vst [vmem:[%s151 + $0x1b8] sm:$0xff] %v262
                %v264 = vld [vmem:[%s150 + $0x380] sm:$0xff]
                %265 = vst [vmem:[%s151 + $0x1c0] sm:$0xff] %v264
                %v266 = vld [vmem:[%s150 + $0x388] sm:$0xff]
                %267 = vst [vmem:[%s151 + $0x1c8] sm:$0xff] %v266
                %v268 = vld [vmem:[%s150 + $0x3a0] sm:$0xff]
                %269 = vst [vmem:[%s151 + $0x1d0] sm:$0xff] %v268
                %v270 = vld [vmem:[%s150 + $0x3a8] sm:$0xff]
                %271 = vst [vmem:[%s151 + $0x1d8] sm:$0xff] %v270
                %v272 = vld [vmem:[%s150 + $0x3c0] sm:$0xff]
                %273 = vst [vmem:[%s151 + $0x1e0] sm:$0xff] %v272
                %v274 = vld [vmem:[%s150 + $0x3c8] sm:$0xff]
                %275 = vst [vmem:[%s151 + $0x1e8] sm:$0xff] %v274
                %v276 = vld [vmem:[%s150 + $0x3e0] sm:$0xff]
                %277 = vst [vmem:[%s151 + $0x1f0] sm:$0xff] %v276
                %v278 = vld [vmem:[%s150 + $0x3e8] sm:$0xff]
                %279 = vst [vmem:[%s151 + $0x1f8] sm:$0xff] %v278
                %v280 = vld [vmem:[%s150 + $0x400] sm:$0xff]
                %281 = vst [vmem:[%s151 + $0x200] sm:$0xff] %v280
                %v282 = vld [vmem:[%s150 + $0x408] sm:$0xff]
                %283 = vst [vmem:[%s151 + $0x208] sm:$0xff] %v282
                %v284 = vld [vmem:[%s150 + $0x420] sm:$0xff]
                %285 = vst [vmem:[%s151 + $0x210] sm:$0xff] %v284
                %v286 = vld [vmem:[%s150 + $0x428] sm:$0xff]
                %287 = vst [vmem:[%s151 + $0x218] sm:$0xff] %v286
                %v288 = vld [vmem:[%s150 + $0x440] sm:$0xff]
                %289 = vst [vmem:[%s151 + $0x220] sm:$0xff] %v288
                %v290 = vld [vmem:[%s150 + $0x448] sm:$0xff]
                %291 = vst [vmem:[%s151 + $0x228] sm:$0xff] %v290
                %v292 = vld [vmem:[%s150 + $0x460] sm:$0xff]
                %293 = vst [vmem:[%s151 + $0x230] sm:$0xff] %v292
                %v294 = vld [vmem:[%s150 + $0x468] sm:$0xff]
                %295 = vst [vmem:[%s151 + $0x238] sm:$0xff] %v294
                %v296 = vld [vmem:[%s150 + $0x480] sm:$0xff]
                %297 = vst [vmem:[%s151 + $0x240] sm:$0xff] %v296
                %v298 = vld [vmem:[%s150 + $0x488] sm:$0xff]
                %299 = vst [vmem:[%s151 + $0x248] sm:$0xff] %v298
                %v300 = vld [vmem:[%s150 + $0x4a0] sm:$0xff]
                %301 = vst [vmem:[%s151 + $0x250] sm:$0xff] %v300
                %v302 = vld [vmem:[%s150 + $0x4a8] sm:$0xff]
                %303 = vst [vmem:[%s151 + $0x258] sm:$0xff] %v302
                %v304 = vld [vmem:[%s150 + $0x4c0] sm:$0xff]
                %305 = vst [vmem:[%s151 + $0x260] sm:$0xff] %v304
                %v306 = vld [vmem:[%s150 + $0x4c8] sm:$0xff]
                %307 = vst [vmem:[%s151 + $0x268] sm:$0xff] %v306
                %v308 = vld [vmem:[%s150 + $0x4e0] sm:$0xff]
                %309 = vst [vmem:[%s151 + $0x270] sm:$0xff] %v308
                %v310 = vld [vmem:[%s150 + $0x4e8] sm:$0xff]
                %311 = vst [vmem:[%s151 + $0x278] sm:$0xff] %v310
                %v312 = vld [vmem:[%s150 + $0x500] sm:$0xff]
                %313 = vst [vmem:[%s151 + $0x280] sm:$0xff] %v312
                %v314 = vld [vmem:[%s150 + $0x508] sm:$0xff]
                %315 = vst [vmem:[%s151 + $0x288] sm:$0xff] %v314
                %v316 = vld [vmem:[%s150 + $0x520] sm:$0xff]
                %317 = vst [vmem:[%s151 + $0x290] sm:$0xff] %v316
                %v318 = vld [vmem:[%s150 + $0x528] sm:$0xff]
                %319 = vst [vmem:[%s151 + $0x298] sm:$0xff] %v318
                %v320 = vld [vmem:[%s150 + $0x540] sm:$0xff]
                %321 = vst [vmem:[%s151 + $0x2a0] sm:$0xff] %v320
                %v322 = vld [vmem:[%s150 + $0x548] sm:$0xff]
                %323 = vst [vmem:[%s151 + $0x2a8] sm:$0xff] %v322
                %v324 = vld [vmem:[%s150 + $0x560] sm:$0xff]
                %325 = vst [vmem:[%s151 + $0x2b0] sm:$0xff] %v324
                %v326 = vld [vmem:[%s150 + $0x568] sm:$0xff]
                %327 = vst [vmem:[%s151 + $0x2b8] sm:$0xff] %v326
                %v328 = vld [vmem:[%s150 + $0x580] sm:$0xff]
                %329 = vst [vmem:[%s151 + $0x2c0] sm:$0xff] %v328
                %v330 = vld [vmem:[%s150 + $0x588] sm:$0xff]
                %331 = vst [vmem:[%s151 + $0x2c8] sm:$0xff] %v330
                %v332 = vld [vmem:[%s150 + $0x5a0] sm:$0xff]
                %333 = vst [vmem:[%s151 + $0x2d0] sm:$0xff] %v332
                %v334 = vld [vmem:[%s150 + $0x5a8] sm:$0xff]
                %335 = vst [vmem:[%s151 + $0x2d8] sm:$0xff] %v334
                %v336 = vld [vmem:[%s150 + $0x5c0] sm:$0xff]
                %337 = vst [vmem:[%s151 + $0x2e0] sm:$0xff] %v336
                %v338 = vld [vmem:[%s150 + $0x5c8] sm:$0xff]
                %339 = vst [vmem:[%s151 + $0x2e8] sm:$0xff] %v338
                %v340 = vld [vmem:[%s150 + $0x5e0] sm:$0xff]
                %341 = vst [vmem:[%s151 + $0x2f0] sm:$0xff] %v340
                %v342 = vld [vmem:[%s150 + $0x5e8] sm:$0xff]
                %343 = vst [vmem:[%s151 + $0x2f8] sm:$0xff] %v342
                %v344 = vld [vmem:[%s150 + $0x600] sm:$0xff]
                %345 = vst [vmem:[%s151 + $0x300] sm:$0xff] %v344
                %v346 = vld [vmem:[%s150 + $0x608] sm:$0xff]
                %347 = vst [vmem:[%s151 + $0x308] sm:$0xff] %v346
                %v348 = vld [vmem:[%s150 + $0x620] sm:$0xff]
                %349 = vst [vmem:[%s151 + $0x310] sm:$0xff] %v348
                %v350 = vld [vmem:[%s150 + $0x628] sm:$0xff]
                %351 = vst [vmem:[%s151 + $0x318] sm:$0xff] %v350
                %v352 = vld [vmem:[%s150 + $0x640] sm:$0xff]
                %353 = vst [vmem:[%s151 + $0x320] sm:$0xff] %v352
                %v354 = vld [vmem:[%s150 + $0x648] sm:$0xff]
                %355 = vst [vmem:[%s151 + $0x328] sm:$0xff] %v354
                %v356 = vld [vmem:[%s150 + $0x660] sm:$0xff]
                %357 = vst [vmem:[%s151 + $0x330] sm:$0xff] %v356
                %v358 = vld [vmem:[%s150 + $0x668] sm:$0xff]
                %359 = vst [vmem:[%s151 + $0x338] sm:$0xff] %v358
                %v360 = vld [vmem:[%s150 + $0x680] sm:$0xff]
                %361 = vst [vmem:[%s151 + $0x340] sm:$0xff] %v360
                %v362 = vld [vmem:[%s150 + $0x688] sm:$0xff]
                %363 = vst [vmem:[%s151 + $0x348] sm:$0xff] %v362
                %v364 = vld [vmem:[%s150 + $0x6a0] sm:$0xff]
                %365 = vst [vmem:[%s151 + $0x350] sm:$0xff] %v364
                %v366 = vld [vmem:[%s150 + $0x6a8] sm:$0xff]
                %367 = vst [vmem:[%s151 + $0x358] sm:$0xff] %v366
                %v368 = vld [vmem:[%s150 + $0x6c0] sm:$0xff]
                %369 = vst [vmem:[%s151 + $0x360] sm:$0xff] %v368
                %v370 = vld [vmem:[%s150 + $0x6c8] sm:$0xff]
                %371 = vst [vmem:[%s151 + $0x368] sm:$0xff] %v370
                %v372 = vld [vmem:[%s150 + $0x6e0] sm:$0xff]
                %373 = vst [vmem:[%s151 + $0x370] sm:$0xff] %v372
                %v374 = vld [vmem:[%s150 + $0x6e8] sm:$0xff]
                %375 = vst [vmem:[%s151 + $0x378] sm:$0xff] %v374
                %v376 = vld [vmem:[%s150 + $0x700] sm:$0xff]
                %377 = vst [vmem:[%s151 + $0x380] sm:$0xff] %v376
                %v378 = vld [vmem:[%s150 + $0x708] sm:$0xff]
                %379 = vst [vmem:[%s151 + $0x388] sm:$0xff] %v378
                %v380 = vld [vmem:[%s150 + $0x720] sm:$0xff]
                %381 = vst [vmem:[%s151 + $0x390] sm:$0xff] %v380
                %v382 = vld [vmem:[%s150 + $0x728] sm:$0xff]
                %383 = vst [vmem:[%s151 + $0x398] sm:$0xff] %v382
                %v384 = vld [vmem:[%s150 + $0x740] sm:$0xff]
                %385 = vst [vmem:[%s151 + $0x3a0] sm:$0xff] %v384
                %v386 = vld [vmem:[%s150 + $0x748] sm:$0xff]
                %387 = vst [vmem:[%s151 + $0x3a8] sm:$0xff] %v386
                %v388 = vld [vmem:[%s150 + $0x760] sm:$0xff]
                %389 = vst [vmem:[%s151 + $0x3b0] sm:$0xff] %v388
                %v390 = vld [vmem:[%s150 + $0x768] sm:$0xff]
                %391 = vst [vmem:[%s151 + $0x3b8] sm:$0xff] %v390
                %v392 = vld [vmem:[%s150 + $0x780] sm:$0xff]
                %393 = vst [vmem:[%s151 + $0x3c0] sm:$0xff] %v392
                %v394 = vld [vmem:[%s150 + $0x788] sm:$0xff]
                %395 = vst [vmem:[%s151 + $0x3c8] sm:$0xff] %v394
                %v396 = vld [vmem:[%s150 + $0x7a0] sm:$0xff]
                %397 = vst [vmem:[%s151 + $0x3d0] sm:$0xff] %v396
                %v398 = vld [vmem:[%s150 + $0x7a8] sm:$0xff]
                %399 = vst [vmem:[%s151 + $0x3d8] sm:$0xff] %v398
                %v400 = vld [vmem:[%s150 + $0x7c0] sm:$0xff]
                %401 = vst [vmem:[%s151 + $0x3e0] sm:$0xff] %v400
                %v402 = vld [vmem:[%s150 + $0x7c8] sm:$0xff]
                %403 = vst [vmem:[%s151 + $0x3e8] sm:$0xff] %v402
                %v404 = vld [vmem:[%s150 + $0x7e0] sm:$0xff]
                %405 = vst [vmem:[%s151 + $0x3f0] sm:$0xff] %v404
                %v406 = vld [vmem:[%s150 + $0x7e8] sm:$0xff]
                %407 = vst [vmem:[%s151 + $0x3f8] sm:$0xff] %v406
                %v408 = vld [vmem:[%s150 + $0x800] sm:$0xff]
                %409 = vst [vmem:[%s151 + $0x400] sm:$0xff] %v408
                %v410 = vld [vmem:[%s150 + $0x808] sm:$0xff]
                %411 = vst [vmem:[%s151 + $0x408] sm:$0xff] %v410
                %v412 = vld [vmem:[%s150 + $0x820] sm:$0xff]
                %413 = vst [vmem:[%s151 + $0x410] sm:$0xff] %v412
                %v414 = vld [vmem:[%s150 + $0x828] sm:$0xff]
                %415 = vst [vmem:[%s151 + $0x418] sm:$0xff] %v414
                %v416 = vld [vmem:[%s150 + $0x840] sm:$0xff]
                %417 = vst [vmem:[%s151 + $0x420] sm:$0xff] %v416
                %v418 = vld [vmem:[%s150 + $0x848] sm:$0xff]
                %419 = vst [vmem:[%s151 + $0x428] sm:$0xff] %v418
                %v420 = vld [vmem:[%s150 + $0x860] sm:$0xff]
                %421 = vst [vmem:[%s151 + $0x430] sm:$0xff] %v420
                %v422 = vld [vmem:[%s150 + $0x868] sm:$0xff]
                %423 = vst [vmem:[%s151 + $0x438] sm:$0xff] %v422
                %v424 = vld [vmem:[%s150 + $0x880] sm:$0xff]
                %425 = vst [vmem:[%s151 + $0x440] sm:$0xff] %v424
                %v426 = vld [vmem:[%s150 + $0x888] sm:$0xff]
                %427 = vst [vmem:[%s151 + $0x448] sm:$0xff] %v426
                %v428 = vld [vmem:[%s150 + $0x8a0] sm:$0xff]
                %429 = vst [vmem:[%s151 + $0x450] sm:$0xff] %v428
                %v430 = vld [vmem:[%s150 + $0x8a8] sm:$0xff]
                %431 = vst [vmem:[%s151 + $0x458] sm:$0xff] %v430
                %v432 = vld [vmem:[%s150 + $0x8c0] sm:$0xff]
                %433 = vst [vmem:[%s151 + $0x460] sm:$0xff] %v432
                %v434 = vld [vmem:[%s150 + $0x8c8] sm:$0xff]
                %435 = vst [vmem:[%s151 + $0x468] sm:$0xff] %v434
                %v436 = vld [vmem:[%s150 + $0x8e0] sm:$0xff]
                %437 = vst [vmem:[%s151 + $0x470] sm:$0xff] %v436
                %v438 = vld [vmem:[%s150 + $0x8e8] sm:$0xff]
                %439 = vst [vmem:[%s151 + $0x478] sm:$0xff] %v438
              $region37: #{attn_model_forward.4} parent=31 // loop_footer
                %s149 = sadd.s32 1, %s145
              $region38: #{attn_model_forward.4} parent=31 // loop_footer_branch
                %144 = sbr.rel target = $region34
              $region39: #{attn_model_forward.4} parent=31 // loop_exit
                _
            $region32: #{attn_model_forward.4} parent=27 // pred_fallthru
              _
            // Predicated region
            $region40: #{attn_model_forward.4} parent=27 // pred_check
              _
            $region41: #{attn_model_forward.4} parent=27 // pred_check_branch
              %441 = sbr.rel target = $region43
            $region42: #{attn_model_forward.4} parent=27 // pred_region
              _
            $region43: #{attn_model_forward.4} parent=27 // pred_fallthru
              _
          $region28: #{attn_model_forward.4} parent=23 // pred_fallthru
            _
          %442 = vnop
        $region24: #{attn_model_forward.4} parent=19 // pred_fallthru
          _
        // Predicated region
        $region44: #{attn_model_forward.4} parent=19 // pred_check
          %p443 = pneg %p76
        $region45: #{attn_model_forward.4} parent=19 // pred_check_branch
          %445 = sbr.rel (%p443) target = $region47
        $region46: #{attn_model_forward.4} parent=19 // pred_region
          %s446 = smul.u32 2, %s9
          %p447 = scmp.lt.s32.totalorder %s446, 3
          %s448 = scalar_select %p447, %s446, 3
          %s449 = scalar_lea.vmem %s2, %s448
          %s450 = smul.u32 2, %s9
        $region47: #{attn_model_forward.4} parent=19 // pred_fallthru
          _
      $region20: #{attn_model_forward.4} parent=5 // pred_fallthru
        _
      %p451 = scmp.le.s32.totalorder 1, %s9
      %p452 = scmp.lt.s32.totalorder %s9, 3
      %p453 = pnand %p451, %p452
      %p454 = pneg %p453
      // Predicated region
      $region48: #{attn_model_forward.4} parent=5 // pred_check
        _
      $region49: #{attn_model_forward.4} parent=5 // pred_check_branch
        %456 = sbr.rel (%p453) target = $region51
      $region50: #{attn_model_forward.4} parent=5 // pred_region
        %s457 = ssub.s32 %s9, 1
        %s458 = sand.u32 %s43, 1
        %s459 = sand.u32 %s43, 1
        %s460 = smul.addr %s459, 1152
        %s461 = scalar_lea.vmem [#allocation2], %s460
        // Predicated region
        $region52: #{attn_model_forward.4} parent=50 // pred_check
          %p462 = pneg %p56
        $region53: #{attn_model_forward.4} parent=50 // pred_check_branch
          %464 = sbr.rel (%p462) target = $region55
        $region54: #{attn_model_forward.4} parent=50 // pred_region
          _
        $region55: #{attn_model_forward.4} parent=50 // pred_fallthru
          _
        %p465 = pneg %p30
        %p466 = pneg %p27
        %s467 = sand.u32 %s43, 1
        %s468 = sand.u32 %s43, 1
        %s469 = smul.addr %s468, 1152
        %s470 = scalar_lea.vmem [#allocation2], %s469
        %p471 = pneg %p56
        %p472 = pneg %p53
        %s473 = smul.u32 2, %s14
        %p474 = scmp.lt.s32.totalorder %s473, 3
        %s475 = scalar_select %p474, %s473, 3
        %s476 = scalar_lea.vmem %s2, %s475
        %p477 = pneg %p82
        %p478 = pneg %p79
        %p479 = pneg %p108
        %p480 = pneg %p105
        %s481 = sand.u32 %s95, 1
        %s482 = sand.u32 %s95, 1
        %s483 = smul.addr %s482, 256
        %s484 = scalar_lea.vmem [#allocation3], %s483
        %s485 = smul.u32 2, %s14
        %s486 = smul.u32 2, %s14
        %p487 = scmp.lt.s32.totalorder %s486, 3
        %s488 = scalar_select %p487, %s486, 3
        %s489 = scalar_lea.vmem %s2, %s488
        %s490 = smul.u32 2, %s14
        %s491 = smul.u32 2, %s14
        %v492 = vld [vmem:[%s0] sm:$0xff]
        %v493 = vld [vmem:[%s0 + $0x10] sm:$0xff]
        %v494 = vld [vmem:[%s0 + $0x20] sm:$0xff]
        %v495 = vld [vmem:[%s0 + $0x30] sm:$0xff]
        %v496 = vld [vmem:[%s0 + $0x40] sm:$0xff]
        %v497 = vld [vmem:[%s0 + $0x50] sm:$0xff]
        %v498 = vld [vmem:[%s0 + $0x60] sm:$0xff]
        %v499 = vld [vmem:[%s0 + $0x70] sm:$0xff]
        %v500 = vld [vmem:[%s0 + $0xa0] sm:$0xff]
        %v501 = vld [vmem:[%s0 + $0xb0] sm:$0xff]
        %v502 = vld [vmem:[%s0 + $0xc0] sm:$0xff]
        %v503 = vld [vmem:[%s0 + $0xd0] sm:$0xff]
        %v504 = vld [vmem:[%s0 + $0xe0] sm:$0xff]
        %v505 = vld [vmem:[%s0 + $0xf0] sm:$0xff]
        %v506 = vld [vmem:[%s0 + $0x100] sm:$0xff]
        %v507 = vld [vmem:[%s0 + $0x110] sm:$0xff]
        %v508 = vld [vmem:[%s461] sm:$0xff]
        %v509 = vld [vmem:[%s461 + $0x8] sm:$0xff]
        %v510 = vld [vmem:[%s461 + $0x10] sm:$0xff]
        %v511 = vld [vmem:[%s461 + $0x18] sm:$0xff]
        %v512 = vld [vmem:[%s461 + $0x20] sm:$0xff]
        %v513 = vld [vmem:[%s461 + $0x28] sm:$0xff]
        %v514 = vld [vmem:[%s461 + $0x30] sm:$0xff]
        %v515 = vld [vmem:[%s461 + $0x38] sm:$0xff]
        %v516 = vld [vmem:[%s461 + $0x40] sm:$0xff]
        %v517 = vld [vmem:[%s461 + $0x48] sm:$0xff]
        %v518 = vld [vmem:[%s461 + $0x50] sm:$0xff]
        %v519 = vld [vmem:[%s461 + $0x58] sm:$0xff]
        %v520 = vld [vmem:[%s461 + $0x60] sm:$0xff]
        %v521 = vld [vmem:[%s461 + $0x68] sm:$0xff]
        %v522 = vld [vmem:[%s461 + $0x70] sm:$0xff]
        %v523 = vld [vmem:[%s461 + $0x78] sm:$0xff]
        %v524 = vld [vmem:[%s0 + $0x1] sm:$0xff]
        %v525 = vld [vmem:[%s0 + $0x11] sm:$0xff]
        %v526 = vld [vmem:[%s0 + $0x21] sm:$0xff]
        %v527 = vld [vmem:[%s0 + $0x31] sm:$0xff]
        %v528 = vld [vmem:[%s0 + $0x41] sm:$0xff]
        %v529 = vld [vmem:[%s0 + $0x51] sm:$0xff]
        %v530 = vld [vmem:[%s0 + $0x61] sm:$0xff]
        %v531 = vld [vmem:[%s0 + $0x71] sm:$0xff]
        %v532 = vld [vmem:[%s0 + $0xa1] sm:$0xff]
        %v533 = vld [vmem:[%s0 + $0xb1] sm:$0xff]
        %v534 = vld [vmem:[%s0 + $0xc1] sm:$0xff]
        %v535 = vld [vmem:[%s0 + $0xd1] sm:$0xff]
        %v536 = vld [vmem:[%s0 + $0xe1] sm:$0xff]
        %v537 = vld [vmem:[%s0 + $0xf1] sm:$0xff]
        %v538 = vld [vmem:[%s0 + $0x101] sm:$0xff]
        %v539 = vld [vmem:[%s0 + $0x111] sm:$0xff]
        %s540 = scalar_lea.vmem %s461, 128 [#allocation2]
        %v541 = vld [vmem:[%s540] sm:$0xff]
        %v542 = vld [vmem:[%s540 + $0x8] sm:$0xff]
        %v543 = vld [vmem:[%s540 + $0x10] sm:$0xff]
        %v544 = vld [vmem:[%s540 + $0x18] sm:$0xff]
        %v545 = vld [vmem:[%s540 + $0x20] sm:$0xff]
        %v546 = vld [vmem:[%s540 + $0x28] sm:$0xff]
        %v547 = vld [vmem:[%s540 + $0x30] sm:$0xff]
        %v548 = vld [vmem:[%s540 + $0x38] sm:$0xff]
        %v549 = vld [vmem:[%s540 + $0x40] sm:$0xff]
        %v550 = vld [vmem:[%s540 + $0x48] sm:$0xff]
        %v551 = vld [vmem:[%s540 + $0x50] sm:$0xff]
        %v552 = vld [vmem:[%s540 + $0x58] sm:$0xff]
        %v553 = vld [vmem:[%s540 + $0x60] sm:$0xff]
        %v554 = vld [vmem:[%s540 + $0x68] sm:$0xff]
        %v555 = vld [vmem:[%s540 + $0x70] sm:$0xff]
        %v556 = vld [vmem:[%s540 + $0x78] sm:$0xff]
        %vm557 = vcmask 523264
        %v559 = vsel %vm557, %v524, 0
        %v562 = vsel %vm557, %v525, 0
        %v565 = vsel %vm557, %v526, 0
        %v568 = vsel %vm557, %v527, 0
        %v571 = vsel %vm557, %v528, 0
        %v574 = vsel %vm557, %v529, 0
        %v577 = vsel %vm557, %v530, 0
        %v580 = vsel %vm557, %v531, 0
        %v583 = vsel %vm557, %v532, 0
        %v586 = vsel %vm557, %v533, 0
        %v589 = vsel %vm557, %v534, 0
        %v592 = vsel %vm557, %v535, 0
        %v595 = vsel %vm557, %v536, 0
        %v598 = vsel %vm557, %v537, 0
        %v601 = vsel %vm557, %v538, 0
        %v604 = vsel %vm557, %v539, 0
        %606 = vmatpush.msra.mxu0 0.0
        %607 = vmatpush.msra.mxu0 0.0
        %608 = vmatpush.msra.mxu0 0.0
        %609 = vmatpush.msra.mxu0 0.0
        %610 = vmatpush.msra.mxu0 0.0
        %611 = vmatpush.msra.mxu0 0.0
        %612 = vmatpush.msra.mxu0 0.0
        %613 = vmatpush.msra.mxu0 0.0
        %614 = vmatpush.msra.mxu0 %v555
        %615 = vmatpush.msra.mxu0 %v553
        %616 = vmatpush.msra.mxu0 %v551
        %617 = vmatpush.msra.mxu0 %v549
        %618 = vmatpush.msra.mxu0 %v547
        %619 = vmatpush.msra.mxu0 %v545
        %620 = vmatpush.msra.mxu0 %v543
        %621 = vmatpush.msra.mxu0 %v541
        %622 = vmatmul.f32.gmra.mxu0 %v559
        %v623 = vpop.f32.mrf.mxu0
        %v624 = vadd.f32 0.0, %v623
        %625 = vmatmul.f32.gmra.mxu0 %v562
        %v626 = vpop.f32.mrf.mxu0
        %v627 = vadd.f32 0.0, %v626
        %628 = vmatmul.f32.gmra.mxu0 %v565
        %v629 = vpop.f32.mrf.mxu0
        %v630 = vadd.f32 0.0, %v629
        %631 = vmatmul.f32.gmra.mxu0 %v568
        %v632 = vpop.f32.mrf.mxu0
        %v633 = vadd.f32 0.0, %v632
        %634 = vmatmul.f32.gmra.mxu0 %v571
        %v635 = vpop.f32.mrf.mxu0
        %v636 = vadd.f32 0.0, %v635
        %637 = vmatmul.f32.gmra.mxu0 %v574
        %v638 = vpop.f32.mrf.mxu0
        %v639 = vadd.f32 0.0, %v638
        %640 = vmatmul.f32.gmra.mxu0 %v577
        %v641 = vpop.f32.mrf.mxu0
        %v642 = vadd.f32 0.0, %v641
        %643 = vmatmul.f32.gmra.mxu0 %v580
        %v644 = vpop.f32.mrf.mxu0
        %v645 = vadd.f32 0.0, %v644
        %646 = vmatmul.f32.gmra.mxu0 %v583
        %v647 = vpop.f32.mrf.mxu0
        %v648 = vadd.f32 0.0, %v647
        %649 = vmatmul.f32.gmra.mxu0 %v586
        %v650 = vpop.f32.mrf.mxu0
        %v651 = vadd.f32 0.0, %v650
        %652 = vmatmul.f32.gmra.mxu0 %v589
        %v653 = vpop.f32.mrf.mxu0
        %v654 = vadd.f32 0.0, %v653
        %655 = vmatmul.f32.gmra.mxu0 %v592
        %v656 = vpop.f32.mrf.mxu0
        %v657 = vadd.f32 0.0, %v656
        %658 = vmatmul.f32.gmra.mxu0 %v595
        %v659 = vpop.f32.mrf.mxu0
        %v660 = vadd.f32 0.0, %v659
        %661 = vmatmul.f32.gmra.mxu0 %v598
        %v662 = vpop.f32.mrf.mxu0
        %v663 = vadd.f32 0.0, %v662
        %664 = vmatmul.f32.gmra.mxu0 %v601
        %v665 = vpop.f32.mrf.mxu0
        %v666 = vadd.f32 0.0, %v665
        %667 = vmatmul.f32.gmra.mxu0 %v604
        %v668 = vpop.f32.mrf.mxu0
        %v669 = vadd.f32 0.0, %v668
        %670 = vdwg.mxu0
        %671 = vmatpush.msra.mxu0 0.0
        %672 = vmatpush.msra.mxu0 0.0
        %673 = vmatpush.msra.mxu0 0.0
        %674 = vmatpush.msra.mxu0 0.0
        %675 = vmatpush.msra.mxu0 0.0
        %676 = vmatpush.msra.mxu0 0.0
        %677 = vmatpush.msra.mxu0 0.0
        %678 = vmatpush.msra.mxu0 0.0
        %679 = vmatpush.msra.mxu0 %v556
        %680 = vmatpush.msra.mxu0 %v554
        %681 = vmatpush.msra.mxu0 %v552
        %682 = vmatpush.msra.mxu0 %v550
        %683 = vmatpush.msra.mxu0 %v548
        %684 = vmatpush.msra.mxu0 %v546
        %685 = vmatpush.msra.mxu0 %v544
        %686 = vmatpush.msra.mxu0 %v542
        %687 = vmatmul.f32.gmra.mxu0 %v559
        %v688 = vpop.f32.mrf.mxu0
        %v689 = vadd.f32 0.0, %v688
        %690 = vmatmul.f32.gmra.mxu0 %v562
        %v691 = vpop.f32.mrf.mxu0
        %v692 = vadd.f32 0.0, %v691
        %693 = vmatmul.f32.gmra.mxu0 %v565
        %v694 = vpop.f32.mrf.mxu0
        %v695 = vadd.f32 0.0, %v694
        %696 = vmatmul.f32.gmra.mxu0 %v568
        %v697 = vpop.f32.mrf.mxu0
        %v698 = vadd.f32 0.0, %v697
        %699 = vmatmul.f32.gmra.mxu0 %v571
        %v700 = vpop.f32.mrf.mxu0
        %v701 = vadd.f32 0.0, %v700
        %702 = vmatmul.f32.gmra.mxu0 %v574
        %v703 = vpop.f32.mrf.mxu0
        %v704 = vadd.f32 0.0, %v703
        %705 = vmatmul.f32.gmra.mxu0 %v577
        %v706 = vpop.f32.mrf.mxu0
        %v707 = vadd.f32 0.0, %v706
        %708 = vmatmul.f32.gmra.mxu0 %v580
        %v709 = vpop.f32.mrf.mxu0
        %v710 = vadd.f32 0.0, %v709
        %711 = vmatmul.f32.gmra.mxu0 %v583
        %v712 = vpop.f32.mrf.mxu0
        %v713 = vadd.f32 0.0, %v712
        %714 = vmatmul.f32.gmra.mxu0 %v586
        %v715 = vpop.f32.mrf.mxu0
        %v716 = vadd.f32 0.0, %v715
        %717 = vmatmul.f32.gmra.mxu0 %v589
        %v718 = vpop.f32.mrf.mxu0
        %v719 = vadd.f32 0.0, %v718
        %720 = vmatmul.f32.gmra.mxu0 %v592
        %v721 = vpop.f32.mrf.mxu0
        %v722 = vadd.f32 0.0, %v721
        %723 = vmatmul.f32.gmra.mxu0 %v595
        %v724 = vpop.f32.mrf.mxu0
        %v725 = vadd.f32 0.0, %v724
        %726 = vmatmul.f32.gmra.mxu0 %v598
        %v727 = vpop.f32.mrf.mxu0
        %v728 = vadd.f32 0.0, %v727
        %729 = vmatmul.f32.gmra.mxu0 %v601
        %v730 = vpop.f32.mrf.mxu0
        %v731 = vadd.f32 0.0, %v730
        %732 = vmatmul.f32.gmra.mxu0 %v604
        %v733 = vpop.f32.mrf.mxu0
        %v734 = vadd.f32 0.0, %v733
        %735 = vdwg.mxu0
        %v737 = vsel %vm557, %v492, 0
        %v740 = vsel %vm557, %v493, 0
        %v743 = vsel %vm557, %v494, 0
        %v746 = vsel %vm557, %v495, 0
        %v749 = vsel %vm557, %v496, 0
        %v752 = vsel %vm557, %v497, 0
        %v755 = vsel %vm557, %v498, 0
        %v758 = vsel %vm557, %v499, 0
        %v761 = vsel %vm557, %v500, 0
        %v764 = vsel %vm557, %v501, 0
        %v767 = vsel %vm557, %v502, 0
        %v770 = vsel %vm557, %v503, 0
        %v773 = vsel %vm557, %v504, 0
        %v776 = vsel %vm557, %v505, 0
        %v779 = vsel %vm557, %v506, 0
        %v782 = vsel %vm557, %v507, 0
        %784 = vmatpush.msra.mxu0 0.0
        %785 = vmatpush.msra.mxu0 0.0
        %786 = vmatpush.msra.mxu0 0.0
        %787 = vmatpush.msra.mxu0 0.0
        %788 = vmatpush.msra.mxu0 0.0
        %789 = vmatpush.msra.mxu0 0.0
        %790 = vmatpush.msra.mxu0 0.0
        %791 = vmatpush.msra.mxu0 0.0
        %792 = vmatpush.msra.mxu0 %v522
        %793 = vmatpush.msra.mxu0 %v520
        %794 = vmatpush.msra.mxu0 %v518
        %795 = vmatpush.msra.mxu0 %v516
        %796 = vmatpush.msra.mxu0 %v514
        %797 = vmatpush.msra.mxu0 %v512
        %798 = vmatpush.msra.mxu0 %v510
        %799 = vmatpush.msra.mxu0 %v508
        %800 = vmatmul.f32.gmra.mxu0 %v737
        %v801 = vpop.f32.mrf.mxu0
        %v802 = vadd.f32 %v624, %v801
        %803 = vmatmul.f32.gmra.mxu0 %v740
        %v804 = vpop.f32.mrf.mxu0
        %v805 = vadd.f32 %v627, %v804
        %806 = vmatmul.f32.gmra.mxu0 %v743
        %v807 = vpop.f32.mrf.mxu0
        %v808 = vadd.f32 %v630, %v807
        %809 = vmatmul.f32.gmra.mxu0 %v746
        %v810 = vpop.f32.mrf.mxu0
        %v811 = vadd.f32 %v633, %v810
        %812 = vmatmul.f32.gmra.mxu0 %v749
        %v813 = vpop.f32.mrf.mxu0
        %v814 = vadd.f32 %v636, %v813
        %815 = vmatmul.f32.gmra.mxu0 %v752
        %v816 = vpop.f32.mrf.mxu0
        %v817 = vadd.f32 %v639, %v816
        %818 = vmatmul.f32.gmra.mxu0 %v755
        %v819 = vpop.f32.mrf.mxu0
        %v820 = vadd.f32 %v642, %v819
        %821 = vmatmul.f32.gmra.mxu0 %v758
        %v822 = vpop.f32.mrf.mxu0
        %v823 = vadd.f32 %v645, %v822
        %824 = vmatmul.f32.gmra.mxu0 %v761
        %v825 = vpop.f32.mrf.mxu0
        %v826 = vadd.f32 %v648, %v825
        %827 = vmatmul.f32.gmra.mxu0 %v764
        %v828 = vpop.f32.mrf.mxu0
        %v829 = vadd.f32 %v651, %v828
        %830 = vmatmul.f32.gmra.mxu0 %v767
        %v831 = vpop.f32.mrf.mxu0
        %v832 = vadd.f32 %v654, %v831
        %833 = vmatmul.f32.gmra.mxu0 %v770
        %v834 = vpop.f32.mrf.mxu0
        %v835 = vadd.f32 %v657, %v834
        %836 = vmatmul.f32.gmra.mxu0 %v773
        %v837 = vpop.f32.mrf.mxu0
        %v838 = vadd.f32 %v660, %v837
        %839 = vmatmul.f32.gmra.mxu0 %v776
        %v840 = vpop.f32.mrf.mxu0
        %v841 = vadd.f32 %v663, %v840
        %842 = vmatmul.f32.gmra.mxu0 %v779
        %v843 = vpop.f32.mrf.mxu0
        %v844 = vadd.f32 %v666, %v843
        %845 = vmatmul.f32.gmra.mxu0 %v782
        %v846 = vpop.f32.mrf.mxu0
        %v847 = vadd.f32 %v669, %v846
        %848 = vdwg.mxu0
        %849 = vmatpush.msra.mxu0 0.0
        %850 = vmatpush.msra.mxu0 0.0
        %851 = vmatpush.msra.mxu0 0.0
        %852 = vmatpush.msra.mxu0 0.0
        %853 = vmatpush.msra.mxu0 0.0
        %854 = vmatpush.msra.mxu0 0.0
        %855 = vmatpush.msra.mxu0 0.0
        %856 = vmatpush.msra.mxu0 0.0
        %857 = vmatpush.msra.mxu0 %v523
        %858 = vmatpush.msra.mxu0 %v521
        %859 = vmatpush.msra.mxu0 %v519
        %860 = vmatpush.msra.mxu0 %v517
        %861 = vmatpush.msra.mxu0 %v515
        %862 = vmatpush.msra.mxu0 %v513
        %863 = vmatpush.msra.mxu0 %v511
        %864 = vmatpush.msra.mxu0 %v509
        %865 = vmatmul.f32.gmra.mxu0 %v737
        %v866 = vpop.f32.mrf.mxu0
        %v867 = vadd.f32 %v689, %v866
        %868 = vmatmul.f32.gmra.mxu0 %v740
        %v869 = vpop.f32.mrf.mxu0
        %v870 = vadd.f32 %v692, %v869
        %871 = vmatmul.f32.gmra.mxu0 %v743
        %v872 = vpop.f32.mrf.mxu0
        %v873 = vadd.f32 %v695, %v872
        %874 = vmatmul.f32.gmra.mxu0 %v746
        %v875 = vpop.f32.mrf.mxu0
        %v876 = vadd.f32 %v698, %v875
        %877 = vmatmul.f32.gmra.mxu0 %v749
        %v878 = vpop.f32.mrf.mxu0
        %v879 = vadd.f32 %v701, %v878
        %880 = vmatmul.f32.gmra.mxu0 %v752
        %v881 = vpop.f32.mrf.mxu0
        %v882 = vadd.f32 %v704, %v881
        %883 = vmatmul.f32.gmra.mxu0 %v755
        %v884 = vpop.f32.mrf.mxu0
        %v885 = vadd.f32 %v707, %v884
        %886 = vmatmul.f32.gmra.mxu0 %v758
        %v887 = vpop.f32.mrf.mxu0
        %v888 = vadd.f32 %v710, %v887
        %889 = vmatmul.f32.gmra.mxu0 %v761
        %v890 = vpop.f32.mrf.mxu0
        %v891 = vadd.f32 %v713, %v890
        %892 = vmatmul.f32.gmra.mxu0 %v764
        %v893 = vpop.f32.mrf.mxu0
        %v894 = vadd.f32 %v716, %v893
        %895 = vmatmul.f32.gmra.mxu0 %v767
        %v896 = vpop.f32.mrf.mxu0
        %v897 = vadd.f32 %v719, %v896
        %898 = vmatmul.f32.gmra.mxu0 %v770
        %v899 = vpop.f32.mrf.mxu0
        %v900 = vadd.f32 %v722, %v899
        %901 = vmatmul.f32.gmra.mxu0 %v773
        %v902 = vpop.f32.mrf.mxu0
        %v903 = vadd.f32 %v725, %v902
        %904 = vmatmul.f32.gmra.mxu0 %v776
        %v905 = vpop.f32.mrf.mxu0
        %v906 = vadd.f32 %v728, %v905
        %907 = vmatmul.f32.gmra.mxu0 %v779
        %v908 = vpop.f32.mrf.mxu0
        %v909 = vadd.f32 %v731, %v908
        %910 = vmatmul.f32.gmra.mxu0 %v782
        %v911 = vpop.f32.mrf.mxu0
        %v912 = vadd.f32 %v734, %v911
        %913 = vdwg.mxu0
        %v914 = vld [vmem:[%s0 + $0x2] sm:$0xff]
        %v915 = vld [vmem:[%s0 + $0x12] sm:$0xff]
        %v916 = vld [vmem:[%s0 + $0x22] sm:$0xff]
        %v917 = vld [vmem:[%s0 + $0x32] sm:$0xff]
        %v918 = vld [vmem:[%s0 + $0x42] sm:$0xff]
        %v919 = vld [vmem:[%s0 + $0x52] sm:$0xff]
        %v920 = vld [vmem:[%s0 + $0x62] sm:$0xff]
        %v921 = vld [vmem:[%s0 + $0x72] sm:$0xff]
        %v922 = vld [vmem:[%s0 + $0xa2] sm:$0xff]
        %v923 = vld [vmem:[%s0 + $0xb2] sm:$0xff]
        %v924 = vld [vmem:[%s0 + $0xc2] sm:$0xff]
        %v925 = vld [vmem:[%s0 + $0xd2] sm:$0xff]
        %v926 = vld [vmem:[%s0 + $0xe2] sm:$0xff]
        %v927 = vld [vmem:[%s0 + $0xf2] sm:$0xff]
        %v928 = vld [vmem:[%s0 + $0x102] sm:$0xff]
        %v929 = vld [vmem:[%s0 + $0x112] sm:$0xff]
        %s930 = scalar_lea.vmem %s461, 256 [#allocation2]
        %v931 = vld [vmem:[%s930] sm:$0xff]
        %v932 = vld [vmem:[%s930 + $0x8] sm:$0xff]
        %v933 = vld [vmem:[%s930 + $0x10] sm:$0xff]
        %v934 = vld [vmem:[%s930 + $0x18] sm:$0xff]
        %v935 = vld [vmem:[%s930 + $0x20] sm:$0xff]
        %v936 = vld [vmem:[%s930 + $0x28] sm:$0xff]
        %v937 = vld [vmem:[%s930 + $0x30] sm:$0xff]
        %v938 = vld [vmem:[%s930 + $0x38] sm:$0xff]
        %v939 = vld [vmem:[%s930 + $0x40] sm:$0xff]
        %v940 = vld [vmem:[%s930 + $0x48] sm:$0xff]
        %v941 = vld [vmem:[%s930 + $0x50] sm:$0xff]
        %v942 = vld [vmem:[%s930 + $0x58] sm:$0xff]
        %v943 = vld [vmem:[%s930 + $0x60] sm:$0xff]
        %v944 = vld [vmem:[%s930 + $0x68] sm:$0xff]
        %v945 = vld [vmem:[%s930 + $0x70] sm:$0xff]
        %v946 = vld [vmem:[%s930 + $0x78] sm:$0xff]
        %v948 = vsel %vm557, %v914, 0
        %v951 = vsel %vm557, %v915, 0
        %v954 = vsel %vm557, %v916, 0
        %v957 = vsel %vm557, %v917, 0
        %v960 = vsel %vm557, %v918, 0
        %v963 = vsel %vm557, %v919, 0
        %v966 = vsel %vm557, %v920, 0
        %v969 = vsel %vm557, %v921, 0
        %v972 = vsel %vm557, %v922, 0
        %v975 = vsel %vm557, %v923, 0
        %v978 = vsel %vm557, %v924, 0
        %v981 = vsel %vm557, %v925, 0
        %v984 = vsel %vm557, %v926, 0
        %v987 = vsel %vm557, %v927, 0
        %v990 = vsel %vm557, %v928, 0
        %v993 = vsel %vm557, %v929, 0
        %995 = vmatpush.msra.mxu0 0.0
        %996 = vmatpush.msra.mxu0 0.0
        %997 = vmatpush.msra.mxu0 0.0
        %998 = vmatpush.msra.mxu0 0.0
        %999 = vmatpush.msra.mxu0 0.0
        %1000 = vmatpush.msra.mxu0 0.0
        %1001 = vmatpush.msra.mxu0 0.0
        %1002 = vmatpush.msra.mxu0 0.0
        %1003 = vmatpush.msra.mxu0 %v945
        %1004 = vmatpush.msra.mxu0 %v943
        %1005 = vmatpush.msra.mxu0 %v941
        %1006 = vmatpush.msra.mxu0 %v939
        %1007 = vmatpush.msra.mxu0 %v937
        %1008 = vmatpush.msra.mxu0 %v935
        %1009 = vmatpush.msra.mxu0 %v933
        %1010 = vmatpush.msra.mxu0 %v931
        %1011 = vmatmul.f32.gmra.mxu0 %v948
        %v1012 = vpop.f32.mrf.mxu0
        %v1013 = vadd.f32 0.0, %v1012
        %1014 = vmatmul.f32.gmra.mxu0 %v951
        %v1015 = vpop.f32.mrf.mxu0
        %v1016 = vadd.f32 0.0, %v1015
        %1017 = vmatmul.f32.gmra.mxu0 %v954
        %v1018 = vpop.f32.mrf.mxu0
        %v1019 = vadd.f32 0.0, %v1018
        %1020 = vmatmul.f32.gmra.mxu0 %v957
        %v1021 = vpop.f32.mrf.mxu0
        %v1022 = vadd.f32 0.0, %v1021
        %1023 = vmatmul.f32.gmra.mxu0 %v960
        %v1024 = vpop.f32.mrf.mxu0
        %v1025 = vadd.f32 0.0, %v1024
        %1026 = vmatmul.f32.gmra.mxu0 %v963
        %v1027 = vpop.f32.mrf.mxu0
        %v1028 = vadd.f32 0.0, %v1027
        %1029 = vmatmul.f32.gmra.mxu0 %v966
        %v1030 = vpop.f32.mrf.mxu0
        %v1031 = vadd.f32 0.0, %v1030
        %1032 = vmatmul.f32.gmra.mxu0 %v969
        %v1033 = vpop.f32.mrf.mxu0
        %v1034 = vadd.f32 0.0, %v1033
        %1035 = vmatmul.f32.gmra.mxu0 %v972
        %v1036 = vpop.f32.mrf.mxu0
        %v1037 = vadd.f32 0.0, %v1036
        %1038 = vmatmul.f32.gmra.mxu0 %v975
        %v1039 = vpop.f32.mrf.mxu0
        %v1040 = vadd.f32 0.0, %v1039
        %1041 = vmatmul.f32.gmra.mxu0 %v978
        %v1042 = vpop.f32.mrf.mxu0
        %v1043 = vadd.f32 0.0, %v1042
        %1044 = vmatmul.f32.gmra.mxu0 %v981
        %v1045 = vpop.f32.mrf.mxu0
        %v1046 = vadd.f32 0.0, %v1045
        %1047 = vmatmul.f32.gmra.mxu0 %v984
        %v1048 = vpop.f32.mrf.mxu0
        %v1049 = vadd.f32 0.0, %v1048
        %1050 = vmatmul.f32.gmra.mxu0 %v987
        %v1051 = vpop.f32.mrf.mxu0
        %v1052 = vadd.f32 0.0, %v1051
        %1053 = vmatmul.f32.gmra.mxu0 %v990
        %v1054 = vpop.f32.mrf.mxu0
        %v1055 = vadd.f32 0.0, %v1054
        %1056 = vmatmul.f32.gmra.mxu0 %v993
        %v1057 = vpop.f32.mrf.mxu0
        %v1058 = vadd.f32 0.0, %v1057
        %1059 = vdwg.mxu0
        %1060 = vmatpush.msra.mxu0 0.0
        %1061 = vmatpush.msra.mxu0 0.0
        %1062 = vmatpush.msra.mxu0 0.0
        %1063 = vmatpush.msra.mxu0 0.0
        %1064 = vmatpush.msra.mxu0 0.0
        %1065 = vmatpush.msra.mxu0 0.0
        %1066 = vmatpush.msra.mxu0 0.0
        %1067 = vmatpush.msra.mxu0 0.0
        %1068 = vmatpush.msra.mxu0 %v946
        %1069 = vmatpush.msra.mxu0 %v944
        %1070 = vmatpush.msra.mxu0 %v942
        %1071 = vmatpush.msra.mxu0 %v940
        %1072 = vmatpush.msra.mxu0 %v938
        %1073 = vmatpush.msra.mxu0 %v936
        %1074 = vmatpush.msra.mxu0 %v934
        %1075 = vmatpush.msra.mxu0 %v932
        %1076 = vmatmul.f32.gmra.mxu0 %v948
        %v1077 = vpop.f32.mrf.mxu0
        %v1078 = vadd.f32 0.0, %v1077
        %1079 = vmatmul.f32.gmra.mxu0 %v951
        %v1080 = vpop.f32.mrf.mxu0
        %v1081 = vadd.f32 0.0, %v1080
        %1082 = vmatmul.f32.gmra.mxu0 %v954
        %v1083 = vpop.f32.mrf.mxu0
        %v1084 = vadd.f32 0.0, %v1083
        %1085 = vmatmul.f32.gmra.mxu0 %v957
        %v1086 = vpop.f32.mrf.mxu0
        %v1087 = vadd.f32 0.0, %v1086
        %1088 = vmatmul.f32.gmra.mxu0 %v960
        %v1089 = vpop.f32.mrf.mxu0
        %v1090 = vadd.f32 0.0, %v1089
        %1091 = vmatmul.f32.gmra.mxu0 %v963
        %v1092 = vpop.f32.mrf.mxu0
        %v1093 = vadd.f32 0.0, %v1092
        %1094 = vmatmul.f32.gmra.mxu0 %v966
        %v1095 = vpop.f32.mrf.mxu0
        %v1096 = vadd.f32 0.0, %v1095
        %1097 = vmatmul.f32.gmra.mxu0 %v969
        %v1098 = vpop.f32.mrf.mxu0
        %v1099 = vadd.f32 0.0, %v1098
        %1100 = vmatmul.f32.gmra.mxu0 %v972
        %v1101 = vpop.f32.mrf.mxu0
        %v1102 = vadd.f32 0.0, %v1101
        %1103 = vmatmul.f32.gmra.mxu0 %v975
        %v1104 = vpop.f32.mrf.mxu0
        %v1105 = vadd.f32 0.0, %v1104
        %1106 = vmatmul.f32.gmra.mxu0 %v978
        %v1107 = vpop.f32.mrf.mxu0
        %v1108 = vadd.f32 0.0, %v1107
        %1109 = vmatmul.f32.gmra.mxu0 %v981
        %v1110 = vpop.f32.mrf.mxu0
        %v1111 = vadd.f32 0.0, %v1110
        %1112 = vmatmul.f32.gmra.mxu0 %v984
        %v1113 = vpop.f32.mrf.mxu0
        %v1114 = vadd.f32 0.0, %v1113
        %1115 = vmatmul.f32.gmra.mxu0 %v987
        %v1116 = vpop.f32.mrf.mxu0
        %v1117 = vadd.f32 0.0, %v1116
        %1118 = vmatmul.f32.gmra.mxu0 %v990
        %v1119 = vpop.f32.mrf.mxu0
        %v1120 = vadd.f32 0.0, %v1119
        %1121 = vmatmul.f32.gmra.mxu0 %v993
        %v1122 = vpop.f32.mrf.mxu0
        %v1123 = vadd.f32 0.0, %v1122
        %1124 = vdwg.mxu0
        %v1125 = vadd.f32 %v802, %v1013
        %v1126 = vadd.f32 %v867, %v1078
        %v1127 = vadd.f32 %v805, %v1016
        %v1128 = vadd.f32 %v870, %v1081
        %v1129 = vadd.f32 %v808, %v1019
        %v1130 = vadd.f32 %v873, %v1084
        %v1131 = vadd.f32 %v811, %v1022
        %v1132 = vadd.f32 %v876, %v1087
        %v1133 = vadd.f32 %v814, %v1025
        %v1134 = vadd.f32 %v879, %v1090
        %v1135 = vadd.f32 %v817, %v1028
        %v1136 = vadd.f32 %v882, %v1093
        %v1137 = vadd.f32 %v820, %v1031
        %v1138 = vadd.f32 %v885, %v1096
        %v1139 = vadd.f32 %v823, %v1034
        %v1140 = vadd.f32 %v888, %v1099
        %v1141 = vadd.f32 %v826, %v1037
        %v1142 = vadd.f32 %v891, %v1102
        %v1143 = vadd.f32 %v829, %v1040
        %v1144 = vadd.f32 %v894, %v1105
        %v1145 = vadd.f32 %v832, %v1043
        %v1146 = vadd.f32 %v897, %v1108
        %v1147 = vadd.f32 %v835, %v1046
        %v1148 = vadd.f32 %v900, %v1111
        %v1149 = vadd.f32 %v838, %v1049
        %v1150 = vadd.f32 %v903, %v1114
        %v1151 = vadd.f32 %v841, %v1052
        %v1152 = vadd.f32 %v906, %v1117
        %v1153 = vadd.f32 %v844, %v1055
        %v1154 = vadd.f32 %v909, %v1120
        %v1155 = vadd.f32 %v847, %v1058
        %v1156 = vadd.f32 %v912, %v1123
        %s1157 = scalar_lea.vmem %s0, 16
        %v1158 = vld [vmem:[%s1157] sm:$0xff]
        %v1159 = vld [vmem:[%s1157 + $0x10] sm:$0xff]
        %v1160 = vld [vmem:[%s1157 + $0x20] sm:$0xff]
        %v1161 = vld [vmem:[%s1157 + $0x30] sm:$0xff]
        %v1162 = vld [vmem:[%s1157 + $0x40] sm:$0xff]
        %v1163 = vld [vmem:[%s1157 + $0x50] sm:$0xff]
        %v1164 = vld [vmem:[%s1157 + $0x60] sm:$0xff]
        %v1165 = vld [vmem:[%s1157 + $0x70] sm:$0xff]
        %v1166 = vld [vmem:[%s1157 + $0xa0] sm:$0xff]
        %v1167 = vld [vmem:[%s1157 + $0xb0] sm:$0xff]
        %v1168 = vld [vmem:[%s1157 + $0xc0] sm:$0xff]
        %v1169 = vld [vmem:[%s1157 + $0xd0] sm:$0xff]
        %v1170 = vld [vmem:[%s1157 + $0xe0] sm:$0xff]
        %v1171 = vld [vmem:[%s1157 + $0xf0] sm:$0xff]
        %v1172 = vld [vmem:[%s1157 + $0x100] sm:$0xff]
        %v1173 = vld [vmem:[%s1157 + $0x110] sm:$0xff]
        %s1174 = scalar_lea.vmem %s461, 384 [#allocation2]
        %v1175 = vld [vmem:[%s1174] sm:$0xff]
        %v1176 = vld [vmem:[%s1174 + $0x8] sm:$0xff]
        %v1177 = vld [vmem:[%s1174 + $0x10] sm:$0xff]
        %v1178 = vld [vmem:[%s1174 + $0x18] sm:$0xff]
        %v1179 = vld [vmem:[%s1174 + $0x20] sm:$0xff]
        %v1180 = vld [vmem:[%s1174 + $0x28] sm:$0xff]
        %v1181 = vld [vmem:[%s1174 + $0x30] sm:$0xff]
        %v1182 = vld [vmem:[%s1174 + $0x38] sm:$0xff]
        %v1183 = vld [vmem:[%s1174 + $0x40] sm:$0xff]
        %v1184 = vld [vmem:[%s1174 + $0x48] sm:$0xff]
        %v1185 = vld [vmem:[%s1174 + $0x50] sm:$0xff]
        %v1186 = vld [vmem:[%s1174 + $0x58] sm:$0xff]
        %v1187 = vld [vmem:[%s1174 + $0x60] sm:$0xff]
        %v1188 = vld [vmem:[%s1174 + $0x68] sm:$0xff]
        %v1189 = vld [vmem:[%s1174 + $0x70] sm:$0xff]
        %v1190 = vld [vmem:[%s1174 + $0x78] sm:$0xff]
        %v1192 = vsel %vm557, %v1158, 0
        %v1195 = vsel %vm557, %v1159, 0
        %v1198 = vsel %vm557, %v1160, 0
        %v1201 = vsel %vm557, %v1161, 0
        %v1204 = vsel %vm557, %v1162, 0
        %v1207 = vsel %vm557, %v1163, 0
        %v1210 = vsel %vm557, %v1164, 0
        %v1213 = vsel %vm557, %v1165, 0
        %v1216 = vsel %vm557, %v1166, 0
        %v1219 = vsel %vm557, %v1167, 0
        %v1222 = vsel %vm557, %v1168, 0
        %v1225 = vsel %vm557, %v1169, 0
        %v1228 = vsel %vm557, %v1170, 0
        %v1231 = vsel %vm557, %v1171, 0
        %v1234 = vsel %vm557, %v1172, 0
        %v1237 = vsel %vm557, %v1173, 0
        %1239 = vmatpush.msra.mxu0 0.0
        %1240 = vmatpush.msra.mxu0 0.0
        %1241 = vmatpush.msra.mxu0 0.0
        %1242 = vmatpush.msra.mxu0 0.0
        %1243 = vmatpush.msra.mxu0 0.0
        %1244 = vmatpush.msra.mxu0 0.0
        %1245 = vmatpush.msra.mxu0 0.0
        %1246 = vmatpush.msra.mxu0 0.0
        %1247 = vmatpush.msra.mxu0 %v1189
        %1248 = vmatpush.msra.mxu0 %v1187
        %1249 = vmatpush.msra.mxu0 %v1185
        %1250 = vmatpush.msra.mxu0 %v1183
        %1251 = vmatpush.msra.mxu0 %v1181
        %1252 = vmatpush.msra.mxu0 %v1179
        %1253 = vmatpush.msra.mxu0 %v1177
        %1254 = vmatpush.msra.mxu0 %v1175
        %1255 = vmatmul.f32.gmra.mxu0 %v1192
        %v1256 = vpop.f32.mrf.mxu0
        %v1257 = vadd.f32 0.0, %v1256
        %1258 = vmatmul.f32.gmra.mxu0 %v1195
        %v1259 = vpop.f32.mrf.mxu0
        %v1260 = vadd.f32 0.0, %v1259
        %1261 = vmatmul.f32.gmra.mxu0 %v1198
        %v1262 = vpop.f32.mrf.mxu0
        %v1263 = vadd.f32 0.0, %v1262
        %1264 = vmatmul.f32.gmra.mxu0 %v1201
        %v1265 = vpop.f32.mrf.mxu0
        %v1266 = vadd.f32 0.0, %v1265
        %1267 = vmatmul.f32.gmra.mxu0 %v1204
        %v1268 = vpop.f32.mrf.mxu0
        %v1269 = vadd.f32 0.0, %v1268
        %1270 = vmatmul.f32.gmra.mxu0 %v1207
        %v1271 = vpop.f32.mrf.mxu0
        %v1272 = vadd.f32 0.0, %v1271
        %1273 = vmatmul.f32.gmra.mxu0 %v1210
        %v1274 = vpop.f32.mrf.mxu0
        %v1275 = vadd.f32 0.0, %v1274
        %1276 = vmatmul.f32.gmra.mxu0 %v1213
        %v1277 = vpop.f32.mrf.mxu0
        %v1278 = vadd.f32 0.0, %v1277
        %1279 = vmatmul.f32.gmra.mxu0 %v1216
        %v1280 = vpop.f32.mrf.mxu0
        %v1281 = vadd.f32 0.0, %v1280
        %1282 = vmatmul.f32.gmra.mxu0 %v1219
        %v1283 = vpop.f32.mrf.mxu0
        %v1284 = vadd.f32 0.0, %v1283
        %1285 = vmatmul.f32.gmra.mxu0 %v1222
        %v1286 = vpop.f32.mrf.mxu0
        %v1287 = vadd.f32 0.0, %v1286
        %1288 = vmatmul.f32.gmra.mxu0 %v1225
        %v1289 = vpop.f32.mrf.mxu0
        %v1290 = vadd.f32 0.0, %v1289
        %1291 = vmatmul.f32.gmra.mxu0 %v1228
        %v1292 = vpop.f32.mrf.mxu0
        %v1293 = vadd.f32 0.0, %v1292
        %1294 = vmatmul.f32.gmra.mxu0 %v1231
        %v1295 = vpop.f32.mrf.mxu0
        %v1296 = vadd.f32 0.0, %v1295
        %1297 = vmatmul.f32.gmra.mxu0 %v1234
        %v1298 = vpop.f32.mrf.mxu0
        %v1299 = vadd.f32 0.0, %v1298
        %1300 = vmatmul.f32.gmra.mxu0 %v1237
        %v1301 = vpop.f32.mrf.mxu0
        %v1302 = vadd.f32 0.0, %v1301
        %1303 = vdwg.mxu0
        %1304 = vmatpush.msra.mxu0 0.0
        %1305 = vmatpush.msra.mxu0 0.0
        %1306 = vmatpush.msra.mxu0 0.0
        %1307 = vmatpush.msra.mxu0 0.0
        %1308 = vmatpush.msra.mxu0 0.0
        %1309 = vmatpush.msra.mxu0 0.0
        %1310 = vmatpush.msra.mxu0 0.0
        %1311 = vmatpush.msra.mxu0 0.0
        %1312 = vmatpush.msra.mxu0 %v1190
        %1313 = vmatpush.msra.mxu0 %v1188
        %1314 = vmatpush.msra.mxu0 %v1186
        %1315 = vmatpush.msra.mxu0 %v1184
        %1316 = vmatpush.msra.mxu0 %v1182
        %1317 = vmatpush.msra.mxu0 %v1180
        %1318 = vmatpush.msra.mxu0 %v1178
        %1319 = vmatpush.msra.mxu0 %v1176
        %1320 = vmatmul.f32.gmra.mxu0 %v1192
        %v1321 = vpop.f32.mrf.mxu0
        %v1322 = vadd.f32 0.0, %v1321
        %1323 = vmatmul.f32.gmra.mxu0 %v1195
        %v1324 = vpop.f32.mrf.mxu0
        %v1325 = vadd.f32 0.0, %v1324
        %1326 = vmatmul.f32.gmra.mxu0 %v1198
        %v1327 = vpop.f32.mrf.mxu0
        %v1328 = vadd.f32 0.0, %v1327
        %1329 = vmatmul.f32.gmra.mxu0 %v1201
        %v1330 = vpop.f32.mrf.mxu0
        %v1331 = vadd.f32 0.0, %v1330
        %1332 = vmatmul.f32.gmra.mxu0 %v1204
        %v1333 = vpop.f32.mrf.mxu0
        %v1334 = vadd.f32 0.0, %v1333
        %1335 = vmatmul.f32.gmra.mxu0 %v1207
        %v1336 = vpop.f32.mrf.mxu0
        %v1337 = vadd.f32 0.0, %v1336
        %1338 = vmatmul.f32.gmra.mxu0 %v1210
        %v1339 = vpop.f32.mrf.mxu0
        %v1340 = vadd.f32 0.0, %v1339
        %1341 = vmatmul.f32.gmra.mxu0 %v1213
        %v1342 = vpop.f32.mrf.mxu0
        %v1343 = vadd.f32 0.0, %v1342
        %1344 = vmatmul.f32.gmra.mxu0 %v1216
        %v1345 = vpop.f32.mrf.mxu0
        %v1346 = vadd.f32 0.0, %v1345
        %1347 = vmatmul.f32.gmra.mxu0 %v1219
        %v1348 = vpop.f32.mrf.mxu0
        %v1349 = vadd.f32 0.0, %v1348
        %1350 = vmatmul.f32.gmra.mxu0 %v1222
        %v1351 = vpop.f32.mrf.mxu0
        %v1352 = vadd.f32 0.0, %v1351
        %1353 = vmatmul.f32.gmra.mxu0 %v1225
        %v1354 = vpop.f32.mrf.mxu0
        %v1355 = vadd.f32 0.0, %v1354
        %1356 = vmatmul.f32.gmra.mxu0 %v1228
        %v1357 = vpop.f32.mrf.mxu0
        %v1358 = vadd.f32 0.0, %v1357
        %1359 = vmatmul.f32.gmra.mxu0 %v1231
        %v1360 = vpop.f32.mrf.mxu0
        %v1361 = vadd.f32 0.0, %v1360
        %1362 = vmatmul.f32.gmra.mxu0 %v1234
        %v1363 = vpop.f32.mrf.mxu0
        %v1364 = vadd.f32 0.0, %v1363
        %1365 = vmatmul.f32.gmra.mxu0 %v1237
        %v1366 = vpop.f32.mrf.mxu0
        %v1367 = vadd.f32 0.0, %v1366
        %1368 = vdwg.mxu0
        %v1369 = vadd.f32 %v1125, %v1257
        %v1370 = vadd.f32 %v1126, %v1322
        %v1371 = vadd.f32 %v1127, %v1260
        %v1372 = vadd.f32 %v1128, %v1325
        %v1373 = vadd.f32 %v1129, %v1263
        %v1374 = vadd.f32 %v1130, %v1328
        %v1375 = vadd.f32 %v1131, %v1266
        %v1376 = vadd.f32 %v1132, %v1331
        %v1377 = vadd.f32 %v1133, %v1269
        %v1378 = vadd.f32 %v1134, %v1334
        %v1379 = vadd.f32 %v1135, %v1272
        %v1380 = vadd.f32 %v1136, %v1337
        %v1381 = vadd.f32 %v1137, %v1275
        %v1382 = vadd.f32 %v1138, %v1340
        %v1383 = vadd.f32 %v1139, %v1278
        %v1384 = vadd.f32 %v1140, %v1343
        %v1385 = vadd.f32 %v1141, %v1281
        %v1386 = vadd.f32 %v1142, %v1346
        %v1387 = vadd.f32 %v1143, %v1284
        %v1388 = vadd.f32 %v1144, %v1349
        %v1389 = vadd.f32 %v1145, %v1287
        %v1390 = vadd.f32 %v1146, %v1352
        %v1391 = vadd.f32 %v1147, %v1290
        %v1392 = vadd.f32 %v1148, %v1355
        %v1393 = vadd.f32 %v1149, %v1293
        %v1394 = vadd.f32 %v1150, %v1358
        %v1395 = vadd.f32 %v1151, %v1296
        %v1396 = vadd.f32 %v1152, %v1361
        %v1397 = vadd.f32 %v1153, %v1299
        %v1398 = vadd.f32 %v1154, %v1364
        %v1399 = vadd.f32 %v1155, %v1302
        %v1400 = vadd.f32 %v1156, %v1367
        %v1401 = vld [vmem:[%s1157 + $0x1] sm:$0xff]
        %v1402 = vld [vmem:[%s1157 + $0x11] sm:$0xff]
        %v1403 = vld [vmem:[%s1157 + $0x21] sm:$0xff]
        %v1404 = vld [vmem:[%s1157 + $0x31] sm:$0xff]
        %v1405 = vld [vmem:[%s1157 + $0x41] sm:$0xff]
        %v1406 = vld [vmem:[%s1157 + $0x51] sm:$0xff]
        %v1407 = vld [vmem:[%s1157 + $0x61] sm:$0xff]
        %v1408 = vld [vmem:[%s1157 + $0x71] sm:$0xff]
        %v1409 = vld [vmem:[%s1157 + $0xa1] sm:$0xff]
        %v1410 = vld [vmem:[%s1157 + $0xb1] sm:$0xff]
        %v1411 = vld [vmem:[%s1157 + $0xc1] sm:$0xff]
        %v1412 = vld [vmem:[%s1157 + $0xd1] sm:$0xff]
        %v1413 = vld [vmem:[%s1157 + $0xe1] sm:$0xff]
        %v1414 = vld [vmem:[%s1157 + $0xf1] sm:$0xff]
        %v1415 = vld [vmem:[%s1157 + $0x101] sm:$0xff]
        %v1416 = vld [vmem:[%s1157 + $0x111] sm:$0xff]
        %s1417 = scalar_lea.vmem %s461, 512 [#allocation2]
        %v1418 = vld [vmem:[%s1417] sm:$0xff]
        %v1419 = vld [vmem:[%s1417 + $0x8] sm:$0xff]
        %v1420 = vld [vmem:[%s1417 + $0x10] sm:$0xff]
        %v1421 = vld [vmem:[%s1417 + $0x18] sm:$0xff]
        %v1422 = vld [vmem:[%s1417 + $0x20] sm:$0xff]
        %v1423 = vld [vmem:[%s1417 + $0x28] sm:$0xff]
        %v1424 = vld [vmem:[%s1417 + $0x30] sm:$0xff]
        %v1425 = vld [vmem:[%s1417 + $0x38] sm:$0xff]
        %v1426 = vld [vmem:[%s1417 + $0x40] sm:$0xff]
        %v1427 = vld [vmem:[%s1417 + $0x48] sm:$0xff]
        %v1428 = vld [vmem:[%s1417 + $0x50] sm:$0xff]
        %v1429 = vld [vmem:[%s1417 + $0x58] sm:$0xff]
        %v1430 = vld [vmem:[%s1417 + $0x60] sm:$0xff]
        %v1431 = vld [vmem:[%s1417 + $0x68] sm:$0xff]
        %v1432 = vld [vmem:[%s1417 + $0x70] sm:$0xff]
        %v1433 = vld [vmem:[%s1417 + $0x78] sm:$0xff]
        %v1435 = vsel %vm557, %v1401, 0
        %v1438 = vsel %vm557, %v1402, 0
        %v1441 = vsel %vm557, %v1403, 0
        %v1444 = vsel %vm557, %v1404, 0
        %v1447 = vsel %vm557, %v1405, 0
        %v1450 = vsel %vm557, %v1406, 0
        %v1453 = vsel %vm557, %v1407, 0
        %v1456 = vsel %vm557, %v1408, 0
        %v1459 = vsel %vm557, %v1409, 0
        %v1462 = vsel %vm557, %v1410, 0
        %v1465 = vsel %vm557, %v1411, 0
        %v1468 = vsel %vm557, %v1412, 0
        %v1471 = vsel %vm557, %v1413, 0
        %v1474 = vsel %vm557, %v1414, 0
        %v1477 = vsel %vm557, %v1415, 0
        %v1480 = vsel %vm557, %v1416, 0
        %1482 = vmatpush.msra.mxu0 0.0
        %1483 = vmatpush.msra.mxu0 0.0
        %1484 = vmatpush.msra.mxu0 0.0
        %1485 = vmatpush.msra.mxu0 0.0
        %1486 = vmatpush.msra.mxu0 0.0
        %1487 = vmatpush.msra.mxu0 0.0
        %1488 = vmatpush.msra.mxu0 0.0
        %1489 = vmatpush.msra.mxu0 0.0
        %1490 = vmatpush.msra.mxu0 %v1432
        %1491 = vmatpush.msra.mxu0 %v1430
        %1492 = vmatpush.msra.mxu0 %v1428
        %1493 = vmatpush.msra.mxu0 %v1426
        %1494 = vmatpush.msra.mxu0 %v1424
        %1495 = vmatpush.msra.mxu0 %v1422
        %1496 = vmatpush.msra.mxu0 %v1420
        %1497 = vmatpush.msra.mxu0 %v1418
        %1498 = vmatmul.f32.gmra.mxu0 %v1435
        %v1499 = vpop.f32.mrf.mxu0
        %v1500 = vadd.f32 0.0, %v1499
        %1501 = vmatmul.f32.gmra.mxu0 %v1438
        %v1502 = vpop.f32.mrf.mxu0
        %v1503 = vadd.f32 0.0, %v1502
        %1504 = vmatmul.f32.gmra.mxu0 %v1441
        %v1505 = vpop.f32.mrf.mxu0
        %v1506 = vadd.f32 0.0, %v1505
        %1507 = vmatmul.f32.gmra.mxu0 %v1444
        %v1508 = vpop.f32.mrf.mxu0
        %v1509 = vadd.f32 0.0, %v1508
        %1510 = vmatmul.f32.gmra.mxu0 %v1447
        %v1511 = vpop.f32.mrf.mxu0
        %v1512 = vadd.f32 0.0, %v1511
        %1513 = vmatmul.f32.gmra.mxu0 %v1450
        %v1514 = vpop.f32.mrf.mxu0
        %v1515 = vadd.f32 0.0, %v1514
        %1516 = vmatmul.f32.gmra.mxu0 %v1453
        %v1517 = vpop.f32.mrf.mxu0
        %v1518 = vadd.f32 0.0, %v1517
        %1519 = vmatmul.f32.gmra.mxu0 %v1456
        %v1520 = vpop.f32.mrf.mxu0
        %v1521 = vadd.f32 0.0, %v1520
        %1522 = vmatmul.f32.gmra.mxu0 %v1459
        %v1523 = vpop.f32.mrf.mxu0
        %v1524 = vadd.f32 0.0, %v1523
        %1525 = vmatmul.f32.gmra.mxu0 %v1462
        %v1526 = vpop.f32.mrf.mxu0
        %v1527 = vadd.f32 0.0, %v1526
        %1528 = vmatmul.f32.gmra.mxu0 %v1465
        %v1529 = vpop.f32.mrf.mxu0
        %v1530 = vadd.f32 0.0, %v1529
        %1531 = vmatmul.f32.gmra.mxu0 %v1468
        %v1532 = vpop.f32.mrf.mxu0
        %v1533 = vadd.f32 0.0, %v1532
        %1534 = vmatmul.f32.gmra.mxu0 %v1471
        %v1535 = vpop.f32.mrf.mxu0
        %v1536 = vadd.f32 0.0, %v1535
        %1537 = vmatmul.f32.gmra.mxu0 %v1474
        %v1538 = vpop.f32.mrf.mxu0
        %v1539 = vadd.f32 0.0, %v1538
        %1540 = vmatmul.f32.gmra.mxu0 %v1477
        %v1541 = vpop.f32.mrf.mxu0
        %v1542 = vadd.f32 0.0, %v1541
        %1543 = vmatmul.f32.gmra.mxu0 %v1480
        %v1544 = vpop.f32.mrf.mxu0
        %v1545 = vadd.f32 0.0, %v1544
        %1546 = vdwg.mxu0
        %1547 = vmatpush.msra.mxu0 0.0
        %1548 = vmatpush.msra.mxu0 0.0
        %1549 = vmatpush.msra.mxu0 0.0
        %1550 = vmatpush.msra.mxu0 0.0
        %1551 = vmatpush.msra.mxu0 0.0
        %1552 = vmatpush.msra.mxu0 0.0
        %1553 = vmatpush.msra.mxu0 0.0
        %1554 = vmatpush.msra.mxu0 0.0
        %1555 = vmatpush.msra.mxu0 %v1433
        %1556 = vmatpush.msra.mxu0 %v1431
        %1557 = vmatpush.msra.mxu0 %v1429
        %1558 = vmatpush.msra.mxu0 %v1427
        %1559 = vmatpush.msra.mxu0 %v1425
        %1560 = vmatpush.msra.mxu0 %v1423
        %1561 = vmatpush.msra.mxu0 %v1421
        %1562 = vmatpush.msra.mxu0 %v1419
        %1563 = vmatmul.f32.gmra.mxu0 %v1435
        %v1564 = vpop.f32.mrf.mxu0
        %v1565 = vadd.f32 0.0, %v1564
        %1566 = vmatmul.f32.gmra.mxu0 %v1438
        %v1567 = vpop.f32.mrf.mxu0
        %v1568 = vadd.f32 0.0, %v1567
        %1569 = vmatmul.f32.gmra.mxu0 %v1441
        %v1570 = vpop.f32.mrf.mxu0
        %v1571 = vadd.f32 0.0, %v1570
        %1572 = vmatmul.f32.gmra.mxu0 %v1444
        %v1573 = vpop.f32.mrf.mxu0
        %v1574 = vadd.f32 0.0, %v1573
        %1575 = vmatmul.f32.gmra.mxu0 %v1447
        %v1576 = vpop.f32.mrf.mxu0
        %v1577 = vadd.f32 0.0, %v1576
        %1578 = vmatmul.f32.gmra.mxu0 %v1450
        %v1579 = vpop.f32.mrf.mxu0
        %v1580 = vadd.f32 0.0, %v1579
        %1581 = vmatmul.f32.gmra.mxu0 %v1453
        %v1582 = vpop.f32.mrf.mxu0
        %v1583 = vadd.f32 0.0, %v1582
        %1584 = vmatmul.f32.gmra.mxu0 %v1456
        %v1585 = vpop.f32.mrf.mxu0
        %v1586 = vadd.f32 0.0, %v1585
        %1587 = vmatmul.f32.gmra.mxu0 %v1459
        %v1588 = vpop.f32.mrf.mxu0
        %v1589 = vadd.f32 0.0, %v1588
        %1590 = vmatmul.f32.gmra.mxu0 %v1462
        %v1591 = vpop.f32.mrf.mxu0
        %v1592 = vadd.f32 0.0, %v1591
        %1593 = vmatmul.f32.gmra.mxu0 %v1465
        %v1594 = vpop.f32.mrf.mxu0
        %v1595 = vadd.f32 0.0, %v1594
        %1596 = vmatmul.f32.gmra.mxu0 %v1468
        %v1597 = vpop.f32.mrf.mxu0
        %v1598 = vadd.f32 0.0, %v1597
        %1599 = vmatmul.f32.gmra.mxu0 %v1471
        %v1600 = vpop.f32.mrf.mxu0
        %v1601 = vadd.f32 0.0, %v1600
        %1602 = vmatmul.f32.gmra.mxu0 %v1474
        %v1603 = vpop.f32.mrf.mxu0
        %v1604 = vadd.f32 0.0, %v1603
        %1605 = vmatmul.f32.gmra.mxu0 %v1477
        %v1606 = vpop.f32.mrf.mxu0
        %v1607 = vadd.f32 0.0, %v1606
        %1608 = vmatmul.f32.gmra.mxu0 %v1480
        %v1609 = vpop.f32.mrf.mxu0
        %v1610 = vadd.f32 0.0, %v1609
        %1611 = vdwg.mxu0
        %v1612 = vadd.f32 %v1369, %v1500
        %v1613 = vadd.f32 %v1370, %v1565
        %v1614 = vadd.f32 %v1371, %v1503
        %v1615 = vadd.f32 %v1372, %v1568
        %v1616 = vadd.f32 %v1373, %v1506
        %v1617 = vadd.f32 %v1374, %v1571
        %v1618 = vadd.f32 %v1375, %v1509
        %v1619 = vadd.f32 %v1376, %v1574
        %v1620 = vadd.f32 %v1377, %v1512
        %v1621 = vadd.f32 %v1378, %v1577
        %v1622 = vadd.f32 %v1379, %v1515
        %v1623 = vadd.f32 %v1380, %v1580
        %v1624 = vadd.f32 %v1381, %v1518
        %v1625 = vadd.f32 %v1382, %v1583
        %v1626 = vadd.f32 %v1383, %v1521
        %v1627 = vadd.f32 %v1384, %v1586
        %v1628 = vadd.f32 %v1385, %v1524
        %v1629 = vadd.f32 %v1386, %v1589
        %v1630 = vadd.f32 %v1387, %v1527
        %v1631 = vadd.f32 %v1388, %v1592
        %v1632 = vadd.f32 %v1389, %v1530
        %v1633 = vadd.f32 %v1390, %v1595
        %v1634 = vadd.f32 %v1391, %v1533
        %v1635 = vadd.f32 %v1392, %v1598
        %v1636 = vadd.f32 %v1393, %v1536
        %v1637 = vadd.f32 %v1394, %v1601
        %v1638 = vadd.f32 %v1395, %v1539
        %v1639 = vadd.f32 %v1396, %v1604
        %v1640 = vadd.f32 %v1397, %v1542
        %v1641 = vadd.f32 %v1398, %v1607
        %v1642 = vadd.f32 %v1399, %v1545
        %v1643 = vadd.f32 %v1400, %v1610
        %v1644 = vld [vmem:[%s1157 + $0x2] sm:$0xff]
        %v1645 = vld [vmem:[%s1157 + $0x12] sm:$0xff]
        %v1646 = vld [vmem:[%s1157 + $0x22] sm:$0xff]
        %v1647 = vld [vmem:[%s1157 + $0x32] sm:$0xff]
        %v1648 = vld [vmem:[%s1157 + $0x42] sm:$0xff]
        %v1649 = vld [vmem:[%s1157 + $0x52] sm:$0xff]
        %v1650 = vld [vmem:[%s1157 + $0x62] sm:$0xff]
        %v1651 = vld [vmem:[%s1157 + $0x72] sm:$0xff]
        %v1652 = vld [vmem:[%s1157 + $0xa2] sm:$0xff]
        %v1653 = vld [vmem:[%s1157 + $0xb2] sm:$0xff]
        %v1654 = vld [vmem:[%s1157 + $0xc2] sm:$0xff]
        %v1655 = vld [vmem:[%s1157 + $0xd2] sm:$0xff]
        %v1656 = vld [vmem:[%s1157 + $0xe2] sm:$0xff]
        %v1657 = vld [vmem:[%s1157 + $0xf2] sm:$0xff]
        %v1658 = vld [vmem:[%s1157 + $0x102] sm:$0xff]
        %v1659 = vld [vmem:[%s1157 + $0x112] sm:$0xff]
        %s1660 = scalar_lea.vmem %s461, 640 [#allocation2]
        %v1661 = vld [vmem:[%s1660] sm:$0xff]
        %v1662 = vld [vmem:[%s1660 + $0x8] sm:$0xff]
        %v1663 = vld [vmem:[%s1660 + $0x10] sm:$0xff]
        %v1664 = vld [vmem:[%s1660 + $0x18] sm:$0xff]
        %v1665 = vld [vmem:[%s1660 + $0x20] sm:$0xff]
        %v1666 = vld [vmem:[%s1660 + $0x28] sm:$0xff]
        %v1667 = vld [vmem:[%s1660 + $0x30] sm:$0xff]
        %v1668 = vld [vmem:[%s1660 + $0x38] sm:$0xff]
        %v1669 = vld [vmem:[%s1660 + $0x40] sm:$0xff]
        %v1670 = vld [vmem:[%s1660 + $0x48] sm:$0xff]
        %v1671 = vld [vmem:[%s1660 + $0x50] sm:$0xff]
        %v1672 = vld [vmem:[%s1660 + $0x58] sm:$0xff]
        %v1673 = vld [vmem:[%s1660 + $0x60] sm:$0xff]
        %v1674 = vld [vmem:[%s1660 + $0x68] sm:$0xff]
        %v1675 = vld [vmem:[%s1660 + $0x70] sm:$0xff]
        %v1676 = vld [vmem:[%s1660 + $0x78] sm:$0xff]
        %v1678 = vsel %vm557, %v1644, 0
        %v1681 = vsel %vm557, %v1645, 0
        %v1684 = vsel %vm557, %v1646, 0
        %v1687 = vsel %vm557, %v1647, 0
        %v1690 = vsel %vm557, %v1648, 0
        %v1693 = vsel %vm557, %v1649, 0
        %v1696 = vsel %vm557, %v1650, 0
        %v1699 = vsel %vm557, %v1651, 0
        %v1702 = vsel %vm557, %v1652, 0
        %v1705 = vsel %vm557, %v1653, 0
        %v1708 = vsel %vm557, %v1654, 0
        %v1711 = vsel %vm557, %v1655, 0
        %v1714 = vsel %vm557, %v1656, 0
        %v1717 = vsel %vm557, %v1657, 0
        %v1720 = vsel %vm557, %v1658, 0
        %v1723 = vsel %vm557, %v1659, 0
        %1725 = vmatpush.msra.mxu0 0.0
        %1726 = vmatpush.msra.mxu0 0.0
        %1727 = vmatpush.msra.mxu0 0.0
        %1728 = vmatpush.msra.mxu0 0.0
        %1729 = vmatpush.msra.mxu0 0.0
        %1730 = vmatpush.msra.mxu0 0.0
        %1731 = vmatpush.msra.mxu0 0.0
        %1732 = vmatpush.msra.mxu0 0.0
        %1733 = vmatpush.msra.mxu0 %v1675
        %1734 = vmatpush.msra.mxu0 %v1673
        %1735 = vmatpush.msra.mxu0 %v1671
        %1736 = vmatpush.msra.mxu0 %v1669
        %1737 = vmatpush.msra.mxu0 %v1667
        %1738 = vmatpush.msra.mxu0 %v1665
        %1739 = vmatpush.msra.mxu0 %v1663
        %1740 = vmatpush.msra.mxu0 %v1661
        %1741 = vmatmul.f32.gmra.mxu0 %v1678
        %v1742 = vpop.f32.mrf.mxu0
        %v1743 = vadd.f32 0.0, %v1742
        %1744 = vmatmul.f32.gmra.mxu0 %v1681
        %v1745 = vpop.f32.mrf.mxu0
        %v1746 = vadd.f32 0.0, %v1745
        %1747 = vmatmul.f32.gmra.mxu0 %v1684
        %v1748 = vpop.f32.mrf.mxu0
        %v1749 = vadd.f32 0.0, %v1748
        %1750 = vmatmul.f32.gmra.mxu0 %v1687
        %v1751 = vpop.f32.mrf.mxu0
        %v1752 = vadd.f32 0.0, %v1751
        %1753 = vmatmul.f32.gmra.mxu0 %v1690
        %v1754 = vpop.f32.mrf.mxu0
        %v1755 = vadd.f32 0.0, %v1754
        %1756 = vmatmul.f32.gmra.mxu0 %v1693
        %v1757 = vpop.f32.mrf.mxu0
        %v1758 = vadd.f32 0.0, %v1757
        %1759 = vmatmul.f32.gmra.mxu0 %v1696
        %v1760 = vpop.f32.mrf.mxu0
        %v1761 = vadd.f32 0.0, %v1760
        %1762 = vmatmul.f32.gmra.mxu0 %v1699
        %v1763 = vpop.f32.mrf.mxu0
        %v1764 = vadd.f32 0.0, %v1763
        %1765 = vmatmul.f32.gmra.mxu0 %v1702
        %v1766 = vpop.f32.mrf.mxu0
        %v1767 = vadd.f32 0.0, %v1766
        %1768 = vmatmul.f32.gmra.mxu0 %v1705
        %v1769 = vpop.f32.mrf.mxu0
        %v1770 = vadd.f32 0.0, %v1769
        %1771 = vmatmul.f32.gmra.mxu0 %v1708
        %v1772 = vpop.f32.mrf.mxu0
        %v1773 = vadd.f32 0.0, %v1772
        %1774 = vmatmul.f32.gmra.mxu0 %v1711
        %v1775 = vpop.f32.mrf.mxu0
        %v1776 = vadd.f32 0.0, %v1775
        %1777 = vmatmul.f32.gmra.mxu0 %v1714
        %v1778 = vpop.f32.mrf.mxu0
        %v1779 = vadd.f32 0.0, %v1778
        %1780 = vmatmul.f32.gmra.mxu0 %v1717
        %v1781 = vpop.f32.mrf.mxu0
        %v1782 = vadd.f32 0.0, %v1781
        %1783 = vmatmul.f32.gmra.mxu0 %v1720
        %v1784 = vpop.f32.mrf.mxu0
        %v1785 = vadd.f32 0.0, %v1784
        %1786 = vmatmul.f32.gmra.mxu0 %v1723
        %v1787 = vpop.f32.mrf.mxu0
        %v1788 = vadd.f32 0.0, %v1787
        %1789 = vdwg.mxu0
        %1790 = vmatpush.msra.mxu0 0.0
        %1791 = vmatpush.msra.mxu0 0.0
        %1792 = vmatpush.msra.mxu0 0.0
        %1793 = vmatpush.msra.mxu0 0.0
        %1794 = vmatpush.msra.mxu0 0.0
        %1795 = vmatpush.msra.mxu0 0.0
        %1796 = vmatpush.msra.mxu0 0.0
        %1797 = vmatpush.msra.mxu0 0.0
        %1798 = vmatpush.msra.mxu0 %v1676
        %1799 = vmatpush.msra.mxu0 %v1674
        %1800 = vmatpush.msra.mxu0 %v1672
        %1801 = vmatpush.msra.mxu0 %v1670
        %1802 = vmatpush.msra.mxu0 %v1668
        %1803 = vmatpush.msra.mxu0 %v1666
        %1804 = vmatpush.msra.mxu0 %v1664
        %1805 = vmatpush.msra.mxu0 %v1662
        %1806 = vmatmul.f32.gmra.mxu0 %v1678
        %v1807 = vpop.f32.mrf.mxu0
        %v1808 = vadd.f32 0.0, %v1807
        %1809 = vmatmul.f32.gmra.mxu0 %v1681
        %v1810 = vpop.f32.mrf.mxu0
        %v1811 = vadd.f32 0.0, %v1810
        %1812 = vmatmul.f32.gmra.mxu0 %v1684
        %v1813 = vpop.f32.mrf.mxu0
        %v1814 = vadd.f32 0.0, %v1813
        %1815 = vmatmul.f32.gmra.mxu0 %v1687
        %v1816 = vpop.f32.mrf.mxu0
        %v1817 = vadd.f32 0.0, %v1816
        %1818 = vmatmul.f32.gmra.mxu0 %v1690
        %v1819 = vpop.f32.mrf.mxu0
        %v1820 = vadd.f32 0.0, %v1819
        %1821 = vmatmul.f32.gmra.mxu0 %v1693
        %v1822 = vpop.f32.mrf.mxu0
        %v1823 = vadd.f32 0.0, %v1822
        %1824 = vmatmul.f32.gmra.mxu0 %v1696
        %v1825 = vpop.f32.mrf.mxu0
        %v1826 = vadd.f32 0.0, %v1825
        %1827 = vmatmul.f32.gmra.mxu0 %v1699
        %v1828 = vpop.f32.mrf.mxu0
        %v1829 = vadd.f32 0.0, %v1828
        %1830 = vmatmul.f32.gmra.mxu0 %v1702
        %v1831 = vpop.f32.mrf.mxu0
        %v1832 = vadd.f32 0.0, %v1831
        %1833 = vmatmul.f32.gmra.mxu0 %v1705
        %v1834 = vpop.f32.mrf.mxu0
        %v1835 = vadd.f32 0.0, %v1834
        %1836 = vmatmul.f32.gmra.mxu0 %v1708
        %v1837 = vpop.f32.mrf.mxu0
        %v1838 = vadd.f32 0.0, %v1837
        %1839 = vmatmul.f32.gmra.mxu0 %v1711
        %v1840 = vpop.f32.mrf.mxu0
        %v1841 = vadd.f32 0.0, %v1840
        %1842 = vmatmul.f32.gmra.mxu0 %v1714
        %v1843 = vpop.f32.mrf.mxu0
        %v1844 = vadd.f32 0.0, %v1843
        %1845 = vmatmul.f32.gmra.mxu0 %v1717
        %v1846 = vpop.f32.mrf.mxu0
        %v1847 = vadd.f32 0.0, %v1846
        %1848 = vmatmul.f32.gmra.mxu0 %v1720
        %v1849 = vpop.f32.mrf.mxu0
        %v1850 = vadd.f32 0.0, %v1849
        %1851 = vmatmul.f32.gmra.mxu0 %v1723
        %v1852 = vpop.f32.mrf.mxu0
        %v1853 = vadd.f32 0.0, %v1852
        %1854 = vdwg.mxu0
        %v1855 = vadd.f32 %v1612, %v1743
        %v1856 = vadd.f32 %v1613, %v1808
        %v1857 = vadd.f32 %v1614, %v1746
        %v1858 = vadd.f32 %v1615, %v1811
        %v1859 = vadd.f32 %v1616, %v1749
        %v1860 = vadd.f32 %v1617, %v1814
        %v1861 = vadd.f32 %v1618, %v1752
        %v1862 = vadd.f32 %v1619, %v1817
        %v1863 = vadd.f32 %v1620, %v1755
        %v1864 = vadd.f32 %v1621, %v1820
        %v1865 = vadd.f32 %v1622, %v1758
        %v1866 = vadd.f32 %v1623, %v1823
        %v1867 = vadd.f32 %v1624, %v1761
        %v1868 = vadd.f32 %v1625, %v1826
        %v1869 = vadd.f32 %v1626, %v1764
        %v1870 = vadd.f32 %v1627, %v1829
        %v1871 = vadd.f32 %v1628, %v1767
        %v1872 = vadd.f32 %v1629, %v1832
        %v1873 = vadd.f32 %v1630, %v1770
        %v1874 = vadd.f32 %v1631, %v1835
        %v1875 = vadd.f32 %v1632, %v1773
        %v1876 = vadd.f32 %v1633, %v1838
        %v1877 = vadd.f32 %v1634, %v1776
        %v1878 = vadd.f32 %v1635, %v1841
        %v1879 = vadd.f32 %v1636, %v1779
        %v1880 = vadd.f32 %v1637, %v1844
        %v1881 = vadd.f32 %v1638, %v1782
        %v1882 = vadd.f32 %v1639, %v1847
        %v1883 = vadd.f32 %v1640, %v1785
        %v1884 = vadd.f32 %v1641, %v1850
        %v1885 = vadd.f32 %v1642, %v1788
        %v1886 = vadd.f32 %v1643, %v1853
        %s1887 = scalar_lea.vmem %s0, 32
        %v1888 = vld [vmem:[%s1887] sm:$0xff]
        %v1889 = vld [vmem:[%s1887 + $0x10] sm:$0xff]
        %v1890 = vld [vmem:[%s1887 + $0x20] sm:$0xff]
        %v1891 = vld [vmem:[%s1887 + $0x30] sm:$0xff]
        %v1892 = vld [vmem:[%s1887 + $0x40] sm:$0xff]
        %v1893 = vld [vmem:[%s1887 + $0x50] sm:$0xff]
        %v1894 = vld [vmem:[%s1887 + $0x60] sm:$0xff]
        %v1895 = vld [vmem:[%s1887 + $0x70] sm:$0xff]
        %v1896 = vld [vmem:[%s1887 + $0xa0] sm:$0xff]
        %v1897 = vld [vmem:[%s1887 + $0xb0] sm:$0xff]
        %v1898 = vld [vmem:[%s1887 + $0xc0] sm:$0xff]
        %v1899 = vld [vmem:[%s1887 + $0xd0] sm:$0xff]
        %v1900 = vld [vmem:[%s1887 + $0xe0] sm:$0xff]
        %v1901 = vld [vmem:[%s1887 + $0xf0] sm:$0xff]
        %v1902 = vld [vmem:[%s1887 + $0x100] sm:$0xff]
        %v1903 = vld [vmem:[%s1887 + $0x110] sm:$0xff]
        %s1904 = scalar_lea.vmem %s461, 768 [#allocation2]
        %v1905 = vld [vmem:[%s1904] sm:$0xff]
        %v1906 = vld [vmem:[%s1904 + $0x8] sm:$0xff]
        %v1907 = vld [vmem:[%s1904 + $0x10] sm:$0xff]
        %v1908 = vld [vmem:[%s1904 + $0x18] sm:$0xff]
        %v1909 = vld [vmem:[%s1904 + $0x20] sm:$0xff]
        %v1910 = vld [vmem:[%s1904 + $0x28] sm:$0xff]
        %v1911 = vld [vmem:[%s1904 + $0x30] sm:$0xff]
        %v1912 = vld [vmem:[%s1904 + $0x38] sm:$0xff]
        %v1913 = vld [vmem:[%s1904 + $0x40] sm:$0xff]
        %v1914 = vld [vmem:[%s1904 + $0x48] sm:$0xff]
        %v1915 = vld [vmem:[%s1904 + $0x50] sm:$0xff]
        %v1916 = vld [vmem:[%s1904 + $0x58] sm:$0xff]
        %v1917 = vld [vmem:[%s1904 + $0x60] sm:$0xff]
        %v1918 = vld [vmem:[%s1904 + $0x68] sm:$0xff]
        %v1919 = vld [vmem:[%s1904 + $0x70] sm:$0xff]
        %v1920 = vld [vmem:[%s1904 + $0x78] sm:$0xff]
        %v1922 = vsel %vm557, %v1888, 0
        %v1925 = vsel %vm557, %v1889, 0
        %v1928 = vsel %vm557, %v1890, 0
        %v1931 = vsel %vm557, %v1891, 0
        %v1934 = vsel %vm557, %v1892, 0
        %v1937 = vsel %vm557, %v1893, 0
        %v1940 = vsel %vm557, %v1894, 0
        %v1943 = vsel %vm557, %v1895, 0
        %v1946 = vsel %vm557, %v1896, 0
        %v1949 = vsel %vm557, %v1897, 0
        %v1952 = vsel %vm557, %v1898, 0
        %v1955 = vsel %vm557, %v1899, 0
        %v1958 = vsel %vm557, %v1900, 0
        %v1961 = vsel %vm557, %v1901, 0
        %v1964 = vsel %vm557, %v1902, 0
        %v1967 = vsel %vm557, %v1903, 0
        %1969 = vmatpush.msra.mxu0 0.0
        %1970 = vmatpush.msra.mxu0 0.0
        %1971 = vmatpush.msra.mxu0 0.0
        %1972 = vmatpush.msra.mxu0 0.0
        %1973 = vmatpush.msra.mxu0 0.0
        %1974 = vmatpush.msra.mxu0 0.0
        %1975 = vmatpush.msra.mxu0 0.0
        %1976 = vmatpush.msra.mxu0 0.0
        %1977 = vmatpush.msra.mxu0 %v1919
        %1978 = vmatpush.msra.mxu0 %v1917
        %1979 = vmatpush.msra.mxu0 %v1915
        %1980 = vmatpush.msra.mxu0 %v1913
        %1981 = vmatpush.msra.mxu0 %v1911
        %1982 = vmatpush.msra.mxu0 %v1909
        %1983 = vmatpush.msra.mxu0 %v1907
        %1984 = vmatpush.msra.mxu0 %v1905
        %1985 = vmatmul.f32.gmra.mxu0 %v1922
        %v1986 = vpop.f32.mrf.mxu0
        %v1987 = vadd.f32 0.0, %v1986
        %1988 = vmatmul.f32.gmra.mxu0 %v1925
        %v1989 = vpop.f32.mrf.mxu0
        %v1990 = vadd.f32 0.0, %v1989
        %1991 = vmatmul.f32.gmra.mxu0 %v1928
        %v1992 = vpop.f32.mrf.mxu0
        %v1993 = vadd.f32 0.0, %v1992
        %1994 = vmatmul.f32.gmra.mxu0 %v1931
        %v1995 = vpop.f32.mrf.mxu0
        %v1996 = vadd.f32 0.0, %v1995
        %1997 = vmatmul.f32.gmra.mxu0 %v1934
        %v1998 = vpop.f32.mrf.mxu0
        %v1999 = vadd.f32 0.0, %v1998
        %2000 = vmatmul.f32.gmra.mxu0 %v1937
        %v2001 = vpop.f32.mrf.mxu0
        %v2002 = vadd.f32 0.0, %v2001
        %2003 = vmatmul.f32.gmra.mxu0 %v1940
        %v2004 = vpop.f32.mrf.mxu0
        %v2005 = vadd.f32 0.0, %v2004
        %2006 = vmatmul.f32.gmra.mxu0 %v1943
        %v2007 = vpop.f32.mrf.mxu0
        %v2008 = vadd.f32 0.0, %v2007
        %2009 = vmatmul.f32.gmra.mxu0 %v1946
        %v2010 = vpop.f32.mrf.mxu0
        %v2011 = vadd.f32 0.0, %v2010
        %2012 = vmatmul.f32.gmra.mxu0 %v1949
        %v2013 = vpop.f32.mrf.mxu0
        %v2014 = vadd.f32 0.0, %v2013
        %2015 = vmatmul.f32.gmra.mxu0 %v1952
        %v2016 = vpop.f32.mrf.mxu0
        %v2017 = vadd.f32 0.0, %v2016
        %2018 = vmatmul.f32.gmra.mxu0 %v1955
        %v2019 = vpop.f32.mrf.mxu0
        %v2020 = vadd.f32 0.0, %v2019
        %2021 = vmatmul.f32.gmra.mxu0 %v1958
        %v2022 = vpop.f32.mrf.mxu0
        %v2023 = vadd.f32 0.0, %v2022
        %2024 = vmatmul.f32.gmra.mxu0 %v1961
        %v2025 = vpop.f32.mrf.mxu0
        %v2026 = vadd.f32 0.0, %v2025
        %2027 = vmatmul.f32.gmra.mxu0 %v1964
        %v2028 = vpop.f32.mrf.mxu0
        %v2029 = vadd.f32 0.0, %v2028
        %2030 = vmatmul.f32.gmra.mxu0 %v1967
        %v2031 = vpop.f32.mrf.mxu0
        %v2032 = vadd.f32 0.0, %v2031
        %2033 = vdwg.mxu0
        %2034 = vmatpush.msra.mxu0 0.0
        %2035 = vmatpush.msra.mxu0 0.0
        %2036 = vmatpush.msra.mxu0 0.0
        %2037 = vmatpush.msra.mxu0 0.0
        %2038 = vmatpush.msra.mxu0 0.0
        %2039 = vmatpush.msra.mxu0 0.0
        %2040 = vmatpush.msra.mxu0 0.0
        %2041 = vmatpush.msra.mxu0 0.0
        %2042 = vmatpush.msra.mxu0 %v1920
        %2043 = vmatpush.msra.mxu0 %v1918
        %2044 = vmatpush.msra.mxu0 %v1916
        %2045 = vmatpush.msra.mxu0 %v1914
        %2046 = vmatpush.msra.mxu0 %v1912
        %2047 = vmatpush.msra.mxu0 %v1910
        %2048 = vmatpush.msra.mxu0 %v1908
        %2049 = vmatpush.msra.mxu0 %v1906
        %2050 = vmatmul.f32.gmra.mxu0 %v1922
        %v2051 = vpop.f32.mrf.mxu0
        %v2052 = vadd.f32 0.0, %v2051
        %2053 = vmatmul.f32.gmra.mxu0 %v1925
        %v2054 = vpop.f32.mrf.mxu0
        %v2055 = vadd.f32 0.0, %v2054
        %2056 = vmatmul.f32.gmra.mxu0 %v1928
        %v2057 = vpop.f32.mrf.mxu0
        %v2058 = vadd.f32 0.0, %v2057
        %2059 = vmatmul.f32.gmra.mxu0 %v1931
        %v2060 = vpop.f32.mrf.mxu0
        %v2061 = vadd.f32 0.0, %v2060
        %2062 = vmatmul.f32.gmra.mxu0 %v1934
        %v2063 = vpop.f32.mrf.mxu0
        %v2064 = vadd.f32 0.0, %v2063
        %2065 = vmatmul.f32.gmra.mxu0 %v1937
        %v2066 = vpop.f32.mrf.mxu0
        %v2067 = vadd.f32 0.0, %v2066
        %2068 = vmatmul.f32.gmra.mxu0 %v1940
        %v2069 = vpop.f32.mrf.mxu0
        %v2070 = vadd.f32 0.0, %v2069
        %2071 = vmatmul.f32.gmra.mxu0 %v1943
        %v2072 = vpop.f32.mrf.mxu0
        %v2073 = vadd.f32 0.0, %v2072
        %2074 = vmatmul.f32.gmra.mxu0 %v1946
        %v2075 = vpop.f32.mrf.mxu0
        %v2076 = vadd.f32 0.0, %v2075
        %2077 = vmatmul.f32.gmra.mxu0 %v1949
        %v2078 = vpop.f32.mrf.mxu0
        %v2079 = vadd.f32 0.0, %v2078
        %2080 = vmatmul.f32.gmra.mxu0 %v1952
        %v2081 = vpop.f32.mrf.mxu0
        %v2082 = vadd.f32 0.0, %v2081
        %2083 = vmatmul.f32.gmra.mxu0 %v1955
        %v2084 = vpop.f32.mrf.mxu0
        %v2085 = vadd.f32 0.0, %v2084
        %2086 = vmatmul.f32.gmra.mxu0 %v1958
        %v2087 = vpop.f32.mrf.mxu0
        %v2088 = vadd.f32 0.0, %v2087
        %2089 = vmatmul.f32.gmra.mxu0 %v1961
        %v2090 = vpop.f32.mrf.mxu0
        %v2091 = vadd.f32 0.0, %v2090
        %2092 = vmatmul.f32.gmra.mxu0 %v1964
        %v2093 = vpop.f32.mrf.mxu0
        %v2094 = vadd.f32 0.0, %v2093
        %2095 = vmatmul.f32.gmra.mxu0 %v1967
        %v2096 = vpop.f32.mrf.mxu0
        %v2097 = vadd.f32 0.0, %v2096
        %2098 = vdwg.mxu0
        %v2099 = vadd.f32 %v1855, %v1987
        %v2100 = vadd.f32 %v1856, %v2052
        %v2101 = vadd.f32 %v1857, %v1990
        %v2102 = vadd.f32 %v1858, %v2055
        %v2103 = vadd.f32 %v1859, %v1993
        %v2104 = vadd.f32 %v1860, %v2058
        %v2105 = vadd.f32 %v1861, %v1996
        %v2106 = vadd.f32 %v1862, %v2061
        %v2107 = vadd.f32 %v1863, %v1999
        %v2108 = vadd.f32 %v1864, %v2064
        %v2109 = vadd.f32 %v1865, %v2002
        %v2110 = vadd.f32 %v1866, %v2067
        %v2111 = vadd.f32 %v1867, %v2005
        %v2112 = vadd.f32 %v1868, %v2070
        %v2113 = vadd.f32 %v1869, %v2008
        %v2114 = vadd.f32 %v1870, %v2073
        %v2115 = vadd.f32 %v1871, %v2011
        %v2116 = vadd.f32 %v1872, %v2076
        %v2117 = vadd.f32 %v1873, %v2014
        %v2118 = vadd.f32 %v1874, %v2079
        %v2119 = vadd.f32 %v1875, %v2017
        %v2120 = vadd.f32 %v1876, %v2082
        %v2121 = vadd.f32 %v1877, %v2020
        %v2122 = vadd.f32 %v1878, %v2085
        %v2123 = vadd.f32 %v1879, %v2023
        %v2124 = vadd.f32 %v1880, %v2088
        %v2125 = vadd.f32 %v1881, %v2026
        %v2126 = vadd.f32 %v1882, %v2091
        %v2127 = vadd.f32 %v1883, %v2029
        %v2128 = vadd.f32 %v1884, %v2094
        %v2129 = vadd.f32 %v1885, %v2032
        %v2130 = vadd.f32 %v1886, %v2097
        %v2131 = vld [vmem:[%s1887 + $0x1] sm:$0xff]
        %v2132 = vld [vmem:[%s1887 + $0x11] sm:$0xff]
        %v2133 = vld [vmem:[%s1887 + $0x21] sm:$0xff]
        %v2134 = vld [vmem:[%s1887 + $0x31] sm:$0xff]
        %v2135 = vld [vmem:[%s1887 + $0x41] sm:$0xff]
        %v2136 = vld [vmem:[%s1887 + $0x51] sm:$0xff]
        %v2137 = vld [vmem:[%s1887 + $0x61] sm:$0xff]
        %v2138 = vld [vmem:[%s1887 + $0x71] sm:$0xff]
        %v2139 = vld [vmem:[%s1887 + $0xa1] sm:$0xff]
        %v2140 = vld [vmem:[%s1887 + $0xb1] sm:$0xff]
        %v2141 = vld [vmem:[%s1887 + $0xc1] sm:$0xff]
        %v2142 = vld [vmem:[%s1887 + $0xd1] sm:$0xff]
        %v2143 = vld [vmem:[%s1887 + $0xe1] sm:$0xff]
        %v2144 = vld [vmem:[%s1887 + $0xf1] sm:$0xff]
        %v2145 = vld [vmem:[%s1887 + $0x101] sm:$0xff]
        %v2146 = vld [vmem:[%s1887 + $0x111] sm:$0xff]
        %s2147 = scalar_lea.vmem %s461, 896 [#allocation2]
        %v2148 = vld [vmem:[%s2147] sm:$0xff]
        %v2149 = vld [vmem:[%s2147 + $0x8] sm:$0xff]
        %v2150 = vld [vmem:[%s2147 + $0x10] sm:$0xff]
        %v2151 = vld [vmem:[%s2147 + $0x18] sm:$0xff]
        %v2152 = vld [vmem:[%s2147 + $0x20] sm:$0xff]
        %v2153 = vld [vmem:[%s2147 + $0x28] sm:$0xff]
        %v2154 = vld [vmem:[%s2147 + $0x30] sm:$0xff]
        %v2155 = vld [vmem:[%s2147 + $0x38] sm:$0xff]
        %v2156 = vld [vmem:[%s2147 + $0x40] sm:$0xff]
        %v2157 = vld [vmem:[%s2147 + $0x48] sm:$0xff]
        %v2158 = vld [vmem:[%s2147 + $0x50] sm:$0xff]
        %v2159 = vld [vmem:[%s2147 + $0x58] sm:$0xff]
        %v2160 = vld [vmem:[%s2147 + $0x60] sm:$0xff]
        %v2161 = vld [vmem:[%s2147 + $0x68] sm:$0xff]
        %v2162 = vld [vmem:[%s2147 + $0x70] sm:$0xff]
        %v2163 = vld [vmem:[%s2147 + $0x78] sm:$0xff]
        %v2165 = vsel %vm557, %v2131, 0
        %v2168 = vsel %vm557, %v2132, 0
        %v2171 = vsel %vm557, %v2133, 0
        %v2174 = vsel %vm557, %v2134, 0
        %v2177 = vsel %vm557, %v2135, 0
        %v2180 = vsel %vm557, %v2136, 0
        %v2183 = vsel %vm557, %v2137, 0
        %v2186 = vsel %vm557, %v2138, 0
        %v2189 = vsel %vm557, %v2139, 0
        %v2192 = vsel %vm557, %v2140, 0
        %v2195 = vsel %vm557, %v2141, 0
        %v2198 = vsel %vm557, %v2142, 0
        %v2201 = vsel %vm557, %v2143, 0
        %v2204 = vsel %vm557, %v2144, 0
        %v2207 = vsel %vm557, %v2145, 0
        %v2210 = vsel %vm557, %v2146, 0
        %2212 = vmatpush.msra.mxu0 0.0
        %2213 = vmatpush.msra.mxu0 0.0
        %2214 = vmatpush.msra.mxu0 0.0
        %2215 = vmatpush.msra.mxu0 0.0
        %2216 = vmatpush.msra.mxu0 0.0
        %2217 = vmatpush.msra.mxu0 0.0
        %2218 = vmatpush.msra.mxu0 0.0
        %2219 = vmatpush.msra.mxu0 0.0
        %2220 = vmatpush.msra.mxu0 %v2162
        %2221 = vmatpush.msra.mxu0 %v2160
        %2222 = vmatpush.msra.mxu0 %v2158
        %2223 = vmatpush.msra.mxu0 %v2156
        %2224 = vmatpush.msra.mxu0 %v2154
        %2225 = vmatpush.msra.mxu0 %v2152
        %2226 = vmatpush.msra.mxu0 %v2150
        %2227 = vmatpush.msra.mxu0 %v2148
        %2228 = vmatmul.f32.gmra.mxu0 %v2165
        %v2229 = vpop.f32.mrf.mxu0
        %v2230 = vadd.f32 0.0, %v2229
        %2231 = vmatmul.f32.gmra.mxu0 %v2168
        %v2232 = vpop.f32.mrf.mxu0
        %v2233 = vadd.f32 0.0, %v2232
        %2234 = vmatmul.f32.gmra.mxu0 %v2171
        %v2235 = vpop.f32.mrf.mxu0
        %v2236 = vadd.f32 0.0, %v2235
        %2237 = vmatmul.f32.gmra.mxu0 %v2174
        %v2238 = vpop.f32.mrf.mxu0
        %v2239 = vadd.f32 0.0, %v2238
        %2240 = vmatmul.f32.gmra.mxu0 %v2177
        %v2241 = vpop.f32.mrf.mxu0
        %v2242 = vadd.f32 0.0, %v2241
        %2243 = vmatmul.f32.gmra.mxu0 %v2180
        %v2244 = vpop.f32.mrf.mxu0
        %v2245 = vadd.f32 0.0, %v2244
        %2246 = vmatmul.f32.gmra.mxu0 %v2183
        %v2247 = vpop.f32.mrf.mxu0
        %v2248 = vadd.f32 0.0, %v2247
        %2249 = vmatmul.f32.gmra.mxu0 %v2186
        %v2250 = vpop.f32.mrf.mxu0
        %v2251 = vadd.f32 0.0, %v2250
        %2252 = vmatmul.f32.gmra.mxu0 %v2189
        %v2253 = vpop.f32.mrf.mxu0
        %v2254 = vadd.f32 0.0, %v2253
        %2255 = vmatmul.f32.gmra.mxu0 %v2192
        %v2256 = vpop.f32.mrf.mxu0
        %v2257 = vadd.f32 0.0, %v2256
        %2258 = vmatmul.f32.gmra.mxu0 %v2195
        %v2259 = vpop.f32.mrf.mxu0
        %v2260 = vadd.f32 0.0, %v2259
        %2261 = vmatmul.f32.gmra.mxu0 %v2198
        %v2262 = vpop.f32.mrf.mxu0
        %v2263 = vadd.f32 0.0, %v2262
        %2264 = vmatmul.f32.gmra.mxu0 %v2201
        %v2265 = vpop.f32.mrf.mxu0
        %v2266 = vadd.f32 0.0, %v2265
        %2267 = vmatmul.f32.gmra.mxu0 %v2204
        %v2268 = vpop.f32.mrf.mxu0
        %v2269 = vadd.f32 0.0, %v2268
        %2270 = vmatmul.f32.gmra.mxu0 %v2207
        %v2271 = vpop.f32.mrf.mxu0
        %v2272 = vadd.f32 0.0, %v2271
        %2273 = vmatmul.f32.gmra.mxu0 %v2210
        %v2274 = vpop.f32.mrf.mxu0
        %v2275 = vadd.f32 0.0, %v2274
        %2276 = vdwg.mxu0
        %2277 = vmatpush.msra.mxu0 0.0
        %2278 = vmatpush.msra.mxu0 0.0
        %2279 = vmatpush.msra.mxu0 0.0
        %2280 = vmatpush.msra.mxu0 0.0
        %2281 = vmatpush.msra.mxu0 0.0
        %2282 = vmatpush.msra.mxu0 0.0
        %2283 = vmatpush.msra.mxu0 0.0
        %2284 = vmatpush.msra.mxu0 0.0
        %2285 = vmatpush.msra.mxu0 %v2163
        %2286 = vmatpush.msra.mxu0 %v2161
        %2287 = vmatpush.msra.mxu0 %v2159
        %2288 = vmatpush.msra.mxu0 %v2157
        %2289 = vmatpush.msra.mxu0 %v2155
        %2290 = vmatpush.msra.mxu0 %v2153
        %2291 = vmatpush.msra.mxu0 %v2151
        %2292 = vmatpush.msra.mxu0 %v2149
        %2293 = vmatmul.f32.gmra.mxu0 %v2165
        %v2294 = vpop.f32.mrf.mxu0
        %v2295 = vadd.f32 0.0, %v2294
        %2296 = vmatmul.f32.gmra.mxu0 %v2168
        %v2297 = vpop.f32.mrf.mxu0
        %v2298 = vadd.f32 0.0, %v2297
        %2299 = vmatmul.f32.gmra.mxu0 %v2171
        %v2300 = vpop.f32.mrf.mxu0
        %v2301 = vadd.f32 0.0, %v2300
        %2302 = vmatmul.f32.gmra.mxu0 %v2174
        %v2303 = vpop.f32.mrf.mxu0
        %v2304 = vadd.f32 0.0, %v2303
        %2305 = vmatmul.f32.gmra.mxu0 %v2177
        %v2306 = vpop.f32.mrf.mxu0
        %v2307 = vadd.f32 0.0, %v2306
        %2308 = vmatmul.f32.gmra.mxu0 %v2180
        %v2309 = vpop.f32.mrf.mxu0
        %v2310 = vadd.f32 0.0, %v2309
        %2311 = vmatmul.f32.gmra.mxu0 %v2183
        %v2312 = vpop.f32.mrf.mxu0
        %v2313 = vadd.f32 0.0, %v2312
        %2314 = vmatmul.f32.gmra.mxu0 %v2186
        %v2315 = vpop.f32.mrf.mxu0
        %v2316 = vadd.f32 0.0, %v2315
        %2317 = vmatmul.f32.gmra.mxu0 %v2189
        %v2318 = vpop.f32.mrf.mxu0
        %v2319 = vadd.f32 0.0, %v2318
        %2320 = vmatmul.f32.gmra.mxu0 %v2192
        %v2321 = vpop.f32.mrf.mxu0
        %v2322 = vadd.f32 0.0, %v2321
        %2323 = vmatmul.f32.gmra.mxu0 %v2195
        %v2324 = vpop.f32.mrf.mxu0
        %v2325 = vadd.f32 0.0, %v2324
        %2326 = vmatmul.f32.gmra.mxu0 %v2198
        %v2327 = vpop.f32.mrf.mxu0
        %v2328 = vadd.f32 0.0, %v2327
        %2329 = vmatmul.f32.gmra.mxu0 %v2201
        %v2330 = vpop.f32.mrf.mxu0
        %v2331 = vadd.f32 0.0, %v2330
        %2332 = vmatmul.f32.gmra.mxu0 %v2204
        %v2333 = vpop.f32.mrf.mxu0
        %v2334 = vadd.f32 0.0, %v2333
        %2335 = vmatmul.f32.gmra.mxu0 %v2207
        %v2336 = vpop.f32.mrf.mxu0
        %v2337 = vadd.f32 0.0, %v2336
        %2338 = vmatmul.f32.gmra.mxu0 %v2210
        %v2339 = vpop.f32.mrf.mxu0
        %v2340 = vadd.f32 0.0, %v2339
        %2341 = vdwg.mxu0
        %v2342 = vadd.f32 %v2099, %v2230
        %v2343 = vadd.f32 %v2100, %v2295
        %v2344 = vadd.f32 %v2101, %v2233
        %v2345 = vadd.f32 %v2102, %v2298
        %v2346 = vadd.f32 %v2103, %v2236
        %v2347 = vadd.f32 %v2104, %v2301
        %v2348 = vadd.f32 %v2105, %v2239
        %v2349 = vadd.f32 %v2106, %v2304
        %v2350 = vadd.f32 %v2107, %v2242
        %v2351 = vadd.f32 %v2108, %v2307
        %v2352 = vadd.f32 %v2109, %v2245
        %v2353 = vadd.f32 %v2110, %v2310
        %v2354 = vadd.f32 %v2111, %v2248
        %v2355 = vadd.f32 %v2112, %v2313
        %v2356 = vadd.f32 %v2113, %v2251
        %v2357 = vadd.f32 %v2114, %v2316
        %v2358 = vadd.f32 %v2115, %v2254
        %v2359 = vadd.f32 %v2116, %v2319
        %v2360 = vadd.f32 %v2117, %v2257
        %v2361 = vadd.f32 %v2118, %v2322
        %v2362 = vadd.f32 %v2119, %v2260
        %v2363 = vadd.f32 %v2120, %v2325
        %v2364 = vadd.f32 %v2121, %v2263
        %v2365 = vadd.f32 %v2122, %v2328
        %v2366 = vadd.f32 %v2123, %v2266
        %v2367 = vadd.f32 %v2124, %v2331
        %v2368 = vadd.f32 %v2125, %v2269
        %v2369 = vadd.f32 %v2126, %v2334
        %v2370 = vadd.f32 %v2127, %v2272
        %v2371 = vadd.f32 %v2128, %v2337
        %v2372 = vadd.f32 %v2129, %v2275
        %v2373 = vadd.f32 %v2130, %v2340
        %v2374 = vld [vmem:[%s1887 + $0x2] sm:$0xff]
        %v2375 = vld [vmem:[%s1887 + $0x12] sm:$0xff]
        %v2376 = vld [vmem:[%s1887 + $0x22] sm:$0xff]
        %v2377 = vld [vmem:[%s1887 + $0x32] sm:$0xff]
        %v2378 = vld [vmem:[%s1887 + $0x42] sm:$0xff]
        %v2379 = vld [vmem:[%s1887 + $0x52] sm:$0xff]
        %v2380 = vld [vmem:[%s1887 + $0x62] sm:$0xff]
        %v2381 = vld [vmem:[%s1887 + $0x72] sm:$0xff]
        %v2382 = vld [vmem:[%s1887 + $0xa2] sm:$0xff]
        %v2383 = vld [vmem:[%s1887 + $0xb2] sm:$0xff]
        %v2384 = vld [vmem:[%s1887 + $0xc2] sm:$0xff]
        %v2385 = vld [vmem:[%s1887 + $0xd2] sm:$0xff]
        %v2386 = vld [vmem:[%s1887 + $0xe2] sm:$0xff]
        %v2387 = vld [vmem:[%s1887 + $0xf2] sm:$0xff]
        %v2388 = vld [vmem:[%s1887 + $0x102] sm:$0xff]
        %v2389 = vld [vmem:[%s1887 + $0x112] sm:$0xff]
        %s2390 = scalar_lea.vmem %s461, 1024 [#allocation2]
        %v2391 = vld [vmem:[%s2390] sm:$0xff]
        %v2392 = vld [vmem:[%s2390 + $0x8] sm:$0xff]
        %v2393 = vld [vmem:[%s2390 + $0x10] sm:$0xff]
        %v2394 = vld [vmem:[%s2390 + $0x18] sm:$0xff]
        %v2395 = vld [vmem:[%s2390 + $0x20] sm:$0xff]
        %v2396 = vld [vmem:[%s2390 + $0x28] sm:$0xff]
        %v2397 = vld [vmem:[%s2390 + $0x30] sm:$0xff]
        %v2398 = vld [vmem:[%s2390 + $0x38] sm:$0xff]
        %v2399 = vld [vmem:[%s2390 + $0x40] sm:$0xff]
        %v2400 = vld [vmem:[%s2390 + $0x48] sm:$0xff]
        %v2401 = vld [vmem:[%s2390 + $0x50] sm:$0xff]
        %v2402 = vld [vmem:[%s2390 + $0x58] sm:$0xff]
        %v2403 = vld [vmem:[%s2390 + $0x60] sm:$0xff]
        %v2404 = vld [vmem:[%s2390 + $0x68] sm:$0xff]
        %v2405 = vld [vmem:[%s2390 + $0x70] sm:$0xff]
        %v2406 = vld [vmem:[%s2390 + $0x78] sm:$0xff]
        %v2408 = vsel %vm557, %v2374, 0
        %v2411 = vsel %vm557, %v2375, 0
        %v2414 = vsel %vm557, %v2376, 0
        %v2417 = vsel %vm557, %v2377, 0
        %v2420 = vsel %vm557, %v2378, 0
        %v2423 = vsel %vm557, %v2379, 0
        %v2426 = vsel %vm557, %v2380, 0
        %v2429 = vsel %vm557, %v2381, 0
        %v2432 = vsel %vm557, %v2382, 0
        %v2435 = vsel %vm557, %v2383, 0
        %v2438 = vsel %vm557, %v2384, 0
        %v2441 = vsel %vm557, %v2385, 0
        %v2444 = vsel %vm557, %v2386, 0
        %v2447 = vsel %vm557, %v2387, 0
        %v2450 = vsel %vm557, %v2388, 0
        %v2453 = vsel %vm557, %v2389, 0
        %2455 = vmatpush.msra.mxu0 0.0
        %2456 = vmatpush.msra.mxu0 0.0
        %2457 = vmatpush.msra.mxu0 0.0
        %2458 = vmatpush.msra.mxu0 0.0
        %2459 = vmatpush.msra.mxu0 0.0
        %2460 = vmatpush.msra.mxu0 0.0
        %2461 = vmatpush.msra.mxu0 0.0
        %2462 = vmatpush.msra.mxu0 0.0
        %2463 = vmatpush.msra.mxu0 %v2405
        %2464 = vmatpush.msra.mxu0 %v2403
        %2465 = vmatpush.msra.mxu0 %v2401
        %2466 = vmatpush.msra.mxu0 %v2399
        %2467 = vmatpush.msra.mxu0 %v2397
        %2468 = vmatpush.msra.mxu0 %v2395
        %2469 = vmatpush.msra.mxu0 %v2393
        %2470 = vmatpush.msra.mxu0 %v2391
        %2471 = vmatmul.f32.gmra.mxu0 %v2408
        %v2472 = vpop.f32.mrf.mxu0
        %v2473 = vadd.f32 0.0, %v2472
        %2474 = vmatmul.f32.gmra.mxu0 %v2411
        %v2475 = vpop.f32.mrf.mxu0
        %v2476 = vadd.f32 0.0, %v2475
        %2477 = vmatmul.f32.gmra.mxu0 %v2414
        %v2478 = vpop.f32.mrf.mxu0
        %v2479 = vadd.f32 0.0, %v2478
        %2480 = vmatmul.f32.gmra.mxu0 %v2417
        %v2481 = vpop.f32.mrf.mxu0
        %v2482 = vadd.f32 0.0, %v2481
        %2483 = vmatmul.f32.gmra.mxu0 %v2420
        %v2484 = vpop.f32.mrf.mxu0
        %v2485 = vadd.f32 0.0, %v2484
        %2486 = vmatmul.f32.gmra.mxu0 %v2423
        %v2487 = vpop.f32.mrf.mxu0
        %v2488 = vadd.f32 0.0, %v2487
        %2489 = vmatmul.f32.gmra.mxu0 %v2426
        %v2490 = vpop.f32.mrf.mxu0
        %v2491 = vadd.f32 0.0, %v2490
        %2492 = vmatmul.f32.gmra.mxu0 %v2429
        %v2493 = vpop.f32.mrf.mxu0
        %v2494 = vadd.f32 0.0, %v2493
        %2495 = vmatmul.f32.gmra.mxu0 %v2432
        %v2496 = vpop.f32.mrf.mxu0
        %v2497 = vadd.f32 0.0, %v2496
        %2498 = vmatmul.f32.gmra.mxu0 %v2435
        %v2499 = vpop.f32.mrf.mxu0
        %v2500 = vadd.f32 0.0, %v2499
        %2501 = vmatmul.f32.gmra.mxu0 %v2438
        %v2502 = vpop.f32.mrf.mxu0
        %v2503 = vadd.f32 0.0, %v2502
        %2504 = vmatmul.f32.gmra.mxu0 %v2441
        %v2505 = vpop.f32.mrf.mxu0
        %v2506 = vadd.f32 0.0, %v2505
        %2507 = vmatmul.f32.gmra.mxu0 %v2444
        %v2508 = vpop.f32.mrf.mxu0
        %v2509 = vadd.f32 0.0, %v2508
        %2510 = vmatmul.f32.gmra.mxu0 %v2447
        %v2511 = vpop.f32.mrf.mxu0
        %v2512 = vadd.f32 0.0, %v2511
        %2513 = vmatmul.f32.gmra.mxu0 %v2450
        %v2514 = vpop.f32.mrf.mxu0
        %v2515 = vadd.f32 0.0, %v2514
        %2516 = vmatmul.f32.gmra.mxu0 %v2453
        %v2517 = vpop.f32.mrf.mxu0
        %v2518 = vadd.f32 0.0, %v2517
        %2519 = vdwg.mxu0
        %2520 = vmatpush.msra.mxu0 0.0
        %2521 = vmatpush.msra.mxu0 0.0
        %2522 = vmatpush.msra.mxu0 0.0
        %2523 = vmatpush.msra.mxu0 0.0
        %2524 = vmatpush.msra.mxu0 0.0
        %2525 = vmatpush.msra.mxu0 0.0
        %2526 = vmatpush.msra.mxu0 0.0
        %2527 = vmatpush.msra.mxu0 0.0
        %2528 = vmatpush.msra.mxu0 %v2406
        %2529 = vmatpush.msra.mxu0 %v2404
        %2530 = vmatpush.msra.mxu0 %v2402
        %2531 = vmatpush.msra.mxu0 %v2400
        %2532 = vmatpush.msra.mxu0 %v2398
        %2533 = vmatpush.msra.mxu0 %v2396
        %2534 = vmatpush.msra.mxu0 %v2394
        %2535 = vmatpush.msra.mxu0 %v2392
        %2536 = vmatmul.f32.gmra.mxu0 %v2408
        %v2537 = vpop.f32.mrf.mxu0
        %v2538 = vadd.f32 0.0, %v2537
        %2539 = vmatmul.f32.gmra.mxu0 %v2411
        %v2540 = vpop.f32.mrf.mxu0
        %v2541 = vadd.f32 0.0, %v2540
        %2542 = vmatmul.f32.gmra.mxu0 %v2414
        %v2543 = vpop.f32.mrf.mxu0
        %v2544 = vadd.f32 0.0, %v2543
        %2545 = vmatmul.f32.gmra.mxu0 %v2417
        %v2546 = vpop.f32.mrf.mxu0
        %v2547 = vadd.f32 0.0, %v2546
        %2548 = vmatmul.f32.gmra.mxu0 %v2420
        %v2549 = vpop.f32.mrf.mxu0
        %v2550 = vadd.f32 0.0, %v2549
        %2551 = vmatmul.f32.gmra.mxu0 %v2423
        %v2552 = vpop.f32.mrf.mxu0
        %v2553 = vadd.f32 0.0, %v2552
        %2554 = vmatmul.f32.gmra.mxu0 %v2426
        %v2555 = vpop.f32.mrf.mxu0
        %v2556 = vadd.f32 0.0, %v2555
        %2557 = vmatmul.f32.gmra.mxu0 %v2429
        %v2558 = vpop.f32.mrf.mxu0
        %v2559 = vadd.f32 0.0, %v2558
        %2560 = vmatmul.f32.gmra.mxu0 %v2432
        %v2561 = vpop.f32.mrf.mxu0
        %v2562 = vadd.f32 0.0, %v2561
        %2563 = vmatmul.f32.gmra.mxu0 %v2435
        %v2564 = vpop.f32.mrf.mxu0
        %v2565 = vadd.f32 0.0, %v2564
        %2566 = vmatmul.f32.gmra.mxu0 %v2438
        %v2567 = vpop.f32.mrf.mxu0
        %v2568 = vadd.f32 0.0, %v2567
        %2569 = vmatmul.f32.gmra.mxu0 %v2441
        %v2570 = vpop.f32.mrf.mxu0
        %v2571 = vadd.f32 0.0, %v2570
        %2572 = vmatmul.f32.gmra.mxu0 %v2444
        %v2573 = vpop.f32.mrf.mxu0
        %v2574 = vadd.f32 0.0, %v2573
        %2575 = vmatmul.f32.gmra.mxu0 %v2447
        %v2576 = vpop.f32.mrf.mxu0
        %v2577 = vadd.f32 0.0, %v2576
        %2578 = vmatmul.f32.gmra.mxu0 %v2450
        %v2579 = vpop.f32.mrf.mxu0
        %v2580 = vadd.f32 0.0, %v2579
        %2581 = vmatmul.f32.gmra.mxu0 %v2453
        %v2582 = vpop.f32.mrf.mxu0
        %v2583 = vadd.f32 0.0, %v2582
        %2584 = vdwg.mxu0
        %v2585 = vadd.f32 %v2342, %v2473
        %v2586 = vadd.f32 %v2343, %v2538
        %v2587 = vadd.f32 %v2344, %v2476
        %v2588 = vadd.f32 %v2345, %v2541
        %v2589 = vadd.f32 %v2346, %v2479
        %v2590 = vadd.f32 %v2347, %v2544
        %v2591 = vadd.f32 %v2348, %v2482
        %v2592 = vadd.f32 %v2349, %v2547
        %v2593 = vadd.f32 %v2350, %v2485
        %v2594 = vadd.f32 %v2351, %v2550
        %v2595 = vadd.f32 %v2352, %v2488
        %v2596 = vadd.f32 %v2353, %v2553
        %v2597 = vadd.f32 %v2354, %v2491
        %v2598 = vadd.f32 %v2355, %v2556
        %v2599 = vadd.f32 %v2356, %v2494
        %v2600 = vadd.f32 %v2357, %v2559
        %v2601 = vadd.f32 %v2358, %v2497
        %v2602 = vadd.f32 %v2359, %v2562
        %v2603 = vadd.f32 %v2360, %v2500
        %v2604 = vadd.f32 %v2361, %v2565
        %v2605 = vadd.f32 %v2362, %v2503
        %v2606 = vadd.f32 %v2363, %v2568
        %v2607 = vadd.f32 %v2364, %v2506
        %v2608 = vadd.f32 %v2365, %v2571
        %v2609 = vadd.f32 %v2366, %v2509
        %v2610 = vadd.f32 %v2367, %v2574
        %v2611 = vadd.f32 %v2368, %v2512
        %v2612 = vadd.f32 %v2369, %v2577
        %v2613 = vadd.f32 %v2370, %v2515
        %v2614 = vadd.f32 %v2371, %v2580
        %v2615 = vadd.f32 %v2372, %v2518
        %v2616 = vadd.f32 %v2373, %v2583
        %v2617 = vld [vmem:[%s489] sm:$0x3]
        %v2619 = vperm.slane %v2617, 0
        %v2620 = vperm.slane %v2617, 1
        %v2623 = vadd.f32 %v2585, %v2619
        %v2624 = vadd.f32 %v2586, %v2620
        %v2625 = vadd.f32 %v2587, %v2619
        %v2626 = vadd.f32 %v2588, %v2620
        %v2627 = vadd.f32 %v2589, %v2619
        %v2628 = vadd.f32 %v2590, %v2620
        %v2629 = vadd.f32 %v2591, %v2619
        %v2630 = vadd.f32 %v2592, %v2620
        %v2631 = vadd.f32 %v2593, %v2619
        %v2632 = vadd.f32 %v2594, %v2620
        %v2633 = vadd.f32 %v2595, %v2619
        %v2634 = vadd.f32 %v2596, %v2620
        %v2635 = vadd.f32 %v2597, %v2619
        %v2636 = vadd.f32 %v2598, %v2620
        %v2637 = vadd.f32 %v2599, %v2619
        %v2638 = vadd.f32 %v2600, %v2620
        %v2639 = vadd.f32 %v2601, %v2619
        %v2640 = vadd.f32 %v2602, %v2620
        %v2641 = vadd.f32 %v2603, %v2619
        %v2642 = vadd.f32 %v2604, %v2620
        %v2643 = vadd.f32 %v2605, %v2619
        %v2644 = vadd.f32 %v2606, %v2620
        %v2645 = vadd.f32 %v2607, %v2619
        %v2646 = vadd.f32 %v2608, %v2620
        %v2647 = vadd.f32 %v2609, %v2619
        %v2648 = vadd.f32 %v2610, %v2620
        %v2649 = vadd.f32 %v2611, %v2619
        %v2650 = vadd.f32 %v2612, %v2620
        %v2651 = vadd.f32 %v2613, %v2619
        %v2652 = vadd.f32 %v2614, %v2620
        %v2653 = vadd.f32 %v2615, %v2619
        %v2654 = vadd.f32 %v2616, %v2620
        %v2655 = vmax.f32 %v2623, 0.0
        %v2656 = vmax.f32 %v2624, 0.0
        %v2657 = vmax.f32 %v2625, 0.0
        %v2658 = vmax.f32 %v2626, 0.0
        %v2659 = vmax.f32 %v2627, 0.0
        %v2660 = vmax.f32 %v2628, 0.0
        %v2661 = vmax.f32 %v2629, 0.0
        %v2662 = vmax.f32 %v2630, 0.0
        %v2663 = vmax.f32 %v2631, 0.0
        %v2664 = vmax.f32 %v2632, 0.0
        %v2665 = vmax.f32 %v2633, 0.0
        %v2666 = vmax.f32 %v2634, 0.0
        %v2667 = vmax.f32 %v2635, 0.0
        %v2668 = vmax.f32 %v2636, 0.0
        %v2669 = vmax.f32 %v2637, 0.0
        %v2670 = vmax.f32 %v2638, 0.0
        %v2671 = vmax.f32 %v2639, 0.0
        %v2672 = vmax.f32 %v2640, 0.0
        %v2673 = vmax.f32 %v2641, 0.0
        %v2674 = vmax.f32 %v2642, 0.0
        %v2675 = vmax.f32 %v2643, 0.0
        %v2676 = vmax.f32 %v2644, 0.0
        %v2677 = vmax.f32 %v2645, 0.0
        %v2678 = vmax.f32 %v2646, 0.0
        %v2679 = vmax.f32 %v2647, 0.0
        %v2680 = vmax.f32 %v2648, 0.0
        %v2681 = vmax.f32 %v2649, 0.0
        %v2682 = vmax.f32 %v2650, 0.0
        %v2683 = vmax.f32 %v2651, 0.0
        %v2684 = vmax.f32 %v2652, 0.0
        %v2685 = vmax.f32 %v2653, 0.0
        %v2686 = vmax.f32 %v2654, 0.0
        %2687 = vst [vmem:[%s484] sm:$0xff] %v2655
        %2688 = vst [vmem:[%s484 + $0x8] sm:$0xff] %v2656
        %2689 = vst [vmem:[%s484 + $0x10] sm:$0xff] %v2657
        %2690 = vst [vmem:[%s484 + $0x18] sm:$0xff] %v2658
        %2691 = vst [vmem:[%s484 + $0x20] sm:$0xff] %v2659
        %2692 = vst [vmem:[%s484 + $0x28] sm:$0xff] %v2660
        %2693 = vst [vmem:[%s484 + $0x30] sm:$0xff] %v2661
        %2694 = vst [vmem:[%s484 + $0x38] sm:$0xff] %v2662
        %2695 = vst [vmem:[%s484 + $0x40] sm:$0xff] %v2663
        %2696 = vst [vmem:[%s484 + $0x48] sm:$0xff] %v2664
        %2697 = vst [vmem:[%s484 + $0x50] sm:$0xff] %v2665
        %2698 = vst [vmem:[%s484 + $0x58] sm:$0xff] %v2666
        %2699 = vst [vmem:[%s484 + $0x60] sm:$0xff] %v2667
        %2700 = vst [vmem:[%s484 + $0x68] sm:$0xff] %v2668
        %2701 = vst [vmem:[%s484 + $0x70] sm:$0xff] %v2669
        %2702 = vst [vmem:[%s484 + $0x78] sm:$0xff] %v2670
        %2703 = vst [vmem:[%s484 + $0x80] sm:$0xff] %v2671
        %2704 = vst [vmem:[%s484 + $0x88] sm:$0xff] %v2672
        %2705 = vst [vmem:[%s484 + $0x90] sm:$0xff] %v2673
        %2706 = vst [vmem:[%s484 + $0x98] sm:$0xff] %v2674
        %2707 = vst [vmem:[%s484 + $0xa0] sm:$0xff] %v2675
        %2708 = vst [vmem:[%s484 + $0xa8] sm:$0xff] %v2676
        %2709 = vst [vmem:[%s484 + $0xb0] sm:$0xff] %v2677
        %2710 = vst [vmem:[%s484 + $0xb8] sm:$0xff] %v2678
        %2711 = vst [vmem:[%s484 + $0xc0] sm:$0xff] %v2679
        %2712 = vst [vmem:[%s484 + $0xc8] sm:$0xff] %v2680
        %2713 = vst [vmem:[%s484 + $0xd0] sm:$0xff] %v2681
        %2714 = vst [vmem:[%s484 + $0xd8] sm:$0xff] %v2682
        %2715 = vst [vmem:[%s484 + $0xe0] sm:$0xff] %v2683
        %2716 = vst [vmem:[%s484 + $0xe8] sm:$0xff] %v2684
        %2717 = vst [vmem:[%s484 + $0xf0] sm:$0xff] %v2685
        %2718 = vst [vmem:[%s484 + $0xf8] sm:$0xff] %v2686
        %s2719 = sand.u32 %s95, 1
        %s2720 = sand.u32 %s95, 1
        %s2721 = smul.addr %s2720, 256
        %s2722 = scalar_lea.vmem [#allocation3], %s2721
        // Predicated region
        $region56: #{attn_model_forward.4} parent=50 // pred_check
          %p2723 = pneg %p105
        $region57: #{attn_model_forward.4} parent=50 // pred_check_branch
          %2725 = sbr.rel (%p2723) target = $region59
        $region58: #{attn_model_forward.4} parent=50 // pred_region
          %s2726 = smul.u32 2, %s14
          %s2727 = smul.addr %s2726, 8
          %s2728 = scalar_lea.vmem %s3, %s2727
          // Predicated region
          $region60: #{attn_model_forward.4} parent=58 // pred_check
            _
          $region61: #{attn_model_forward.4} parent=58 // pred_check_branch
            %2730 = sbr.rel (0) target = $region63
          $region62: #{attn_model_forward.4} parent=58 // pred_region
            // Predicated region
            $region64: #{attn_model_forward.4} parent=62 // pred_check
              _
            $region65: #{attn_model_forward.4} parent=62 // pred_check_branch
              %2732 = sbr.rel (0) target = $region67
            $region66: #{attn_model_forward.4} parent=62 // pred_region
              loop: start=0, step=1, limit=1
              $region68: #{attn_model_forward.4} parent=66 // loop_pre_header
                _
              $region69: #{attn_model_forward.4} parent=66 // loop_header
                %s2734 = sphi 0, %s2738
                %p2735 = scmp.ge.s32.totalorder %s2734, 1
                %s2739 = sphi %s2722, %s2722
                %s2740 = sphi %s2728, %s2728
              $region70: #{attn_model_forward.4} parent=66 // loop_header_branch
                %2737 = sbr.rel (%p2735) target = $region74
              $region71: #{attn_model_forward.4} parent=66 // loop_body
                %v2741 = vld [vmem:[%s2739] sm:$0xff]
                %2742 = vst [vmem:[%s2740] sm:$0xff] %v2741
                %v2743 = vld [vmem:[%s2739 + $0x8] sm:$0xff]
                %2744 = vst [vmem:[%s2740 + $0x8] sm:$0xff] %v2743
                %v2745 = vld [vmem:[%s2739 + $0x10] sm:$0xff]
                %2746 = vst [vmem:[%s2740 + $0x20] sm:$0xff] %v2745
                %v2747 = vld [vmem:[%s2739 + $0x18] sm:$0xff]
                %2748 = vst [vmem:[%s2740 + $0x28] sm:$0xff] %v2747
                %v2749 = vld [vmem:[%s2739 + $0x20] sm:$0xff]
                %2750 = vst [vmem:[%s2740 + $0x40] sm:$0xff] %v2749
                %v2751 = vld [vmem:[%s2739 + $0x28] sm:$0xff]
                %2752 = vst [vmem:[%s2740 + $0x48] sm:$0xff] %v2751
                %v2753 = vld [vmem:[%s2739 + $0x30] sm:$0xff]
                %2754 = vst [vmem:[%s2740 + $0x60] sm:$0xff] %v2753
                %v2755 = vld [vmem:[%s2739 + $0x38] sm:$0xff]
                %2756 = vst [vmem:[%s2740 + $0x68] sm:$0xff] %v2755
                %v2757 = vld [vmem:[%s2739 + $0x40] sm:$0xff]
                %2758 = vst [vmem:[%s2740 + $0x80] sm:$0xff] %v2757
                %v2759 = vld [vmem:[%s2739 + $0x48] sm:$0xff]
                %2760 = vst [vmem:[%s2740 + $0x88] sm:$0xff] %v2759
                %v2761 = vld [vmem:[%s2739 + $0x50] sm:$0xff]
                %2762 = vst [vmem:[%s2740 + $0xa0] sm:$0xff] %v2761
                %v2763 = vld [vmem:[%s2739 + $0x58] sm:$0xff]
                %2764 = vst [vmem:[%s2740 + $0xa8] sm:$0xff] %v2763
                %v2765 = vld [vmem:[%s2739 + $0x60] sm:$0xff]
                %2766 = vst [vmem:[%s2740 + $0xc0] sm:$0xff] %v2765
                %v2767 = vld [vmem:[%s2739 + $0x68] sm:$0xff]
                %2768 = vst [vmem:[%s2740 + $0xc8] sm:$0xff] %v2767
                %v2769 = vld [vmem:[%s2739 + $0x70] sm:$0xff]
                %2770 = vst [vmem:[%s2740 + $0xe0] sm:$0xff] %v2769
                %v2771 = vld [vmem:[%s2739 + $0x78] sm:$0xff]
                %2772 = vst [vmem:[%s2740 + $0xe8] sm:$0xff] %v2771
                %v2773 = vld [vmem:[%s2739 + $0x80] sm:$0xff]
                %2774 = vst [vmem:[%s2740 + $0x100] sm:$0xff] %v2773
                %v2775 = vld [vmem:[%s2739 + $0x88] sm:$0xff]
                %2776 = vst [vmem:[%s2740 + $0x108] sm:$0xff] %v2775
                %v2777 = vld [vmem:[%s2739 + $0x90] sm:$0xff]
                %2778 = vst [vmem:[%s2740 + $0x120] sm:$0xff] %v2777
                %v2779 = vld [vmem:[%s2739 + $0x98] sm:$0xff]
                %2780 = vst [vmem:[%s2740 + $0x128] sm:$0xff] %v2779
                %v2781 = vld [vmem:[%s2739 + $0xa0] sm:$0xff]
                %2782 = vst [vmem:[%s2740 + $0x140] sm:$0xff] %v2781
                %v2783 = vld [vmem:[%s2739 + $0xa8] sm:$0xff]
                %2784 = vst [vmem:[%s2740 + $0x148] sm:$0xff] %v2783
                %v2785 = vld [vmem:[%s2739 + $0xb0] sm:$0xff]
                %2786 = vst [vmem:[%s2740 + $0x160] sm:$0xff] %v2785
                %v2787 = vld [vmem:[%s2739 + $0xb8] sm:$0xff]
                %2788 = vst [vmem:[%s2740 + $0x168] sm:$0xff] %v2787
                %v2789 = vld [vmem:[%s2739 + $0xc0] sm:$0xff]
                %2790 = vst [vmem:[%s2740 + $0x180] sm:$0xff] %v2789
                %v2791 = vld [vmem:[%s2739 + $0xc8] sm:$0xff]
                %2792 = vst [vmem:[%s2740 + $0x188] sm:$0xff] %v2791
                %v2793 = vld [vmem:[%s2739 + $0xd0] sm:$0xff]
                %2794 = vst [vmem:[%s2740 + $0x1a0] sm:$0xff] %v2793
                %v2795 = vld [vmem:[%s2739 + $0xd8] sm:$0xff]
                %2796 = vst [vmem:[%s2740 + $0x1a8] sm:$0xff] %v2795
                %v2797 = vld [vmem:[%s2739 + $0xe0] sm:$0xff]
                %2798 = vst [vmem:[%s2740 + $0x1c0] sm:$0xff] %v2797
                %v2799 = vld [vmem:[%s2739 + $0xe8] sm:$0xff]
                %2800 = vst [vmem:[%s2740 + $0x1c8] sm:$0xff] %v2799
                %v2801 = vld [vmem:[%s2739 + $0xf0] sm:$0xff]
                %2802 = vst [vmem:[%s2740 + $0x1e0] sm:$0xff] %v2801
                %v2803 = vld [vmem:[%s2739 + $0xf8] sm:$0xff]
                %2804 = vst [vmem:[%s2740 + $0x1e8] sm:$0xff] %v2803
              $region72: #{attn_model_forward.4} parent=66 // loop_footer
                %s2738 = sadd.s32 1, %s2734
              $region73: #{attn_model_forward.4} parent=66 // loop_footer_branch
                %2733 = sbr.rel target = $region69
              $region74: #{attn_model_forward.4} parent=66 // loop_exit
                _
            $region67: #{attn_model_forward.4} parent=62 // pred_fallthru
              _
            // Predicated region
            $region75: #{attn_model_forward.4} parent=62 // pred_check
              _
            $region76: #{attn_model_forward.4} parent=62 // pred_check_branch
              %2806 = sbr.rel target = $region78
            $region77: #{attn_model_forward.4} parent=62 // pred_region
              _
            $region78: #{attn_model_forward.4} parent=62 // pred_fallthru
              _
          $region63: #{attn_model_forward.4} parent=58 // pred_fallthru
            _
          %2807 = vnop
        $region59: #{attn_model_forward.4} parent=50 // pred_fallthru
          _
      $region51: #{attn_model_forward.4} parent=5 // pred_fallthru
        _
      %p2808 = scmp.le.s32.totalorder 2, %s9
      // Predicated region
      $region79: #{attn_model_forward.4} parent=5 // pred_check
        %p2809 = pneg %p2808
      $region80: #{attn_model_forward.4} parent=5 // pred_check_branch
        %2811 = sbr.rel (%p2809) target = $region82
      $region81: #{attn_model_forward.4} parent=5 // pred_region
        %s2812 = ssub.s32 %s9, 2
        // Predicated region
        $region83: #{attn_model_forward.4} parent=81 // pred_check
          %p2813 = pneg %p111
        $region84: #{attn_model_forward.4} parent=81 // pred_check_branch
          %2815 = sbr.rel (%p2813) target = $region86
        $region85: #{attn_model_forward.4} parent=81 // pred_region
          %s2816 = sand.u32 %s96, 1
          %s2817 = sand.u32 %s96, 1
          %s2818 = smul.addr %s2817, 256
          %s2819 = scalar_lea.vmem [#allocation3], %s2818
        $region86: #{attn_model_forward.4} parent=81 // pred_fallthru
          _
      $region82: #{attn_model_forward.4} parent=5 // pred_fallthru
        _
    $region6: #{attn_model_forward.4} parent=1 // loop_footer
      %s13 = sadd.s32 1, %s9
    $region7: #{attn_model_forward.4} parent=1 // loop_footer_branch
      %8 = sbr.rel target = $region3
    $region8: #{attn_model_forward.4} parent=1 // loop_exit
      _

// kernel: attn_model_forward.5
$region0: #{attn_model_forward.5}
  #allocation0 [shape = 'u32[]', space=smem, size = 0x4, offset = 0x4, fixed_abs, tag = 'smem constant byte address 0x4 - core index']
  #allocation1 [shape = 'u32[72,128]{1,0:T(1,128)}', space=vmem, size = 0x9000, scoped, tag = 'internal scratch']
  %s0 = inlined_call_operand.vmem [shape: f32[2,16,512], index: 0, kind: input, shape index: {}]
  %s1 = inlined_call_operand.vmem [shape: f32[16,16], index: 1, kind: input, shape index: {}]
  %s2 = inlined_call_operand.vmem [shape: f32[512,160], index: 2, kind: input, shape index: {}]
  %s3 = inlined_call_operand.vmem [shape: f32[1,32], index: 3, kind: input, shape index: {}]
  %s4 = inlined_call_operand.vmem [shape: f32[16,128], index: 4, kind: input, shape index: {}]
  %s5 = inlined_call_operand.vmem [shape: f32[1,128], index: 5, kind: input, shape index: {}]
  %s6 = inlined_call_operand.vmem [shape: f32[32,32], index: 6, kind: input, shape index: {}]
  %s7 = inlined_call_operand.vmem [shape: f32[1,1,32], index: 7, kind: input, shape index: {}]
  %s8 = inlined_call_operand.vmem [shape: f32[32,128], index: 8, kind: input, shape index: {}]
  %s9 = inlined_call_operand.vmem [shape: f32[32,128], index: 9, kind: input, shape index: {}]
  %s10 = inlined_call_operand.vmem [shape: f32[1,128], index: 10, kind: input, shape index: {}]
  %s11 = inlined_call_operand.vmem [shape: f32[16,128], index: 11, kind: output, shape index: {}]
  %s12 = sld [smem:[#allocation0]]
  $region54: #{attn_model_forward.5} parent=0
    _
  %s14 = ssub.s32 1, %s12
  %s15 = scalar_select 0, %s14, %s12
  // Predicated region
  $region2: #{attn_model_forward.5} parent=0 // pred_check
    _
  $region3: #{attn_model_forward.5} parent=0 // pred_check_branch
    %17 = sbr.rel (0) target = $region5
  $region4: #{attn_model_forward.5} parent=0 // pred_region
    _
  $region5: #{attn_model_forward.5} parent=0 // pred_fallthru
    _
  // Predicated region
  $region6: #{attn_model_forward.5} parent=0 // pred_check
    _
  $region7: #{attn_model_forward.5} parent=0 // pred_check_branch
    %19 = sbr.rel (0) target = $region9
  $region8: #{attn_model_forward.5} parent=0 // pred_region
    _
  $region9: #{attn_model_forward.5} parent=0 // pred_fallthru
    _
  // Predicated region
  $region10: #{attn_model_forward.5} parent=0 // pred_check
    _
  $region11: #{attn_model_forward.5} parent=0 // pred_check_branch
    %21 = sbr.rel (0) target = $region13
  $region12: #{attn_model_forward.5} parent=0 // pred_region
    _
  $region13: #{attn_model_forward.5} parent=0 // pred_fallthru
    _
  // Predicated region
  $region14: #{attn_model_forward.5} parent=0 // pred_check
    _
  $region15: #{attn_model_forward.5} parent=0 // pred_check_branch
    %23 = sbr.rel (0) target = $region17
  $region16: #{attn_model_forward.5} parent=0 // pred_region
    _
  $region17: #{attn_model_forward.5} parent=0 // pred_fallthru
    _
  // Predicated region
  $region18: #{attn_model_forward.5} parent=0 // pred_check
    _
  $region19: #{attn_model_forward.5} parent=0 // pred_check_branch
    %25 = sbr.rel (0) target = $region21
  $region20: #{attn_model_forward.5} parent=0 // pred_region
    _
  $region21: #{attn_model_forward.5} parent=0 // pred_fallthru
    _
  // Predicated region
  $region22: #{attn_model_forward.5} parent=0 // pred_check
    _
  $region23: #{attn_model_forward.5} parent=0 // pred_check_branch
    %27 = sbr.rel (0) target = $region25
  $region24: #{attn_model_forward.5} parent=0 // pred_region
    _
  $region25: #{attn_model_forward.5} parent=0 // pred_fallthru
    _
  // Predicated region
  $region26: #{attn_model_forward.5} parent=0 // pred_check
    _
  $region27: #{attn_model_forward.5} parent=0 // pred_check_branch
    %29 = sbr.rel (0) target = $region29
  $region28: #{attn_model_forward.5} parent=0 // pred_region
    _
  $region29: #{attn_model_forward.5} parent=0 // pred_fallthru
    _
  // Predicated region
  $region30: #{attn_model_forward.5} parent=0 // pred_check
    _
  $region31: #{attn_model_forward.5} parent=0 // pred_check_branch
    %31 = sbr.rel (0) target = $region33
  $region32: #{attn_model_forward.5} parent=0 // pred_region
    _
  $region33: #{attn_model_forward.5} parent=0 // pred_fallthru
    _
  // Predicated region
  $region34: #{attn_model_forward.5} parent=0 // pred_check
    _
  $region35: #{attn_model_forward.5} parent=0 // pred_check_branch
    %33 = sbr.rel (0) target = $region37
  $region36: #{attn_model_forward.5} parent=0 // pred_region
    _
  $region37: #{attn_model_forward.5} parent=0 // pred_fallthru
    _
  // Predicated region
  $region38: #{attn_model_forward.5} parent=0 // pred_check
    _
  $region39: #{attn_model_forward.5} parent=0 // pred_check_branch
    %35 = sbr.rel (0) target = $region41
  $region40: #{attn_model_forward.5} parent=0 // pred_region
    _
  $region41: #{attn_model_forward.5} parent=0 // pred_fallthru
    _
  // Predicated region
  $region42: #{attn_model_forward.5} parent=0 // pred_check
    _
  $region43: #{attn_model_forward.5} parent=0 // pred_check_branch
    %37 = sbr.rel (0) target = $region45
  $region44: #{attn_model_forward.5} parent=0 // pred_region
    _
  $region45: #{attn_model_forward.5} parent=0 // pred_fallthru
    _
  %v38 = vld [vmem:[%s0] sm:$0xff]
  %v39 = vld [vmem:[%s0 + $0x8] sm:$0xff]
  %v40 = vld [vmem:[%s0 + $0x10] sm:$0xff]
  %v41 = vld [vmem:[%s0 + $0x18] sm:$0xff]
  %v42 = vld [vmem:[%s0 + $0x20] sm:$0xff]
  %v43 = vld [vmem:[%s0 + $0x28] sm:$0xff]
  %v44 = vld [vmem:[%s0 + $0x30] sm:$0xff]
  %v45 = vld [vmem:[%s0 + $0x38] sm:$0xff]
  %v46 = vld [vmem:[%s0 + $0x40] sm:$0xff]
  %v47 = vld [vmem:[%s0 + $0x48] sm:$0xff]
  %v48 = vld [vmem:[%s0 + $0x50] sm:$0xff]
  %v49 = vld [vmem:[%s0 + $0x58] sm:$0xff]
  %v50 = vld [vmem:[%s0 + $0x60] sm:$0xff]
  %v51 = vld [vmem:[%s0 + $0x68] sm:$0xff]
  %v52 = vld [vmem:[%s0 + $0x70] sm:$0xff]
  %v53 = vld [vmem:[%s0 + $0x78] sm:$0xff]
  %v54 = vld [vmem:[%s2] sm:$0xff]
  %v55 = vld [vmem:[%s2 + $0x8] sm:$0xff]
  %v56 = vld [vmem:[%s2 + $0x10] sm:$0xff]
  %v57 = vld [vmem:[%s2 + $0x18] sm:$0xff]
  %v58 = vld [vmem:[%s2 + $0x20] sm:$0xff]
  %v59 = vld [vmem:[%s2 + $0x28] sm:$0xff]
  %v60 = vld [vmem:[%s2 + $0x30] sm:$0xff]
  %v61 = vld [vmem:[%s2 + $0x38] sm:$0xff]
  %v62 = vld [vmem:[%s2 + $0x40] sm:$0xff]
  %v63 = vld [vmem:[%s2 + $0x48] sm:$0xff]
  %v64 = vld [vmem:[%s2 + $0x50] sm:$0xff]
  %v65 = vld [vmem:[%s2 + $0x58] sm:$0xff]
  %v66 = vld [vmem:[%s2 + $0x60] sm:$0xff]
  %v67 = vld [vmem:[%s2 + $0x68] sm:$0xff]
  %v68 = vld [vmem:[%s2 + $0x70] sm:$0xff]
  %v69 = vld [vmem:[%s2 + $0x78] sm:$0xff]
  %v70 = vld [vmem:[%s2 + $0x80] sm:$0xff]
  %v71 = vld [vmem:[%s2 + $0x88] sm:$0xff]
  %v72 = vld [vmem:[%s2 + $0x90] sm:$0xff]
  %v73 = vld [vmem:[%s2 + $0x98] sm:$0xff]
  %v74 = vld [vmem:[%s2 + $0xa0] sm:$0xff]
  %v75 = vld [vmem:[%s2 + $0xa8] sm:$0xff]
  %v76 = vld [vmem:[%s2 + $0xb0] sm:$0xff]
  %v77 = vld [vmem:[%s2 + $0xb8] sm:$0xff]
  %v78 = vld [vmem:[%s2 + $0xc0] sm:$0xff]
  %v79 = vld [vmem:[%s2 + $0xc8] sm:$0xff]
  %v80 = vld [vmem:[%s2 + $0xd0] sm:$0xff]
  %v81 = vld [vmem:[%s2 + $0xd8] sm:$0xff]
  %v82 = vld [vmem:[%s2 + $0xe0] sm:$0xff]
  %v83 = vld [vmem:[%s2 + $0xe8] sm:$0xff]
  %v84 = vld [vmem:[%s2 + $0xf0] sm:$0xff]
  %v85 = vld [vmem:[%s2 + $0xf8] sm:$0xff]
  %v86 = vld [vmem:[%s2 + $0x100] sm:$0xff]
  %v87 = vld [vmem:[%s2 + $0x108] sm:$0xff]
  %v88 = vld [vmem:[%s2 + $0x110] sm:$0xff]
  %v89 = vld [vmem:[%s2 + $0x118] sm:$0xff]
  %v90 = vld [vmem:[%s2 + $0x120] sm:$0xff]
  %v91 = vld [vmem:[%s2 + $0x128] sm:$0xff]
  %v92 = vld [vmem:[%s2 + $0x130] sm:$0xff]
  %v93 = vld [vmem:[%s2 + $0x138] sm:$0xff]
  %v94 = vld [vmem:[%s2 + $0x140] sm:$0xff]
  %v95 = vld [vmem:[%s2 + $0x148] sm:$0xff]
  %v96 = vld [vmem:[%s2 + $0x150] sm:$0xff]
  %v97 = vld [vmem:[%s2 + $0x158] sm:$0xff]
  %v98 = vld [vmem:[%s2 + $0x160] sm:$0xff]
  %v99 = vld [vmem:[%s2 + $0x168] sm:$0xff]
  %v100 = vld [vmem:[%s2 + $0x170] sm:$0xff]
  %v101 = vld [vmem:[%s2 + $0x178] sm:$0xff]
  %v102 = vld [vmem:[%s2 + $0x180] sm:$0xff]
  %v103 = vld [vmem:[%s2 + $0x188] sm:$0xff]
  %v104 = vld [vmem:[%s2 + $0x190] sm:$0xff]
  %v105 = vld [vmem:[%s2 + $0x198] sm:$0xff]
  %v106 = vld [vmem:[%s2 + $0x1a0] sm:$0xff]
  %v107 = vld [vmem:[%s2 + $0x1a8] sm:$0xff]
  %v108 = vld [vmem:[%s2 + $0x1b0] sm:$0xff]
  %v109 = vld [vmem:[%s2 + $0x1b8] sm:$0xff]
  %v110 = vld [vmem:[%s2 + $0x1c0] sm:$0xff]
  %v111 = vld [vmem:[%s2 + $0x1c8] sm:$0xff]
  %v112 = vld [vmem:[%s2 + $0x1d0] sm:$0xff]
  %v113 = vld [vmem:[%s2 + $0x1d8] sm:$0xff]
  %v114 = vld [vmem:[%s2 + $0x1e0] sm:$0xff]
  %v115 = vld [vmem:[%s2 + $0x1e8] sm:$0xff]
  %v116 = vld [vmem:[%s2 + $0x1f0] sm:$0xff]
  %v117 = vld [vmem:[%s2 + $0x1f8] sm:$0xff]
  %v118 = vld [vmem:[%s2 + $0x200] sm:$0xff]
  %v119 = vld [vmem:[%s2 + $0x208] sm:$0xff]
  %v120 = vld [vmem:[%s2 + $0x210] sm:$0xff]
  %v121 = vld [vmem:[%s2 + $0x218] sm:$0xff]
  %v122 = vld [vmem:[%s2 + $0x220] sm:$0xff]
  %v123 = vld [vmem:[%s2 + $0x228] sm:$0xff]
  %v124 = vld [vmem:[%s2 + $0x230] sm:$0xff]
  %v125 = vld [vmem:[%s2 + $0x238] sm:$0xff]
  %v126 = vld [vmem:[%s2 + $0x240] sm:$0xff]
  %v127 = vld [vmem:[%s2 + $0x248] sm:$0xff]
  %v128 = vld [vmem:[%s2 + $0x250] sm:$0xff]
  %v129 = vld [vmem:[%s2 + $0x258] sm:$0xff]
  %v130 = vld [vmem:[%s2 + $0x260] sm:$0xff]
  %v131 = vld [vmem:[%s2 + $0x268] sm:$0xff]
  %v132 = vld [vmem:[%s2 + $0x270] sm:$0xff]
  %v133 = vld [vmem:[%s2 + $0x278] sm:$0xff]
  %v134 = vld [vmem:[%s2 + $0x280] sm:$0xff]
  %v135 = vld [vmem:[%s2 + $0x288] sm:$0xff]
  %v136 = vld [vmem:[%s2 + $0x290] sm:$0xff]
  %v137 = vld [vmem:[%s2 + $0x298] sm:$0xff]
  %v138 = vld [vmem:[%s2 + $0x2a0] sm:$0xff]
  %v139 = vld [vmem:[%s2 + $0x2a8] sm:$0xff]
  %v140 = vld [vmem:[%s2 + $0x2b0] sm:$0xff]
  %v141 = vld [vmem:[%s2 + $0x2b8] sm:$0xff]
  %v142 = vld [vmem:[%s2 + $0x2c0] sm:$0xff]
  %v143 = vld [vmem:[%s2 + $0x2c8] sm:$0xff]
  %v144 = vld [vmem:[%s2 + $0x2d0] sm:$0xff]
  %v145 = vld [vmem:[%s2 + $0x2d8] sm:$0xff]
  %v146 = vld [vmem:[%s2 + $0x2e0] sm:$0xff]
  %v147 = vld [vmem:[%s2 + $0x2e8] sm:$0xff]
  %v148 = vld [vmem:[%s2 + $0x2f0] sm:$0xff]
  %v149 = vld [vmem:[%s2 + $0x2f8] sm:$0xff]
  %v150 = vld [vmem:[%s2 + $0x300] sm:$0xff]
  %v151 = vld [vmem:[%s2 + $0x308] sm:$0xff]
  %v152 = vld [vmem:[%s2 + $0x310] sm:$0xff]
  %v153 = vld [vmem:[%s2 + $0x318] sm:$0xff]
  %v154 = vld [vmem:[%s2 + $0x320] sm:$0xff]
  %v155 = vld [vmem:[%s2 + $0x328] sm:$0xff]
  %v156 = vld [vmem:[%s2 + $0x330] sm:$0xff]
  %v157 = vld [vmem:[%s2 + $0x338] sm:$0xff]
  %v158 = vld [vmem:[%s2 + $0x340] sm:$0xff]
  %v159 = vld [vmem:[%s2 + $0x348] sm:$0xff]
  %v160 = vld [vmem:[%s2 + $0x350] sm:$0xff]
  %v161 = vld [vmem:[%s2 + $0x358] sm:$0xff]
  %v162 = vld [vmem:[%s2 + $0x360] sm:$0xff]
  %v163 = vld [vmem:[%s2 + $0x368] sm:$0xff]
  %v164 = vld [vmem:[%s2 + $0x370] sm:$0xff]
  %v165 = vld [vmem:[%s2 + $0x378] sm:$0xff]
  %v166 = vld [vmem:[%s2 + $0x380] sm:$0xff]
  %v167 = vld [vmem:[%s2 + $0x388] sm:$0xff]
  %v168 = vld [vmem:[%s2 + $0x390] sm:$0xff]
  %v169 = vld [vmem:[%s2 + $0x398] sm:$0xff]
  %v170 = vld [vmem:[%s2 + $0x3a0] sm:$0xff]
  %v171 = vld [vmem:[%s2 + $0x3a8] sm:$0xff]
  %v172 = vld [vmem:[%s2 + $0x3b0] sm:$0xff]
  %v173 = vld [vmem:[%s2 + $0x3b8] sm:$0xff]
  %v174 = vld [vmem:[%s2 + $0x3c0] sm:$0xff]
  %v175 = vld [vmem:[%s2 + $0x3c8] sm:$0xff]
  %v176 = vld [vmem:[%s2 + $0x3d0] sm:$0xff]
  %v177 = vld [vmem:[%s2 + $0x3d8] sm:$0xff]
  %v178 = vld [vmem:[%s2 + $0x3e0] sm:$0xff]
  %v179 = vld [vmem:[%s2 + $0x3e8] sm:$0xff]
  %v180 = vld [vmem:[%s2 + $0x3f0] sm:$0xff]
  %v181 = vld [vmem:[%s2 + $0x3f8] sm:$0xff]
  %182 = vmatpush.msra.mxu0 %v84
  %183 = vmatpush.msra.mxu0 %v82
  %184 = vmatpush.msra.mxu0 %v80
  %185 = vmatpush.msra.mxu0 %v78
  %186 = vmatpush.msra.mxu0 %v76
  %187 = vmatpush.msra.mxu0 %v74
  %188 = vmatpush.msra.mxu0 %v72
  %189 = vmatpush.msra.mxu0 %v70
  %190 = vmatpush.msra.mxu0 %v68
  %191 = vmatpush.msra.mxu0 %v66
  %192 = vmatpush.msra.mxu0 %v64
  %193 = vmatpush.msra.mxu0 %v62
  %194 = vmatpush.msra.mxu0 %v60
  %195 = vmatpush.msra.mxu0 %v58
  %196 = vmatpush.msra.mxu0 %v56
  %197 = vmatpush.msra.mxu0 %v54
  %198 = vmatmul.f32.gmra.mxu0 %v38
  %v199 = vpop.f32.mrf.mxu0
  %v200 = vadd.f32 0.0, %v199
  %201 = vmatmul.f32.gmra.mxu0 %v42
  %v202 = vpop.f32.mrf.mxu0
  %v203 = vadd.f32 0.0, %v202
  %204 = vmatmul.f32.gmra.mxu0 %v46
  %v205 = vpop.f32.mrf.mxu0
  %v206 = vadd.f32 0.0, %v205
  %207 = vmatmul.f32.gmra.mxu0 %v50
  %v208 = vpop.f32.mrf.mxu0
  %v209 = vadd.f32 0.0, %v208
  %210 = vdwg.mxu0
  %211 = vmatpush.msra.mxu0 %v116
  %212 = vmatpush.msra.mxu0 %v114
  %213 = vmatpush.msra.mxu0 %v112
  %214 = vmatpush.msra.mxu0 %v110
  %215 = vmatpush.msra.mxu0 %v108
  %216 = vmatpush.msra.mxu0 %v106
  %217 = vmatpush.msra.mxu0 %v104
  %218 = vmatpush.msra.mxu0 %v102
  %219 = vmatpush.msra.mxu0 %v100
  %220 = vmatpush.msra.mxu0 %v98
  %221 = vmatpush.msra.mxu0 %v96
  %222 = vmatpush.msra.mxu0 %v94
  %223 = vmatpush.msra.mxu0 %v92
  %224 = vmatpush.msra.mxu0 %v90
  %225 = vmatpush.msra.mxu0 %v88
  %226 = vmatpush.msra.mxu0 %v86
  %227 = vmatmul.f32.gmra.mxu0 %v39
  %v228 = vpop.f32.mrf.mxu0
  %v229 = vadd.f32 %v200, %v228
  %230 = vmatmul.f32.gmra.mxu0 %v43
  %v231 = vpop.f32.mrf.mxu0
  %v232 = vadd.f32 %v203, %v231
  %233 = vmatmul.f32.gmra.mxu0 %v47
  %v234 = vpop.f32.mrf.mxu0
  %v235 = vadd.f32 %v206, %v234
  %236 = vmatmul.f32.gmra.mxu0 %v51
  %v237 = vpop.f32.mrf.mxu0
  %v238 = vadd.f32 %v209, %v237
  %239 = vdwg.mxu0
  %240 = vmatpush.msra.mxu0 %v148
  %241 = vmatpush.msra.mxu0 %v146
  %242 = vmatpush.msra.mxu0 %v144
  %243 = vmatpush.msra.mxu0 %v142
  %244 = vmatpush.msra.mxu0 %v140
  %245 = vmatpush.msra.mxu0 %v138
  %246 = vmatpush.msra.mxu0 %v136
  %247 = vmatpush.msra.mxu0 %v134
  %248 = vmatpush.msra.mxu0 %v132
  %249 = vmatpush.msra.mxu0 %v130
  %250 = vmatpush.msra.mxu0 %v128
  %251 = vmatpush.msra.mxu0 %v126
  %252 = vmatpush.msra.mxu0 %v124
  %253 = vmatpush.msra.mxu0 %v122
  %254 = vmatpush.msra.mxu0 %v120
  %255 = vmatpush.msra.mxu0 %v118
  %256 = vmatmul.f32.gmra.mxu0 %v40
  %v257 = vpop.f32.mrf.mxu0
  %v258 = vadd.f32 %v229, %v257
  %259 = vmatmul.f32.gmra.mxu0 %v44
  %v260 = vpop.f32.mrf.mxu0
  %v261 = vadd.f32 %v232, %v260
  %262 = vmatmul.f32.gmra.mxu0 %v48
  %v263 = vpop.f32.mrf.mxu0
  %v264 = vadd.f32 %v235, %v263
  %265 = vmatmul.f32.gmra.mxu0 %v52
  %v266 = vpop.f32.mrf.mxu0
  %v267 = vadd.f32 %v238, %v266
  %268 = vdwg.mxu0
  %269 = vmatpush.msra.mxu0 %v180
  %270 = vmatpush.msra.mxu0 %v178
  %271 = vmatpush.msra.mxu0 %v176
  %272 = vmatpush.msra.mxu0 %v174
  %273 = vmatpush.msra.mxu0 %v172
  %274 = vmatpush.msra.mxu0 %v170
  %275 = vmatpush.msra.mxu0 %v168
  %276 = vmatpush.msra.mxu0 %v166
  %277 = vmatpush.msra.mxu0 %v164
  %278 = vmatpush.msra.mxu0 %v162
  %279 = vmatpush.msra.mxu0 %v160
  %280 = vmatpush.msra.mxu0 %v158
  %281 = vmatpush.msra.mxu0 %v156
  %282 = vmatpush.msra.mxu0 %v154
  %283 = vmatpush.msra.mxu0 %v152
  %284 = vmatpush.msra.mxu0 %v150
  %285 = vmatmul.f32.gmra.mxu0 %v41
  %v286 = vpop.f32.mrf.mxu0
  %v287 = vadd.f32 %v258, %v286
  %288 = vmatmul.f32.gmra.mxu0 %v45
  %v289 = vpop.f32.mrf.mxu0
  %v290 = vadd.f32 %v261, %v289
  %291 = vmatmul.f32.gmra.mxu0 %v49
  %v292 = vpop.f32.mrf.mxu0
  %v293 = vadd.f32 %v264, %v292
  %294 = vmatmul.f32.gmra.mxu0 %v53
  %v295 = vpop.f32.mrf.mxu0
  %v296 = vadd.f32 %v267, %v295
  %297 = vdwg.mxu0
  %298 = vmatpush.msra.mxu0 %v85
  %299 = vmatpush.msra.mxu0 %v83
  %300 = vmatpush.msra.mxu0 %v81
  %301 = vmatpush.msra.mxu0 %v79
  %302 = vmatpush.msra.mxu0 %v77
  %303 = vmatpush.msra.mxu0 %v75
  %304 = vmatpush.msra.mxu0 %v73
  %305 = vmatpush.msra.mxu0 %v71
  %306 = vmatpush.msra.mxu0 %v69
  %307 = vmatpush.msra.mxu0 %v67
  %308 = vmatpush.msra.mxu0 %v65
  %309 = vmatpush.msra.mxu0 %v63
  %310 = vmatpush.msra.mxu0 %v61
  %311 = vmatpush.msra.mxu0 %v59
  %312 = vmatpush.msra.mxu0 %v57
  %313 = vmatpush.msra.mxu0 %v55
  %314 = vmatmul.f32.gmra.mxu0 %v38
  %v315 = vpop.f32.mrf.mxu0
  %v316 = vadd.f32 0.0, %v315
  %317 = vmatmul.f32.gmra.mxu0 %v42
  %v318 = vpop.f32.mrf.mxu0
  %v319 = vadd.f32 0.0, %v318
  %320 = vmatmul.f32.gmra.mxu0 %v46
  %v321 = vpop.f32.mrf.mxu0
  %v322 = vadd.f32 0.0, %v321
  %323 = vmatmul.f32.gmra.mxu0 %v50
  %v324 = vpop.f32.mrf.mxu0
  %v325 = vadd.f32 0.0, %v324
  %326 = vdwg.mxu0
  %327 = vmatpush.msra.mxu0 %v117
  %328 = vmatpush.msra.mxu0 %v115
  %329 = vmatpush.msra.mxu0 %v113
  %330 = vmatpush.msra.mxu0 %v111
  %331 = vmatpush.msra.mxu0 %v109
  %332 = vmatpush.msra.mxu0 %v107
  %333 = vmatpush.msra.mxu0 %v105
  %334 = vmatpush.msra.mxu0 %v103
  %335 = vmatpush.msra.mxu0 %v101
  %336 = vmatpush.msra.mxu0 %v99
  %337 = vmatpush.msra.mxu0 %v97
  %338 = vmatpush.msra.mxu0 %v95
  %339 = vmatpush.msra.mxu0 %v93
  %340 = vmatpush.msra.mxu0 %v91
  %341 = vmatpush.msra.mxu0 %v89
  %342 = vmatpush.msra.mxu0 %v87
  %343 = vmatmul.f32.gmra.mxu0 %v39
  %v344 = vpop.f32.mrf.mxu0
  %v345 = vadd.f32 %v316, %v344
  %346 = vmatmul.f32.gmra.mxu0 %v43
  %v347 = vpop.f32.mrf.mxu0
  %v348 = vadd.f32 %v319, %v347
  %349 = vmatmul.f32.gmra.mxu0 %v47
  %v350 = vpop.f32.mrf.mxu0
  %v351 = vadd.f32 %v322, %v350
  %352 = vmatmul.f32.gmra.mxu0 %v51
  %v353 = vpop.f32.mrf.mxu0
  %v354 = vadd.f32 %v325, %v353
  %355 = vdwg.mxu0
  %356 = vmatpush.msra.mxu0 %v149
  %357 = vmatpush.msra.mxu0 %v147
  %358 = vmatpush.msra.mxu0 %v145
  %359 = vmatpush.msra.mxu0 %v143
  %360 = vmatpush.msra.mxu0 %v141
  %361 = vmatpush.msra.mxu0 %v139
  %362 = vmatpush.msra.mxu0 %v137
  %363 = vmatpush.msra.mxu0 %v135
  %364 = vmatpush.msra.mxu0 %v133
  %365 = vmatpush.msra.mxu0 %v131
  %366 = vmatpush.msra.mxu0 %v129
  %367 = vmatpush.msra.mxu0 %v127
  %368 = vmatpush.msra.mxu0 %v125
  %369 = vmatpush.msra.mxu0 %v123
  %370 = vmatpush.msra.mxu0 %v121
  %371 = vmatpush.msra.mxu0 %v119
  %372 = vmatmul.f32.gmra.mxu0 %v40
  %v373 = vpop.f32.mrf.mxu0
  %v374 = vadd.f32 %v345, %v373
  %375 = vmatmul.f32.gmra.mxu0 %v44
  %v376 = vpop.f32.mrf.mxu0
  %v377 = vadd.f32 %v348, %v376
  %378 = vmatmul.f32.gmra.mxu0 %v48
  %v379 = vpop.f32.mrf.mxu0
  %v380 = vadd.f32 %v351, %v379
  %381 = vmatmul.f32.gmra.mxu0 %v52
  %v382 = vpop.f32.mrf.mxu0
  %v383 = vadd.f32 %v354, %v382
  %384 = vdwg.mxu0
  %385 = vmatpush.msra.mxu0 %v181
  %386 = vmatpush.msra.mxu0 %v179
  %387 = vmatpush.msra.mxu0 %v177
  %388 = vmatpush.msra.mxu0 %v175
  %389 = vmatpush.msra.mxu0 %v173
  %390 = vmatpush.msra.mxu0 %v171
  %391 = vmatpush.msra.mxu0 %v169
  %392 = vmatpush.msra.mxu0 %v167
  %393 = vmatpush.msra.mxu0 %v165
  %394 = vmatpush.msra.mxu0 %v163
  %395 = vmatpush.msra.mxu0 %v161
  %396 = vmatpush.msra.mxu0 %v159
  %397 = vmatpush.msra.mxu0 %v157
  %398 = vmatpush.msra.mxu0 %v155
  %399 = vmatpush.msra.mxu0 %v153
  %400 = vmatpush.msra.mxu0 %v151
  %401 = vmatmul.f32.gmra.mxu0 %v41
  %v402 = vpop.f32.mrf.mxu0
  %v403 = vadd.f32 %v374, %v402
  %404 = vmatmul.f32.gmra.mxu0 %v45
  %v405 = vpop.f32.mrf.mxu0
  %v406 = vadd.f32 %v377, %v405
  %407 = vmatmul.f32.gmra.mxu0 %v49
  %v408 = vpop.f32.mrf.mxu0
  %v409 = vadd.f32 %v380, %v408
  %410 = vmatmul.f32.gmra.mxu0 %v53
  %v411 = vpop.f32.mrf.mxu0
  %v412 = vadd.f32 %v383, %v411
  %413 = vdwg.mxu0
  %v414 = vld [vmem:[%s3] sm:$0x1]
  %v416 = vperm.slane %v414, 0
  %v418 = vadd.f32 %v403, %v416
  %v419 = vadd.f32 %v406, %v416
  %v420 = vadd.f32 %v409, %v416
  %v421 = vadd.f32 %v412, %v416
  %v422 = vld [vmem:[%s1] sm:$0xff]
  %v423 = vld [vmem:[%s1 + $0x8] sm:$0xff]
  %v424 = vld [vmem:[%s4] sm:$0xff]
  %v425 = vld [vmem:[%s4 + $0x8] sm:$0xff]
  %v426 = vld [vmem:[%s5] sm:$0x1]
  %v428 = vperm.slane %v426, 0
  %vm430 = vcmask 130048
  %v432 = vsel %vm430, %v422, 0
  %v435 = vsel %vm430, %v423, 0
  %437 = vmatpush.msra.mxu0 0.0
  %438 = vmatpush.msra.mxu0 0.0
  %439 = vmatpush.msra.mxu0 0.0
  %440 = vmatpush.msra.mxu0 0.0
  %441 = vmatpush.msra.mxu0 0.0
  %442 = vmatpush.msra.mxu0 0.0
  %443 = vmatpush.msra.mxu0 0.0
  %444 = vmatpush.msra.mxu0 0.0
  %445 = vmatpush.msra.mxu0 0.0
  %446 = vmatpush.msra.mxu0 0.0
  %447 = vmatpush.msra.mxu0 0.0
  %448 = vmatpush.msra.mxu0 0.0
  %449 = vmatpush.msra.mxu0 0.0
  %450 = vmatpush.msra.mxu0 0.0
  %451 = vmatpush.msra.mxu0 %v425
  %452 = vmatpush.msra.mxu0 %v424
  %453 = vmatmul.f32.gmra.mxu0 %v432
  %v454 = vpop.f32.mrf.mxu0
  %v455 = vadd.f32 %v428, %v454
  %456 = vmatmul.f32.gmra.mxu0 %v435
  %v457 = vpop.f32.mrf.mxu0
  %v458 = vadd.f32 %v428, %v457
  %459 = vdwg.mxu0
  %v462 = vrot.slane %v455, 2
  %v463 = vrot.slane %v455, 4
  %v464 = vrot.slane %v455, 6
  %v465 = vrot.slane %v458, 2
  %v466 = vrot.slane %v458, 4
  %v467 = vrot.slane %v458, 6
  %v468 = vld [vmem:[%s6] sm:$0xff]
  %v469 = vld [vmem:[%s6 + $0x8] sm:$0xff]
  %v470 = vld [vmem:[%s6 + $0x10] sm:$0xff]
  %v471 = vld [vmem:[%s6 + $0x18] sm:$0xff]
  %v472 = vld [vmem:[%s8] sm:$0xff]
  %v473 = vld [vmem:[%s8 + $0x8] sm:$0xff]
  %v474 = vld [vmem:[%s8 + $0x10] sm:$0xff]
  %v475 = vld [vmem:[%s8 + $0x18] sm:$0xff]
  %v476 = vld [vmem:[%s7] sm:$0x1]
  %v478 = vperm.slane %v476, 0
  %vm480 = vcmask 261120
  %v482 = vsel %vm480, 0.0, 0
  %484 = vmatpush.msra.mxu0 0.0
  %485 = vmatpush.msra.mxu0 0.0
  %486 = vmatpush.msra.mxu0 0.0
  %487 = vmatpush.msra.mxu0 0.0
  %488 = vmatpush.msra.mxu0 0.0
  %489 = vmatpush.msra.mxu0 0.0
  %490 = vmatpush.msra.mxu0 0.0
  %491 = vmatpush.msra.mxu0 0.0
  %492 = vmatpush.msra.mxu0 0.0
  %493 = vmatpush.msra.mxu0 0.0
  %494 = vmatpush.msra.mxu0 0.0
  %495 = vmatpush.msra.mxu0 0.0
  %496 = vmatpush.msra.mxu0 %v471
  %497 = vmatpush.msra.mxu0 %v470
  %498 = vmatpush.msra.mxu0 %v469
  %499 = vmatpush.msra.mxu0 %v468
  %500 = vmatmul.f32.gmra.mxu0 %v482
  %v501 = vpop.f32.mrf.mxu0
  %v502 = vadd.f32 0.0, %v501
  %503 = vdwg.mxu0
  %v505 = vrot.slane %v502, 1
  %v506 = vperm.slane %v502, 0
  %v507 = vperm.slane %v505, 0
  %v510 = vadd.f32 %v418, %v506
  %v511 = vadd.f32 %v419, %v506
  %v512 = vadd.f32 %v420, %v507
  %v513 = vadd.f32 %v421, %v507
  %v514 = vtanh.pop %v510
  %v515 = vtanh.pop %v511
  %v516 = vtanh.pop %v512
  %v517 = vtanh.pop %v513
  %v518 = vmul.f32 %v514, %v478
  %v519 = vmul.f32 %v515, %v478
  %v520 = vmul.f32 %v516, %v478
  %v521 = vmul.f32 %v517, %v478
  %v522 = vsel %vm480, %v518, 0.0
  %523 = vadd.xlane.f32.xlu0 %v522
  %v524 = vpop.xlane.xlu0 %523
  %v525 = vsel %vm480, %v519, 0.0
  %526 = vadd.xlane.f32.xlu0 %v525
  %v527 = vpop.xlane.xlu0 %526
  %v528 = vsel %vm480, %v520, 0.0
  %529 = vadd.xlane.f32.xlu0 %v528
  %v530 = vpop.xlane.xlu0 %529
  %v531 = vsel %vm480, %v521, 0.0
  %532 = vadd.xlane.f32.xlu0 %v531
  %v533 = vpop.xlane.xlu0 %532
  %v538 = vlaneseq
  %v539 = vand.u32 %v538, 127
  %v540 = vperm.slane %v524, %v539
  %v541 = vadd.s32 %v539, 4294967288
  %v542 = vperm.slane %v527, %v541
  %vm543 = vcmask 130112
  %v544 = vsel %vm543, %v542, %v540
  %v545 = vperm.slane %v530, %v539
  %v546 = vperm.slane %v533, %v541
  %v547 = vsel %vm543, %v546, %v545
  %vm548 = vcmask 1041409
  %v549 = vsel %vm548, %v547, %v544
  %vm551 = vcmask 123904
  %v552 = vsel %vm551, %v549, -inf
  %553 = vmax.xlane.f32.xlu0 %v552
  %v554 = vpop.xlane.xlu0 %553
  %v556 = vperm.slane %v554, 0
  %v557 = vperm.slane %v554, 1
  %v560 = vsub.f32 %v524, %v556
  %v561 = vsub.f32 %v527, %v556
  %v562 = vsub.f32 %v530, %v557
  %v563 = vsub.f32 %v533, %v557
  %v564 = vmul.f32 %v560, 1.442695
  %v565 = vpow.pop %v564
  %v566 = vmul.f32 %v561, 1.442695
  %v567 = vpow.pop %v566
  %v568 = vmul.f32 %v562, 1.442695
  %v569 = vpow.pop %v568
  %v570 = vmul.f32 %v563, 1.442695
  %v571 = vpow.pop %v570
  %576 = vset.pattern.permute.xlu0 0
  %577 = vperm.xlu0 %576, %v565
  %v578 = vpop.permute.xlu0 %577
  %579 = vset.pattern.permute.xlu0 0
  %580 = vperm.xlu0 %579, %v567
  %v581 = vpop.permute.xlu0 %580
  %582 = vset.pattern.permute.xlu0 0
  %583 = vperm.xlu0 %582, %v569
  %v584 = vpop.permute.xlu0 %583
  %585 = vset.pattern.permute.xlu0 0
  %586 = vperm.xlu0 %585, %v571
  %v587 = vpop.permute.xlu0 %586
  %v588 = vperm.slane %v578, %v539
  %v589 = vperm.slane %v581, %v541
  %v590 = vsel %vm543, %v589, %v588
  %v591 = vperm.slane %v584, %v539
  %v592 = vperm.slane %v587, %v541
  %v593 = vsel %vm543, %v592, %v591
  %v594 = vsel %vm548, %v593, %v590
  %v596 = vsel %vm551, %v594, 0.0
  %597 = vadd.xlane.f32.xlu0 %v596
  %v598 = vpop.xlane.xlu0 %597
  %v599 = vrcp.pop %v598
  %v601 = vperm.slane %v599, 0
  %v602 = vperm.slane %v599, 1
  %v605 = vmul.f32 %v565, %v601
  %v606 = vmul.f32 %v567, %v601
  %v607 = vmul.f32 %v569, %v602
  %v608 = vmul.f32 %v571, %v602
  %611 = vset.pattern.permute.xlu0 0
  %612 = vperm.xlu0 %611, %v605
  %v613 = vpop.permute.xlu0 %612
  %614 = vset.pattern.permute.xlu0 0
  %615 = vperm.xlu0 %614, %v606
  %v616 = vpop.permute.xlu0 %615
  %v617 = vperm.slane %v613, %v539
  %v618 = vperm.slane %v616, %v541
  %v619 = vsel %vm543, %v618, %v617
  %v620 = vsel %vm430, %v619, 0
  %622 = vmatpush.msra.mxu0 0.0
  %623 = vmatpush.msra.mxu0 0.0
  %624 = vmatpush.msra.mxu0 0.0
  %625 = vmatpush.msra.mxu0 0.0
  %626 = vmatpush.msra.mxu0 0.0
  %627 = vmatpush.msra.mxu0 0.0
  %628 = vmatpush.msra.mxu0 0.0
  %629 = vmatpush.msra.mxu0 0.0
  %630 = vmatpush.msra.mxu0 0.0
  %631 = vmatpush.msra.mxu0 0.0
  %632 = vmatpush.msra.mxu0 0.0
  %633 = vmatpush.msra.mxu0 0.0
  %634 = vmatpush.msra.mxu0 0.0
  %635 = vmatpush.msra.mxu0 0.0
  %636 = vmatpush.msra.mxu0 %v290
  %637 = vmatpush.msra.mxu0 %v287
  %638 = vmatmul.f32.gmra.mxu0 %v620
  %v639 = vpop.f32.mrf.mxu0
  %v640 = vadd.f32 0.0, %v639
  %641 = vdwg.mxu0
  %644 = vset.pattern.permute.xlu0 0
  %645 = vperm.xlu0 %644, %v607
  %v646 = vpop.permute.xlu0 %645
  %647 = vset.pattern.permute.xlu0 0
  %648 = vperm.xlu0 %647, %v608
  %v649 = vpop.permute.xlu0 %648
  %v650 = vperm.slane %v646, %v539
  %v651 = vperm.slane %v649, %v541
  %v652 = vsel %vm543, %v651, %v650
  %v653 = vsel %vm430, %v652, 0
  %655 = vmatpush.msra.mxu0 0.0
  %656 = vmatpush.msra.mxu0 0.0
  %657 = vmatpush.msra.mxu0 0.0
  %658 = vmatpush.msra.mxu0 0.0
  %659 = vmatpush.msra.mxu0 0.0
  %660 = vmatpush.msra.mxu0 0.0
  %661 = vmatpush.msra.mxu0 0.0
  %662 = vmatpush.msra.mxu0 0.0
  %663 = vmatpush.msra.mxu0 0.0
  %664 = vmatpush.msra.mxu0 0.0
  %665 = vmatpush.msra.mxu0 0.0
  %666 = vmatpush.msra.mxu0 0.0
  %667 = vmatpush.msra.mxu0 0.0
  %668 = vmatpush.msra.mxu0 0.0
  %669 = vmatpush.msra.mxu0 %v296
  %670 = vmatpush.msra.mxu0 %v293
  %671 = vmatmul.f32.gmra.mxu0 %v653
  %v672 = vpop.f32.mrf.mxu0
  %v673 = vadd.f32 0.0, %v672
  %674 = vdwg.mxu0
  %675 = vmatpush.msra.mxu0 0.0
  %676 = vmatpush.msra.mxu0 0.0
  %677 = vmatpush.msra.mxu0 0.0
  %678 = vmatpush.msra.mxu0 0.0
  %679 = vmatpush.msra.mxu0 0.0
  %680 = vmatpush.msra.mxu0 0.0
  %681 = vmatpush.msra.mxu0 0.0
  %682 = vmatpush.msra.mxu0 0.0
  %683 = vmatpush.msra.mxu0 0.0
  %684 = vmatpush.msra.mxu0 0.0
  %685 = vmatpush.msra.mxu0 0.0
  %686 = vmatpush.msra.mxu0 0.0
  %687 = vmatpush.msra.mxu0 %v475
  %688 = vmatpush.msra.mxu0 %v474
  %689 = vmatpush.msra.mxu0 %v473
  %690 = vmatpush.msra.mxu0 %v472
  %691 = vmatmul.f32.gmra.mxu0 %v482
  %v692 = vpop.f32.mrf.mxu0
  %v693 = vadd.f32 0.0, %v692
  %694 = vdwg.mxu0
  %v696 = vrot.slane %v693, 1
  %v699 = vadd.f32 %v640, %v693
  %v700 = vadd.f32 %v673, %v696
  %701 = vst [vmem:[#allocation1] ss:$4 sm:$0xff] %v455
  %v702 = vld.sshfl [vmem:[#allocation1] sm:$0xff pattern:$0x73625140]
  %v703 = vrot.slane %v702, 1
  %v706 = vadd.f32 %v699, %v702
  %v707 = vadd.f32 %v700, %v703
  %v708 = vxor.u32 %v706, 2147483648
  %v709 = vxor.u32 %v707, 2147483648
  %v710 = vmul.f32 %v708, 1.442695
  %v711 = vpow.pop %v710
  %v712 = vmul.f32 %v709, 1.442695
  %v713 = vpow.pop %v712
  %v714 = vadd.f32 %v711, 1.0
  %v715 = vadd.f32 %v713, 1.0
  %v716 = vrcp.pop %v714
  %v717 = vmul.f32 %v714, %v716
  %v718 = vsub.f32 1.0, %v717
  %v719 = vmul.f32 %v716, %v718
  %v720 = vadd.f32 %v716, %v719
  %vm721 = vweird.f32 %v714
  %vm722 = vweird.f32 %v716
  %vm723 = vmor %vm721, %vm722
  %v724 = vsel %vm723, %v716, %v720
  %v725 = vand.u32 2147483647, %v714
  %vm726 = vcmp.eq.f32.partialorder %v725, 8.507059e+37
  %v727 = vand.u32 %v714, 2147483648
  %v728 = vor.u32 1.1754944e-38, %v727
  %v729 = vsel %vm726, %v728, %v724
  %v730 = vmul.f32 1.0, %v729
  %v731 = vrcp.pop %v715
  %v732 = vmul.f32 %v715, %v731
  %v733 = vsub.f32 1.0, %v732
  %v734 = vmul.f32 %v731, %v733
  %v735 = vadd.f32 %v731, %v734
  %vm736 = vweird.f32 %v715
  %vm737 = vweird.f32 %v731
  %vm738 = vmor %vm736, %vm737
  %v739 = vsel %vm738, %v731, %v735
  %v740 = vand.u32 2147483647, %v715
  %vm741 = vcmp.eq.f32.partialorder %v740, 8.507059e+37
  %v742 = vand.u32 %v715, 2147483648
  %v743 = vor.u32 1.1754944e-38, %v742
  %v744 = vsel %vm741, %v743, %v739
  %v745 = vmul.f32 1.0, %v744
  %v746 = vtanh.pop %v706
  %v747 = vtanh.pop %v707
  %v748 = vmul.f32 %v730, 0.0
  %v749 = vmul.f32 %v745, 0.0
  %752 = vrot.lane.b32.xlu0 %v746, 64
  %v753 = vpop.permute.xlu0 %752
  %754 = vrot.lane.b32.xlu0 %v747, 64
  %v755 = vpop.permute.xlu0 %754
  %v758 = vmul.f32 %v730, %v753
  %v759 = vmul.f32 %v745, %v755
  %762 = vrot.lane.b32.xlu0 %v758, 32
  %v763 = vpop.permute.xlu0 %762
  %764 = vrot.lane.b32.xlu0 %v759, 32
  %v765 = vpop.permute.xlu0 %764
  %v768 = vadd.f32 %v748, %v763
  %v769 = vadd.f32 %v749, %v765
  %v770 = vtanh.pop %v768
  %v771 = vtanh.pop %v769
  %774 = vrot.lane.b32.xlu0 %v770, 64
  %v775 = vpop.permute.xlu0 %774
  %776 = vrot.lane.b32.xlu0 %v771, 64
  %v777 = vpop.permute.xlu0 %776
  %v780 = vmul.f32 %v730, %v775
  %v781 = vmul.f32 %v745, %v777
  %v784 = vrot.slane %v781, 7
  %v785 = vsel %vm548, %v784, %v780
  %786 = vrot.lane.b32.xlu0 %v785, 32
  %v787 = vpop.permute.xlu0 %786
  %v788 = vsel %vm480, %v787, 0
  %790 = vmatpush.msra.mxu0 0.0
  %791 = vmatpush.msra.mxu0 0.0
  %792 = vmatpush.msra.mxu0 0.0
  %793 = vmatpush.msra.mxu0 0.0
  %794 = vmatpush.msra.mxu0 0.0
  %795 = vmatpush.msra.mxu0 0.0
  %796 = vmatpush.msra.mxu0 0.0
  %797 = vmatpush.msra.mxu0 0.0
  %798 = vmatpush.msra.mxu0 0.0
  %799 = vmatpush.msra.mxu0 0.0
  %800 = vmatpush.msra.mxu0 0.0
  %801 = vmatpush.msra.mxu0 0.0
  %802 = vmatpush.msra.mxu0 %v471
  %803 = vmatpush.msra.mxu0 %v470
  %804 = vmatpush.msra.mxu0 %v469
  %805 = vmatpush.msra.mxu0 %v468
  %806 = vmatmul.f32.gmra.mxu0 %v788
  %v807 = vpop.f32.mrf.mxu0
  %v808 = vadd.f32 0.0, %v807
  %809 = vdwg.mxu0
  %v811 = vrot.slane %v808, 1
  %v812 = vperm.slane %v808, 0
  %v813 = vperm.slane %v811, 0
  %v816 = vadd.f32 %v418, %v812
  %v817 = vadd.f32 %v419, %v812
  %v818 = vadd.f32 %v420, %v813
  %v819 = vadd.f32 %v421, %v813
  %v820 = vtanh.pop %v816
  %v821 = vtanh.pop %v817
  %v822 = vtanh.pop %v818
  %v823 = vtanh.pop %v819
  %v824 = vmul.f32 %v820, %v478
  %v825 = vmul.f32 %v821, %v478
  %v826 = vmul.f32 %v822, %v478
  %v827 = vmul.f32 %v823, %v478
  %v828 = vsel %vm480, %v824, 0.0
  %829 = vadd.xlane.f32.xlu0 %v828
  %v830 = vpop.xlane.xlu0 %829
  %v831 = vsel %vm480, %v825, 0.0
  %832 = vadd.xlane.f32.xlu0 %v831
  %v833 = vpop.xlane.xlu0 %832
  %v834 = vsel %vm480, %v826, 0.0
  %835 = vadd.xlane.f32.xlu0 %v834
  %v836 = vpop.xlane.xlu0 %835
  %v837 = vsel %vm480, %v827, 0.0
  %838 = vadd.xlane.f32.xlu0 %v837
  %v839 = vpop.xlane.xlu0 %838
  %v844 = vperm.slane %v830, %v539
  %v845 = vperm.slane %v833, %v541
  %v846 = vsel %vm543, %v845, %v844
  %v847 = vperm.slane %v836, %v539
  %v848 = vperm.slane %v839, %v541
  %v849 = vsel %vm543, %v848, %v847
  %v850 = vsel %vm548, %v849, %v846
  %v852 = vsel %vm551, %v850, -inf
  %853 = vmax.xlane.f32.xlu0 %v852
  %v854 = vpop.xlane.xlu0 %853
  %v856 = vperm.slane %v854, 0
  %v857 = vperm.slane %v854, 1
  %v860 = vsub.f32 %v830, %v856
  %v861 = vsub.f32 %v833, %v856
  %v862 = vsub.f32 %v836, %v857
  %v863 = vsub.f32 %v839, %v857
  %v864 = vmul.f32 %v860, 1.442695
  %v865 = vpow.pop %v864
  %v866 = vmul.f32 %v861, 1.442695
  %v867 = vpow.pop %v866
  %v868 = vmul.f32 %v862, 1.442695
  %v869 = vpow.pop %v868
  %v870 = vmul.f32 %v863, 1.442695
  %v871 = vpow.pop %v870
  %876 = vset.pattern.permute.xlu0 0
  %877 = vperm.xlu0 %876, %v865
  %v878 = vpop.permute.xlu0 %877
  %879 = vset.pattern.permute.xlu0 0
  %880 = vperm.xlu0 %879, %v867
  %v881 = vpop.permute.xlu0 %880
  %882 = vset.pattern.permute.xlu0 0
  %883 = vperm.xlu0 %882, %v869
  %v884 = vpop.permute.xlu0 %883
  %885 = vset.pattern.permute.xlu0 0
  %886 = vperm.xlu0 %885, %v871
  %v887 = vpop.permute.xlu0 %886
  %v888 = vperm.slane %v878, %v539
  %v889 = vperm.slane %v881, %v541
  %v890 = vsel %vm543, %v889, %v888
  %v891 = vperm.slane %v884, %v539
  %v892 = vperm.slane %v887, %v541
  %v893 = vsel %vm543, %v892, %v891
  %v894 = vsel %vm548, %v893, %v890
  %v896 = vsel %vm551, %v894, 0.0
  %897 = vadd.xlane.f32.xlu0 %v896
  %v898 = vpop.xlane.xlu0 %897
  %v899 = vrcp.pop %v898
  %v901 = vperm.slane %v899, 0
  %v902 = vperm.slane %v899, 1
  %v905 = vmul.f32 %v865, %v901
  %v906 = vmul.f32 %v867, %v901
  %v907 = vmul.f32 %v869, %v902
  %v908 = vmul.f32 %v871, %v902
  %911 = vset.pattern.permute.xlu0 0
  %912 = vperm.xlu0 %911, %v905
  %v913 = vpop.permute.xlu0 %912
  %914 = vset.pattern.permute.xlu0 0
  %915 = vperm.xlu0 %914, %v906
  %v916 = vpop.permute.xlu0 %915
  %v917 = vperm.slane %v913, %v539
  %v918 = vperm.slane %v916, %v541
  %v919 = vsel %vm543, %v918, %v917
  %v920 = vsel %vm430, %v919, 0
  %922 = vmatpush.msra.mxu0 0.0
  %923 = vmatpush.msra.mxu0 0.0
  %924 = vmatpush.msra.mxu0 0.0
  %925 = vmatpush.msra.mxu0 0.0
  %926 = vmatpush.msra.mxu0 0.0
  %927 = vmatpush.msra.mxu0 0.0
  %928 = vmatpush.msra.mxu0 0.0
  %929 = vmatpush.msra.mxu0 0.0
  %930 = vmatpush.msra.mxu0 0.0
  %931 = vmatpush.msra.mxu0 0.0
  %932 = vmatpush.msra.mxu0 0.0
  %933 = vmatpush.msra.mxu0 0.0
  %934 = vmatpush.msra.mxu0 0.0
  %935 = vmatpush.msra.mxu0 0.0
  %936 = vmatpush.msra.mxu0 %v290
  %937 = vmatpush.msra.mxu0 %v287
  %938 = vmatmul.f32.gmra.mxu0 %v920
  %v939 = vpop.f32.mrf.mxu0
  %v940 = vadd.f32 0.0, %v939
  %941 = vdwg.mxu0
  %944 = vset.pattern.permute.xlu0 0
  %945 = vperm.xlu0 %944, %v907
  %v946 = vpop.permute.xlu0 %945
  %947 = vset.pattern.permute.xlu0 0
  %948 = vperm.xlu0 %947, %v908
  %v949 = vpop.permute.xlu0 %948
  %v950 = vperm.slane %v946, %v539
  %v951 = vperm.slane %v949, %v541
  %v952 = vsel %vm543, %v951, %v950
  %v953 = vsel %vm430, %v952, 0
  %955 = vmatpush.msra.mxu0 0.0
  %956 = vmatpush.msra.mxu0 0.0
  %957 = vmatpush.msra.mxu0 0.0
  %958 = vmatpush.msra.mxu0 0.0
  %959 = vmatpush.msra.mxu0 0.0
  %960 = vmatpush.msra.mxu0 0.0
  %961 = vmatpush.msra.mxu0 0.0
  %962 = vmatpush.msra.mxu0 0.0
  %963 = vmatpush.msra.mxu0 0.0
  %964 = vmatpush.msra.mxu0 0.0
  %965 = vmatpush.msra.mxu0 0.0
  %966 = vmatpush.msra.mxu0 0.0
  %967 = vmatpush.msra.mxu0 0.0
  %968 = vmatpush.msra.mxu0 0.0
  %969 = vmatpush.msra.mxu0 %v296
  %970 = vmatpush.msra.mxu0 %v293
  %971 = vmatmul.f32.gmra.mxu0 %v953
  %v972 = vpop.f32.mrf.mxu0
  %v973 = vadd.f32 0.0, %v972
  %974 = vdwg.mxu0
  %975 = vmatpush.msra.mxu0 0.0
  %976 = vmatpush.msra.mxu0 0.0
  %977 = vmatpush.msra.mxu0 0.0
  %978 = vmatpush.msra.mxu0 0.0
  %979 = vmatpush.msra.mxu0 0.0
  %980 = vmatpush.msra.mxu0 0.0
  %981 = vmatpush.msra.mxu0 0.0
  %982 = vmatpush.msra.mxu0 0.0
  %983 = vmatpush.msra.mxu0 0.0
  %984 = vmatpush.msra.mxu0 0.0
  %985 = vmatpush.msra.mxu0 0.0
  %986 = vmatpush.msra.mxu0 0.0
  %987 = vmatpush.msra.mxu0 %v475
  %988 = vmatpush.msra.mxu0 %v474
  %989 = vmatpush.msra.mxu0 %v473
  %990 = vmatpush.msra.mxu0 %v472
  %991 = vmatmul.f32.gmra.mxu0 %v788
  %v992 = vpop.f32.mrf.mxu0
  %v993 = vadd.f32 0.0, %v992
  %994 = vdwg.mxu0
  %v996 = vrot.slane %v993, 1
  %v999 = vadd.f32 %v940, %v993
  %v1000 = vadd.f32 %v973, %v996
  %1001 = vst [vmem:[#allocation1] ss:$4 sm:$0xff] %v462
  %v1002 = vld.sshfl [vmem:[#allocation1] sm:$0xff pattern:$0x73625140]
  %v1003 = vrot.slane %v1002, 1
  %v1006 = vadd.f32 %v999, %v1002
  %v1007 = vadd.f32 %v1000, %v1003
  %v1008 = vxor.u32 %v1006, 2147483648
  %v1009 = vxor.u32 %v1007, 2147483648
  %v1010 = vmul.f32 %v1008, 1.442695
  %v1011 = vpow.pop %v1010
  %v1012 = vmul.f32 %v1009, 1.442695
  %v1013 = vpow.pop %v1012
  %v1014 = vadd.f32 %v1011, 1.0
  %v1015 = vadd.f32 %v1013, 1.0
  %v1016 = vrcp.pop %v1014
  %v1017 = vmul.f32 %v1014, %v1016
  %v1018 = vsub.f32 1.0, %v1017
  %v1019 = vmul.f32 %v1016, %v1018
  %v1020 = vadd.f32 %v1016, %v1019
  %vm1021 = vweird.f32 %v1014
  %vm1022 = vweird.f32 %v1016
  %vm1023 = vmor %vm1021, %vm1022
  %v1024 = vsel %vm1023, %v1016, %v1020
  %v1025 = vand.u32 2147483647, %v1014
  %vm1026 = vcmp.eq.f32.partialorder %v1025, 8.507059e+37
  %v1027 = vand.u32 %v1014, 2147483648
  %v1028 = vor.u32 1.1754944e-38, %v1027
  %v1029 = vsel %vm1026, %v1028, %v1024
  %v1030 = vmul.f32 1.0, %v1029
  %v1031 = vrcp.pop %v1015
  %v1032 = vmul.f32 %v1015, %v1031
  %v1033 = vsub.f32 1.0, %v1032
  %v1034 = vmul.f32 %v1031, %v1033
  %v1035 = vadd.f32 %v1031, %v1034
  %vm1036 = vweird.f32 %v1015
  %vm1037 = vweird.f32 %v1031
  %vm1038 = vmor %vm1036, %vm1037
  %v1039 = vsel %vm1038, %v1031, %v1035
  %v1040 = vand.u32 2147483647, %v1015
  %vm1041 = vcmp.eq.f32.partialorder %v1040, 8.507059e+37
  %v1042 = vand.u32 %v1015, 2147483648
  %v1043 = vor.u32 1.1754944e-38, %v1042
  %v1044 = vsel %vm1041, %v1043, %v1039
  %v1045 = vmul.f32 1.0, %v1044
  %v1046 = vtanh.pop %v1006
  %v1047 = vtanh.pop %v1007
  %v1048 = vmul.f32 %v1030, %v768
  %v1049 = vmul.f32 %v1045, %v769
  %1052 = vrot.lane.b32.xlu0 %v1046, 64
  %v1053 = vpop.permute.xlu0 %1052
  %1054 = vrot.lane.b32.xlu0 %v1047, 64
  %v1055 = vpop.permute.xlu0 %1054
  %v1058 = vmul.f32 %v1030, %v1053
  %v1059 = vmul.f32 %v1045, %v1055
  %1062 = vrot.lane.b32.xlu0 %v1058, 32
  %v1063 = vpop.permute.xlu0 %1062
  %1064 = vrot.lane.b32.xlu0 %v1059, 32
  %v1065 = vpop.permute.xlu0 %1064
  %v1068 = vadd.f32 %v1048, %v1063
  %v1069 = vadd.f32 %v1049, %v1065
  %v1070 = vtanh.pop %v1068
  %v1071 = vtanh.pop %v1069
  %1074 = vrot.lane.b32.xlu0 %v1070, 64
  %v1075 = vpop.permute.xlu0 %1074
  %1076 = vrot.lane.b32.xlu0 %v1071, 64
  %v1077 = vpop.permute.xlu0 %1076
  %v1080 = vmul.f32 %v1030, %v1075
  %v1081 = vmul.f32 %v1045, %v1077
  %v1084 = vrot.slane %v1081, 7
  %v1085 = vsel %vm548, %v1084, %v1080
  %1086 = vrot.lane.b32.xlu0 %v1085, 32
  %v1087 = vpop.permute.xlu0 %1086
  %v1088 = vsel %vm480, %v1087, 0
  %1090 = vmatpush.msra.mxu0 0.0
  %1091 = vmatpush.msra.mxu0 0.0
  %1092 = vmatpush.msra.mxu0 0.0
  %1093 = vmatpush.msra.mxu0 0.0
  %1094 = vmatpush.msra.mxu0 0.0
  %1095 = vmatpush.msra.mxu0 0.0
  %1096 = vmatpush.msra.mxu0 0.0
  %1097 = vmatpush.msra.mxu0 0.0
  %1098 = vmatpush.msra.mxu0 0.0
  %1099 = vmatpush.msra.mxu0 0.0
  %1100 = vmatpush.msra.mxu0 0.0
  %1101 = vmatpush.msra.mxu0 0.0
  %1102 = vmatpush.msra.mxu0 %v471
  %1103 = vmatpush.msra.mxu0 %v470
  %1104 = vmatpush.msra.mxu0 %v469
  %1105 = vmatpush.msra.mxu0 %v468
  %1106 = vmatmul.f32.gmra.mxu0 %v1088
  %v1107 = vpop.f32.mrf.mxu0
  %v1108 = vadd.f32 0.0, %v1107
  %1109 = vdwg.mxu0
  %v1111 = vrot.slane %v1108, 1
  %v1112 = vperm.slane %v1108, 0
  %v1113 = vperm.slane %v1111, 0
  %v1116 = vadd.f32 %v418, %v1112
  %v1117 = vadd.f32 %v419, %v1112
  %v1118 = vadd.f32 %v420, %v1113
  %v1119 = vadd.f32 %v421, %v1113
  %v1120 = vtanh.pop %v1116
  %v1121 = vtanh.pop %v1117
  %v1122 = vtanh.pop %v1118
  %v1123 = vtanh.pop %v1119
  %v1124 = vmul.f32 %v1120, %v478
  %v1125 = vmul.f32 %v1121, %v478
  %v1126 = vmul.f32 %v1122, %v478
  %v1127 = vmul.f32 %v1123, %v478
  %v1128 = vsel %vm480, %v1124, 0.0
  %1129 = vadd.xlane.f32.xlu0 %v1128
  %v1130 = vpop.xlane.xlu0 %1129
  %v1131 = vsel %vm480, %v1125, 0.0
  %1132 = vadd.xlane.f32.xlu0 %v1131
  %v1133 = vpop.xlane.xlu0 %1132
  %v1134 = vsel %vm480, %v1126, 0.0
  %1135 = vadd.xlane.f32.xlu0 %v1134
  %v1136 = vpop.xlane.xlu0 %1135
  %v1137 = vsel %vm480, %v1127, 0.0
  %1138 = vadd.xlane.f32.xlu0 %v1137
  %v1139 = vpop.xlane.xlu0 %1138
  %v1144 = vperm.slane %v1130, %v539
  %v1145 = vperm.slane %v1133, %v541
  %v1146 = vsel %vm543, %v1145, %v1144
  %v1147 = vperm.slane %v1136, %v539
  %v1148 = vperm.slane %v1139, %v541
  %v1149 = vsel %vm543, %v1148, %v1147
  %v1150 = vsel %vm548, %v1149, %v1146
  %v1152 = vsel %vm551, %v1150, -inf
  %1153 = vmax.xlane.f32.xlu0 %v1152
  %v1154 = vpop.xlane.xlu0 %1153
  %v1156 = vperm.slane %v1154, 0
  %v1157 = vperm.slane %v1154, 1
  %v1160 = vsub.f32 %v1130, %v1156
  %v1161 = vsub.f32 %v1133, %v1156
  %v1162 = vsub.f32 %v1136, %v1157
  %v1163 = vsub.f32 %v1139, %v1157
  %v1164 = vmul.f32 %v1160, 1.442695
  %v1165 = vpow.pop %v1164
  %v1166 = vmul.f32 %v1161, 1.442695
  %v1167 = vpow.pop %v1166
  %v1168 = vmul.f32 %v1162, 1.442695
  %v1169 = vpow.pop %v1168
  %v1170 = vmul.f32 %v1163, 1.442695
  %v1171 = vpow.pop %v1170
  %1176 = vset.pattern.permute.xlu0 0
  %1177 = vperm.xlu0 %1176, %v1165
  %v1178 = vpop.permute.xlu0 %1177
  %1179 = vset.pattern.permute.xlu0 0
  %1180 = vperm.xlu0 %1179, %v1167
  %v1181 = vpop.permute.xlu0 %1180
  %1182 = vset.pattern.permute.xlu0 0
  %1183 = vperm.xlu0 %1182, %v1169
  %v1184 = vpop.permute.xlu0 %1183
  %1185 = vset.pattern.permute.xlu0 0
  %1186 = vperm.xlu0 %1185, %v1171
  %v1187 = vpop.permute.xlu0 %1186
  %v1188 = vperm.slane %v1178, %v539
  %v1189 = vperm.slane %v1181, %v541
  %v1190 = vsel %vm543, %v1189, %v1188
  %v1191 = vperm.slane %v1184, %v539
  %v1192 = vperm.slane %v1187, %v541
  %v1193 = vsel %vm543, %v1192, %v1191
  %v1194 = vsel %vm548, %v1193, %v1190
  %v1196 = vsel %vm551, %v1194, 0.0
  %1197 = vadd.xlane.f32.xlu0 %v1196
  %v1198 = vpop.xlane.xlu0 %1197
  %v1199 = vrcp.pop %v1198
  %v1201 = vperm.slane %v1199, 0
  %v1202 = vperm.slane %v1199, 1
  %v1205 = vmul.f32 %v1165, %v1201
  %v1206 = vmul.f32 %v1167, %v1201
  %v1207 = vmul.f32 %v1169, %v1202
  %v1208 = vmul.f32 %v1171, %v1202
  %1211 = vset.pattern.permute.xlu0 0
  %1212 = vperm.xlu0 %1211, %v1205
  %v1213 = vpop.permute.xlu0 %1212
  %1214 = vset.pattern.permute.xlu0 0
  %1215 = vperm.xlu0 %1214, %v1206
  %v1216 = vpop.permute.xlu0 %1215
  %v1217 = vperm.slane %v1213, %v539
  %v1218 = vperm.slane %v1216, %v541
  %v1219 = vsel %vm543, %v1218, %v1217
  %v1220 = vsel %vm430, %v1219, 0
  %1222 = vmatpush.msra.mxu0 0.0
  %1223 = vmatpush.msra.mxu0 0.0
  %1224 = vmatpush.msra.mxu0 0.0
  %1225 = vmatpush.msra.mxu0 0.0
  %1226 = vmatpush.msra.mxu0 0.0
  %1227 = vmatpush.msra.mxu0 0.0
  %1228 = vmatpush.msra.mxu0 0.0
  %1229 = vmatpush.msra.mxu0 0.0
  %1230 = vmatpush.msra.mxu0 0.0
  %1231 = vmatpush.msra.mxu0 0.0
  %1232 = vmatpush.msra.mxu0 0.0
  %1233 = vmatpush.msra.mxu0 0.0
  %1234 = vmatpush.msra.mxu0 0.0
  %1235 = vmatpush.msra.mxu0 0.0
  %1236 = vmatpush.msra.mxu0 %v290
  %1237 = vmatpush.msra.mxu0 %v287
  %1238 = vmatmul.f32.gmra.mxu0 %v1220
  %v1239 = vpop.f32.mrf.mxu0
  %v1240 = vadd.f32 0.0, %v1239
  %1241 = vdwg.mxu0
  %1244 = vset.pattern.permute.xlu0 0
  %1245 = vperm.xlu0 %1244, %v1207
  %v1246 = vpop.permute.xlu0 %1245
  %1247 = vset.pattern.permute.xlu0 0
  %1248 = vperm.xlu0 %1247, %v1208
  %v1249 = vpop.permute.xlu0 %1248
  %v1250 = vperm.slane %v1246, %v539
  %v1251 = vperm.slane %v1249, %v541
  %v1252 = vsel %vm543, %v1251, %v1250
  %v1253 = vsel %vm430, %v1252, 0
  %1255 = vmatpush.msra.mxu0 0.0
  %1256 = vmatpush.msra.mxu0 0.0
  %1257 = vmatpush.msra.mxu0 0.0
  %1258 = vmatpush.msra.mxu0 0.0
  %1259 = vmatpush.msra.mxu0 0.0
  %1260 = vmatpush.msra.mxu0 0.0
  %1261 = vmatpush.msra.mxu0 0.0
  %1262 = vmatpush.msra.mxu0 0.0
  %1263 = vmatpush.msra.mxu0 0.0
  %1264 = vmatpush.msra.mxu0 0.0
  %1265 = vmatpush.msra.mxu0 0.0
  %1266 = vmatpush.msra.mxu0 0.0
  %1267 = vmatpush.msra.mxu0 0.0
  %1268 = vmatpush.msra.mxu0 0.0
  %1269 = vmatpush.msra.mxu0 %v296
  %1270 = vmatpush.msra.mxu0 %v293
  %1271 = vmatmul.f32.gmra.mxu0 %v1253
  %v1272 = vpop.f32.mrf.mxu0
  %v1273 = vadd.f32 0.0, %v1272
  %1274 = vdwg.mxu0
  %1275 = vmatpush.msra.mxu0 0.0
  %1276 = vmatpush.msra.mxu0 0.0
  %1277 = vmatpush.msra.mxu0 0.0
  %1278 = vmatpush.msra.mxu0 0.0
  %1279 = vmatpush.msra.mxu0 0.0
  %1280 = vmatpush.msra.mxu0 0.0
  %1281 = vmatpush.msra.mxu0 0.0
  %1282 = vmatpush.msra.mxu0 0.0
  %1283 = vmatpush.msra.mxu0 0.0
  %1284 = vmatpush.msra.mxu0 0.0
  %1285 = vmatpush.msra.mxu0 0.0
  %1286 = vmatpush.msra.mxu0 0.0
  %1287 = vmatpush.msra.mxu0 %v475
  %1288 = vmatpush.msra.mxu0 %v474
  %1289 = vmatpush.msra.mxu0 %v473
  %1290 = vmatpush.msra.mxu0 %v472
  %1291 = vmatmul.f32.gmra.mxu0 %v1088
  %v1292 = vpop.f32.mrf.mxu0
  %v1293 = vadd.f32 0.0, %v1292
  %1294 = vdwg.mxu0
  %v1296 = vrot.slane %v1293, 1
  %v1299 = vadd.f32 %v1240, %v1293
  %v1300 = vadd.f32 %v1273, %v1296
  %1301 = vst [vmem:[#allocation1] ss:$4 sm:$0xff] %v463
  %v1302 = vld.sshfl [vmem:[#allocation1] sm:$0xff pattern:$0x73625140]
  %v1303 = vrot.slane %v1302, 1
  %v1306 = vadd.f32 %v1299, %v1302
  %v1307 = vadd.f32 %v1300, %v1303
  %v1308 = vxor.u32 %v1306, 2147483648
  %v1309 = vxor.u32 %v1307, 2147483648
  %v1310 = vmul.f32 %v1308, 1.442695
  %v1311 = vpow.pop %v1310
  %v1312 = vmul.f32 %v1309, 1.442695
  %v1313 = vpow.pop %v1312
  %v1314 = vadd.f32 %v1311, 1.0
  %v1315 = vadd.f32 %v1313, 1.0
  %v1316 = vrcp.pop %v1314
  %v1317 = vmul.f32 %v1314, %v1316
  %v1318 = vsub.f32 1.0, %v1317
  %v1319 = vmul.f32 %v1316, %v1318
  %v1320 = vadd.f32 %v1316, %v1319
  %vm1321 = vweird.f32 %v1314
  %vm1322 = vweird.f32 %v1316
  %vm1323 = vmor %vm1321, %vm1322
  %v1324 = vsel %vm1323, %v1316, %v1320
  %v1325 = vand.u32 2147483647, %v1314
  %vm1326 = vcmp.eq.f32.partialorder %v1325, 8.507059e+37
  %v1327 = vand.u32 %v1314, 2147483648
  %v1328 = vor.u32 1.1754944e-38, %v1327
  %v1329 = vsel %vm1326, %v1328, %v1324
  %v1330 = vmul.f32 1.0, %v1329
  %v1331 = vrcp.pop %v1315
  %v1332 = vmul.f32 %v1315, %v1331
  %v1333 = vsub.f32 1.0, %v1332
  %v1334 = vmul.f32 %v1331, %v1333
  %v1335 = vadd.f32 %v1331, %v1334
  %vm1336 = vweird.f32 %v1315
  %vm1337 = vweird.f32 %v1331
  %vm1338 = vmor %vm1336, %vm1337
  %v1339 = vsel %vm1338, %v1331, %v1335
  %v1340 = vand.u32 2147483647, %v1315
  %vm1341 = vcmp.eq.f32.partialorder %v1340, 8.507059e+37
  %v1342 = vand.u32 %v1315, 2147483648
  %v1343 = vor.u32 1.1754944e-38, %v1342
  %v1344 = vsel %vm1341, %v1343, %v1339
  %v1345 = vmul.f32 1.0, %v1344
  %v1346 = vtanh.pop %v1306
  %v1347 = vtanh.pop %v1307
  %v1348 = vmul.f32 %v1330, %v1068
  %v1349 = vmul.f32 %v1345, %v1069
  %1352 = vrot.lane.b32.xlu0 %v1346, 64
  %v1353 = vpop.permute.xlu0 %1352
  %1354 = vrot.lane.b32.xlu0 %v1347, 64
  %v1355 = vpop.permute.xlu0 %1354
  %v1358 = vmul.f32 %v1330, %v1353
  %v1359 = vmul.f32 %v1345, %v1355
  %1362 = vrot.lane.b32.xlu0 %v1358, 32
  %v1363 = vpop.permute.xlu0 %1362
  %1364 = vrot.lane.b32.xlu0 %v1359, 32
  %v1365 = vpop.permute.xlu0 %1364
  %v1368 = vadd.f32 %v1348, %v1363
  %v1369 = vadd.f32 %v1349, %v1365
  %v1370 = vtanh.pop %v1368
  %v1371 = vtanh.pop %v1369
  %1374 = vrot.lane.b32.xlu0 %v1370, 64
  %v1375 = vpop.permute.xlu0 %1374
  %1376 = vrot.lane.b32.xlu0 %v1371, 64
  %v1377 = vpop.permute.xlu0 %1376
  %v1380 = vmul.f32 %v1330, %v1375
  %v1381 = vmul.f32 %v1345, %v1377
  %v1384 = vrot.slane %v1381, 7
  %v1385 = vsel %vm548, %v1384, %v1380
  %1386 = vrot.lane.b32.xlu0 %v1385, 32
  %v1387 = vpop.permute.xlu0 %1386
  %v1388 = vsel %vm480, %v1387, 0
  %1390 = vmatpush.msra.mxu0 0.0
  %1391 = vmatpush.msra.mxu0 0.0
  %1392 = vmatpush.msra.mxu0 0.0
  %1393 = vmatpush.msra.mxu0 0.0
  %1394 = vmatpush.msra.mxu0 0.0
  %1395 = vmatpush.msra.mxu0 0.0
  %1396 = vmatpush.msra.mxu0 0.0
  %1397 = vmatpush.msra.mxu0 0.0
  %1398 = vmatpush.msra.mxu0 0.0
  %1399 = vmatpush.msra.mxu0 0.0
  %1400 = vmatpush.msra.mxu0 0.0
  %1401 = vmatpush.msra.mxu0 0.0
  %1402 = vmatpush.msra.mxu0 %v471
  %1403 = vmatpush.msra.mxu0 %v470
  %1404 = vmatpush.msra.mxu0 %v469
  %1405 = vmatpush.msra.mxu0 %v468
  %1406 = vmatmul.f32.gmra.mxu0 %v1388
  %v1407 = vpop.f32.mrf.mxu0
  %v1408 = vadd.f32 0.0, %v1407
  %1409 = vdwg.mxu0
  %v1411 = vrot.slane %v1408, 1
  %v1412 = vperm.slane %v1408, 0
  %v1413 = vperm.slane %v1411, 0
  %v1416 = vadd.f32 %v418, %v1412
  %v1417 = vadd.f32 %v419, %v1412
  %v1418 = vadd.f32 %v420, %v1413
  %v1419 = vadd.f32 %v421, %v1413
  %v1420 = vtanh.pop %v1416
  %v1421 = vtanh.pop %v1417
  %v1422 = vtanh.pop %v1418
  %v1423 = vtanh.pop %v1419
  %v1424 = vmul.f32 %v1420, %v478
  %v1425 = vmul.f32 %v1421, %v478
  %v1426 = vmul.f32 %v1422, %v478
  %v1427 = vmul.f32 %v1423, %v478
  %v1428 = vsel %vm480, %v1424, 0.0
  %1429 = vadd.xlane.f32.xlu0 %v1428
  %v1430 = vpop.xlane.xlu0 %1429
  %v1431 = vsel %vm480, %v1425, 0.0
  %1432 = vadd.xlane.f32.xlu0 %v1431
  %v1433 = vpop.xlane.xlu0 %1432
  %v1434 = vsel %vm480, %v1426, 0.0
  %1435 = vadd.xlane.f32.xlu0 %v1434
  %v1436 = vpop.xlane.xlu0 %1435
  %v1437 = vsel %vm480, %v1427, 0.0
  %1438 = vadd.xlane.f32.xlu0 %v1437
  %v1439 = vpop.xlane.xlu0 %1438
  %v1444 = vperm.slane %v1430, %v539
  %v1445 = vperm.slane %v1433, %v541
  %v1446 = vsel %vm543, %v1445, %v1444
  %v1447 = vperm.slane %v1436, %v539
  %v1448 = vperm.slane %v1439, %v541
  %v1449 = vsel %vm543, %v1448, %v1447
  %v1450 = vsel %vm548, %v1449, %v1446
  %v1452 = vsel %vm551, %v1450, -inf
  %1453 = vmax.xlane.f32.xlu0 %v1452
  %v1454 = vpop.xlane.xlu0 %1453
  %v1456 = vperm.slane %v1454, 0
  %v1457 = vperm.slane %v1454, 1
  %v1460 = vsub.f32 %v1430, %v1456
  %v1461 = vsub.f32 %v1433, %v1456
  %v1462 = vsub.f32 %v1436, %v1457
  %v1463 = vsub.f32 %v1439, %v1457
  %v1464 = vmul.f32 %v1460, 1.442695
  %v1465 = vpow.pop %v1464
  %v1466 = vmul.f32 %v1461, 1.442695
  %v1467 = vpow.pop %v1466
  %v1468 = vmul.f32 %v1462, 1.442695
  %v1469 = vpow.pop %v1468
  %v1470 = vmul.f32 %v1463, 1.442695
  %v1471 = vpow.pop %v1470
  %1476 = vset.pattern.permute.xlu0 0
  %1477 = vperm.xlu0 %1476, %v1465
  %v1478 = vpop.permute.xlu0 %1477
  %1479 = vset.pattern.permute.xlu0 0
  %1480 = vperm.xlu0 %1479, %v1467
  %v1481 = vpop.permute.xlu0 %1480
  %1482 = vset.pattern.permute.xlu0 0
  %1483 = vperm.xlu0 %1482, %v1469
  %v1484 = vpop.permute.xlu0 %1483
  %1485 = vset.pattern.permute.xlu0 0
  %1486 = vperm.xlu0 %1485, %v1471
  %v1487 = vpop.permute.xlu0 %1486
  %v1488 = vperm.slane %v1478, %v539
  %v1489 = vperm.slane %v1481, %v541
  %v1490 = vsel %vm543, %v1489, %v1488
  %v1491 = vperm.slane %v1484, %v539
  %v1492 = vperm.slane %v1487, %v541
  %v1493 = vsel %vm543, %v1492, %v1491
  %v1494 = vsel %vm548, %v1493, %v1490
  %v1496 = vsel %vm551, %v1494, 0.0
  %1497 = vadd.xlane.f32.xlu0 %v1496
  %v1498 = vpop.xlane.xlu0 %1497
  %v1499 = vrcp.pop %v1498
  %v1501 = vperm.slane %v1499, 0
  %v1502 = vperm.slane %v1499, 1
  %v1505 = vmul.f32 %v1465, %v1501
  %v1506 = vmul.f32 %v1467, %v1501
  %v1507 = vmul.f32 %v1469, %v1502
  %v1508 = vmul.f32 %v1471, %v1502
  %1511 = vset.pattern.permute.xlu0 0
  %1512 = vperm.xlu0 %1511, %v1505
  %v1513 = vpop.permute.xlu0 %1512
  %1514 = vset.pattern.permute.xlu0 0
  %1515 = vperm.xlu0 %1514, %v1506
  %v1516 = vpop.permute.xlu0 %1515
  %v1517 = vperm.slane %v1513, %v539
  %v1518 = vperm.slane %v1516, %v541
  %v1519 = vsel %vm543, %v1518, %v1517
  %v1520 = vsel %vm430, %v1519, 0
  %1522 = vmatpush.msra.mxu0 0.0
  %1523 = vmatpush.msra.mxu0 0.0
  %1524 = vmatpush.msra.mxu0 0.0
  %1525 = vmatpush.msra.mxu0 0.0
  %1526 = vmatpush.msra.mxu0 0.0
  %1527 = vmatpush.msra.mxu0 0.0
  %1528 = vmatpush.msra.mxu0 0.0
  %1529 = vmatpush.msra.mxu0 0.0
  %1530 = vmatpush.msra.mxu0 0.0
  %1531 = vmatpush.msra.mxu0 0.0
  %1532 = vmatpush.msra.mxu0 0.0
  %1533 = vmatpush.msra.mxu0 0.0
  %1534 = vmatpush.msra.mxu0 0.0
  %1535 = vmatpush.msra.mxu0 0.0
  %1536 = vmatpush.msra.mxu0 %v290
  %1537 = vmatpush.msra.mxu0 %v287
  %1538 = vmatmul.f32.gmra.mxu0 %v1520
  %v1539 = vpop.f32.mrf.mxu0
  %v1540 = vadd.f32 0.0, %v1539
  %1541 = vdwg.mxu0
  %1544 = vset.pattern.permute.xlu0 0
  %1545 = vperm.xlu0 %1544, %v1507
  %v1546 = vpop.permute.xlu0 %1545
  %1547 = vset.pattern.permute.xlu0 0
  %1548 = vperm.xlu0 %1547, %v1508
  %v1549 = vpop.permute.xlu0 %1548
  %v1550 = vperm.slane %v1546, %v539
  %v1551 = vperm.slane %v1549, %v541
  %v1552 = vsel %vm543, %v1551, %v1550
  %v1553 = vsel %vm430, %v1552, 0
  %1555 = vmatpush.msra.mxu0 0.0
  %1556 = vmatpush.msra.mxu0 0.0
  %1557 = vmatpush.msra.mxu0 0.0
  %1558 = vmatpush.msra.mxu0 0.0
  %1559 = vmatpush.msra.mxu0 0.0
  %1560 = vmatpush.msra.mxu0 0.0
  %1561 = vmatpush.msra.mxu0 0.0
  %1562 = vmatpush.msra.mxu0 0.0
  %1563 = vmatpush.msra.mxu0 0.0
  %1564 = vmatpush.msra.mxu0 0.0
  %1565 = vmatpush.msra.mxu0 0.0
  %1566 = vmatpush.msra.mxu0 0.0
  %1567 = vmatpush.msra.mxu0 0.0
  %1568 = vmatpush.msra.mxu0 0.0
  %1569 = vmatpush.msra.mxu0 %v296
  %1570 = vmatpush.msra.mxu0 %v293
  %1571 = vmatmul.f32.gmra.mxu0 %v1553
  %v1572 = vpop.f32.mrf.mxu0
  %v1573 = vadd.f32 0.0, %v1572
  %1574 = vdwg.mxu0
  %1575 = vmatpush.msra.mxu0 0.0
  %1576 = vmatpush.msra.mxu0 0.0
  %1577 = vmatpush.msra.mxu0 0.0
  %1578 = vmatpush.msra.mxu0 0.0
  %1579 = vmatpush.msra.mxu0 0.0
  %1580 = vmatpush.msra.mxu0 0.0
  %1581 = vmatpush.msra.mxu0 0.0
  %1582 = vmatpush.msra.mxu0 0.0
  %1583 = vmatpush.msra.mxu0 0.0
  %1584 = vmatpush.msra.mxu0 0.0
  %1585 = vmatpush.msra.mxu0 0.0
  %1586 = vmatpush.msra.mxu0 0.0
  %1587 = vmatpush.msra.mxu0 %v475
  %1588 = vmatpush.msra.mxu0 %v474
  %1589 = vmatpush.msra.mxu0 %v473
  %1590 = vmatpush.msra.mxu0 %v472
  %1591 = vmatmul.f32.gmra.mxu0 %v1388
  %v1592 = vpop.f32.mrf.mxu0
  %v1593 = vadd.f32 0.0, %v1592
  %1594 = vdwg.mxu0
  %v1596 = vrot.slane %v1593, 1
  %v1599 = vadd.f32 %v1540, %v1593
  %v1600 = vadd.f32 %v1573, %v1596
  %1601 = vst [vmem:[#allocation1] ss:$4 sm:$0xff] %v464
  %v1602 = vld.sshfl [vmem:[#allocation1] sm:$0xff pattern:$0x73625140]
  %v1603 = vrot.slane %v1602, 1
  %v1606 = vadd.f32 %v1599, %v1602
  %v1607 = vadd.f32 %v1600, %v1603
  %v1608 = vxor.u32 %v1606, 2147483648
  %v1609 = vxor.u32 %v1607, 2147483648
  %v1610 = vmul.f32 %v1608, 1.442695
  %v1611 = vpow.pop %v1610
  %v1612 = vmul.f32 %v1609, 1.442695
  %v1613 = vpow.pop %v1612
  %v1614 = vadd.f32 %v1611, 1.0
  %v1615 = vadd.f32 %v1613, 1.0
  %v1616 = vrcp.pop %v1614
  %v1617 = vmul.f32 %v1614, %v1616
  %v1618 = vsub.f32 1.0, %v1617
  %v1619 = vmul.f32 %v1616, %v1618
  %v1620 = vadd.f32 %v1616, %v1619
  %vm1621 = vweird.f32 %v1614
  %vm1622 = vweird.f32 %v1616
  %vm1623 = vmor %vm1621, %vm1622
  %v1624 = vsel %vm1623, %v1616, %v1620
  %v1625 = vand.u32 2147483647, %v1614
  %vm1626 = vcmp.eq.f32.partialorder %v1625, 8.507059e+37
  %v1627 = vand.u32 %v1614, 2147483648
  %v1628 = vor.u32 1.1754944e-38, %v1627
  %v1629 = vsel %vm1626, %v1628, %v1624
  %v1630 = vmul.f32 1.0, %v1629
  %v1631 = vrcp.pop %v1615
  %v1632 = vmul.f32 %v1615, %v1631
  %v1633 = vsub.f32 1.0, %v1632
  %v1634 = vmul.f32 %v1631, %v1633
  %v1635 = vadd.f32 %v1631, %v1634
  %vm1636 = vweird.f32 %v1615
  %vm1637 = vweird.f32 %v1631
  %vm1638 = vmor %vm1636, %vm1637
  %v1639 = vsel %vm1638, %v1631, %v1635
  %v1640 = vand.u32 2147483647, %v1615
  %vm1641 = vcmp.eq.f32.partialorder %v1640, 8.507059e+37
  %v1642 = vand.u32 %v1615, 2147483648
  %v1643 = vor.u32 1.1754944e-38, %v1642
  %v1644 = vsel %vm1641, %v1643, %v1639
  %v1645 = vmul.f32 1.0, %v1644
  %v1646 = vtanh.pop %v1606
  %v1647 = vtanh.pop %v1607
  %v1648 = vmul.f32 %v1630, %v1368
  %v1649 = vmul.f32 %v1645, %v1369
  %1652 = vrot.lane.b32.xlu0 %v1646, 64
  %v1653 = vpop.permute.xlu0 %1652
  %1654 = vrot.lane.b32.xlu0 %v1647, 64
  %v1655 = vpop.permute.xlu0 %1654
  %v1658 = vmul.f32 %v1630, %v1653
  %v1659 = vmul.f32 %v1645, %v1655
  %1662 = vrot.lane.b32.xlu0 %v1658, 32
  %v1663 = vpop.permute.xlu0 %1662
  %1664 = vrot.lane.b32.xlu0 %v1659, 32
  %v1665 = vpop.permute.xlu0 %1664
  %v1668 = vadd.f32 %v1648, %v1663
  %v1669 = vadd.f32 %v1649, %v1665
  %v1670 = vtanh.pop %v1668
  %v1671 = vtanh.pop %v1669
  %1674 = vrot.lane.b32.xlu0 %v1670, 64
  %v1675 = vpop.permute.xlu0 %1674
  %1676 = vrot.lane.b32.xlu0 %v1671, 64
  %v1677 = vpop.permute.xlu0 %1676
  %v1680 = vmul.f32 %v1630, %v1675
  %v1681 = vmul.f32 %v1645, %v1677
  %v1684 = vrot.slane %v1681, 7
  %v1685 = vsel %vm548, %v1684, %v1680
  %1686 = vrot.lane.b32.xlu0 %v1685, 32
  %v1687 = vpop.permute.xlu0 %1686
  %v1688 = vsel %vm480, %v1687, 0
  %1690 = vmatpush.msra.mxu0 0.0
  %1691 = vmatpush.msra.mxu0 0.0
  %1692 = vmatpush.msra.mxu0 0.0
  %1693 = vmatpush.msra.mxu0 0.0
  %1694 = vmatpush.msra.mxu0 0.0
  %1695 = vmatpush.msra.mxu0 0.0
  %1696 = vmatpush.msra.mxu0 0.0
  %1697 = vmatpush.msra.mxu0 0.0
  %1698 = vmatpush.msra.mxu0 0.0
  %1699 = vmatpush.msra.mxu0 0.0
  %1700 = vmatpush.msra.mxu0 0.0
  %1701 = vmatpush.msra.mxu0 0.0
  %1702 = vmatpush.msra.mxu0 %v471
  %1703 = vmatpush.msra.mxu0 %v470
  %1704 = vmatpush.msra.mxu0 %v469
  %1705 = vmatpush.msra.mxu0 %v468
  %1706 = vmatmul.f32.gmra.mxu0 %v1688
  %v1707 = vpop.f32.mrf.mxu0
  %v1708 = vadd.f32 0.0, %v1707
  %1709 = vdwg.mxu0
  %v1711 = vrot.slane %v1708, 1
  %v1712 = vperm.slane %v1708, 0
  %v1713 = vperm.slane %v1711, 0
  %v1716 = vadd.f32 %v418, %v1712
  %v1717 = vadd.f32 %v419, %v1712
  %v1718 = vadd.f32 %v420, %v1713
  %v1719 = vadd.f32 %v421, %v1713
  %v1720 = vtanh.pop %v1716
  %v1721 = vtanh.pop %v1717
  %v1722 = vtanh.pop %v1718
  %v1723 = vtanh.pop %v1719
  %v1724 = vmul.f32 %v1720, %v478
  %v1725 = vmul.f32 %v1721, %v478
  %v1726 = vmul.f32 %v1722, %v478
  %v1727 = vmul.f32 %v1723, %v478
  %v1728 = vsel %vm480, %v1724, 0.0
  %1729 = vadd.xlane.f32.xlu0 %v1728
  %v1730 = vpop.xlane.xlu0 %1729
  %v1731 = vsel %vm480, %v1725, 0.0
  %1732 = vadd.xlane.f32.xlu0 %v1731
  %v1733 = vpop.xlane.xlu0 %1732
  %v1734 = vsel %vm480, %v1726, 0.0
  %1735 = vadd.xlane.f32.xlu0 %v1734
  %v1736 = vpop.xlane.xlu0 %1735
  %v1737 = vsel %vm480, %v1727, 0.0
  %1738 = vadd.xlane.f32.xlu0 %v1737
  %v1739 = vpop.xlane.xlu0 %1738
  %v1744 = vperm.slane %v1730, %v539
  %v1745 = vperm.slane %v1733, %v541
  %v1746 = vsel %vm543, %v1745, %v1744
  %v1747 = vperm.slane %v1736, %v539
  %v1748 = vperm.slane %v1739, %v541
  %v1749 = vsel %vm543, %v1748, %v1747
  %v1750 = vsel %vm548, %v1749, %v1746
  %v1752 = vsel %vm551, %v1750, -inf
  %1753 = vmax.xlane.f32.xlu0 %v1752
  %v1754 = vpop.xlane.xlu0 %1753
  %v1756 = vperm.slane %v1754, 0
  %v1757 = vperm.slane %v1754, 1
  %v1760 = vsub.f32 %v1730, %v1756
  %v1761 = vsub.f32 %v1733, %v1756
  %v1762 = vsub.f32 %v1736, %v1757
  %v1763 = vsub.f32 %v1739, %v1757
  %v1764 = vmul.f32 %v1760, 1.442695
  %v1765 = vpow.pop %v1764
  %v1766 = vmul.f32 %v1761, 1.442695
  %v1767 = vpow.pop %v1766
  %v1768 = vmul.f32 %v1762, 1.442695
  %v1769 = vpow.pop %v1768
  %v1770 = vmul.f32 %v1763, 1.442695
  %v1771 = vpow.pop %v1770
  %1776 = vset.pattern.permute.xlu0 0
  %1777 = vperm.xlu0 %1776, %v1765
  %v1778 = vpop.permute.xlu0 %1777
  %1779 = vset.pattern.permute.xlu0 0
  %1780 = vperm.xlu0 %1779, %v1767
  %v1781 = vpop.permute.xlu0 %1780
  %1782 = vset.pattern.permute.xlu0 0
  %1783 = vperm.xlu0 %1782, %v1769
  %v1784 = vpop.permute.xlu0 %1783
  %1785 = vset.pattern.permute.xlu0 0
  %1786 = vperm.xlu0 %1785, %v1771
  %v1787 = vpop.permute.xlu0 %1786
  %v1788 = vperm.slane %v1778, %v539
  %v1789 = vperm.slane %v1781, %v541
  %v1790 = vsel %vm543, %v1789, %v1788
  %v1791 = vperm.slane %v1784, %v539
  %v1792 = vperm.slane %v1787, %v541
  %v1793 = vsel %vm543, %v1792, %v1791
  %v1794 = vsel %vm548, %v1793, %v1790
  %v1796 = vsel %vm551, %v1794, 0.0
  %1797 = vadd.xlane.f32.xlu0 %v1796
  %v1798 = vpop.xlane.xlu0 %1797
  %v1799 = vrcp.pop %v1798
  %v1801 = vperm.slane %v1799, 0
  %v1802 = vperm.slane %v1799, 1
  %v1805 = vmul.f32 %v1765, %v1801
  %v1806 = vmul.f32 %v1767, %v1801
  %v1807 = vmul.f32 %v1769, %v1802
  %v1808 = vmul.f32 %v1771, %v1802
  %1811 = vset.pattern.permute.xlu0 0
  %1812 = vperm.xlu0 %1811, %v1805
  %v1813 = vpop.permute.xlu0 %1812
  %1814 = vset.pattern.permute.xlu0 0
  %1815 = vperm.xlu0 %1814, %v1806
  %v1816 = vpop.permute.xlu0 %1815
  %v1817 = vperm.slane %v1813, %v539
  %v1818 = vperm.slane %v1816, %v541
  %v1819 = vsel %vm543, %v1818, %v1817
  %v1820 = vsel %vm430, %v1819, 0
  %1822 = vmatpush.msra.mxu0 0.0
  %1823 = vmatpush.msra.mxu0 0.0
  %1824 = vmatpush.msra.mxu0 0.0
  %1825 = vmatpush.msra.mxu0 0.0
  %1826 = vmatpush.msra.mxu0 0.0
  %1827 = vmatpush.msra.mxu0 0.0
  %1828 = vmatpush.msra.mxu0 0.0
  %1829 = vmatpush.msra.mxu0 0.0
  %1830 = vmatpush.msra.mxu0 0.0
  %1831 = vmatpush.msra.mxu0 0.0
  %1832 = vmatpush.msra.mxu0 0.0
  %1833 = vmatpush.msra.mxu0 0.0
  %1834 = vmatpush.msra.mxu0 0.0
  %1835 = vmatpush.msra.mxu0 0.0
  %1836 = vmatpush.msra.mxu0 %v290
  %1837 = vmatpush.msra.mxu0 %v287
  %1838 = vmatmul.f32.gmra.mxu0 %v1820
  %v1839 = vpop.f32.mrf.mxu0
  %v1840 = vadd.f32 0.0, %v1839
  %1841 = vdwg.mxu0
  %1844 = vset.pattern.permute.xlu0 0
  %1845 = vperm.xlu0 %1844, %v1807
  %v1846 = vpop.permute.xlu0 %1845
  %1847 = vset.pattern.permute.xlu0 0
  %1848 = vperm.xlu0 %1847, %v1808
  %v1849 = vpop.permute.xlu0 %1848
  %v1850 = vperm.slane %v1846, %v539
  %v1851 = vperm.slane %v1849, %v541
  %v1852 = vsel %vm543, %v1851, %v1850
  %v1853 = vsel %vm430, %v1852, 0
  %1855 = vmatpush.msra.mxu0 0.0
  %1856 = vmatpush.msra.mxu0 0.0
  %1857 = vmatpush.msra.mxu0 0.0
  %1858 = vmatpush.msra.mxu0 0.0
  %1859 = vmatpush.msra.mxu0 0.0
  %1860 = vmatpush.msra.mxu0 0.0
  %1861 = vmatpush.msra.mxu0 0.0
  %1862 = vmatpush.msra.mxu0 0.0
  %1863 = vmatpush.msra.mxu0 0.0
  %1864 = vmatpush.msra.mxu0 0.0
  %1865 = vmatpush.msra.mxu0 0.0
  %1866 = vmatpush.msra.mxu0 0.0
  %1867 = vmatpush.msra.mxu0 0.0
  %1868 = vmatpush.msra.mxu0 0.0
  %1869 = vmatpush.msra.mxu0 %v296
  %1870 = vmatpush.msra.mxu0 %v293
  %1871 = vmatmul.f32.gmra.mxu0 %v1853
  %v1872 = vpop.f32.mrf.mxu0
  %v1873 = vadd.f32 0.0, %v1872
  %1874 = vdwg.mxu0
  %1875 = vmatpush.msra.mxu0 0.0
  %1876 = vmatpush.msra.mxu0 0.0
  %1877 = vmatpush.msra.mxu0 0.0
  %1878 = vmatpush.msra.mxu0 0.0
  %1879 = vmatpush.msra.mxu0 0.0
  %1880 = vmatpush.msra.mxu0 0.0
  %1881 = vmatpush.msra.mxu0 0.0
  %1882 = vmatpush.msra.mxu0 0.0
  %1883 = vmatpush.msra.mxu0 0.0
  %1884 = vmatpush.msra.mxu0 0.0
  %1885 = vmatpush.msra.mxu0 0.0
  %1886 = vmatpush.msra.mxu0 0.0
  %1887 = vmatpush.msra.mxu0 %v475
  %1888 = vmatpush.msra.mxu0 %v474
  %1889 = vmatpush.msra.mxu0 %v473
  %1890 = vmatpush.msra.mxu0 %v472
  %1891 = vmatmul.f32.gmra.mxu0 %v1688
  %v1892 = vpop.f32.mrf.mxu0
  %v1893 = vadd.f32 0.0, %v1892
  %1894 = vdwg.mxu0
  %v1896 = vrot.slane %v1893, 1
  %v1899 = vadd.f32 %v1840, %v1893
  %v1900 = vadd.f32 %v1873, %v1896
  %1901 = vst [vmem:[#allocation1] ss:$4 sm:$0xff] %v458
  %v1902 = vld.sshfl [vmem:[#allocation1] sm:$0xff pattern:$0x73625140]
  %v1903 = vrot.slane %v1902, 1
  %v1906 = vadd.f32 %v1899, %v1902
  %v1907 = vadd.f32 %v1900, %v1903
  %v1908 = vxor.u32 %v1906, 2147483648
  %v1909 = vxor.u32 %v1907, 2147483648
  %v1910 = vmul.f32 %v1908, 1.442695
  %v1911 = vpow.pop %v1910
  %v1912 = vmul.f32 %v1909, 1.442695
  %v1913 = vpow.pop %v1912
  %v1914 = vadd.f32 %v1911, 1.0
  %v1915 = vadd.f32 %v1913, 1.0
  %v1916 = vrcp.pop %v1914
  %v1917 = vmul.f32 %v1914, %v1916
  %v1918 = vsub.f32 1.0, %v1917
  %v1919 = vmul.f32 %v1916, %v1918
  %v1920 = vadd.f32 %v1916, %v1919
  %vm1921 = vweird.f32 %v1914
  %vm1922 = vweird.f32 %v1916
  %vm1923 = vmor %vm1921, %vm1922
  %v1924 = vsel %vm1923, %v1916, %v1920
  %v1925 = vand.u32 2147483647, %v1914
  %vm1926 = vcmp.eq.f32.partialorder %v1925, 8.507059e+37
  %v1927 = vand.u32 %v1914, 2147483648
  %v1928 = vor.u32 1.1754944e-38, %v1927
  %v1929 = vsel %vm1926, %v1928, %v1924
  %v1930 = vmul.f32 1.0, %v1929
  %v1931 = vrcp.pop %v1915
  %v1932 = vmul.f32 %v1915, %v1931
  %v1933 = vsub.f32 1.0, %v1932
  %v1934 = vmul.f32 %v1931, %v1933
  %v1935 = vadd.f32 %v1931, %v1934
  %vm1936 = vweird.f32 %v1915
  %vm1937 = vweird.f32 %v1931
  %vm1938 = vmor %vm1936, %vm1937
  %v1939 = vsel %vm1938, %v1931, %v1935
  %v1940 = vand.u32 2147483647, %v1915
  %vm1941 = vcmp.eq.f32.partialorder %v1940, 8.507059e+37
  %v1942 = vand.u32 %v1915, 2147483648
  %v1943 = vor.u32 1.1754944e-38, %v1942
  %v1944 = vsel %vm1941, %v1943, %v1939
  %v1945 = vmul.f32 1.0, %v1944
  %v1946 = vtanh.pop %v1906
  %v1947 = vtanh.pop %v1907
  %v1948 = vmul.f32 %v1930, %v1668
  %v1949 = vmul.f32 %v1945, %v1669
  %1952 = vrot.lane.b32.xlu0 %v1946, 64
  %v1953 = vpop.permute.xlu0 %1952
  %1954 = vrot.lane.b32.xlu0 %v1947, 64
  %v1955 = vpop.permute.xlu0 %1954
  %v1958 = vmul.f32 %v1930, %v1953
  %v1959 = vmul.f32 %v1945, %v1955
  %1962 = vrot.lane.b32.xlu0 %v1958, 32
  %v1963 = vpop.permute.xlu0 %1962
  %1964 = vrot.lane.b32.xlu0 %v1959, 32
  %v1965 = vpop.permute.xlu0 %1964
  %v1968 = vadd.f32 %v1948, %v1963
  %v1969 = vadd.f32 %v1949, %v1965
  %v1970 = vtanh.pop %v1968
  %v1971 = vtanh.pop %v1969
  %1974 = vrot.lane.b32.xlu0 %v1970, 64
  %v1975 = vpop.permute.xlu0 %1974
  %1976 = vrot.lane.b32.xlu0 %v1971, 64
  %v1977 = vpop.permute.xlu0 %1976
  %v1980 = vmul.f32 %v1930, %v1975
  %v1981 = vmul.f32 %v1945, %v1977
  %v1984 = vrot.slane %v1981, 7
  %v1985 = vsel %vm548, %v1984, %v1980
  %1986 = vrot.lane.b32.xlu0 %v1985, 32
  %v1987 = vpop.permute.xlu0 %1986
  %v1988 = vsel %vm480, %v1987, 0
  %1990 = vmatpush.msra.mxu0 0.0
  %1991 = vmatpush.msra.mxu0 0.0
  %1992 = vmatpush.msra.mxu0 0.0
  %1993 = vmatpush.msra.mxu0 0.0
  %1994 = vmatpush.msra.mxu0 0.0
  %1995 = vmatpush.msra.mxu0 0.0
  %1996 = vmatpush.msra.mxu0 0.0
  %1997 = vmatpush.msra.mxu0 0.0
  %1998 = vmatpush.msra.mxu0 0.0
  %1999 = vmatpush.msra.mxu0 0.0
  %2000 = vmatpush.msra.mxu0 0.0
  %2001 = vmatpush.msra.mxu0 0.0
  %2002 = vmatpush.msra.mxu0 %v471
  %2003 = vmatpush.msra.mxu0 %v470
  %2004 = vmatpush.msra.mxu0 %v469
  %2005 = vmatpush.msra.mxu0 %v468
  %2006 = vmatmul.f32.gmra.mxu0 %v1988
  %v2007 = vpop.f32.mrf.mxu0
  %v2008 = vadd.f32 0.0, %v2007
  %2009 = vdwg.mxu0
  %v2011 = vrot.slane %v2008, 1
  %v2012 = vperm.slane %v2008, 0
  %v2013 = vperm.slane %v2011, 0
  %v2016 = vadd.f32 %v418, %v2012
  %v2017 = vadd.f32 %v419, %v2012
  %v2018 = vadd.f32 %v420, %v2013
  %v2019 = vadd.f32 %v421, %v2013
  %v2020 = vtanh.pop %v2016
  %v2021 = vtanh.pop %v2017
  %v2022 = vtanh.pop %v2018
  %v2023 = vtanh.pop %v2019
  %v2024 = vmul.f32 %v2020, %v478
  %v2025 = vmul.f32 %v2021, %v478
  %v2026 = vmul.f32 %v2022, %v478
  %v2027 = vmul.f32 %v2023, %v478
  %v2028 = vsel %vm480, %v2024, 0.0
  %2029 = vadd.xlane.f32.xlu0 %v2028
  %v2030 = vpop.xlane.xlu0 %2029
  %v2031 = vsel %vm480, %v2025, 0.0
  %2032 = vadd.xlane.f32.xlu0 %v2031
  %v2033 = vpop.xlane.xlu0 %2032
  %v2034 = vsel %vm480, %v2026, 0.0
  %2035 = vadd.xlane.f32.xlu0 %v2034
  %v2036 = vpop.xlane.xlu0 %2035
  %v2037 = vsel %vm480, %v2027, 0.0
  %2038 = vadd.xlane.f32.xlu0 %v2037
  %v2039 = vpop.xlane.xlu0 %2038
  %v2044 = vperm.slane %v2030, %v539
  %v2045 = vperm.slane %v2033, %v541
  %v2046 = vsel %vm543, %v2045, %v2044
  %v2047 = vperm.slane %v2036, %v539
  %v2048 = vperm.slane %v2039, %v541
  %v2049 = vsel %vm543, %v2048, %v2047
  %v2050 = vsel %vm548, %v2049, %v2046
  %v2052 = vsel %vm551, %v2050, -inf
  %2053 = vmax.xlane.f32.xlu0 %v2052
  %v2054 = vpop.xlane.xlu0 %2053
  %v2056 = vperm.slane %v2054, 0
  %v2057 = vperm.slane %v2054, 1
  %v2060 = vsub.f32 %v2030, %v2056
  %v2061 = vsub.f32 %v2033, %v2056
  %v2062 = vsub.f32 %v2036, %v2057
  %v2063 = vsub.f32 %v2039, %v2057
  %v2064 = vmul.f32 %v2060, 1.442695
  %v2065 = vpow.pop %v2064
  %v2066 = vmul.f32 %v2061, 1.442695
  %v2067 = vpow.pop %v2066
  %v2068 = vmul.f32 %v2062, 1.442695
  %v2069 = vpow.pop %v2068
  %v2070 = vmul.f32 %v2063, 1.442695
  %v2071 = vpow.pop %v2070
  %2076 = vset.pattern.permute.xlu0 0
  %2077 = vperm.xlu0 %2076, %v2065
  %v2078 = vpop.permute.xlu0 %2077
  %2079 = vset.pattern.permute.xlu0 0
  %2080 = vperm.xlu0 %2079, %v2067
  %v2081 = vpop.permute.xlu0 %2080
  %2082 = vset.pattern.permute.xlu0 0
  %2083 = vperm.xlu0 %2082, %v2069
  %v2084 = vpop.permute.xlu0 %2083
  %2085 = vset.pattern.permute.xlu0 0
  %2086 = vperm.xlu0 %2085, %v2071
  %v2087 = vpop.permute.xlu0 %2086
  %v2088 = vperm.slane %v2078, %v539
  %v2089 = vperm.slane %v2081, %v541
  %v2090 = vsel %vm543, %v2089, %v2088
  %v2091 = vperm.slane %v2084, %v539
  %v2092 = vperm.slane %v2087, %v541
  %v2093 = vsel %vm543, %v2092, %v2091
  %v2094 = vsel %vm548, %v2093, %v2090
  %v2096 = vsel %vm551, %v2094, 0.0
  %2097 = vadd.xlane.f32.xlu0 %v2096
  %v2098 = vpop.xlane.xlu0 %2097
  %v2099 = vrcp.pop %v2098
  %v2101 = vperm.slane %v2099, 0
  %v2102 = vperm.slane %v2099, 1
  %v2105 = vmul.f32 %v2065, %v2101
  %v2106 = vmul.f32 %v2067, %v2101
  %v2107 = vmul.f32 %v2069, %v2102
  %v2108 = vmul.f32 %v2071, %v2102
  %2111 = vset.pattern.permute.xlu0 0
  %2112 = vperm.xlu0 %2111, %v2105
  %v2113 = vpop.permute.xlu0 %2112
  %2114 = vset.pattern.permute.xlu0 0
  %2115 = vperm.xlu0 %2114, %v2106
  %v2116 = vpop.permute.xlu0 %2115
  %v2117 = vperm.slane %v2113, %v539
  %v2118 = vperm.slane %v2116, %v541
  %v2119 = vsel %vm543, %v2118, %v2117
  %v2120 = vsel %vm430, %v2119, 0
  %2122 = vmatpush.msra.mxu0 0.0
  %2123 = vmatpush.msra.mxu0 0.0
  %2124 = vmatpush.msra.mxu0 0.0
  %2125 = vmatpush.msra.mxu0 0.0
  %2126 = vmatpush.msra.mxu0 0.0
  %2127 = vmatpush.msra.mxu0 0.0
  %2128 = vmatpush.msra.mxu0 0.0
  %2129 = vmatpush.msra.mxu0 0.0
  %2130 = vmatpush.msra.mxu0 0.0
  %2131 = vmatpush.msra.mxu0 0.0
  %2132 = vmatpush.msra.mxu0 0.0
  %2133 = vmatpush.msra.mxu0 0.0
  %2134 = vmatpush.msra.mxu0 0.0
  %2135 = vmatpush.msra.mxu0 0.0
  %2136 = vmatpush.msra.mxu0 %v290
  %2137 = vmatpush.msra.mxu0 %v287
  %2138 = vmatmul.f32.gmra.mxu0 %v2120
  %v2139 = vpop.f32.mrf.mxu0
  %v2140 = vadd.f32 0.0, %v2139
  %2141 = vdwg.mxu0
  %2144 = vset.pattern.permute.xlu0 0
  %2145 = vperm.xlu0 %2144, %v2107
  %v2146 = vpop.permute.xlu0 %2145
  %2147 = vset.pattern.permute.xlu0 0
  %2148 = vperm.xlu0 %2147, %v2108
  %v2149 = vpop.permute.xlu0 %2148
  %v2150 = vperm.slane %v2146, %v539
  %v2151 = vperm.slane %v2149, %v541
  %v2152 = vsel %vm543, %v2151, %v2150
  %v2153 = vsel %vm430, %v2152, 0
  %2155 = vmatpush.msra.mxu0 0.0
  %2156 = vmatpush.msra.mxu0 0.0
  %2157 = vmatpush.msra.mxu0 0.0
  %2158 = vmatpush.msra.mxu0 0.0
  %2159 = vmatpush.msra.mxu0 0.0
  %2160 = vmatpush.msra.mxu0 0.0
  %2161 = vmatpush.msra.mxu0 0.0
  %2162 = vmatpush.msra.mxu0 0.0
  %2163 = vmatpush.msra.mxu0 0.0
  %2164 = vmatpush.msra.mxu0 0.0
  %2165 = vmatpush.msra.mxu0 0.0
  %2166 = vmatpush.msra.mxu0 0.0
  %2167 = vmatpush.msra.mxu0 0.0
  %2168 = vmatpush.msra.mxu0 0.0
  %2169 = vmatpush.msra.mxu0 %v296
  %2170 = vmatpush.msra.mxu0 %v293
  %2171 = vmatmul.f32.gmra.mxu0 %v2153
  %v2172 = vpop.f32.mrf.mxu0
  %v2173 = vadd.f32 0.0, %v2172
  %2174 = vdwg.mxu0
  %2175 = vmatpush.msra.mxu0 0.0
  %2176 = vmatpush.msra.mxu0 0.0
  %2177 = vmatpush.msra.mxu0 0.0
  %2178 = vmatpush.msra.mxu0 0.0
  %2179 = vmatpush.msra.mxu0 0.0
  %2180 = vmatpush.msra.mxu0 0.0
  %2181 = vmatpush.msra.mxu0 0.0
  %2182 = vmatpush.msra.mxu0 0.0
  %2183 = vmatpush.msra.mxu0 0.0
  %2184 = vmatpush.msra.mxu0 0.0
  %2185 = vmatpush.msra.mxu0 0.0
  %2186 = vmatpush.msra.mxu0 0.0
  %2187 = vmatpush.msra.mxu0 %v475
  %2188 = vmatpush.msra.mxu0 %v474
  %2189 = vmatpush.msra.mxu0 %v473
  %2190 = vmatpush.msra.mxu0 %v472
  %2191 = vmatmul.f32.gmra.mxu0 %v1988
  %v2192 = vpop.f32.mrf.mxu0
  %v2193 = vadd.f32 0.0, %v2192
  %2194 = vdwg.mxu0
  %v2196 = vrot.slane %v2193, 1
  %v2199 = vadd.f32 %v2140, %v2193
  %v2200 = vadd.f32 %v2173, %v2196
  %2201 = vst [vmem:[#allocation1] ss:$4 sm:$0xff] %v465
  %v2202 = vld.sshfl [vmem:[#allocation1] sm:$0xff pattern:$0x73625140]
  %v2203 = vrot.slane %v2202, 1
  %v2206 = vadd.f32 %v2199, %v2202
  %v2207 = vadd.f32 %v2200, %v2203
  %v2208 = vxor.u32 %v2206, 2147483648
  %v2209 = vxor.u32 %v2207, 2147483648
  %v2210 = vmul.f32 %v2208, 1.442695
  %v2211 = vpow.pop %v2210
  %v2212 = vmul.f32 %v2209, 1.442695
  %v2213 = vpow.pop %v2212
  %v2214 = vadd.f32 %v2211, 1.0
  %v2215 = vadd.f32 %v2213, 1.0
  %v2216 = vrcp.pop %v2214
  %v2217 = vmul.f32 %v2214, %v2216
  %v2218 = vsub.f32 1.0, %v2217
  %v2219 = vmul.f32 %v2216, %v2218
  %v2220 = vadd.f32 %v2216, %v2219
  %vm2221 = vweird.f32 %v2214
  %vm2222 = vweird.f32 %v2216
  %vm2223 = vmor %vm2221, %vm2222
  %v2224 = vsel %vm2223, %v2216, %v2220
  %v2225 = vand.u32 2147483647, %v2214
  %vm2226 = vcmp.eq.f32.partialorder %v2225, 8.507059e+37
  %v2227 = vand.u32 %v2214, 2147483648
  %v2228 = vor.u32 1.1754944e-38, %v2227
  %v2229 = vsel %vm2226, %v2228, %v2224
  %v2230 = vmul.f32 1.0, %v2229
  %v2231 = vrcp.pop %v2215
  %v2232 = vmul.f32 %v2215, %v2231
  %v2233 = vsub.f32 1.0, %v2232
  %v2234 = vmul.f32 %v2231, %v2233
  %v2235 = vadd.f32 %v2231, %v2234
  %vm2236 = vweird.f32 %v2215
  %vm2237 = vweird.f32 %v2231
  %vm2238 = vmor %vm2236, %vm2237
  %v2239 = vsel %vm2238, %v2231, %v2235
  %v2240 = vand.u32 2147483647, %v2215
  %vm2241 = vcmp.eq.f32.partialorder %v2240, 8.507059e+37
  %v2242 = vand.u32 %v2215, 2147483648
  %v2243 = vor.u32 1.1754944e-38, %v2242
  %v2244 = vsel %vm2241, %v2243, %v2239
  %v2245 = vmul.f32 1.0, %v2244
  %v2246 = vtanh.pop %v2206
  %v2247 = vtanh.pop %v2207
  %v2248 = vmul.f32 %v2230, %v1968
  %v2249 = vmul.f32 %v2245, %v1969
  %2252 = vrot.lane.b32.xlu0 %v2246, 64
  %v2253 = vpop.permute.xlu0 %2252
  %2254 = vrot.lane.b32.xlu0 %v2247, 64
  %v2255 = vpop.permute.xlu0 %2254
  %v2258 = vmul.f32 %v2230, %v2253
  %v2259 = vmul.f32 %v2245, %v2255
  %2262 = vrot.lane.b32.xlu0 %v2258, 32
  %v2263 = vpop.permute.xlu0 %2262
  %2264 = vrot.lane.b32.xlu0 %v2259, 32
  %v2265 = vpop.permute.xlu0 %2264
  %v2268 = vadd.f32 %v2248, %v2263
  %v2269 = vadd.f32 %v2249, %v2265
  %v2270 = vtanh.pop %v2268
  %v2271 = vtanh.pop %v2269
  %2274 = vrot.lane.b32.xlu0 %v2270, 64
  %v2275 = vpop.permute.xlu0 %2274
  %2276 = vrot.lane.b32.xlu0 %v2271, 64
  %v2277 = vpop.permute.xlu0 %2276
  %v2280 = vmul.f32 %v2230, %v2275
  %v2281 = vmul.f32 %v2245, %v2277
  %v2284 = vrot.slane %v2281, 7
  %v2285 = vsel %vm548, %v2284, %v2280
  %2286 = vrot.lane.b32.xlu0 %v2285, 32
  %v2287 = vpop.permute.xlu0 %2286
  %v2288 = vsel %vm480, %v2287, 0
  %2290 = vmatpush.msra.mxu0 0.0
  %2291 = vmatpush.msra.mxu0 0.0
  %2292 = vmatpush.msra.mxu0 0.0
  %2293 = vmatpush.msra.mxu0 0.0
  %2294 = vmatpush.msra.mxu0 0.0
  %2295 = vmatpush.msra.mxu0 0.0
  %2296 = vmatpush.msra.mxu0 0.0
  %2297 = vmatpush.msra.mxu0 0.0
  %2298 = vmatpush.msra.mxu0 0.0
  %2299 = vmatpush.msra.mxu0 0.0
  %2300 = vmatpush.msra.mxu0 0.0
  %2301 = vmatpush.msra.mxu0 0.0
  %2302 = vmatpush.msra.mxu0 %v471
  %2303 = vmatpush.msra.mxu0 %v470
  %2304 = vmatpush.msra.mxu0 %v469
  %2305 = vmatpush.msra.mxu0 %v468
  %2306 = vmatmul.f32.gmra.mxu0 %v2288
  %v2307 = vpop.f32.mrf.mxu0
  %v2308 = vadd.f32 0.0, %v2307
  %2309 = vdwg.mxu0
  %v2311 = vrot.slane %v2308, 1
  %v2312 = vperm.slane %v2308, 0
  %v2313 = vperm.slane %v2311, 0
  %v2316 = vadd.f32 %v418, %v2312
  %v2317 = vadd.f32 %v419, %v2312
  %v2318 = vadd.f32 %v420, %v2313
  %v2319 = vadd.f32 %v421, %v2313
  %v2320 = vtanh.pop %v2316
  %v2321 = vtanh.pop %v2317
  %v2322 = vtanh.pop %v2318
  %v2323 = vtanh.pop %v2319
  %v2324 = vmul.f32 %v2320, %v478
  %v2325 = vmul.f32 %v2321, %v478
  %v2326 = vmul.f32 %v2322, %v478
  %v2327 = vmul.f32 %v2323, %v478
  %v2328 = vsel %vm480, %v2324, 0.0
  %2329 = vadd.xlane.f32.xlu0 %v2328
  %v2330 = vpop.xlane.xlu0 %2329
  %v2331 = vsel %vm480, %v2325, 0.0
  %2332 = vadd.xlane.f32.xlu0 %v2331
  %v2333 = vpop.xlane.xlu0 %2332
  %v2334 = vsel %vm480, %v2326, 0.0
  %2335 = vadd.xlane.f32.xlu0 %v2334
  %v2336 = vpop.xlane.xlu0 %2335
  %v2337 = vsel %vm480, %v2327, 0.0
  %2338 = vadd.xlane.f32.xlu0 %v2337
  %v2339 = vpop.xlane.xlu0 %2338
  %v2344 = vperm.slane %v2330, %v539
  %v2345 = vperm.slane %v2333, %v541
  %v2346 = vsel %vm543, %v2345, %v2344
  %v2347 = vperm.slane %v2336, %v539
  %v2348 = vperm.slane %v2339, %v541
  %v2349 = vsel %vm543, %v2348, %v2347
  %v2350 = vsel %vm548, %v2349, %v2346
  %v2352 = vsel %vm551, %v2350, -inf
  %2353 = vmax.xlane.f32.xlu0 %v2352
  %v2354 = vpop.xlane.xlu0 %2353
  %v2356 = vperm.slane %v2354, 0
  %v2357 = vperm.slane %v2354, 1
  %v2360 = vsub.f32 %v2330, %v2356
  %v2361 = vsub.f32 %v2333, %v2356
  %v2362 = vsub.f32 %v2336, %v2357
  %v2363 = vsub.f32 %v2339, %v2357
  %v2364 = vmul.f32 %v2360, 1.442695
  %v2365 = vpow.pop %v2364
  %v2366 = vmul.f32 %v2361, 1.442695
  %v2367 = vpow.pop %v2366
  %v2368 = vmul.f32 %v2362, 1.442695
  %v2369 = vpow.pop %v2368
  %v2370 = vmul.f32 %v2363, 1.442695
  %v2371 = vpow.pop %v2370
  %2376 = vset.pattern.permute.xlu0 0
  %2377 = vperm.xlu0 %2376, %v2365
  %v2378 = vpop.permute.xlu0 %2377
  %2379 = vset.pattern.permute.xlu0 0
  %2380 = vperm.xlu0 %2379, %v2367
  %v2381 = vpop.permute.xlu0 %2380
  %2382 = vset.pattern.permute.xlu0 0
  %2383 = vperm.xlu0 %2382, %v2369
  %v2384 = vpop.permute.xlu0 %2383
  %2385 = vset.pattern.permute.xlu0 0
  %2386 = vperm.xlu0 %2385, %v2371
  %v2387 = vpop.permute.xlu0 %2386
  %v2388 = vperm.slane %v2378, %v539
  %v2389 = vperm.slane %v2381, %v541
  %v2390 = vsel %vm543, %v2389, %v2388
  %v2391 = vperm.slane %v2384, %v539
  %v2392 = vperm.slane %v2387, %v541
  %v2393 = vsel %vm543, %v2392, %v2391
  %v2394 = vsel %vm548, %v2393, %v2390
  %v2396 = vsel %vm551, %v2394, 0.0
  %2397 = vadd.xlane.f32.xlu0 %v2396
  %v2398 = vpop.xlane.xlu0 %2397
  %v2399 = vrcp.pop %v2398
  %v2401 = vperm.slane %v2399, 0
  %v2402 = vperm.slane %v2399, 1
  %v2405 = vmul.f32 %v2365, %v2401
  %v2406 = vmul.f32 %v2367, %v2401
  %v2407 = vmul.f32 %v2369, %v2402
  %v2408 = vmul.f32 %v2371, %v2402
  %2411 = vset.pattern.permute.xlu0 0
  %2412 = vperm.xlu0 %2411, %v2405
  %v2413 = vpop.permute.xlu0 %2412
  %2414 = vset.pattern.permute.xlu0 0
  %2415 = vperm.xlu0 %2414, %v2406
  %v2416 = vpop.permute.xlu0 %2415
  %v2417 = vperm.slane %v2413, %v539
  %v2418 = vperm.slane %v2416, %v541
  %v2419 = vsel %vm543, %v2418, %v2417
  %v2420 = vsel %vm430, %v2419, 0
  %2422 = vmatpush.msra.mxu0 0.0
  %2423 = vmatpush.msra.mxu0 0.0
  %2424 = vmatpush.msra.mxu0 0.0
  %2425 = vmatpush.msra.mxu0 0.0
  %2426 = vmatpush.msra.mxu0 0.0
  %2427 = vmatpush.msra.mxu0 0.0
  %2428 = vmatpush.msra.mxu0 0.0
  %2429 = vmatpush.msra.mxu0 0.0
  %2430 = vmatpush.msra.mxu0 0.0
  %2431 = vmatpush.msra.mxu0 0.0
  %2432 = vmatpush.msra.mxu0 0.0
  %2433 = vmatpush.msra.mxu0 0.0
  %2434 = vmatpush.msra.mxu0 0.0
  %2435 = vmatpush.msra.mxu0 0.0
  %2436 = vmatpush.msra.mxu0 %v290
  %2437 = vmatpush.msra.mxu0 %v287
  %2438 = vmatmul.f32.gmra.mxu0 %v2420
  %v2439 = vpop.f32.mrf.mxu0
  %v2440 = vadd.f32 0.0, %v2439
  %2441 = vdwg.mxu0
  %2444 = vset.pattern.permute.xlu0 0
  %2445 = vperm.xlu0 %2444, %v2407
  %v2446 = vpop.permute.xlu0 %2445
  %2447 = vset.pattern.permute.xlu0 0
  %2448 = vperm.xlu0 %2447, %v2408
  %v2449 = vpop.permute.xlu0 %2448
  %v2450 = vperm.slane %v2446, %v539
  %v2451 = vperm.slane %v2449, %v541
  %v2452 = vsel %vm543, %v2451, %v2450
  %v2453 = vsel %vm430, %v2452, 0
  %2455 = vmatpush.msra.mxu0 0.0
  %2456 = vmatpush.msra.mxu0 0.0
  %2457 = vmatpush.msra.mxu0 0.0
  %2458 = vmatpush.msra.mxu0 0.0
  %2459 = vmatpush.msra.mxu0 0.0
  %2460 = vmatpush.msra.mxu0 0.0
  %2461 = vmatpush.msra.mxu0 0.0
  %2462 = vmatpush.msra.mxu0 0.0
  %2463 = vmatpush.msra.mxu0 0.0
  %2464 = vmatpush.msra.mxu0 0.0
  %2465 = vmatpush.msra.mxu0 0.0
  %2466 = vmatpush.msra.mxu0 0.0
  %2467 = vmatpush.msra.mxu0 0.0
  %2468 = vmatpush.msra.mxu0 0.0
  %2469 = vmatpush.msra.mxu0 %v296
  %2470 = vmatpush.msra.mxu0 %v293
  %2471 = vmatmul.f32.gmra.mxu0 %v2453
  %v2472 = vpop.f32.mrf.mxu0
  %v2473 = vadd.f32 0.0, %v2472
  %2474 = vdwg.mxu0
  %2475 = vmatpush.msra.mxu0 0.0
  %2476 = vmatpush.msra.mxu0 0.0
  %2477 = vmatpush.msra.mxu0 0.0
  %2478 = vmatpush.msra.mxu0 0.0
  %2479 = vmatpush.msra.mxu0 0.0
  %2480 = vmatpush.msra.mxu0 0.0
  %2481 = vmatpush.msra.mxu0 0.0
  %2482 = vmatpush.msra.mxu0 0.0
  %2483 = vmatpush.msra.mxu0 0.0
  %2484 = vmatpush.msra.mxu0 0.0
  %2485 = vmatpush.msra.mxu0 0.0
  %2486 = vmatpush.msra.mxu0 0.0
  %2487 = vmatpush.msra.mxu0 %v475
  %2488 = vmatpush.msra.mxu0 %v474
  %2489 = vmatpush.msra.mxu0 %v473
  %2490 = vmatpush.msra.mxu0 %v472
  %2491 = vmatmul.f32.gmra.mxu0 %v2288
  %v2492 = vpop.f32.mrf.mxu0
  %v2493 = vadd.f32 0.0, %v2492
  %2494 = vdwg.mxu0
  %v2496 = vrot.slane %v2493, 1
  %v2499 = vadd.f32 %v2440, %v2493
  %v2500 = vadd.f32 %v2473, %v2496
  %2501 = vst [vmem:[#allocation1] ss:$4 sm:$0xff] %v466
  %v2502 = vld.sshfl [vmem:[#allocation1] sm:$0xff pattern:$0x73625140]
  %v2503 = vrot.slane %v2502, 1
  %v2506 = vadd.f32 %v2499, %v2502
  %v2507 = vadd.f32 %v2500, %v2503
  %v2508 = vxor.u32 %v2506, 2147483648
  %v2509 = vxor.u32 %v2507, 2147483648
  %v2510 = vmul.f32 %v2508, 1.442695
  %v2511 = vpow.pop %v2510
  %v2512 = vmul.f32 %v2509, 1.442695
  %v2513 = vpow.pop %v2512
  %v2514 = vadd.f32 %v2511, 1.0
  %v2515 = vadd.f32 %v2513, 1.0
  %v2516 = vrcp.pop %v2514
  %v2517 = vmul.f32 %v2514, %v2516
  %v2518 = vsub.f32 1.0, %v2517
  %v2519 = vmul.f32 %v2516, %v2518
  %v2520 = vadd.f32 %v2516, %v2519
  %vm2521 = vweird.f32 %v2514
  %vm2522 = vweird.f32 %v2516
  %vm2523 = vmor %vm2521, %vm2522
  %v2524 = vsel %vm2523, %v2516, %v2520
  %v2525 = vand.u32 2147483647, %v2514
  %vm2526 = vcmp.eq.f32.partialorder %v2525, 8.507059e+37
  %v2527 = vand.u32 %v2514, 2147483648
  %v2528 = vor.u32 1.1754944e-38, %v2527
  %v2529 = vsel %vm2526, %v2528, %v2524
  %v2530 = vmul.f32 1.0, %v2529
  %v2531 = vrcp.pop %v2515
  %v2532 = vmul.f32 %v2515, %v2531
  %v2533 = vsub.f32 1.0, %v2532
  %v2534 = vmul.f32 %v2531, %v2533
  %v2535 = vadd.f32 %v2531, %v2534
  %vm2536 = vweird.f32 %v2515
  %vm2537 = vweird.f32 %v2531
  %vm2538 = vmor %vm2536, %vm2537
  %v2539 = vsel %vm2538, %v2531, %v2535
  %v2540 = vand.u32 2147483647, %v2515
  %vm2541 = vcmp.eq.f32.partialorder %v2540, 8.507059e+37
  %v2542 = vand.u32 %v2515, 2147483648
  %v2543 = vor.u32 1.1754944e-38, %v2542
  %v2544 = vsel %vm2541, %v2543, %v2539
  %v2545 = vmul.f32 1.0, %v2544
  %v2546 = vtanh.pop %v2506
  %v2547 = vtanh.pop %v2507
  %v2548 = vmul.f32 %v2530, %v2268
  %v2549 = vmul.f32 %v2545, %v2269
  %2552 = vrot.lane.b32.xlu0 %v2546, 64
  %v2553 = vpop.permute.xlu0 %2552
  %2554 = vrot.lane.b32.xlu0 %v2547, 64
  %v2555 = vpop.permute.xlu0 %2554
  %v2558 = vmul.f32 %v2530, %v2553
  %v2559 = vmul.f32 %v2545, %v2555
  %2562 = vrot.lane.b32.xlu0 %v2558, 32
  %v2563 = vpop.permute.xlu0 %2562
  %2564 = vrot.lane.b32.xlu0 %v2559, 32
  %v2565 = vpop.permute.xlu0 %2564
  %v2568 = vadd.f32 %v2548, %v2563
  %v2569 = vadd.f32 %v2549, %v2565
  %v2570 = vtanh.pop %v2568
  %v2571 = vtanh.pop %v2569
  %2574 = vrot.lane.b32.xlu0 %v2570, 64
  %v2575 = vpop.permute.xlu0 %2574
  %2576 = vrot.lane.b32.xlu0 %v2571, 64
  %v2577 = vpop.permute.xlu0 %2576
  %v2580 = vmul.f32 %v2530, %v2575
  %v2581 = vmul.f32 %v2545, %v2577
  %v2584 = vrot.slane %v2581, 7
  %v2585 = vsel %vm548, %v2584, %v2580
  %2586 = vrot.lane.b32.xlu0 %v2585, 32
  %v2587 = vpop.permute.xlu0 %2586
  %v2588 = vsel %vm480, %v2587, 0
  %2590 = vmatpush.msra.mxu0 0.0
  %2591 = vmatpush.msra.mxu0 0.0
  %2592 = vmatpush.msra.mxu0 0.0
  %2593 = vmatpush.msra.mxu0 0.0
  %2594 = vmatpush.msra.mxu0 0.0
  %2595 = vmatpush.msra.mxu0 0.0
  %2596 = vmatpush.msra.mxu0 0.0
  %2597 = vmatpush.msra.mxu0 0.0
  %2598 = vmatpush.msra.mxu0 0.0
  %2599 = vmatpush.msra.mxu0 0.0
  %2600 = vmatpush.msra.mxu0 0.0
  %2601 = vmatpush.msra.mxu0 0.0
  %2602 = vmatpush.msra.mxu0 %v471
  %2603 = vmatpush.msra.mxu0 %v470
  %2604 = vmatpush.msra.mxu0 %v469
  %2605 = vmatpush.msra.mxu0 %v468
  %2606 = vmatmul.f32.gmra.mxu0 %v2588
  %v2607 = vpop.f32.mrf.mxu0
  %v2608 = vadd.f32 0.0, %v2607
  %2609 = vdwg.mxu0
  %v2611 = vrot.slane %v2608, 1
  %v2612 = vperm.slane %v2608, 0
  %v2613 = vperm.slane %v2611, 0
  %v2616 = vadd.f32 %v418, %v2612
  %v2617 = vadd.f32 %v419, %v2612
  %v2618 = vadd.f32 %v420, %v2613
  %v2619 = vadd.f32 %v421, %v2613
  %v2620 = vtanh.pop %v2616
  %v2621 = vtanh.pop %v2617
  %v2622 = vtanh.pop %v2618
  %v2623 = vtanh.pop %v2619
  %v2624 = vmul.f32 %v2620, %v478
  %v2625 = vmul.f32 %v2621, %v478
  %v2626 = vmul.f32 %v2622, %v478
  %v2627 = vmul.f32 %v2623, %v478
  %v2628 = vsel %vm480, %v2624, 0.0
  %2629 = vadd.xlane.f32.xlu0 %v2628
  %v2630 = vpop.xlane.xlu0 %2629
  %v2631 = vsel %vm480, %v2625, 0.0
  %2632 = vadd.xlane.f32.xlu0 %v2631
  %v2633 = vpop.xlane.xlu0 %2632
  %v2634 = vsel %vm480, %v2626, 0.0
  %2635 = vadd.xlane.f32.xlu0 %v2634
  %v2636 = vpop.xlane.xlu0 %2635
  %v2637 = vsel %vm480, %v2627, 0.0
  %2638 = vadd.xlane.f32.xlu0 %v2637
  %v2639 = vpop.xlane.xlu0 %2638
  %v2644 = vperm.slane %v2630, %v539
  %v2645 = vperm.slane %v2633, %v541
  %v2646 = vsel %vm543, %v2645, %v2644
  %v2647 = vperm.slane %v2636, %v539
  %v2648 = vperm.slane %v2639, %v541
  %v2649 = vsel %vm543, %v2648, %v2647
  %v2650 = vsel %vm548, %v2649, %v2646
  %v2652 = vsel %vm551, %v2650, -inf
  %2653 = vmax.xlane.f32.xlu0 %v2652
  %v2654 = vpop.xlane.xlu0 %2653
  %v2656 = vperm.slane %v2654, 0
  %v2657 = vperm.slane %v2654, 1
  %v2660 = vsub.f32 %v2630, %v2656
  %v2661 = vsub.f32 %v2633, %v2656
  %v2662 = vsub.f32 %v2636, %v2657
  %v2663 = vsub.f32 %v2639, %v2657
  %v2664 = vmul.f32 %v2660, 1.442695
  %v2665 = vpow.pop %v2664
  %v2666 = vmul.f32 %v2661, 1.442695
  %v2667 = vpow.pop %v2666
  %v2668 = vmul.f32 %v2662, 1.442695
  %v2669 = vpow.pop %v2668
  %v2670 = vmul.f32 %v2663, 1.442695
  %v2671 = vpow.pop %v2670
  %2676 = vset.pattern.permute.xlu0 0
  %2677 = vperm.xlu0 %2676, %v2665
  %v2678 = vpop.permute.xlu0 %2677
  %2679 = vset.pattern.permute.xlu0 0
  %2680 = vperm.xlu0 %2679, %v2667
  %v2681 = vpop.permute.xlu0 %2680
  %2682 = vset.pattern.permute.xlu0 0
  %2683 = vperm.xlu0 %2682, %v2669
  %v2684 = vpop.permute.xlu0 %2683
  %2685 = vset.pattern.permute.xlu0 0
  %2686 = vperm.xlu0 %2685, %v2671
  %v2687 = vpop.permute.xlu0 %2686
  %v2688 = vperm.slane %v2678, %v539
  %v2689 = vperm.slane %v2681, %v541
  %v2690 = vsel %vm543, %v2689, %v2688
  %v2691 = vperm.slane %v2684, %v539
  %v2692 = vperm.slane %v2687, %v541
  %v2693 = vsel %vm543, %v2692, %v2691
  %v2694 = vsel %vm548, %v2693, %v2690
  %v2696 = vsel %vm551, %v2694, 0.0
  %2697 = vadd.xlane.f32.xlu0 %v2696
  %v2698 = vpop.xlane.xlu0 %2697
  %v2699 = vrcp.pop %v2698
  %v2701 = vperm.slane %v2699, 0
  %v2702 = vperm.slane %v2699, 1
  %v2705 = vmul.f32 %v2665, %v2701
  %v2706 = vmul.f32 %v2667, %v2701
  %v2707 = vmul.f32 %v2669, %v2702
  %v2708 = vmul.f32 %v2671, %v2702
  %2711 = vset.pattern.permute.xlu0 0
  %2712 = vperm.xlu0 %2711, %v2705
  %v2713 = vpop.permute.xlu0 %2712
  %2714 = vset.pattern.permute.xlu0 0
  %2715 = vperm.xlu0 %2714, %v2706
  %v2716 = vpop.permute.xlu0 %2715
  %v2717 = vperm.slane %v2713, %v539
  %v2718 = vperm.slane %v2716, %v541
  %v2719 = vsel %vm543, %v2718, %v2717
  %v2720 = vsel %vm430, %v2719, 0
  %2722 = vmatpush.msra.mxu0 0.0
  %2723 = vmatpush.msra.mxu0 0.0
  %2724 = vmatpush.msra.mxu0 0.0
  %2725 = vmatpush.msra.mxu0 0.0
  %2726 = vmatpush.msra.mxu0 0.0
  %2727 = vmatpush.msra.mxu0 0.0
  %2728 = vmatpush.msra.mxu0 0.0
  %2729 = vmatpush.msra.mxu0 0.0
  %2730 = vmatpush.msra.mxu0 0.0
  %2731 = vmatpush.msra.mxu0 0.0
  %2732 = vmatpush.msra.mxu0 0.0
  %2733 = vmatpush.msra.mxu0 0.0
  %2734 = vmatpush.msra.mxu0 0.0
  %2735 = vmatpush.msra.mxu0 0.0
  %2736 = vmatpush.msra.mxu0 %v290
  %2737 = vmatpush.msra.mxu0 %v287
  %2738 = vmatmul.f32.gmra.mxu0 %v2720
  %v2739 = vpop.f32.mrf.mxu0
  %v2740 = vadd.f32 0.0, %v2739
  %2741 = vdwg.mxu0
  %2744 = vset.pattern.permute.xlu0 0
  %2745 = vperm.xlu0 %2744, %v2707
  %v2746 = vpop.permute.xlu0 %2745
  %2747 = vset.pattern.permute.xlu0 0
  %2748 = vperm.xlu0 %2747, %v2708
  %v2749 = vpop.permute.xlu0 %2748
  %v2750 = vperm.slane %v2746, %v539
  %v2751 = vperm.slane %v2749, %v541
  %v2752 = vsel %vm543, %v2751, %v2750
  %v2753 = vsel %vm430, %v2752, 0
  %2755 = vmatpush.msra.mxu0 0.0
  %2756 = vmatpush.msra.mxu0 0.0
  %2757 = vmatpush.msra.mxu0 0.0
  %2758 = vmatpush.msra.mxu0 0.0
  %2759 = vmatpush.msra.mxu0 0.0
  %2760 = vmatpush.msra.mxu0 0.0
  %2761 = vmatpush.msra.mxu0 0.0
  %2762 = vmatpush.msra.mxu0 0.0
  %2763 = vmatpush.msra.mxu0 0.0
  %2764 = vmatpush.msra.mxu0 0.0
  %2765 = vmatpush.msra.mxu0 0.0
  %2766 = vmatpush.msra.mxu0 0.0
  %2767 = vmatpush.msra.mxu0 0.0
  %2768 = vmatpush.msra.mxu0 0.0
  %2769 = vmatpush.msra.mxu0 %v296
  %2770 = vmatpush.msra.mxu0 %v293
  %2771 = vmatmul.f32.gmra.mxu0 %v2753
  %v2772 = vpop.f32.mrf.mxu0
  %v2773 = vadd.f32 0.0, %v2772
  %2774 = vdwg.mxu0
  %2775 = vmatpush.msra.mxu0 0.0
  %2776 = vmatpush.msra.mxu0 0.0
  %2777 = vmatpush.msra.mxu0 0.0
  %2778 = vmatpush.msra.mxu0 0.0
  %2779 = vmatpush.msra.mxu0 0.0
  %2780 = vmatpush.msra.mxu0 0.0
  %2781 = vmatpush.msra.mxu0 0.0
  %2782 = vmatpush.msra.mxu0 0.0
  %2783 = vmatpush.msra.mxu0 0.0
  %2784 = vmatpush.msra.mxu0 0.0
  %2785 = vmatpush.msra.mxu0 0.0
  %2786 = vmatpush.msra.mxu0 0.0
  %2787 = vmatpush.msra.mxu0 %v475
  %2788 = vmatpush.msra.mxu0 %v474
  %2789 = vmatpush.msra.mxu0 %v473
  %2790 = vmatpush.msra.mxu0 %v472
  %2791 = vmatmul.f32.gmra.mxu0 %v2588
  %v2792 = vpop.f32.mrf.mxu0
  %v2793 = vadd.f32 0.0, %v2792
  %2794 = vdwg.mxu0
  %v2796 = vrot.slane %v2793, 1
  %v2799 = vadd.f32 %v2740, %v2793
  %v2800 = vadd.f32 %v2773, %v2796
  %2801 = vst [vmem:[#allocation1] ss:$4 sm:$0xff] %v467
  %v2802 = vld.sshfl [vmem:[#allocation1] sm:$0xff pattern:$0x73625140]
  %v2803 = vrot.slane %v2802, 1
  %v2806 = vadd.f32 %v2799, %v2802
  %v2807 = vadd.f32 %v2800, %v2803
  %v2808 = vxor.u32 %v2806, 2147483648
  %v2809 = vxor.u32 %v2807, 2147483648
  %v2810 = vmul.f32 %v2808, 1.442695
  %v2811 = vpow.pop %v2810
  %v2812 = vmul.f32 %v2809, 1.442695
  %v2813 = vpow.pop %v2812
  %v2814 = vadd.f32 %v2811, 1.0
  %v2815 = vadd.f32 %v2813, 1.0
  %v2816 = vrcp.pop %v2814
  %v2817 = vmul.f32 %v2814, %v2816
  %v2818 = vsub.f32 1.0, %v2817
  %v2819 = vmul.f32 %v2816, %v2818
  %v2820 = vadd.f32 %v2816, %v2819
  %vm2821 = vweird.f32 %v2814
  %vm2822 = vweird.f32 %v2816
  %vm2823 = vmor %vm2821, %vm2822
  %v2824 = vsel %vm2823, %v2816, %v2820
  %v2825 = vand.u32 2147483647, %v2814
  %vm2826 = vcmp.eq.f32.partialorder %v2825, 8.507059e+37
  %v2827 = vand.u32 %v2814, 2147483648
  %v2828 = vor.u32 1.1754944e-38, %v2827
  %v2829 = vsel %vm2826, %v2828, %v2824
  %v2830 = vmul.f32 1.0, %v2829
  %v2831 = vrcp.pop %v2815
  %v2832 = vmul.f32 %v2815, %v2831
  %v2833 = vsub.f32 1.0, %v2832
  %v2834 = vmul.f32 %v2831, %v2833
  %v2835 = vadd.f32 %v2831, %v2834
  %vm2836 = vweird.f32 %v2815
  %vm2837 = vweird.f32 %v2831
  %vm2838 = vmor %vm2836, %vm2837
  %v2839 = vsel %vm2838, %v2831, %v2835
  %v2840 = vand.u32 2147483647, %v2815
  %vm2841 = vcmp.eq.f32.partialorder %v2840, 8.507059e+37
  %v2842 = vand.u32 %v2815, 2147483648
  %v2843 = vor.u32 1.1754944e-38, %v2842
  %v2844 = vsel %vm2841, %v2843, %v2839
  %v2845 = vmul.f32 1.0, %v2844
  %v2846 = vtanh.pop %v2806
  %v2847 = vtanh.pop %v2807
  %v2848 = vmul.f32 %v2830, %v2568
  %v2849 = vmul.f32 %v2845, %v2569
  %2852 = vrot.lane.b32.xlu0 %v2846, 64
  %v2853 = vpop.permute.xlu0 %2852
  %2854 = vrot.lane.b32.xlu0 %v2847, 64
  %v2855 = vpop.permute.xlu0 %2854
  %v2858 = vmul.f32 %v2830, %v2853
  %v2859 = vmul.f32 %v2845, %v2855
  %2862 = vrot.lane.b32.xlu0 %v2858, 32
  %v2863 = vpop.permute.xlu0 %2862
  %2864 = vrot.lane.b32.xlu0 %v2859, 32
  %v2865 = vpop.permute.xlu0 %2864
  %v2868 = vadd.f32 %v2848, %v2863
  %v2869 = vadd.f32 %v2849, %v2865
  %v2870 = vtanh.pop %v2868
  %v2871 = vtanh.pop %v2869
  %2874 = vrot.lane.b32.xlu0 %v2870, 64
  %v2875 = vpop.permute.xlu0 %2874
  %2876 = vrot.lane.b32.xlu0 %v2871, 64
  %v2877 = vpop.permute.xlu0 %2876
  %v2880 = vmul.f32 %v2830, %v2875
  %v2881 = vmul.f32 %v2845, %v2877
  %v2883 = vrot.slane %v1080, 6
  %v2884 = vrot.slane %v1081, 5
  %vm2885 = vcmask 1043459
  %v2886 = vsel %vm2885, %v2884, %v2883
  %v2888 = vrot.slane %v1380, 4
  %v2889 = vrot.slane %v1381, 3
  %vm2890 = vcmask 1045509
  %v2891 = vsel %vm2890, %v2889, %v2888
  %v2893 = vrot.slane %v1680, 2
  %v2894 = vrot.slane %v1681, 1
  %vm2895 = vcmask 1047559
  %v2896 = vsel %vm2895, %v2894, %v2893
  %v2899 = vrot.slane %v2280, 6
  %v2900 = vrot.slane %v2281, 5
  %v2901 = vsel %vm2885, %v2900, %v2899
  %v2903 = vrot.slane %v2580, 4
  %v2904 = vrot.slane %v2581, 3
  %v2905 = vsel %vm2890, %v2904, %v2903
  %v2909 = vrot.slane %v2880, 2
  %v2910 = vrot.slane %v2881, 1
  %v2911 = vsel %vm2895, %v2910, %v2909
  %vm2913 = vcmask 1041408
  %v2914 = vsel %vm2913, %v785, %v2886
  %vm2915 = vcmask 1043456
  %v2916 = vsel %vm2915, %v2914, %v2891
  %vm2917 = vcmask 1045504
  %v2918 = vsel %vm2917, %v2916, %v2896
  %v2919 = vsel %vm2913, %v1985, %v2901
  %v2920 = vsel %vm2915, %v2919, %v2905
  %v2921 = vsel %vm2917, %v2920, %v2911
  %v2922 = vld [vmem:[%s9] sm:$0xff]
  %v2923 = vld [vmem:[%s9 + $0x8] sm:$0xff]
  %v2924 = vld [vmem:[%s9 + $0x10] sm:$0xff]
  %v2925 = vld [vmem:[%s9 + $0x18] sm:$0xff]
  %v2926 = vld [vmem:[%s10] sm:$0x1]
  %v2928 = vperm.slane %v2926, 0
  %2932 = vrot.lane.b32.xlu0 %v2918, 32
  %v2933 = vpop.permute.xlu0 %2932
  %2934 = vrot.lane.b32.xlu0 %v2921, 32
  %v2935 = vpop.permute.xlu0 %2934
  %v2936 = vsel %vm480, %v2933, 0
  %v2938 = vsel %vm480, %v2935, 0
  %2940 = vmatpush.msra.mxu0 0.0
  %2941 = vmatpush.msra.mxu0 0.0
  %2942 = vmatpush.msra.mxu0 0.0
  %2943 = vmatpush.msra.mxu0 0.0
  %2944 = vmatpush.msra.mxu0 0.0
  %2945 = vmatpush.msra.mxu0 0.0
  %2946 = vmatpush.msra.mxu0 0.0
  %2947 = vmatpush.msra.mxu0 0.0
  %2948 = vmatpush.msra.mxu0 0.0
  %2949 = vmatpush.msra.mxu0 0.0
  %2950 = vmatpush.msra.mxu0 0.0
  %2951 = vmatpush.msra.mxu0 0.0
  %2952 = vmatpush.msra.mxu0 %v2925
  %2953 = vmatpush.msra.mxu0 %v2924
  %2954 = vmatpush.msra.mxu0 %v2923
  %2955 = vmatpush.msra.mxu0 %v2922
  %2956 = vmatmul.f32.gmra.mxu0 %v2936
  %v2957 = vpop.f32.mrf.mxu0
  %v2958 = vadd.f32 %v2928, %v2957
  %2959 = vmatmul.f32.gmra.mxu0 %v2938
  %v2960 = vpop.f32.mrf.mxu0
  %v2961 = vadd.f32 %v2928, %v2960
  %2962 = vdwg.mxu0
  %2963 = vst [vmem:[%s11] sm:$0xff] %v2958
  %2964 = vst [vmem:[%s11 + $0x8] sm:$0xff] %v2961
  // Predicated region
  $region46: #{attn_model_forward.5} parent=0 // pred_check
    _
  $region47: #{attn_model_forward.5} parent=0 // pred_check_branch
    %2966 = sbr.rel (0) target = $region49
  $region48: #{attn_model_forward.5} parent=0 // pred_region
    _
  $region49: #{attn_model_forward.5} parent=0 // pred_fallthru
    _
  // Predicated region
  $region50: #{attn_model_forward.5} parent=0 // pred_check
    _
  $region51: #{attn_model_forward.5} parent=0 // pred_check_branch
    %2968 = sbr.rel (0) target = $region53
  $region52: #{attn_model_forward.5} parent=0 // pred_region
    _
  $region53: #{attn_model_forward.5} parent=0 // pred_fallthru
    _

</llo_original>
